<compile_context>
chip_gen: v5e
topology: v5e:2x2
jax: 0.10.0
libtpu: 0.0.40
codegen_flags: <defaults>
</compile_context>

<pallas_src>
import functools

import jax
import jax.numpy as jnp
from jax.experimental import pallas as pl
from jax.experimental.pallas import tpu as pltpu

_LN_EPS = 1e-6     # timm ViT LayerNorm eps
_BN_EPS = 1e-5     # nn.BatchNorm1d eps
_VMEM_LIMIT = 48 * 1024 * 1024
_IMAGENET_MEAN = (0.485, 0.456, 0.406)
_IMAGENET_STD = (0.229, 0.224, 0.225)


# ----------------------------- tiling helpers -----------------------------

def _pick_tile(dim, candidates):
    for c in candidates:
        if c <= dim and dim % c == 0:
            return c
    return dim   # fall back to a full (single) block — legal per BlockSpec rules


# --------------------- fused tiled matmul (MXU) kernel ---------------------

def _make_mm_kernel(nk, has_bias, has_res, fuse_ln, act):
    """o = epilogue( LN?(a) @ w ) with f32 accumulation across the K grid axis."""
    def kernel(*refs):
        it = iter(refs)
        a_ref = next(it)
        w_ref = next(it)
        lg_ref = next(it) if fuse_ln else None
        lb_ref = next(it) if fuse_ln else None
        b_ref = next(it) if has_bias else None
        r_ref = next(it) if has_res else None
        o_ref = next(it)
        acc_ref = next(it)

        a = a_ref[...]
        if fuse_ln:                       # LayerNorm prologue (requires nk == 1)
            x = a.astype(jnp.float32)
            mu = jnp.mean(x, axis=-1, keepdims=True)
            xc = x - mu
            var = jnp.mean(xc * xc, axis=-1, keepdims=True)
            x = xc * jax.lax.rsqrt(var + _LN_EPS) * lg_ref[...] + lb_ref[...]
            a = x.astype(jnp.bfloat16)

        @pl.when(pl.program_id(2) == 0)
        def _():
            acc_ref[...] = jnp.zeros_like(acc_ref)

        acc_ref[...] += jnp.dot(a, w_ref[...], preferred_element_type=jnp.float32)

        @pl.when(pl.program_id(2) == nk - 1)
        def _():
            y = acc_ref[...]
            if has_bias:
                y = y + b_ref[...]
            if act == "gelu":
                # TODO(synk): nn.GELU is exact (erf); tanh approximation used here.
                y = jax.nn.gelu(y, approximate=True)
            if has_res:
                y = y + r_ref[...].astype(jnp.float32)
            o_ref[...] = y.astype(o_ref.dtype)

    return kernel


def matmul_fused(a, w, *, bias=None, residual=None, ln=None, act=None,
                 out_dtype=jnp.float32):
    """[LN](a) @ w  (+bias) (+GELU) (+residual) with bf16 MXU math, f32 acc."""
    M, K = a.shape
    N = w.shape[1]
    tm = _pick_tile(M, (256, 128, 64, 32, 16, 8))
    tn = _pick_tile(N, (512, 256, 128))
    tk = K if ln is not None else _pick_tile(K, (512, 256, 128))
    nk = K // tk

    a_in = a if ln is not None else a.astype(jnp.bfloat16)   # LN prologue wants f32 rows
    w_bf = w.astype(jnp.bfloat16)

    in_specs = [pl.BlockSpec((tm, tk), lambda i, j, k: (i, k)),
                pl.BlockSpec((tk, tn), lambda i, j, k: (k, j))]
    operands = [a_in, w_bf]
    if ln is not None:
        g, b = ln
        in_specs += [pl.BlockSpec((1, tk), lambda i, j, k: (0, k)),
                     pl.BlockSpec((1, tk), lambda i, j, k: (0, k))]
        operands += [g.reshape(1, K).astype(jnp.float32),
                     b.reshape(1, K).astype(jnp.float32)]
    if bias is not None:
        in_specs.append(pl.BlockSpec((1, tn), lambda i, j, k: (0, j)))
        operands.append(bias.reshape(1, N).astype(jnp.float32))
    if residual is not None:
        in_specs.append(pl.BlockSpec((tm, tn), lambda i, j, k: (i, j)))
        operands.append(residual)

    kernel = _make_mm_kernel(nk, bias is not None, residual is not None,
                             ln is not None, act)
    return pl.pallas_call(
        kernel,
        out_shape=jax.ShapeDtypeStruct((M, N), out_dtype),
        grid=(M // tm, N // tn, nk),
        in_specs=in_specs,
        out_specs=pl.BlockSpec((tm, tn), lambda i, j, k: (i, j)),
        scratch_shapes=[pltpu.VMEM((tm, tn), jnp.float32)],
        compiler_params=pltpu.CompilerParams(
            dimension_semantics=("parallel", "parallel", "arbitrary"),
            vmem_limit_bytes=_VMEM_LIMIT),
    )(*operands)


# --------------------------- fused attention kernel ---------------------------

def _make_attn_kernel(sp, s_valid, scale):
    def kernel(q_ref, k_ref, v_ref, o_ref):
        q = q_ref[...]                                   # (sp, hd) bf16
        k = k_ref[...]
        v = v_ref[...]
        s = jnp.dot(q, k.T, preferred_element_type=jnp.float32) * scale
        if s_valid < sp:                                 # mask padded key columns
            col = jax.lax.broadcasted_iota(jnp.int32, (sp, sp), 1)
            s = jnp.where(col < s_valid, s, -1e30)
        m = jnp.max(s, axis=-1, keepdims=True)
        p = jnp.exp(s - m)
        l = jnp.sum(p, axis=-1, keepdims=True)
        p = p * pl.reciprocal(l, approx=True)
        o = jnp.dot(p.astype(jnp.bfloat16), v, preferred_element_type=jnp.float32)
        o_ref[...] = o.astype(o_ref.dtype)
    return kernel


def attention(q, k, v, *, s_valid):
    """q,k,v: (B, H, Sp, hd) bf16 -> (B, H, Sp, hd) bf16 (softmax(QK^T)V)."""
    B, H, Sp, hd = q.shape
    kernel = _make_attn_kernel(Sp, s_valid, float(hd) ** -0.5)
    spec = pl.BlockSpec((None, None, Sp, hd), lambda b, h: (b, h, 0, 0))
    return pl.pallas_call(
        kernel,
        out_shape=jax.ShapeDtypeStruct((B, H, Sp, hd), jnp.bfloat16),
        grid=(B, H),
        in_specs=[spec, spec, spec],
        out_specs=spec,
        compiler_params=pltpu.CompilerParams(
            dimension_semantics=("parallel", "parallel"),
            vmem_limit_bytes=_VMEM_LIMIT),
    )(q, k, v)


# ------------------------------- head kernels -------------------------------

def _head_train_kernel(x_ref, lg_ref, lb_ref, bg_ref, bb_ref, w_ref,
                       gf_ref, feat_ref, logit_ref):
    x = x_ref[...].astype(jnp.float32)                       # (B, D) cls tokens
    mu = jnp.mean(x, axis=-1, keepdims=True)                 # final LayerNorm
    xc = x - mu
    var = jnp.mean(xc * xc, axis=-1, keepdims=True)
    gf = xc * jax.lax.rsqrt(var + _LN_EPS) * lg_ref[...] + lb_ref[...]
    bmu = jnp.mean(gf, axis=0, keepdims=True)                # BatchNorm1d (batch stats)
    bvar = jnp.mean(jnp.square(gf - bmu), axis=0, keepdims=True)
    feat = (gf - bmu) * jax.lax.rsqrt(bvar + _BN_EPS) * bg_ref[...] + bb_ref[...]
    gf_ref[...] = gf
    feat_ref[...] = feat
    logit_ref[...] = jnp.dot(feat.astype(jnp.bfloat16), w_ref[...],
                             preferred_element_type=jnp.float32)


def _head_eval_kernel(x_ref, lg_ref, lb_ref, s_ref, b_ref, gf_ref, feat_ref):
    x = x_ref[...].astype(jnp.float32)
    mu = jnp.mean(x, axis=-1, keepdims=True)
    xc = x - mu
    var = jnp.mean(xc * xc, axis=-1, keepdims=True)
    gf = xc * jax.lax.rsqrt(var + _LN_EPS) * lg_ref[...] + lb_ref[...]
    gf_ref[...] = gf
    feat_ref[...] = gf * s_ref[...] + b_ref[...]             # BN1d running stats (folded)


def _head_train(x_cls, lg, lb, bg, bb, wcls):
    B, D = x_cls.shape
    Npad = wcls.shape[1]
    fm = lambda i: (0, 0)
    return pl.pallas_call(
        _head_train_kernel,
        out_shape=(jax.ShapeDtypeStruct((B, D), jnp.float32),
                   jax.ShapeDtypeStruct((B, D), jnp.float32),
                   jax.ShapeDtypeStruct((B, Npad), jnp.float32)),
        grid=(1,),
        in_specs=[pl.BlockSpec((B, D), fm), pl.BlockSpec((1, D), fm),
                  pl.BlockSpec((1, D), fm), pl.BlockSpec((1, D), fm),
                  pl.BlockSpec((1, D), fm), pl.BlockSpec((D, Npad), fm)],
        out_specs=(pl.BlockSpec((B, D), fm), pl.BlockSpec((B, D), fm),
                   pl.BlockSpec((B, Npad), fm)),
        compiler_params=pltpu.CompilerParams(
            dimension_semantics=("arbitrary",), vmem_limit_bytes=_VMEM_LIMIT),
    )(x_cls, lg, lb, bg, bb, wcls)


def _head_eval(x_cls, lg, lb, scale, bias):
    B, D = x_cls.shape
    fm = lambda i: (0, 0)
    return pl.pallas_call(
        _head_eval_kernel,
        out_shape=(jax.ShapeDtypeStruct((B, D), jnp.float32),
                   jax.ShapeDtypeStruct((B, D), jnp.float32)),
        grid=(1,),
        in_specs=[pl.BlockSpec((B, D), fm), pl.BlockSpec((1, D), fm),
                  pl.BlockSpec((1, D), fm), pl.BlockSpec((1, D), fm),
                  pl.BlockSpec((1, D), fm)],
        out_specs=(pl.BlockSpec((B, D), fm), pl.BlockSpec((B, D), fm)),
        compiler_params=pltpu.CompilerParams(
            dimension_semantics=("arbitrary",), vmem_limit_bytes=_VMEM_LIMIT),
    )(x_cls, lg, lb, scale, bias)


# --------------------------------- forward ---------------------------------

@functools.partial(jax.jit,
                   static_argnames=("training", "dropout_rate", "patch", "heads"))
def baseline_vit_forward(x_nchw, params, *, training=True, dropout_rate=0.0,
                         patch=16, heads=4):
    D = params["patch_w"].shape[1]
    hd = D // heads

    # --- patch embedding: fold NormalizeByChannelMeanStd into the conv weights ---
    x = jnp.transpose(x_nchw, (0, 2, 3, 1)).astype(jnp.float32)   # NCHW -> NHWC
    B, H, W, C = x.shape
    Hp, Wp = H // patch, W // patch
    mean = jnp.asarray(_IMAGENET_MEAN, jnp.float32)
    std = jnp.asarray(_IMAGENET_STD, jnp.float32)
    inv_k = jnp.broadcast_to(1.0 / std, (patch, patch, C)).reshape(-1)
    mean_k = jnp.broadcast_to(mean, (patch, patch, C)).reshape(-1)
    w_eff = params["patch_w"] * inv_k[:, None]
    b_eff = params["patch_b"] - (mean_k * inv_k) @ params["patch_w"]

    patches = x.reshape(B, Hp, patch, Wp, patch, C).transpose(0, 1, 3, 2, 4, 5)
    patches = patches.reshape(B * Hp * Wp, patch * patch * C)      # non-overlapping: no inflation
    emb = matmul_fused(patches, w_eff, bias=b_eff).reshape(B, Hp * Wp, D)

    # --- cls token + positional embedding (camera=0, view=0 -> plain pos add) ---
    cls = jnp.broadcast_to(params["cls"], (B, 1, D))
    tokens = jnp.concatenate([cls, emb], axis=1) + params["pos"]
    S = tokens.shape[1]
    Sp = ((S + 7) // 8) * 8                     # pad tokens to a sublane multiple
    tokens = jnp.pad(tokens, ((0, 0), (0, Sp - S), (0, 0)))
    x2d = tokens.reshape(B * Sp, D)             # f32 residual stream

    # --- transformer blocks ---
    # TODO(synk): stochastic DropPath (drop_path_rate=0.1) during training is not
    # implemented; treated as identity (matches eval-path semantics).
    for blk in params["blocks"]:
        qkv = matmul_fused(x2d, blk["w_qkv"], bias=blk["b_qkv"],
                           ln=(blk["ln1_g"], blk["ln1_b"]),
                           out_dtype=jnp.bfloat16)                  # (M, 3D)
        qkv = qkv.reshape(B, Sp, 3, heads, hd).transpose(2, 0, 3, 1, 4)
        attn = attention(qkv[0], qkv[1], qkv[2], s_valid=S)         # (B, H, Sp, hd)
        attn2d = attn.transpose(0, 2, 1, 3).reshape(B * Sp, D)
        x2d = matmul_fused(attn2d, blk["w_proj"], bias=blk["b_proj"],
                           residual=x2d)                            # + residual, f32
        h = matmul_fused(x2d, blk["w_fc1"], bias=blk["b_fc1"],
                         ln=(blk["ln2_g"], blk["ln2_b"]), act="gelu",
                         out_dtype=jnp.bfloat16)
        x2d = matmul_fused(h, blk["w_fc2"], bias=blk["b_fc2"], residual=x2d)

    # --- head: final LN (cls token only) -> bnneck -> classifier ---
    x_cls = x2d.reshape(B, Sp, D)[:, 0, :]
    lg = params["norm_g"].reshape(1, D)
    lb = params["norm_b"].reshape(1, D)
    bn = params["bnneck"]
    num_classes = params["classifier"].shape[1]
    if training:
        if dropout_rate > 0.0:
            # TODO(synk): train-time F.dropout on `feat` not implemented (default rate 0.0).
            pass
        npad = max(128, ((num_classes + 127) // 128) * 128)        # lane-dense logits
        wcls = jnp.pad(params["classifier"],
                       ((0, 0), (0, npad - num_classes))).astype(jnp.bfloat16)
        gf, feat, logits = _head_train(x_cls, lg, lb, bn["gamma"].reshape(1, D),
                                       bn["beta"].reshape(1, D), wcls)
        return gf, feat, logits[:, :num_classes]
    else:
        scale = bn["gamma"] * jax.lax.rsqrt(bn["var"] + _BN_EPS)
        bias = bn["beta"] - bn["mean"] * scale
        gf, feat = _head_eval(x_cls, lg, lb, scale.reshape(1, D), bias.reshape(1, D))
        return gf, feat


# ------------------------- deterministic parameters -------------------------

def init_params(key, num_classes, *, depth=3, dim=256, heads=4, mlp_ratio=4,
                patch=16, img_size=(64, 32)):
    Hp, Wp = img_size[0] // patch, img_size[1] // patch
    n_tokens = Hp * Wp + 1
    hidden = dim * mlp_ratio
    params = {}
    key, k1, k2, k3 = jax.random.split(key, 4)
    kdim = patch * patch * 3
    params["patch_w"] = 0.02 * jax.random.normal(k1, (kdim, dim), jnp.float32)
    params["patch_b"] = jnp.zeros((dim,), jnp.float32)
    params["cls"] = 0.02 * jax.random.normal(k2, (1, 1, dim), jnp.float32)
    params["pos"] = 0.02 * jax.random.normal(k3, (1, n_tokens, dim), jnp.float32)
    blocks = []
    for _ in range(depth):
        key, kq, kpj, kf1, kf2, kb1, kb2 = jax.random.split(key, 7)
        blocks.append({
            "ln1_g": jnp.ones((dim,), jnp.float32),
            "ln1_b": jnp.zeros((dim,), jnp.float32),
            "w_qkv": 0.02 * jax.random.normal(kq, (dim, 3 * dim), jnp.float32),
            "b_qkv": 0.02 * jax.random.normal(kb1, (3 * dim,), jnp.float32),
            "w_proj": 0.02 * jax.random.normal(kpj, (dim, dim), jnp.float32),
            "b_proj": jnp.zeros((dim,), jnp.float32),
            "ln2_g": jnp.ones((dim,), jnp.float32),
            "ln2_b": jnp.zeros((dim,), jnp.float32),
            "w_fc1": 0.02 * jax.random.normal(kf1, (dim, hidden), jnp.float32),
            "b_fc1": 0.02 * jax.random.normal(kb2, (hidden,), jnp.float32),
            "w_fc2": 0.02 * jax.random.normal(kf2, (hidden, dim), jnp.float32),
            "b_fc2": jnp.zeros((dim,), jnp.float32),
        })
    params["blocks"] = blocks
    params["norm_g"] = jnp.ones((dim,), jnp.float32)
    params["norm_b"] = jnp.zeros((dim,), jnp.float32)
    key, kg, kb, km, kv, kc = jax.random.split(key, 6)
    params["bnneck"] = {
        "gamma": 1.0 + 0.1 * jax.random.normal(kg, (dim,), jnp.float32),
        "beta": 0.1 * jax.random.normal(kb, (dim,), jnp.float32),
        "mean": 0.1 * jax.random.normal(km, (dim,), jnp.float32),
        "var": 1.0 + 0.1 * jax.random.uniform(kv, (dim,), jnp.float32),
    }
    params["classifier"] = 0.001 * jax.random.normal(kc, (dim, num_classes), jnp.float32)
    return params


# ----------------------------------- main -----------------------------------

if __name__ == "__main__":
    key = jax.random.PRNGKey(0)
    kp, kx = jax.random.split(key)
    num_classes = 10
    # Small demo config (spec is ViT-B/16: dim=768, depth=12, img 256x128).
    dim, depth, heads, patch = 256, 3, 4, 16
    params = init_params(kp, num_classes, depth=depth, dim=dim, heads=heads,
                         patch=patch, img_size=(64, 32))
    x = jax.random.normal(kx, (2, 3, 64, 32), jnp.float32)      # NCHW, PyTorch convention

    # Fresh nn.Module defaults to training=True -> (global_feat, feat, logits).
    gf, feat, logits = baseline_vit_forward(x, params, training=True,
                                            dropout_rate=0.0, patch=patch, heads=heads)
    jax.block_until_ready((gf, feat, logits))
    assert gf.shape == (2, dim)
    assert feat.shape == (2, dim)
    assert logits.shape == (2, num_classes)

    # Eval path: (global_feat, feat) with running-stat bnneck.
    gf_e, feat_e = baseline_vit_forward(x, params, training=False,
                                        patch=patch, heads=heads)
    jax.block_until_ready((gf_e, feat_e))
    assert gf_e.shape == (2, dim) and feat_e.shape == (2, dim)

    print("KERNEL_OK")
</pallas_src>

<mosaic_0001>
module attributes {stable_mosaic.version = 11 : i64} {
  func.func @kernel(%arg0: i32, %arg1: i32, %arg2: i32, %arg3: memref<16x256xbf16, #tpu.memory_space<vmem>>, %arg4: memref<256x256xbf16, #tpu.memory_space<vmem>>, %arg5: memref<1x256xf32, #tpu.memory_space<vmem>>, %arg6: memref<16x256xf32, #tpu.memory_space<vmem>>, %arg7: memref<16x256xf32, #tpu.memory_space<vmem>>) attributes {dimension_semantics = [#tpu.dimension_semantics<parallel>, #tpu.dimension_semantics<parallel>, #tpu.dimension_semantics<arbitrary>], iteration_bounds = array<i64: 1, 1, 3>, scalar_prefetch = 0 : i64, scratch_operands = 1 : i64, tpu.core_type = #tpu.core_type<tc>, window_params = [{transform_indices = @transform_0, window_bounds = array<i64: 16, 256>}, {transform_indices = @transform_1, window_bounds = array<i64: 256, 256>}, {transform_indices = @transform_2, window_bounds = array<i64: 1, 256>}, {transform_indices = @transform_3, window_bounds = array<i64: 16, 256>}]} {
    %c0 = arith.constant 0 : index
    %c0_0 = arith.constant 0 : index
    %0 = vector.load %arg3[%c0, %c0_0] : memref<16x256xbf16, #tpu.memory_space<vmem>>, vector<16x256xbf16>
    %c0_i32 = arith.constant 0 : i32
    %1 = arith.cmpi eq, %arg2, %c0_i32 : i32
    %2 = arith.extui %1 : i1 to i32
    %c0_i32_1 = arith.constant 0 : i32
    %3 = arith.cmpi ne, %2, %c0_i32_1 : i32
    scf.if %3 {
      %cst_9 = arith.constant 0.000000e+00 : f32
      %12 = vector.broadcast %cst_9 : f32 to vector<16x256xf32>
      %c0_10 = arith.constant 0 : index
      %c0_11 = arith.constant 0 : index
      %13 = vector.load %arg7[%c0_10, %c0_11] : memref<16x256xf32, #tpu.memory_space<vmem>>, vector<16x256xf32>
      tpu.vector_store %arg7[%c0_10, %c0_11], %12 {strides = array<i32>} : memref<16x256xf32, #tpu.memory_space<vmem>>, vector<16x256xf32>,
    } else {
    }
    %c0_2 = arith.constant 0 : index
    %c0_3 = arith.constant 0 : index
    %4 = vector.load %arg7[%c0_2, %c0_3] : memref<16x256xf32, #tpu.memory_space<vmem>>, vector<16x256xf32>
    %c0_4 = arith.constant 0 : index
    %c0_5 = arith.constant 0 : index
    %5 = vector.load %arg4[%c0_4, %c0_5] : memref<256x256xbf16, #tpu.memory_space<vmem>>, vector<256x256xbf16>
    %cst = arith.constant dense<0.000000e+00> : vector<16x256xf32>
    %6 = tpu.matmul %0, %5, %cst {dimension_numbers = #tpu.dot_dimension_numbers<[1], [0], [0], [1], [0, 0, 1, 1], [], []>} : vector<16x256xbf16>, vector<256x256xbf16>, vector<16x256xf32> -> vector<16x256xf32>
    %7 = arith.addf %4, %6 : vector<16x256xf32>
    %c0_6 = arith.constant 0 : index
    %c0_7 = arith.constant 0 : index
    %8 = vector.load %arg7[%c0_6, %c0_7] : memref<16x256xf32, #tpu.memory_space<vmem>>, vector<16x256xf32>
    tpu.vector_store %arg7[%c0_6, %c0_7], %7 {strides = array<i32>} : memref<16x256xf32, #tpu.memory_space<vmem>>, vector<16x256xf32>,
    %c2_i32 = arith.constant 2 : i32
    %9 = arith.cmpi eq, %arg2, %c2_i32 : i32
    %10 = arith.extui %9 : i1 to i32
    %c0_i32_8 = arith.constant 0 : i32
    %11 = arith.cmpi ne, %10, %c0_i32_8 : i32
    scf.if %11 {
      %c0_9 = arith.constant 0 : index
      %c0_10 = arith.constant 0 : index
      %12 = vector.load %arg7[%c0_9, %c0_10] : memref<16x256xf32, #tpu.memory_space<vmem>>, vector<16x256xf32>
      %c0_11 = arith.constant 0 : index
      %c0_12 = arith.constant 0 : index
      %13 = vector.load %arg5[%c0_11, %c0_12] : memref<1x256xf32, #tpu.memory_space<vmem>>, vector<1x256xf32>
      %14 = vector.broadcast %13 : vector<1x256xf32> to vector<16x256xf32>
      %15 = arith.addf %12, %14 : vector<16x256xf32>
      %c0_13 = arith.constant 0 : index
      %c0_14 = arith.constant 0 : index
      %16 = vector.load %arg6[%c0_13, %c0_14] : memref<16x256xf32, #tpu.memory_space<vmem>>, vector<16x256xf32>
      tpu.vector_store %arg6[%c0_13, %c0_14], %15 {strides = array<i32>} : memref<16x256xf32, #tpu.memory_space<vmem>>, vector<16x256xf32>,
    } else {
    }
    return
  }
  func.func @transform_0(%arg0: i32, %arg1: i32, %arg2: i32) -> (i32, i32) {
    %c0_i32 = arith.constant 0 : i32
    return %arg0, %arg2 : i32, i32
  }
  func.func @transform_1(%arg0: i32, %arg1: i32, %arg2: i32) -> (i32, i32) {
    %c0_i32 = arith.constant 0 : i32
    return %arg2, %arg1 : i32, i32
  }
  func.func @transform_2(%arg0: i32, %arg1: i32, %arg2: i32) -> (i32, i32) {
    %c0_i32 = arith.constant 0 : i32
    %c0_i32_0 = arith.constant 0 : i32
    return %c0_i32, %arg1 : i32, i32
  }
  func.func @transform_3(%arg0: i32, %arg1: i32, %arg2: i32) -> (i32, i32) {
    %c0_i32 = arith.constant 0 : i32
    return %arg0, %arg1 : i32, i32
  }
}

module attributes {stable_mosaic.version = 11 : i64} {
  func.func @kernel(%arg0: i32, %arg1: i32, %arg2: i32, %arg3: memref<32x256xf32, #tpu.memory_space<vmem>>, %arg4: memref<256x256xbf16, #tpu.memory_space<vmem>>, %arg5: memref<1x256xf32, #tpu.memory_space<vmem>>, %arg6: memref<1x256xf32, #tpu.memory_space<vmem>>, %arg7: memref<1x256xf32, #tpu.memory_space<vmem>>, %arg8: memref<32x256xbf16, #tpu.memory_space<vmem>>, %arg9: memref<32x256xf32, #tpu.memory_space<vmem>>) attributes {dimension_semantics = [#tpu.dimension_semantics<parallel>, #tpu.dimension_semantics<parallel>, #tpu.dimension_semantics<arbitrary>], iteration_bounds = array<i64: 1, 3, 1>, scalar_prefetch = 0 : i64, scratch_operands = 1 : i64, tpu.core_type = #tpu.core_type<tc>, window_params = [{transform_indices = @transform_0, window_bounds = array<i64: 32, 256>}, {transform_indices = @transform_1, window_bounds = array<i64: 256, 256>}, {transform_indices = @transform_2, window_bounds = array<i64: 1, 256>}, {transform_indices = @transform_3, window_bounds = array<i64: 1, 256>}, {transform_indices = @transform_4, window_bounds = array<i64: 1, 256>}, {transform_indices = @transform_5, window_bounds = array<i64: 32, 256>}]} {
    %c0 = arith.constant 0 : index
    %c0_0 = arith.constant 0 : index
    %0 = vector.load %arg3[%c0, %c0_0] : memref<32x256xf32, #tpu.memory_space<vmem>>, vector<32x256xf32>
    %cst = arith.constant dense<0.000000e+00> : vector<32xf32>
    %1 = vector.multi_reduction <add>, %0, %cst [1] : vector<32x256xf32> to vector<32xf32>
    %2 = vector.shape_cast %1 : vector<32xf32> to vector<32x1xf32>
    %cst_1 = arith.constant 2.560000e+02 : f32
    %3 = vector.broadcast %cst_1 : f32 to vector<32x1xf32>
    %4 = arith.divf %2, %3 : vector<32x1xf32>
    %5 = vector.broadcast %4 : vector<32x1xf32> to vector<32x256xf32>
    %6 = arith.subf %0, %5 : vector<32x256xf32>
    %7 = arith.mulf %6, %6 : vector<32x256xf32>
    %cst_2 = arith.constant dense<0.000000e+00> : vector<32xf32>
    %8 = vector.multi_reduction <add>, %7, %cst_2 [1] : vector<32x256xf32> to vector<32xf32>
    %9 = vector.shape_cast %8 : vector<32xf32> to vector<32x1xf32>
    %cst_3 = arith.constant 2.560000e+02 : f32
    %10 = vector.broadcast %cst_3 : f32 to vector<32x1xf32>
    %11 = arith.divf %9, %10 : vector<32x1xf32>
    %cst_4 = arith.constant 9.99999997E-7 : f32
    %12 = vector.broadcast %cst_4 : f32 to vector<32x1xf32>
    %13 = arith.addf %11, %12 : vector<32x1xf32>
    %14 = math.rsqrt %13 : vector<32x1xf32>
    %15 = vector.broadcast %14 : vector<32x1xf32> to vector<32x256xf32>
    %16 = arith.mulf %6, %15 : vector<32x256xf32>
    %c0_5 = arith.constant 0 : index
    %c0_6 = arith.constant 0 : index
    %17 = vector.load %arg5[%c0_5, %c0_6] : memref<1x256xf32, #tpu.memory_space<vmem>>, vector<1x256xf32>
    %18 = vector.broadcast %17 : vector<1x256xf32> to vector<32x256xf32>
    %19 = arith.mulf %16, %18 : vector<32x256xf32>
    %c0_7 = arith.constant 0 : index
    %c0_8 = arith.constant 0 : index
    %20 = vector.load %arg6[%c0_7, %c0_8] : memref<1x256xf32, #tpu.memory_space<vmem>>, vector<1x256xf32>
    %21 = vector.broadcast %20 : vector<1x256xf32> to vector<32x256xf32>
    %22 = arith.addf %19, %21 : vector<32x256xf32>
    %23 = arith.truncf %22 : vector<32x256xf32> to vector<32x256xbf16>
    %c0_i32 = arith.constant 0 : i32
    %24 = arith.cmpi eq, %arg2, %c0_i32 : i32
    %25 = arith.extui %24 : i1 to i32
    %c0_i32_9 = arith.constant 0 : i32
    %26 = arith.cmpi ne, %25, %c0_i32_9 : i32
    scf.if %26 {
      %cst_19 = arith.constant 0.000000e+00 : f32
      %35 = vector.broadcast %cst_19 : f32 to vector<32x256xf32>
      %c0_20 = arith.constant 0 : index
      %c0_21 = arith.constant 0 : index
      %36 = vector.load %arg9[%c0_20, %c0_21] : memref<32x256xf32, #tpu.memory_space<vmem>>, vector<32x256xf32>
      tpu.vector_store %arg9[%c0_20, %c0_21], %35 {strides = array<i32>} : memref<32x256xf32, #tpu.memory_space<vmem>>, vector<32x256xf32>,
    } else {
    }
    %c0_10 = arith.constant 0 : index
    %c0_11 = arith.constant 0 : index
    %27 = vector.load %arg9[%c0_10, %c0_11] : memref<32x256xf32, #tpu.memory_space<vmem>>, vector<32x256xf32>
    %c0_12 = arith.constant 0 : index
    %c0_13 = arith.constant 0 : index
    %28 = vector.load %arg4[%c0_12, %c0_13] : memref<256x256xbf16, #tpu.memory_space<vmem>>, vector<256x256xbf16>
    %cst_14 = arith.constant dense<0.000000e+00> : vector<32x256xf32>
    %29 = tpu.matmul %23, %28, %cst_14 {dimension_numbers = #tpu.dot_dimension_numbers<[1], [0], [0], [1], [0, 0, 1, 1], [], []>} : vector<32x256xbf16>, vector<256x256xbf16>, vector<32x256xf32> -> vector<32x256xf32>
    %30 = arith.addf %27, %29 : vector<32x256xf32>
    %c0_15 = arith.constant 0 : index
    %c0_16 = arith.constant 0 : index
    %31 = vector.load %arg9[%c0_15, %c0_16] : memref<32x256xf32, #tpu.memory_space<vmem>>, vector<32x256xf32>
    tpu.vector_store %arg9[%c0_15, %c0_16], %30 {strides = array<i32>} : memref<32x256xf32, #tpu.memory_space<vmem>>, vector<32x256xf32>,
    %c0_i32_17 = arith.constant 0 : i32
    %32 = arith.cmpi eq, %arg2, %c0_i32_17 : i32
    %33 = arith.extui %32 : i1 to i32
    %c0_i32_18 = arith.constant 0 : i32
    %34 = arith.cmpi ne, %33, %c0_i32_18 : i32
    scf.if %34 {
      %c0_19 = arith.constant 0 : index
      %c0_20 = arith.constant 0 : index
      %35 = vector.load %arg9[%c0_19, %c0_20] : memref<32x256xf32, #tpu.memory_space<vmem>>, vector<32x256xf32>
      %c0_21 = arith.constant 0 : index
      %c0_22 = arith.constant 0 : index
      %36 = vector.load %arg7[%c0_21, %c0_22] : memref<1x256xf32, #tpu.memory_space<vmem>>, vector<1x256xf32>
      %37 = vector.broadcast %36 : vector<1x256xf32> to vector<32x256xf32>
      %38 = arith.addf %35, %37 : vector<32x256xf32>
      %39 = arith.truncf %38 : vector<32x256xf32> to vector<32x256xbf16>
      %c0_23 = arith.constant 0 : index
      %c0_24 = arith.constant 0 : index
      %40 = vector.load %arg8[%c0_23, %c0_24] : memref<32x256xbf16, #tpu.memory_space<vmem>>, vector<32x256xbf16>
      tpu.vector_store %arg8[%c0_23, %c0_24], %39 {strides = array<i32>} : memref<32x256xbf16, #tpu.memory_space<vmem>>, vector<32x256xbf16>,
    } else {
    }
    return
  }
  func.func @transform_0(%arg0: i32, %arg1: i32, %arg2: i32) -> (i32, i32) {
    %c0_i32 = arith.constant 0 : i32
    return %arg0, %arg2 : i32, i32
  }
  func.func @transform_1(%arg0: i32, %arg1: i32, %arg2: i32) -> (i32, i32) {
    %c0_i32 = arith.constant 0 : i32
    return %arg2, %arg1 : i32, i32
  }
  func.func @transform_2(%arg0: i32, %arg1: i32, %arg2: i32) -> (i32, i32) {
    %c0_i32 = arith.constant 0 : i32
    %c0_i32_0 = arith.constant 0 : i32
    return %c0_i32, %arg2 : i32, i32
  }
  func.func @transform_3(%arg0: i32, %arg1: i32, %arg2: i32) -> (i32, i32) {
    %c0_i32 = arith.constant 0 : i32
    %c0_i32_0 = arith.constant 0 : i32
    return %c0_i32, %arg2 : i32, i32
  }
  func.func @transform_4(%arg0: i32, %arg1: i32, %arg2: i32) -> (i32, i32) {
    %c0_i32 = arith.constant 0 : i32
    %c0_i32_0 = arith.constant 0 : i32
    return %c0_i32, %arg1 : i32, i32
  }
  func.func @transform_5(%arg0: i32, %arg1: i32, %arg2: i32) -> (i32, i32) {
    %c0_i32 = arith.constant 0 : i32
    return %arg0, %arg1 : i32, i32
  }
}

module attributes {stable_mosaic.version = 11 : i64} {
  func.func @kernel(%arg0: i32, %arg1: i32, %arg2: memref<1x1x16x64xbf16, #tpu.memory_space<vmem>>, %arg3: memref<1x1x16x64xbf16, #tpu.memory_space<vmem>>, %arg4: memref<1x1x16x64xbf16, #tpu.memory_space<vmem>>, %arg5: memref<1x1x16x64xbf16, #tpu.memory_space<vmem>>) attributes {dimension_semantics = [#tpu.dimension_semantics<parallel>, #tpu.dimension_semantics<parallel>], iteration_bounds = array<i64: 2, 4>, scalar_prefetch = 0 : i64, scratch_operands = 0 : i64, tpu.core_type = #tpu.core_type<tc>, window_params = [{transform_indices = @transform_0, window_bounds = array<i64: 1, 1, 16, 64>}, {transform_indices = @transform_1, window_bounds = array<i64: 1, 1, 16, 64>}, {transform_indices = @transform_2, window_bounds = array<i64: 1, 1, 16, 64>}, {transform_indices = @transform_3, window_bounds = array<i64: 1, 1, 16, 64>}]} {
    %c0 = arith.constant 0 : index
    %c0_0 = arith.constant 0 : index
    %c0_1 = arith.constant 0 : index
    %c0_2 = arith.constant 0 : index
    %0 = vector.load %arg2[%c0, %c0_0, %c0_1, %c0_2] : memref<1x1x16x64xbf16, #tpu.memory_space<vmem>>, vector<1x1x16x64xbf16>
    %1 = vector.shape_cast %0 : vector<1x1x16x64xbf16> to vector<16x64xbf16>
    %c0_3 = arith.constant 0 : index
    %c0_4 = arith.constant 0 : index
    %c0_5 = arith.constant 0 : index
    %c0_6 = arith.constant 0 : index
    %2 = vector.load %arg3[%c0_3, %c0_4, %c0_5, %c0_6] : memref<1x1x16x64xbf16, #tpu.memory_space<vmem>>, vector<1x1x16x64xbf16>
    %3 = vector.shape_cast %2 : vector<1x1x16x64xbf16> to vector<16x64xbf16>
    %c0_7 = arith.constant 0 : index
    %c0_8 = arith.constant 0 : index
    %c0_9 = arith.constant 0 : index
    %c0_10 = arith.constant 0 : index
    %4 = vector.load %arg4[%c0_7, %c0_8, %c0_9, %c0_10] : memref<1x1x16x64xbf16, #tpu.memory_space<vmem>>, vector<1x1x16x64xbf16>
    %5 = vector.shape_cast %4 : vector<1x1x16x64xbf16> to vector<16x64xbf16>
    %6 = tpu.transpose %3, [1, 0] : vector<16x64xbf16> -> vector<64x16xbf16>
    %cst = arith.constant dense<0.000000e+00> : vector<16x16xf32>
    %7 = tpu.matmul %1, %6, %cst {dimension_numbers = #tpu.dot_dimension_numbers<[1], [0], [0], [1], [0, 0, 1, 1], [], []>} : vector<16x64xbf16>, vector<64x16xbf16>, vector<16x16xf32> -> vector<16x16xf32>
    %cst_11 = arith.constant 1.250000e-01 : f32
    %8 = vector.broadcast %cst_11 : f32 to vector<16x16xf32>
    %9 = arith.mulf %7, %8 : vector<16x16xf32>
    %10 = tpu.iota {dimensions = array<i32: 1>} : vector<16x16xi32>
    %c9_i32 = arith.constant 9 : i32
    %11 = vector.broadcast %c9_i32 : i32 to vector<16x16xi32>
    %12 = arith.cmpi slt, %10, %11 : vector<16x16xi32>
    %cst_12 = arith.constant -1.000000e+30 : f32
    %13 = vector.broadcast %cst_12 : f32 to vector<16x16xf32>
    %14 = arith.select %12, %9, %13 : vector<16x16xi1>, vector<16x16xf32>
    %cst_13 = arith.constant dense<0xFF800000> : vector<16xf32>
    %15 = vector.multi_reduction <maximumf>, %14, %cst_13 [1] : vector<16x16xf32> to vector<16xf32>
    %16 = vector.shape_cast %15 : vector<16xf32> to vector<16x1xf32>
    %17 = vector.broadcast %16 : vector<16x1xf32> to vector<16x16xf32>
    %18 = arith.subf %14, %17 : vector<16x16xf32>
    %19 = math.exp %18 : vector<16x16xf32>
    %cst_14 = arith.constant dense<0.000000e+00> : vector<16xf32>
    %20 = vector.multi_reduction <add>, %19, %cst_14 [1] : vector<16x16xf32> to vector<16xf32>
    %21 = vector.shape_cast %20 : vector<16xf32> to vector<16x1xf32>
    %22 = tpu.reciprocal %21 {approx = true} : vector<16x1xf32> -> vector<16x1xf32>
    %23 = vector.broadcast %22 : vector<16x1xf32> to vector<16x16xf32>
    %24 = arith.mulf %19, %23 : vector<16x16xf32>
    %25 = arith.truncf %24 : vector<16x16xf32> to vector<16x16xbf16>
    %cst_15 = arith.constant dense<0.000000e+00> : vector<16x64xf32>
    %26 = tpu.matmul %25, %5, %cst_15 {dimension_numbers = #tpu.dot_dimension_numbers<[1], [0], [0], [1], [0, 0, 1, 1], [], []>} : vector<16x16xbf16>, vector<16x64xbf16>, vector<16x64xf32> -> vector<16x64xf32>
    %27 = arith.truncf %26 : vector<16x64xf32> to vector<16x64xbf16>
    %c0_16 = arith.constant 0 : index
    %c0_17 = arith.constant 0 : index
    %c0_18 = arith.constant 0 : index
    %c0_19 = arith.constant 0 : index
    %28 = vector.load %arg5[%c0_16, %c0_17, %c0_18, %c0_19] : memref<1x1x16x64xbf16, #tpu.memory_space<vmem>>, vector<1x1x16x64xbf16>
    %29 = vector.shape_cast %28 : vector<1x1x16x64xbf16> to vector<16x64xbf16>
    %30 = vector.shape_cast %27 : vector<16x64xbf16> to vector<1x1x16x64xbf16>
    tpu.vector_store %arg5[%c0_16, %c0_17, %c0_18, %c0_19], %30 {strides = array<i32>} : memref<1x1x16x64xbf16, #tpu.memory_space<vmem>>, vector<1x1x16x64xbf16>,
    return
  }
  func.func @transform_0(%arg0: i32, %arg1: i32) -> (i32, i32, i32, i32) {
    %c0_i32 = arith.constant 0 : i32
    %c0_i32_0 = arith.constant 0 : i32
    %c0_i32_1 = arith.constant 0 : i32
    return %arg0, %arg1, %c0_i32, %c0_i32_0 : i32, i32, i32, i32
  }
  func.func @transform_1(%arg0: i32, %arg1: i32) -> (i32, i32, i32, i32) {
    %c0_i32 = arith.constant 0 : i32
    %c0_i32_0 = arith.constant 0 : i32
    %c0_i32_1 = arith.constant 0 : i32
    return %arg0, %arg1, %c0_i32, %c0_i32_0 : i32, i32, i32, i32
  }
  func.func @transform_2(%arg0: i32, %arg1: i32) -> (i32, i32, i32, i32) {
    %c0_i32 = arith.constant 0 : i32
    %c0_i32_0 = arith.constant 0 : i32
    %c0_i32_1 = arith.constant 0 : i32
    return %arg0, %arg1, %c0_i32, %c0_i32_0 : i32, i32, i32, i32
  }
  func.func @transform_3(%arg0: i32, %arg1: i32) -> (i32, i32, i32, i32) {
    %c0_i32 = arith.constant 0 : i32
    %c0_i32_0 = arith.constant 0 : i32
    %c0_i32_1 = arith.constant 0 : i32
    return %arg0, %arg1, %c0_i32, %c0_i32_0 : i32, i32, i32, i32
  }
}

module attributes {stable_mosaic.version = 11 : i64} {
  func.func @kernel(%arg0: i32, %arg1: i32, %arg2: i32, %arg3: memref<32x256xbf16, #tpu.memory_space<vmem>>, %arg4: memref<256x256xbf16, #tpu.memory_space<vmem>>, %arg5: memref<1x256xf32, #tpu.memory_space<vmem>>, %arg6: memref<32x256xf32, #tpu.memory_space<vmem>>, %arg7: memref<32x256xf32, #tpu.memory_space<vmem>>, %arg8: memref<32x256xf32, #tpu.memory_space<vmem>>) attributes {dimension_semantics = [#tpu.dimension_semantics<parallel>, #tpu.dimension_semantics<parallel>, #tpu.dimension_semantics<arbitrary>], iteration_bounds = array<i64: 1, 1, 1>, scalar_prefetch = 0 : i64, scratch_operands = 1 : i64, tpu.core_type = #tpu.core_type<tc>, window_params = [{transform_indices = @transform_0, window_bounds = array<i64: 32, 256>}, {transform_indices = @transform_1, window_bounds = array<i64: 256, 256>}, {transform_indices = @transform_2, window_bounds = array<i64: 1, 256>}, {transform_indices = @transform_3, window_bounds = array<i64: 32, 256>}, {transform_indices = @transform_4, window_bounds = array<i64: 32, 256>}]} {
    %c0 = arith.constant 0 : index
    %c0_0 = arith.constant 0 : index
    %0 = vector.load %arg3[%c0, %c0_0] : memref<32x256xbf16, #tpu.memory_space<vmem>>, vector<32x256xbf16>
    %c0_i32 = arith.constant 0 : i32
    %1 = arith.cmpi eq, %arg2, %c0_i32 : i32
    %2 = arith.extui %1 : i1 to i32
    %c0_i32_1 = arith.constant 0 : i32
    %3 = arith.cmpi ne, %2, %c0_i32_1 : i32
    scf.if %3 {
      %cst_10 = arith.constant 0.000000e+00 : f32
      %12 = vector.broadcast %cst_10 : f32 to vector<32x256xf32>
      %c0_11 = arith.constant 0 : index
      %c0_12 = arith.constant 0 : index
      %13 = vector.load %arg8[%c0_11, %c0_12] : memref<32x256xf32, #tpu.memory_space<vmem>>, vector<32x256xf32>
      tpu.vector_store %arg8[%c0_11, %c0_12], %12 {strides = array<i32>} : memref<32x256xf32, #tpu.memory_space<vmem>>, vector<32x256xf32>,
    } else {
    }
    %c0_2 = arith.constant 0 : index
    %c0_3 = arith.constant 0 : index
    %4 = vector.load %arg8[%c0_2, %c0_3] : memref<32x256xf32, #tpu.memory_space<vmem>>, vector<32x256xf32>
    %c0_4 = arith.constant 0 : index
    %c0_5 = arith.constant 0 : index
    %5 = vector.load %arg4[%c0_4, %c0_5] : memref<256x256xbf16, #tpu.memory_space<vmem>>, vector<256x256xbf16>
    %cst = arith.constant dense<0.000000e+00> : vector<32x256xf32>
    %6 = tpu.matmul %0, %5, %cst {dimension_numbers = #tpu.dot_dimension_numbers<[1], [0], [0], [1], [0, 0, 1, 1], [], []>} : vector<32x256xbf16>, vector<256x256xbf16>, vector<32x256xf32> -> vector<32x256xf32>
    %7 = arith.addf %4, %6 : vector<32x256xf32>
    %c0_6 = arith.constant 0 : index
    %c0_7 = arith.constant 0 : index
    %8 = vector.load %arg8[%c0_6, %c0_7] : memref<32x256xf32, #tpu.memory_space<vmem>>, vector<32x256xf32>
    tpu.vector_store %arg8[%c0_6, %c0_7], %7 {strides = array<i32>} : memref<32x256xf32, #tpu.memory_space<vmem>>, vector<32x256xf32>,
    %c0_i32_8 = arith.constant 0 : i32
    %9 = arith.cmpi eq, %arg2, %c0_i32_8 : i32
    %10 = arith.extui %9 : i1 to i32
    %c0_i32_9 = arith.constant 0 : i32
    %11 = arith.cmpi ne, %10, %c0_i32_9 : i32
    scf.if %11 {
      %c0_10 = arith.constant 0 : index
      %c0_11 = arith.constant 0 : index
      %12 = vector.load %arg8[%c0_10, %c0_11] : memref<32x256xf32, #tpu.memory_space<vmem>>, vector<32x256xf32>
      %c0_12 = arith.constant 0 : index
      %c0_13 = arith.constant 0 : index
      %13 = vector.load %arg5[%c0_12, %c0_13] : memref<1x256xf32, #tpu.memory_space<vmem>>, vector<1x256xf32>
      %14 = vector.broadcast %13 : vector<1x256xf32> to vector<32x256xf32>
      %15 = arith.addf %12, %14 : vector<32x256xf32>
      %c0_14 = arith.constant 0 : index
      %c0_15 = arith.constant 0 : index
      %16 = vector.load %arg6[%c0_14, %c0_15] : memref<32x256xf32, #tpu.memory_space<vmem>>, vector<32x256xf32>
      %17 = arith.addf %15, %16 : vector<32x256xf32>
      %c0_16 = arith.constant 0 : index
      %c0_17 = arith.constant 0 : index
      %18 = vector.load %arg7[%c0_16, %c0_17] : memref<32x256xf32, #tpu.memory_space<vmem>>, vector<32x256xf32>
      tpu.vector_store %arg7[%c0_16, %c0_17], %17 {strides = array<i32>} : memref<32x256xf32, #tpu.memory_space<vmem>>, vector<32x256xf32>,
    } else {
    }
    return
  }
  func.func @transform_0(%arg0: i32, %arg1: i32, %arg2: i32) -> (i32, i32) {
    %c0_i32 = arith.constant 0 : i32
    return %arg0, %arg2 : i32, i32
  }
  func.func @transform_1(%arg0: i32, %arg1: i32, %arg2: i32) -> (i32, i32) {
    %c0_i32 = arith.constant 0 : i32
    return %arg2, %arg1 : i32, i32
  }
  func.func @transform_2(%arg0: i32, %arg1: i32, %arg2: i32) -> (i32, i32) {
    %c0_i32 = arith.constant 0 : i32
    %c0_i32_0 = arith.constant 0 : i32
    return %c0_i32, %arg1 : i32, i32
  }
  func.func @transform_3(%arg0: i32, %arg1: i32, %arg2: i32) -> (i32, i32) {
    %c0_i32 = arith.constant 0 : i32
    return %arg0, %arg1 : i32, i32
  }
  func.func @transform_4(%arg0: i32, %arg1: i32, %arg2: i32) -> (i32, i32) {
    %c0_i32 = arith.constant 0 : i32
    return %arg0, %arg1 : i32, i32
  }
}

module attributes {stable_mosaic.version = 11 : i64} {
  func.func @kernel(%arg0: i32, %arg1: i32, %arg2: i32, %arg3: memref<32x256xf32, #tpu.memory_space<vmem>>, %arg4: memref<256x512xbf16, #tpu.memory_space<vmem>>, %arg5: memref<1x256xf32, #tpu.memory_space<vmem>>, %arg6: memref<1x256xf32, #tpu.memory_space<vmem>>, %arg7: memref<1x512xf32, #tpu.memory_space<vmem>>, %arg8: memref<32x512xbf16, #tpu.memory_space<vmem>>, %arg9: memref<32x512xf32, #tpu.memory_space<vmem>>) attributes {dimension_semantics = [#tpu.dimension_semantics<parallel>, #tpu.dimension_semantics<parallel>, #tpu.dimension_semantics<arbitrary>], iteration_bounds = array<i64: 1, 2, 1>, scalar_prefetch = 0 : i64, scratch_operands = 1 : i64, tpu.core_type = #tpu.core_type<tc>, window_params = [{transform_indices = @transform_0, window_bounds = array<i64: 32, 256>}, {transform_indices = @transform_1, window_bounds = array<i64: 256, 512>}, {transform_indices = @transform_2, window_bounds = array<i64: 1, 256>}, {transform_indices = @transform_3, window_bounds = array<i64: 1, 256>}, {transform_indices = @transform_4, window_bounds = array<i64: 1, 512>}, {transform_indices = @transform_5, window_bounds = array<i64: 32, 512>}]} {
    %c0 = arith.constant 0 : index
    %c0_0 = arith.constant 0 : index
    %0 = vector.load %arg3[%c0, %c0_0] : memref<32x256xf32, #tpu.memory_space<vmem>>, vector<32x256xf32>
    %cst = arith.constant dense<0.000000e+00> : vector<32xf32>
    %1 = vector.multi_reduction <add>, %0, %cst [1] : vector<32x256xf32> to vector<32xf32>
    %2 = vector.shape_cast %1 : vector<32xf32> to vector<32x1xf32>
    %cst_1 = arith.constant 2.560000e+02 : f32
    %3 = vector.broadcast %cst_1 : f32 to vector<32x1xf32>
    %4 = arith.divf %2, %3 : vector<32x1xf32>
    %5 = vector.broadcast %4 : vector<32x1xf32> to vector<32x256xf32>
    %6 = arith.subf %0, %5 : vector<32x256xf32>
    %7 = arith.mulf %6, %6 : vector<32x256xf32>
    %cst_2 = arith.constant dense<0.000000e+00> : vector<32xf32>
    %8 = vector.multi_reduction <add>, %7, %cst_2 [1] : vector<32x256xf32> to vector<32xf32>
    %9 = vector.shape_cast %8 : vector<32xf32> to vector<32x1xf32>
    %cst_3 = arith.constant 2.560000e+02 : f32
    %10 = vector.broadcast %cst_3 : f32 to vector<32x1xf32>
    %11 = arith.divf %9, %10 : vector<32x1xf32>
    %cst_4 = arith.constant 9.99999997E-7 : f32
    %12 = vector.broadcast %cst_4 : f32 to vector<32x1xf32>
    %13 = arith.addf %11, %12 : vector<32x1xf32>
    %14 = math.rsqrt %13 : vector<32x1xf32>
    %15 = vector.broadcast %14 : vector<32x1xf32> to vector<32x256xf32>
    %16 = arith.mulf %6, %15 : vector<32x256xf32>
    %c0_5 = arith.constant 0 : index
    %c0_6 = arith.constant 0 : index
    %17 = vector.load %arg5[%c0_5, %c0_6] : memref<1x256xf32, #tpu.memory_space<vmem>>, vector<1x256xf32>
    %18 = vector.broadcast %17 : vector<1x256xf32> to vector<32x256xf32>
    %19 = arith.mulf %16, %18 : vector<32x256xf32>
    %c0_7 = arith.constant 0 : index
    %c0_8 = arith.constant 0 : index
    %20 = vector.load %arg6[%c0_7, %c0_8] : memref<1x256xf32, #tpu.memory_space<vmem>>, vector<1x256xf32>
    %21 = vector.broadcast %20 : vector<1x256xf32> to vector<32x256xf32>
    %22 = arith.addf %19, %21 : vector<32x256xf32>
    %23 = arith.truncf %22 : vector<32x256xf32> to vector<32x256xbf16>
    %c0_i32 = arith.constant 0 : i32
    %24 = arith.cmpi eq, %arg2, %c0_i32 : i32
    %25 = arith.extui %24 : i1 to i32
    %c0_i32_9 = arith.constant 0 : i32
    %26 = arith.cmpi ne, %25, %c0_i32_9 : i32
    scf.if %26 {
      %cst_19 = arith.constant 0.000000e+00 : f32
      %35 = vector.broadcast %cst_19 : f32 to vector<32x512xf32>
      %c0_20 = arith.constant 0 : index
      %c0_21 = arith.constant 0 : index
      %36 = vector.load %arg9[%c0_20, %c0_21] : memref<32x512xf32, #tpu.memory_space<vmem>>, vector<32x512xf32>
      tpu.vector_store %arg9[%c0_20, %c0_21], %35 {strides = array<i32>} : memref<32x512xf32, #tpu.memory_space<vmem>>, vector<32x512xf32>,
    } else {
    }
    %c0_10 = arith.constant 0 : index
    %c0_11 = arith.constant 0 : index
    %27 = vector.load %arg9[%c0_10, %c0_11] : memref<32x512xf32, #tpu.memory_space<vmem>>, vector<32x512xf32>
    %c0_12 = arith.constant 0 : index
    %c0_13 = arith.constant 0 : index
    %28 = vector.load %arg4[%c0_12, %c0_13] : memref<256x512xbf16, #tpu.memory_space<vmem>>, vector<256x512xbf16>
    %cst_14 = arith.constant dense<0.000000e+00> : vector<32x512xf32>
    %29 = tpu.matmul %23, %28, %cst_14 {dimension_numbers = #tpu.dot_dimension_numbers<[1], [0], [0], [1], [0, 0, 1, 1], [], []>} : vector<32x256xbf16>, vector<256x512xbf16>, vector<32x512xf32> -> vector<32x512xf32>
    %30 = arith.addf %27, %29 : vector<32x512xf32>
    %c0_15 = arith.constant 0 : index
    %c0_16 = arith.constant 0 : index
    %31 = vector.load %arg9[%c0_15, %c0_16] : memref<32x512xf32, #tpu.memory_space<vmem>>, vector<32x512xf32>
    tpu.vector_store %arg9[%c0_15, %c0_16], %30 {strides = array<i32>} : memref<32x512xf32, #tpu.memory_space<vmem>>, vector<32x512xf32>,
    %c0_i32_17 = arith.constant 0 : i32
    %32 = arith.cmpi eq, %arg2, %c0_i32_17 : i32
    %33 = arith.extui %32 : i1 to i32
    %c0_i32_18 = arith.constant 0 : i32
    %34 = arith.cmpi ne, %33, %c0_i32_18 : i32
    scf.if %34 {
      %c0_19 = arith.constant 0 : index
      %c0_20 = arith.constant 0 : index
      %35 = vector.load %arg9[%c0_19, %c0_20] : memref<32x512xf32, #tpu.memory_space<vmem>>, vector<32x512xf32>
      %c0_21 = arith.constant 0 : index
      %c0_22 = arith.constant 0 : index
      %36 = vector.load %arg7[%c0_21, %c0_22] : memref<1x512xf32, #tpu.memory_space<vmem>>, vector<1x512xf32>
      %37 = vector.broadcast %36 : vector<1x512xf32> to vector<32x512xf32>
      %38 = arith.addf %35, %37 : vector<32x512xf32>
      %39 = arith.mulf %38, %38 : vector<32x512xf32>
      %40 = arith.mulf %38, %39 : vector<32x512xf32>
      %cst_23 = arith.constant 4.471500e-02 : f32
      %41 = vector.broadcast %cst_23 : f32 to vector<32x512xf32>
      %42 = arith.mulf %41, %40 : vector<32x512xf32>
      %43 = arith.addf %38, %42 : vector<32x512xf32>
      %cst_24 = arith.constant 0.797884583 : f32
      %44 = vector.broadcast %cst_24 : f32 to vector<32x512xf32>
      %45 = arith.mulf %44, %43 : vector<32x512xf32>
      %46 = math.tanh %45 : vector<32x512xf32>
      %cst_25 = arith.constant 1.000000e+00 : f32
      %47 = vector.broadcast %cst_25 : f32 to vector<32x512xf32>
      %48 = arith.addf %47, %46 : vector<32x512xf32>
      %cst_26 = arith.constant 5.000000e-01 : f32
      %49 = vector.broadcast %cst_26 : f32 to vector<32x512xf32>
      %50 = arith.mulf %49, %48 : vector<32x512xf32>
      %51 = arith.mulf %38, %50 : vector<32x512xf32>
      %52 = arith.truncf %51 : vector<32x512xf32> to vector<32x512xbf16>
      %c0_27 = arith.constant 0 : index
      %c0_28 = arith.constant 0 : index
      %53 = vector.load %arg8[%c0_27, %c0_28] : memref<32x512xbf16, #tpu.memory_space<vmem>>, vector<32x512xbf16>
      tpu.vector_store %arg8[%c0_27, %c0_28], %52 {strides = array<i32>} : memref<32x512xbf16, #tpu.memory_space<vmem>>, vector<32x512xbf16>,
    } else {
    }
    return
  }
  func.func @transform_0(%arg0: i32, %arg1: i32, %arg2: i32) -> (i32, i32) {
    %c0_i32 = arith.constant 0 : i32
    return %arg0, %arg2 : i32, i32
  }
  func.func @transform_1(%arg0: i32, %arg1: i32, %arg2: i32) -> (i32, i32) {
    %c0_i32 = arith.constant 0 : i32
    return %arg2, %arg1 : i32, i32
  }
  func.func @transform_2(%arg0: i32, %arg1: i32, %arg2: i32) -> (i32, i32) {
    %c0_i32 = arith.constant 0 : i32
    %c0_i32_0 = arith.constant 0 : i32
    return %c0_i32, %arg2 : i32, i32
  }
  func.func @transform_3(%arg0: i32, %arg1: i32, %arg2: i32) -> (i32, i32) {
    %c0_i32 = arith.constant 0 : i32
    %c0_i32_0 = arith.constant 0 : i32
    return %c0_i32, %arg2 : i32, i32
  }
  func.func @transform_4(%arg0: i32, %arg1: i32, %arg2: i32) -> (i32, i32) {
    %c0_i32 = arith.constant 0 : i32
    %c0_i32_0 = arith.constant 0 : i32
    return %c0_i32, %arg1 : i32, i32
  }
  func.func @transform_5(%arg0: i32, %arg1: i32, %arg2: i32) -> (i32, i32) {
    %c0_i32 = arith.constant 0 : i32
    return %arg0, %arg1 : i32, i32
  }
}

module attributes {stable_mosaic.version = 11 : i64} {
  func.func @kernel(%arg0: i32, %arg1: i32, %arg2: i32, %arg3: memref<32x512xbf16, #tpu.memory_space<vmem>>, %arg4: memref<512x256xbf16, #tpu.memory_space<vmem>>, %arg5: memref<1x256xf32, #tpu.memory_space<vmem>>, %arg6: memref<32x256xf32, #tpu.memory_space<vmem>>, %arg7: memref<32x256xf32, #tpu.memory_space<vmem>>, %arg8: memref<32x256xf32, #tpu.memory_space<vmem>>) attributes {dimension_semantics = [#tpu.dimension_semantics<parallel>, #tpu.dimension_semantics<parallel>, #tpu.dimension_semantics<arbitrary>], iteration_bounds = array<i64: 1, 1, 2>, scalar_prefetch = 0 : i64, scratch_operands = 1 : i64, tpu.core_type = #tpu.core_type<tc>, window_params = [{transform_indices = @transform_0, window_bounds = array<i64: 32, 512>}, {transform_indices = @transform_1, window_bounds = array<i64: 512, 256>}, {transform_indices = @transform_2, window_bounds = array<i64: 1, 256>}, {transform_indices = @transform_3, window_bounds = array<i64: 32, 256>}, {transform_indices = @transform_4, window_bounds = array<i64: 32, 256>}]} {
    %c0 = arith.constant 0 : index
    %c0_0 = arith.constant 0 : index
    %0 = vector.load %arg3[%c0, %c0_0] : memref<32x512xbf16, #tpu.memory_space<vmem>>, vector<32x512xbf16>
    %c0_i32 = arith.constant 0 : i32
    %1 = arith.cmpi eq, %arg2, %c0_i32 : i32
    %2 = arith.extui %1 : i1 to i32
    %c0_i32_1 = arith.constant 0 : i32
    %3 = arith.cmpi ne, %2, %c0_i32_1 : i32
    scf.if %3 {
      %cst_9 = arith.constant 0.000000e+00 : f32
      %12 = vector.broadcast %cst_9 : f32 to vector<32x256xf32>
      %c0_10 = arith.constant 0 : index
      %c0_11 = arith.constant 0 : index
      %13 = vector.load %arg8[%c0_10, %c0_11] : memref<32x256xf32, #tpu.memory_space<vmem>>, vector<32x256xf32>
      tpu.vector_store %arg8[%c0_10, %c0_11], %12 {strides = array<i32>} : memref<32x256xf32, #tpu.memory_space<vmem>>, vector<32x256xf32>,
    } else {
    }
    %c0_2 = arith.constant 0 : index
    %c0_3 = arith.constant 0 : index
    %4 = vector.load %arg8[%c0_2, %c0_3] : memref<32x256xf32, #tpu.memory_space<vmem>>, vector<32x256xf32>
    %c0_4 = arith.constant 0 : index
    %c0_5 = arith.constant 0 : index
    %5 = vector.load %arg4[%c0_4, %c0_5] : memref<512x256xbf16, #tpu.memory_space<vmem>>, vector<512x256xbf16>
    %cst = arith.constant dense<0.000000e+00> : vector<32x256xf32>
    %6 = tpu.matmul %0, %5, %cst {dimension_numbers = #tpu.dot_dimension_numbers<[1], [0], [0], [1], [0, 0, 1, 1], [], []>} : vector<32x512xbf16>, vector<512x256xbf16>, vector<32x256xf32> -> vector<32x256xf32>
    %7 = arith.addf %4, %6 : vector<32x256xf32>
    %c0_6 = arith.constant 0 : index
    %c0_7 = arith.constant 0 : index
    %8 = vector.load %arg8[%c0_6, %c0_7] : memref<32x256xf32, #tpu.memory_space<vmem>>, vector<32x256xf32>
    tpu.vector_store %arg8[%c0_6, %c0_7], %7 {strides = array<i32>} : memref<32x256xf32, #tpu.memory_space<vmem>>, vector<32x256xf32>,
    %c1_i32 = arith.constant 1 : i32
    %9 = arith.cmpi eq, %arg2, %c1_i32 : i32
    %10 = arith.extui %9 : i1 to i32
    %c0_i32_8 = arith.constant 0 : i32
    %11 = arith.cmpi ne, %10, %c0_i32_8 : i32
    scf.if %11 {
      %c0_9 = arith.constant 0 : index
      %c0_10 = arith.constant 0 : index
      %12 = vector.load %arg8[%c0_9, %c0_10] : memref<32x256xf32, #tpu.memory_space<vmem>>, vector<32x256xf32>
      %c0_11 = arith.constant 0 : index
      %c0_12 = arith.constant 0 : index
      %13 = vector.load %arg5[%c0_11, %c0_12] : memref<1x256xf32, #tpu.memory_space<vmem>>, vector<1x256xf32>
      %14 = vector.broadcast %13 : vector<1x256xf32> to vector<32x256xf32>
      %15 = arith.addf %12, %14 : vector<32x256xf32>
      %c0_13 = arith.constant 0 : index
      %c0_14 = arith.constant 0 : index
      %16 = vector.load %arg6[%c0_13, %c0_14] : memref<32x256xf32, #tpu.memory_space<vmem>>, vector<32x256xf32>
      %17 = arith.addf %15, %16 : vector<32x256xf32>
      %c0_15 = arith.constant 0 : index
      %c0_16 = arith.constant 0 : index
      %18 = vector.load %arg7[%c0_15, %c0_16] : memref<32x256xf32, #tpu.memory_space<vmem>>, vector<32x256xf32>
      tpu.vector_store %arg7[%c0_15, %c0_16], %17 {strides = array<i32>} : memref<32x256xf32, #tpu.memory_space<vmem>>, vector<32x256xf32>,
    } else {
    }
    return
  }
  func.func @transform_0(%arg0: i32, %arg1: i32, %arg2: i32) -> (i32, i32) {
    %c0_i32 = arith.constant 0 : i32
    return %arg0, %arg2 : i32, i32
  }
  func.func @transform_1(%arg0: i32, %arg1: i32, %arg2: i32) -> (i32, i32) {
    %c0_i32 = arith.constant 0 : i32
    return %arg2, %arg1 : i32, i32
  }
  func.func @transform_2(%arg0: i32, %arg1: i32, %arg2: i32) -> (i32, i32) {
    %c0_i32 = arith.constant 0 : i32
    %c0_i32_0 = arith.constant 0 : i32
    return %c0_i32, %arg1 : i32, i32
  }
  func.func @transform_3(%arg0: i32, %arg1: i32, %arg2: i32) -> (i32, i32) {
    %c0_i32 = arith.constant 0 : i32
    return %arg0, %arg1 : i32, i32
  }
  func.func @transform_4(%arg0: i32, %arg1: i32, %arg2: i32) -> (i32, i32) {
    %c0_i32 = arith.constant 0 : i32
    return %arg0, %arg1 : i32, i32
  }
}

module attributes {stable_mosaic.version = 11 : i64} {
  func.func @_head_train_kernel(%arg0: i32, %arg1: memref<2x256xf32, #tpu.memory_space<vmem>>, %arg2: memref<1x256xf32, #tpu.memory_space<vmem>>, %arg3: memref<1x256xf32, #tpu.memory_space<vmem>>, %arg4: memref<1x256xf32, #tpu.memory_space<vmem>>, %arg5: memref<1x256xf32, #tpu.memory_space<vmem>>, %arg6: memref<256x128xbf16, #tpu.memory_space<vmem>>, %arg7: memref<2x256xf32, #tpu.memory_space<vmem>>, %arg8: memref<2x256xf32, #tpu.memory_space<vmem>>, %arg9: memref<2x128xf32, #tpu.memory_space<vmem>>) attributes {dimension_semantics = [#tpu.dimension_semantics<arbitrary>], iteration_bounds = array<i64: 1>, scalar_prefetch = 0 : i64, scratch_operands = 0 : i64, tpu.core_type = #tpu.core_type<tc>, window_params = [{pipeline_mode = #tpu.pipeline_mode<synchronous>, transform_indices = @transform_0, window_bounds = array<i64: 2, 256>}, {pipeline_mode = #tpu.pipeline_mode<synchronous>, transform_indices = @transform_1, window_bounds = array<i64: 1, 256>}, {pipeline_mode = #tpu.pipeline_mode<synchronous>, transform_indices = @transform_2, window_bounds = array<i64: 1, 256>}, {pipeline_mode = #tpu.pipeline_mode<synchronous>, transform_indices = @transform_3, window_bounds = array<i64: 1, 256>}, {pipeline_mode = #tpu.pipeline_mode<synchronous>, transform_indices = @transform_4, window_bounds = array<i64: 1, 256>}, {pipeline_mode = #tpu.pipeline_mode<synchronous>, transform_indices = @transform_5, window_bounds = array<i64: 256, 128>}, {pipeline_mode = #tpu.pipeline_mode<synchronous>, transform_indices = @transform_6, window_bounds = array<i64: 2, 256>}, {pipeline_mode = #tpu.pipeline_mode<synchronous>, transform_indices = @transform_7, window_bounds = array<i64: 2, 256>}, {pipeline_mode = #tpu.pipeline_mode<synchronous>, transform_indices = @transform_8, window_bounds = array<i64: 2, 128>}]} {
    %c0 = arith.constant 0 : index
    %c0_0 = arith.constant 0 : index
    %0 = vector.load %arg1[%c0, %c0_0] : memref<2x256xf32, #tpu.memory_space<vmem>>, vector<2x256xf32>
    %cst = arith.constant dense<0.000000e+00> : vector<2xf32>
    %1 = vector.multi_reduction <add>, %0, %cst [1] : vector<2x256xf32> to vector<2xf32>
    %2 = vector.shape_cast %1 : vector<2xf32> to vector<2x1xf32>
    %cst_1 = arith.constant 2.560000e+02 : f32
    %3 = vector.broadcast %cst_1 : f32 to vector<2x1xf32>
    %4 = arith.divf %2, %3 : vector<2x1xf32>
    %5 = vector.broadcast %4 : vector<2x1xf32> to vector<2x256xf32>
    %6 = arith.subf %0, %5 : vector<2x256xf32>
    %7 = arith.mulf %6, %6 : vector<2x256xf32>
    %cst_2 = arith.constant dense<0.000000e+00> : vector<2xf32>
    %8 = vector.multi_reduction <add>, %7, %cst_2 [1] : vector<2x256xf32> to vector<2xf32>
    %9 = vector.shape_cast %8 : vector<2xf32> to vector<2x1xf32>
    %cst_3 = arith.constant 2.560000e+02 : f32
    %10 = vector.broadcast %cst_3 : f32 to vector<2x1xf32>
    %11 = arith.divf %9, %10 : vector<2x1xf32>
    %cst_4 = arith.constant 9.99999997E-7 : f32
    %12 = vector.broadcast %cst_4 : f32 to vector<2x1xf32>
    %13 = arith.addf %11, %12 : vector<2x1xf32>
    %14 = math.rsqrt %13 : vector<2x1xf32>
    %15 = vector.broadcast %14 : vector<2x1xf32> to vector<2x256xf32>
    %16 = arith.mulf %6, %15 : vector<2x256xf32>
    %c0_5 = arith.constant 0 : index
    %c0_6 = arith.constant 0 : index
    %17 = vector.load %arg2[%c0_5, %c0_6] : memref<1x256xf32, #tpu.memory_space<vmem>>, vector<1x256xf32>
    %18 = vector.broadcast %17 : vector<1x256xf32> to vector<2x256xf32>
    %19 = arith.mulf %16, %18 : vector<2x256xf32>
    %c0_7 = arith.constant 0 : index
    %c0_8 = arith.constant 0 : index
    %20 = vector.load %arg3[%c0_7, %c0_8] : memref<1x256xf32, #tpu.memory_space<vmem>>, vector<1x256xf32>
    %21 = vector.broadcast %20 : vector<1x256xf32> to vector<2x256xf32>
    %22 = arith.addf %19, %21 : vector<2x256xf32>
    %cst_9 = arith.constant dense<0.000000e+00> : vector<256xf32>
    %23 = vector.multi_reduction <add>, %22, %cst_9 [0] : vector<2x256xf32> to vector<256xf32>
    %24 = vector.shape_cast %23 : vector<256xf32> to vector<1x256xf32>
    %cst_10 = arith.constant 2.000000e+00 : f32
    %25 = vector.broadcast %cst_10 : f32 to vector<1x256xf32>
    %26 = arith.divf %24, %25 : vector<1x256xf32>
    %27 = vector.broadcast %26 : vector<1x256xf32> to vector<2x256xf32>
    %28 = arith.subf %22, %27 : vector<2x256xf32>
    %29 = arith.mulf %28, %28 : vector<2x256xf32>
    %cst_11 = arith.constant dense<0.000000e+00> : vector<256xf32>
    %30 = vector.multi_reduction <add>, %29, %cst_11 [0] : vector<2x256xf32> to vector<256xf32>
    %31 = vector.shape_cast %30 : vector<256xf32> to vector<1x256xf32>
    %cst_12 = arith.constant 2.000000e+00 : f32
    %32 = vector.broadcast %cst_12 : f32 to vector<1x256xf32>
    %33 = arith.divf %31, %32 : vector<1x256xf32>
    %34 = vector.broadcast %26 : vector<1x256xf32> to vector<2x256xf32>
    %35 = arith.subf %22, %34 : vector<2x256xf32>
    %cst_13 = arith.constant 9.99999974E-6 : f32
    %36 = vector.broadcast %cst_13 : f32 to vector<1x256xf32>
    %37 = arith.addf %33, %36 : vector<1x256xf32>
    %38 = math.rsqrt %37 : vector<1x256xf32>
    %39 = vector.broadcast %38 : vector<1x256xf32> to vector<2x256xf32>
    %40 = arith.mulf %35, %39 : vector<2x256xf32>
    %c0_14 = arith.constant 0 : index
    %c0_15 = arith.constant 0 : index
    %41 = vector.load %arg4[%c0_14, %c0_15] : memref<1x256xf32, #tpu.memory_space<vmem>>, vector<1x256xf32>
    %42 = vector.broadcast %41 : vector<1x256xf32> to vector<2x256xf32>
    %43 = arith.mulf %40, %42 : vector<2x256xf32>
    %c0_16 = arith.constant 0 : index
    %c0_17 = arith.constant 0 : index
    %44 = vector.load %arg5[%c0_16, %c0_17] : memref<1x256xf32, #tpu.memory_space<vmem>>, vector<1x256xf32>
    %45 = vector.broadcast %44 : vector<1x256xf32> to vector<2x256xf32>
    %46 = arith.addf %43, %45 : vector<2x256xf32>
    %c0_18 = arith.constant 0 : index
    %c0_19 = arith.constant 0 : index
    %47 = vector.load %arg7[%c0_18, %c0_19] : memref<2x256xf32, #tpu.memory_space<vmem>>, vector<2x256xf32>
    tpu.vector_store %arg7[%c0_18, %c0_19], %22 {strides = array<i32>} : memref<2x256xf32, #tpu.memory_space<vmem>>, vector<2x256xf32>,
    %c0_20 = arith.constant 0 : index
    %c0_21 = arith.constant 0 : index
    %48 = vector.load %arg8[%c0_20, %c0_21] : memref<2x256xf32, #tpu.memory_space<vmem>>, vector<2x256xf32>
    tpu.vector_store %arg8[%c0_20, %c0_21], %46 {strides = array<i32>} : memref<2x256xf32, #tpu.memory_space<vmem>>, vector<2x256xf32>,
    %49 = arith.truncf %46 : vector<2x256xf32> to vector<2x256xbf16>
    %c0_22 = arith.constant 0 : index
    %c0_23 = arith.constant 0 : index
    %50 = vector.load %arg6[%c0_22, %c0_23] : memref<256x128xbf16, #tpu.memory_space<vmem>>, vector<256x128xbf16>
    %cst_24 = arith.constant dense<0.000000e+00> : vector<2x128xf32>
    %51 = tpu.matmul %49, %50, %cst_24 {dimension_numbers = #tpu.dot_dimension_numbers<[1], [0], [0], [1], [0, 0, 1, 1], [], []>} : vector<2x256xbf16>, vector<256x128xbf16>, vector<2x128xf32> -> vector<2x128xf32>
    %c0_25 = arith.constant 0 : index
    %c0_26 = arith.constant 0 : index
    %52 = vector.load %arg9[%c0_25, %c0_26] : memref<2x128xf32, #tpu.memory_space<vmem>>, vector<2x128xf32>
    tpu.vector_store %arg9[%c0_25, %c0_26], %51 {strides = array<i32>} : memref<2x128xf32, #tpu.memory_space<vmem>>, vector<2x128xf32>,
    return
  }
  func.func @transform_0(%arg0: i32) -> (i32, i32) {
    %c0_i32 = arith.constant 0 : i32
    %c0_i32_0 = arith.constant 0 : i32
    %c0_i32_1 = arith.constant 0 : i32
    return %c0_i32, %c0_i32_0 : i32, i32
  }
  func.func @transform_1(%arg0: i32) -> (i32, i32) {
    %c0_i32 = arith.constant 0 : i32
    %c0_i32_0 = arith.constant 0 : i32
    %c0_i32_1 = arith.constant 0 : i32
    return %c0_i32, %c0_i32_0 : i32, i32
  }
  func.func @transform_2(%arg0: i32) -> (i32, i32) {
    %c0_i32 = arith.constant 0 : i32
    %c0_i32_0 = arith.constant 0 : i32
    %c0_i32_1 = arith.constant 0 : i32
    return %c0_i32, %c0_i32_0 : i32, i32
  }
  func.func @transform_3(%arg0: i32) -> (i32, i32) {
    %c0_i32 = arith.constant 0 : i32
    %c0_i32_0 = arith.constant 0 : i32
    %c0_i32_1 = arith.constant 0 : i32
    return %c0_i32, %c0_i32_0 : i32, i32
  }
  func.func @transform_4(%arg0: i32) -> (i32, i32) {
    %c0_i32 = arith.constant 0 : i32
    %c0_i32_0 = arith.constant 0 : i32
    %c0_i32_1 = arith.constant 0 : i32
    return %c0_i32, %c0_i32_0 : i32, i32
  }
  func.func @transform_5(%arg0: i32) -> (i32, i32) {
    %c0_i32 = arith.constant 0 : i32
    %c0_i32_0 = arith.constant 0 : i32
    %c0_i32_1 = arith.constant 0 : i32
    return %c0_i32, %c0_i32_0 : i32, i32
  }
  func.func @transform_6(%arg0: i32) -> (i32, i32) {
    %c0_i32 = arith.constant 0 : i32
    %c0_i32_0 = arith.constant 0 : i32
    %c0_i32_1 = arith.constant 0 : i32
    return %c0_i32, %c0_i32_0 : i32, i32
  }
  func.func @transform_7(%arg0: i32) -> (i32, i32) {
    %c0_i32 = arith.constant 0 : i32
    %c0_i32_0 = arith.constant 0 : i32
    %c0_i32_1 = arith.constant 0 : i32
    return %c0_i32, %c0_i32_0 : i32, i32
  }
  func.func @transform_8(%arg0: i32) -> (i32, i32) {
    %c0_i32 = arith.constant 0 : i32
    %c0_i32_0 = arith.constant 0 : i32
    %c0_i32_1 = arith.constant 0 : i32
    return %c0_i32, %c0_i32_0 : i32, i32
  }
}

</mosaic_0001>

<llo_original>
// kernel: mul.9
$region0: #{mul.9}
  #allocation0 [shape = 's32[1]{0}', space=sflag, size = 0x4, scoped, tag = 'scoped memory for mul.9']
  %s0 = inlined_call_operand.vmem [shape: f32[768], index: 0, kind: input, shape index: {}]
  %s1 = inlined_call_operand.vmem [shape: f32[768], index: 1, kind: input, shape index: {}]
  %s2 = inlined_call_operand.vmem [shape: f32[768], index: 2, kind: output, shape index: {}]
  %v3 = vld [vmem:[%s0] sm:$0x3f]
  %v4 = vld [vmem:[%s1] sm:$0x3f]
  %5 = xla_tuple %v3, %v4
  %6 = xla_tuple %5
  %v7 = vmul.f32 %v3, %v4
  %8 = xla_tuple %v7
  %9 = vst [vmem:[%s2] sm:$0xff] %v7

// kernel: sub.1
$region0: #{sub.1}
  #allocation0 [shape = 's32[1]{0}', space=sflag, size = 0x4, scoped, tag = 'scoped memory for sub.1']
  %s0 = inlined_call_operand.vmem [shape: f32[256], index: 0, kind: input, shape index: {}]
  %s1 = inlined_call_operand.vmem [shape: f32[256], index: 1, kind: input, shape index: {}]
  %s2 = inlined_call_operand.vmem [shape: f32[256], index: 2, kind: output, shape index: {}]
  %v3 = vld [vmem:[%s0] sm:$0x3]
  %v4 = vld [vmem:[%s1] sm:$0x3]
  %5 = xla_tuple %v3, %v4
  %6 = xla_tuple %5
  %v7 = vsub.f32 %v3, %v4
  %8 = xla_tuple %v7
  %9 = vst [vmem:[%s2] sm:$0x3] %v7

// kernel: baseline_vit_forward.17
$region0: #{baseline_vit_forward.17}
  #allocation0 [shape = 'u32[]', space=smem, size = 0x4, offset = 0x4, fixed_abs, tag = 'smem constant byte address 0x4 - core index']
  #allocation1 [shape = 'u32[72,128]{1,0:T(1,128)}', space=vmem, size = 0x9000, scoped, tag = 'internal scratch']
  #allocation2 [shape = 'f32[16,256]{1,0:T(8,128)}', space=vmem, size = 0x4000, scoped, tag = 'scratch operand']
  %s0 = inlined_call_operand.vmem [shape: bf16[16,768], index: 0, kind: input, shape index: {}]
  %s1 = inlined_call_operand.vmem [shape: bf16[768,256], index: 1, kind: input, shape index: {}]
  %s2 = inlined_call_operand.vmem [shape: f32[1,256], index: 2, kind: input, shape index: {}]
  %s3 = inlined_call_operand.vmem [shape: f32[16,256], index: 3, kind: output, shape index: {}]
  %s4 = sld [smem:[#allocation0]]
  $region91: #{baseline_vit_forward.17} parent=0
    _
  %s6 = ssub.s32 1, %s4
  %s7 = scalar_select 0, %s6, %s4
  $region1: #{baseline_vit_forward.17} parent=0
    #allocation3 [shape = 'u8[16384]{0}', space=vmem, size = 0x4000, scoped, tag = 'input window, operand 0']
    loop: start=0, step=1, limit=5
    $region2: #{baseline_vit_forward.17} parent=1 // loop_pre_header
      _
    $region3: #{baseline_vit_forward.17} parent=1 // loop_header
      %s9 = sphi 0, %s13
      %p10 = scmp.ge.s32.totalorder %s9, 5
      %s16 = sphi 0, %s35
      %s17 = sphi 0, %s31
      %s18 = sphi 0, %s27
      %s19 = sphi 0, %s16
      %s20 = sphi 0, %s17
      %s21 = sphi 0, %s18
      %s22 = sphi 0, %s19
      %s23 = sphi 0, %s20
      %s24 = sphi 0, %s21
      %s40 = sphi 0, %s42
      %s43 = sphi 0, %s40
      %s44 = sphi 0, %s43
      %s60 = sphi 0, %s44
      %s68 = sphi 0, %s70
      %s71 = sphi 0, %s68
      %s72 = sphi 0, %s71
      %s88 = sphi 0, %s72
      %s94 = sphi 0, %s96
      %s97 = sphi 0, %s94
      %s98 = sphi 0, %s97
      %s114 = sphi 0, %s98
      %s122 = sphi 0, %s124
      %s125 = sphi 0, %s122
      %s126 = sphi 0, %s125
      %s142 = sphi 0, %s126
    $region4: #{baseline_vit_forward.17} parent=1 // loop_header_branch
      %12 = sbr.rel (%p10) target = $region8
    $region5: #{baseline_vit_forward.17} parent=1 // loop_body
      %s14 = ssub.s32 %s9, 1
      %s15 = ssub.s32 %s9, 2
      %s25 = sadd.s32 1, %s18
      %p26 = scmp.ge.s32.totalorder %s25, 3
      %s27 = scalar_select %p26, 0, %s25
      %s28 = sadd.s32 1, %s17
      %s29 = scalar_select %p26, %s28, %s17
      %p30 = scmp.ge.s32.totalorder %s29, 1
      %s31 = scalar_select %p30, 0, %s29
      %s32 = sadd.s32 1, %s16
      %s33 = scalar_select %p30, %s32, %s16
      %p34 = scmp.ge.s32.totalorder %s33, 1
      %s35 = scalar_select %p34, 0, %s33
      %s36 = ssub.s32 %s16, %s35
      %s37 = ssub.s32 %s18, %s27
      %s38 = sor.u32 %s36, %s37
      %p39 = scmp.eq.s32.totalorder %s38, 0
      %s41 = sadd.s32 %s40, 1
      %s42 = scalar_select %p39, %s40, %s41
      %p45 = pneg %p39
      %p46 = scmp.eq.s32.totalorder %s9, 2
      %p47 = por %p45, %p46
      %p48 = scmp.ne.s32.totalorder %s40, %s43
      %p49 = scmp.eq.s32.totalorder %s9, 0
      %p50 = por %p48, %p49
      %p51 = scmp.ne.s32.totalorder %s40, %s43
      %p52 = scmp.eq.s32.totalorder %s14, 2
      %p53 = por %p51, %p52
      %p54 = scmp.ne.s32.totalorder %s43, %s44
      %p55 = scmp.eq.s32.totalorder %s14, 0
      %p56 = por %p54, %p55
      %p57 = scmp.ne.s32.totalorder %s43, %s44
      %p58 = scmp.eq.s32.totalorder %s15, 2
      %p59 = por %p57, %p58
      %p61 = scmp.ne.s32.totalorder %s44, %s60
      %p62 = scmp.eq.s32.totalorder %s15, 0
      %p63 = por %p61, %p62
      %s64 = ssub.s32 %s18, %s27
      %s65 = ssub.s32 %s17, %s31
      %s66 = sor.u32 %s64, %s65
      %p67 = scmp.eq.s32.totalorder %s66, 0
      %s69 = sadd.s32 %s68, 1
      %s70 = scalar_select %p67, %s68, %s69
      %p73 = pneg %p67
      %p74 = scmp.eq.s32.totalorder %s9, 2
      %p75 = por %p73, %p74
      %p76 = scmp.ne.s32.totalorder %s68, %s71
      %p77 = scmp.eq.s32.totalorder %s9, 0
      %p78 = por %p76, %p77
      %p79 = scmp.ne.s32.totalorder %s68, %s71
      %p80 = scmp.eq.s32.totalorder %s14, 2
      %p81 = por %p79, %p80
      %p82 = scmp.ne.s32.totalorder %s71, %s72
      %p83 = scmp.eq.s32.totalorder %s14, 0
      %p84 = por %p82, %p83
      %p85 = scmp.ne.s32.totalorder %s71, %s72
      %p86 = scmp.eq.s32.totalorder %s15, 2
      %p87 = por %p85, %p86
      %p89 = scmp.ne.s32.totalorder %s72, %s88
      %p90 = scmp.eq.s32.totalorder %s15, 0
      %p91 = por %p89, %p90
      %s92 = ssub.s32 %s17, %s31
      %p93 = scmp.eq.s32.totalorder %s92, 0
      %s95 = sadd.s32 %s94, 1
      %s96 = scalar_select %p93, %s94, %s95
      %p99 = pneg %p93
      %p100 = scmp.eq.s32.totalorder %s9, 2
      %p101 = por %p99, %p100
      %p102 = scmp.ne.s32.totalorder %s94, %s97
      %p103 = scmp.eq.s32.totalorder %s9, 0
      %p104 = por %p102, %p103
      %p105 = scmp.ne.s32.totalorder %s94, %s97
      %p106 = scmp.eq.s32.totalorder %s14, 2
      %p107 = por %p105, %p106
      %p108 = scmp.ne.s32.totalorder %s97, %s98
      %p109 = scmp.eq.s32.totalorder %s14, 0
      %p110 = por %p108, %p109
      %p111 = scmp.ne.s32.totalorder %s97, %s98
      %p112 = scmp.eq.s32.totalorder %s15, 2
      %p113 = por %p111, %p112
      %p115 = scmp.ne.s32.totalorder %s98, %s114
      %p116 = scmp.eq.s32.totalorder %s15, 0
      %p117 = por %p115, %p116
      %s118 = ssub.s32 %s16, %s35
      %s119 = ssub.s32 %s17, %s31
      %s120 = sor.u32 %s118, %s119
      %p121 = scmp.eq.s32.totalorder %s120, 0
      %s123 = sadd.s32 %s122, 1
      %s124 = scalar_select %p121, %s122, %s123
      %p127 = pneg %p121
      %p128 = scmp.eq.s32.totalorder %s9, 2
      %p129 = por %p127, %p128
      %p130 = scmp.ne.s32.totalorder %s122, %s125
      %p131 = scmp.eq.s32.totalorder %s9, 0
      %p132 = por %p130, %p131
      %p133 = scmp.ne.s32.totalorder %s122, %s125
      %p134 = scmp.eq.s32.totalorder %s14, 2
      %p135 = por %p133, %p134
      %p136 = scmp.ne.s32.totalorder %s125, %s126
      %p137 = scmp.eq.s32.totalorder %s14, 0
      %p138 = por %p136, %p137
      %p139 = scmp.ne.s32.totalorder %s125, %s126
      %p140 = scmp.eq.s32.totalorder %s15, 2
      %p141 = por %p139, %p140
      %p143 = scmp.ne.s32.totalorder %s126, %s142
      %p144 = scmp.eq.s32.totalorder %s15, 0
      %p145 = por %p143, %p144
      %p146 = scmp.le.s32.totalorder 1, %s9
      %p147 = scmp.lt.s32.totalorder %s9, 4
      %p148 = pnand %p146, %p147
      %p149 = pneg %p148
      // Predicated region
      $region9: #{baseline_vit_forward.17} parent=5 // pred_check
        _
      $region10: #{baseline_vit_forward.17} parent=5 // pred_check_branch
        %151 = sbr.rel (%p148) target = $region12
      $region11: #{baseline_vit_forward.17} parent=5 // pred_region
        %s152 = ssub.s32 %s9, 1
        // Predicated region
        $region13: #{baseline_vit_forward.17} parent=11 // pred_check
          %p153 = pneg %p110
        $region14: #{baseline_vit_forward.17} parent=11 // pred_check_branch
          %155 = sbr.rel (%p153) target = $region16
        $region15: #{baseline_vit_forward.17} parent=11 // pred_region
          %s156 = smul.u32 2, %s20
          %p157 = scmp.lt.s32.totalorder %s156, 1
          %s158 = scalar_select %p157, %s156, 1
          %s159 = scalar_lea.vmem %s2, %s158
          %s160 = smul.u32 2, %s20
        $region16: #{baseline_vit_forward.17} parent=11 // pred_fallthru
          _
      $region12: #{baseline_vit_forward.17} parent=5 // pred_fallthru
        _
      %p161 = scmp.lt.s32.totalorder %s9, 3
      // Predicated region
      $region17: #{baseline_vit_forward.17} parent=5 // pred_check
        %p162 = pneg %p161
      $region18: #{baseline_vit_forward.17} parent=5 // pred_check_branch
        %164 = sbr.rel (%p162) target = $region20
      $region19: #{baseline_vit_forward.17} parent=5 // pred_region
        // Predicated region
        $region21: #{baseline_vit_forward.17} parent=19 // pred_check
          %p165 = pneg %p50
        $region22: #{baseline_vit_forward.17} parent=19 // pred_check_branch
          %167 = sbr.rel (%p165) target = $region24
        $region23: #{baseline_vit_forward.17} parent=19 // pred_region
          %s168 = sand.u32 %s40, 1
          %s169 = sand.u32 %s40, 1
          %s170 = smul.addr %s169, 16
          %s171 = scalar_lea.vmem [#allocation3], %s170
          %s172 = smul.u32 2, %s16
          %s173 = smul.u32 2, %s18
          %s174 = smul.addr %s172, 6
          %s175 = sadd.s32 %s173, %s174
          %s176 = smul.addr %s175, 4
          %s177 = scalar_lea.vmem %s0, %s176
          // Predicated region
          $region25: #{baseline_vit_forward.17} parent=23 // pred_check
            _
          $region26: #{baseline_vit_forward.17} parent=23 // pred_check_branch
            %179 = sbr.rel (0) target = $region28
          $region27: #{baseline_vit_forward.17} parent=23 // pred_region
            // Predicated region
            $region29: #{baseline_vit_forward.17} parent=27 // pred_check
              _
            $region30: #{baseline_vit_forward.17} parent=27 // pred_check_branch
              %181 = sbr.rel (0) target = $region32
            $region31: #{baseline_vit_forward.17} parent=27 // pred_region
              // Predicated region
              $region44: #{baseline_vit_forward.17} parent=31 // pred_check
                _
              $region45: #{baseline_vit_forward.17} parent=31 // pred_check_branch
                %199 = sbr.rel (0) target = $region47
              $region46: #{baseline_vit_forward.17} parent=31 // pred_region
                loop: start=0, step=1, limit=1
                $region48: #{baseline_vit_forward.17} parent=46 // loop_pre_header
                  _
                $region49: #{baseline_vit_forward.17} parent=46 // loop_header
                  %s201 = sphi 0, %s205
                  %p202 = scmp.ge.s32.totalorder %s201, 1
                  %s206 = sphi %s177, %s177
                  %s207 = sphi %s171, %s171
                $region50: #{baseline_vit_forward.17} parent=46 // loop_header_branch
                  %204 = sbr.rel (%p202) target = $region54
                $region51: #{baseline_vit_forward.17} parent=46 // loop_body
                  %v208 = vld [vmem:[%s206] sm:$0xff]
                  %209 = vst [vmem:[%s207] sm:$0xff] %v208
                  %v210 = vld [vmem:[%s206 + $0x18] sm:$0xff]
                  %211 = vst [vmem:[%s207 + $0x8] sm:$0xff] %v210
                $region52: #{baseline_vit_forward.17} parent=46 // loop_footer
                  %s205 = sadd.s32 1, %s201
                $region53: #{baseline_vit_forward.17} parent=46 // loop_footer_branch
                  %200 = sbr.rel target = $region49
                $region54: #{baseline_vit_forward.17} parent=46 // loop_exit
                  _
              $region47: #{baseline_vit_forward.17} parent=31 // pred_fallthru
                _
              // Predicated region
              $region55: #{baseline_vit_forward.17} parent=31 // pred_check
                _
              $region56: #{baseline_vit_forward.17} parent=31 // pred_check_branch
                %213 = sbr.rel target = $region58
              $region57: #{baseline_vit_forward.17} parent=31 // pred_region
                _
              $region58: #{baseline_vit_forward.17} parent=31 // pred_fallthru
                _
            $region32: #{baseline_vit_forward.17} parent=27 // pred_fallthru
              _
            // Predicated region
            $region33: #{baseline_vit_forward.17} parent=27 // pred_check
              _
            $region34: #{baseline_vit_forward.17} parent=27 // pred_check_branch
              %183 = sbr.rel target = $region36
            $region35: #{baseline_vit_forward.17} parent=27 // pred_region
              %s185 = ssub.s32 256, 1
              loop: start=0, step=1, limit=1
              $region37: #{baseline_vit_forward.17} parent=35 // loop_pre_header
                _
              $region38: #{baseline_vit_forward.17} parent=35 // loop_header
                %s187 = sphi 0, %s191
                %p188 = scmp.ge.s32.totalorder %s187, 1
                %s192 = sphi %s177, %s177
                %s193 = sphi %s171, %s171
              $region39: #{baseline_vit_forward.17} parent=35 // loop_header_branch
                %190 = sbr.rel (%p188) target = $region43
              $region40: #{baseline_vit_forward.17} parent=35 // loop_body
                %v194 = vld [vmem:[%s192] sm:%s185]
                %195 = vst [vmem:[%s193] sm:%s185] %v194
                %v196 = vld [vmem:[%s192 + $0x18] sm:%s185]
                %197 = vst [vmem:[%s193 + $0x8] sm:%s185] %v196
              $region41: #{baseline_vit_forward.17} parent=35 // loop_footer
                %s191 = sadd.s32 1, %s187
              $region42: #{baseline_vit_forward.17} parent=35 // loop_footer_branch
                %186 = sbr.rel target = $region38
              $region43: #{baseline_vit_forward.17} parent=35 // loop_exit
                _
            $region36: #{baseline_vit_forward.17} parent=27 // pred_fallthru
              _
          $region28: #{baseline_vit_forward.17} parent=23 // pred_fallthru
            _
          %214 = vnop
        $region24: #{baseline_vit_forward.17} parent=19 // pred_fallthru
          _
        // Predicated region
        $region59: #{baseline_vit_forward.17} parent=19 // pred_check
          %p215 = pneg %p78
        $region60: #{baseline_vit_forward.17} parent=19 // pred_check_branch
          %217 = sbr.rel (%p215) target = $region62
        $region61: #{baseline_vit_forward.17} parent=19 // pred_region
          %s218 = smul.u32 32, %s18
          %s219 = smul.u32 2, %s17
          %p220 = scmp.lt.s32.totalorder %s218, 95
          %s221 = scalar_select %p220, %s218, 95
          %p222 = scmp.lt.s32.totalorder %s219, 1
          %s223 = scalar_select %p222, %s219, 1
          %s224 = smul.addr %s221, 2
          %s225 = sadd.s32 %s223, %s224
          %s226 = smul.addr %s225, 4
          %s227 = scalar_lea.vmem %s1, %s226
          %s228 = smul.u32 32, %s18
          %s229 = smul.u32 2, %s17
        $region62: #{baseline_vit_forward.17} parent=19 // pred_fallthru
          _
      $region20: #{baseline_vit_forward.17} parent=5 // pred_fallthru
        _
      %p230 = scmp.le.s32.totalorder 1, %s9
      %p231 = scmp.lt.s32.totalorder %s9, 4
      %p232 = pnand %p230, %p231
      %p233 = pneg %p232
      // Predicated region
      $region63: #{baseline_vit_forward.17} parent=5 // pred_check
        _
      $region64: #{baseline_vit_forward.17} parent=5 // pred_check_branch
        %235 = sbr.rel (%p232) target = $region66
      $region65: #{baseline_vit_forward.17} parent=5 // pred_region
        %s236 = ssub.s32 %s9, 1
        %s237 = sand.u32 %s43, 1
        %s238 = sand.u32 %s43, 1
        %s239 = smul.addr %s238, 16
        %s240 = scalar_lea.vmem [#allocation3], %s239
        // Predicated region
        $region67: #{baseline_vit_forward.17} parent=65 // pred_check
          %p241 = pneg %p56
        $region68: #{baseline_vit_forward.17} parent=65 // pred_check_branch
          %243 = sbr.rel (%p241) target = $region70
        $region69: #{baseline_vit_forward.17} parent=65 // pred_region
          _
        $region70: #{baseline_vit_forward.17} parent=65 // pred_fallthru
          _
        %s244 = sand.u32 %s43, 1
        %s245 = sand.u32 %s43, 1
        %s246 = smul.addr %s245, 16
        %s247 = scalar_lea.vmem [#allocation3], %s246
        %p248 = pneg %p56
        %p249 = pneg %p53
        %s250 = smul.u32 32, %s21
        %s251 = smul.u32 2, %s20
        %p252 = scmp.lt.s32.totalorder %s250, 95
        %s253 = scalar_select %p252, %s250, 95
        %p254 = scmp.lt.s32.totalorder %s251, 1
        %s255 = scalar_select %p254, %s251, 1
        %s256 = smul.addr %s253, 2
        %s257 = sadd.s32 %s255, %s256
        %s258 = smul.addr %s257, 4
        %s259 = scalar_lea.vmem %s1, %s258
        %p260 = pneg %p84
        %p261 = pneg %p81
        %s262 = smul.u32 2, %s20
        %p263 = scmp.lt.s32.totalorder %s262, 1
        %s264 = scalar_select %p263, %s262, 1
        %s265 = scalar_lea.vmem %s2, %s264
        %p266 = pneg %p110
        %p267 = pneg %p107
        %p268 = pneg %p138
        %p269 = pneg %p135
        %s270 = smul.u32 2, %s19
        %s271 = smul.u32 2, %s20
        %p272 = scmp.lt.s32.totalorder %s270, 1
        %s273 = scalar_select %p272, %s270, 1
        %p274 = scmp.lt.s32.totalorder %s271, 1
        %s275 = scalar_select %p274, %s271, 1
        %s276 = smul.addr %s273, 2
        %s277 = sadd.s32 %s275, %s276
        %s278 = smul.addr %s277, 8
        %s279 = scalar_lea.vmem %s3, %s278
        %s280 = smul.u32 2, %s19
        %s281 = smul.u32 2, %s21
        %s282 = smul.u32 32, %s21
        %s283 = smul.u32 2, %s20
        %p284 = scmp.lt.s32.totalorder %s282, 95
        %s285 = scalar_select %p284, %s282, 95
        %p286 = scmp.lt.s32.totalorder %s283, 1
        %s287 = scalar_select %p286, %s283, 1
        %s288 = smul.addr %s285, 2
        %s289 = sadd.s32 %s287, %s288
        %s290 = smul.addr %s289, 4
        %s291 = scalar_lea.vmem %s1, %s290
        %s292 = smul.u32 32, %s21
        %s293 = smul.u32 2, %s20
        %s294 = smul.u32 2, %s20
        %p295 = scmp.lt.s32.totalorder %s294, 1
        %s296 = scalar_select %p295, %s294, 1
        %s297 = scalar_lea.vmem %s2, %s296
        %s298 = smul.u32 2, %s20
        %s299 = smul.u32 2, %s19
        %s300 = smul.u32 2, %s20
        %p301 = scmp.lt.s32.totalorder %s299, 1
        %s302 = scalar_select %p301, %s299, 1
        %p303 = scmp.lt.s32.totalorder %s300, 1
        %s304 = scalar_select %p303, %s300, 1
        %s305 = smul.addr %s302, 2
        %s306 = sadd.s32 %s304, %s305
        %s307 = smul.addr %s306, 8
        %s308 = scalar_lea.vmem %s3, %s307
        %s309 = smul.u32 2, %s19
        %s310 = smul.u32 2, %s20
        %v311 = vld [vmem:[%s240] sm:$0xff]
        %v312 = vld [vmem:[%s240 + $0x8] sm:$0xff]
        %p313 = scmp.eq.s32.totalorder %s21, 0
        // Predicated region
        $region71: #{baseline_vit_forward.17} parent=65 // pred_check
          %p314 = pneg %p313
        $region72: #{baseline_vit_forward.17} parent=65 // pred_check_branch
          %316 = sbr.rel (%p314) target = $region74
        $region73: #{baseline_vit_forward.17} parent=65 // pred_region
          %317 = vst [vmem:[#allocation2] sm:$0xff] 0.0
          %318 = vst [vmem:[#allocation2 + $0x8] sm:$0xff] 0.0
          %319 = vst [vmem:[#allocation2 + $0x10] sm:$0xff] 0.0
          %320 = vst [vmem:[#allocation2 + $0x18] sm:$0xff] 0.0
        $region74: #{baseline_vit_forward.17} parent=65 // pred_fallthru
          _
        %v321 = vld [vmem:[#allocation2] sm:$0xff]
        %v322 = vld [vmem:[#allocation2 + $0x8] sm:$0xff]
        %v323 = vld [vmem:[#allocation2 + $0x10] sm:$0xff]
        %v324 = vld [vmem:[#allocation2 + $0x18] sm:$0xff]
        %v325 = vld [vmem:[%s291] sm:$0xff]
        %v326 = vld [vmem:[%s291 + $0x8] sm:$0xff]
        %v327 = vld [vmem:[%s291 + $0x10] sm:$0xff]
        %v328 = vld [vmem:[%s291 + $0x18] sm:$0xff]
        %v329 = vld [vmem:[%s291 + $0x20] sm:$0xff]
        %v330 = vld [vmem:[%s291 + $0x28] sm:$0xff]
        %v331 = vld [vmem:[%s291 + $0x30] sm:$0xff]
        %v332 = vld [vmem:[%s291 + $0x38] sm:$0xff]
        %v333 = vld [vmem:[%s291 + $0x40] sm:$0xff]
        %v334 = vld [vmem:[%s291 + $0x48] sm:$0xff]
        %v335 = vld [vmem:[%s291 + $0x50] sm:$0xff]
        %v336 = vld [vmem:[%s291 + $0x58] sm:$0xff]
        %v337 = vld [vmem:[%s291 + $0x60] sm:$0xff]
        %v338 = vld [vmem:[%s291 + $0x68] sm:$0xff]
        %v339 = vld [vmem:[%s291 + $0x70] sm:$0xff]
        %v340 = vld [vmem:[%s291 + $0x78] sm:$0xff]
        %v341 = vld [vmem:[%s291 + $0x80] sm:$0xff]
        %v342 = vld [vmem:[%s291 + $0x88] sm:$0xff]
        %v343 = vld [vmem:[%s291 + $0x90] sm:$0xff]
        %v344 = vld [vmem:[%s291 + $0x98] sm:$0xff]
        %v345 = vld [vmem:[%s291 + $0xa0] sm:$0xff]
        %v346 = vld [vmem:[%s291 + $0xa8] sm:$0xff]
        %v347 = vld [vmem:[%s291 + $0xb0] sm:$0xff]
        %v348 = vld [vmem:[%s291 + $0xb8] sm:$0xff]
        %v349 = vld [vmem:[%s291 + $0xc0] sm:$0xff]
        %v350 = vld [vmem:[%s291 + $0xc8] sm:$0xff]
        %v351 = vld [vmem:[%s291 + $0xd0] sm:$0xff]
        %v352 = vld [vmem:[%s291 + $0xd8] sm:$0xff]
        %v353 = vld [vmem:[%s291 + $0xe0] sm:$0xff]
        %v354 = vld [vmem:[%s291 + $0xe8] sm:$0xff]
        %v355 = vld [vmem:[%s291 + $0xf0] sm:$0xff]
        %v356 = vld [vmem:[%s291 + $0xf8] sm:$0xff]
        %v359 = vunpack.c.l.b16 %v311
        %v360 = vunpack.c.h.b16 %v311
        %v361 = vunpack.c.l.b16 %v312
        %v362 = vunpack.c.h.b16 %v312
        %v363 = vpack.c.b16 %v361, %v359
        %v364 = vpack.c.b16 %v362, %v360
        %v399 = vunpack.c.l.b16 %v325
        %v400 = vunpack.c.h.b16 %v325
        %v401 = vunpack.c.l.b16 %v326
        %v402 = vunpack.c.h.b16 %v326
        %v403 = vunpack.c.l.b16 %v327
        %v404 = vunpack.c.h.b16 %v327
        %v405 = vunpack.c.l.b16 %v328
        %v406 = vunpack.c.h.b16 %v328
        %v407 = vunpack.c.l.b16 %v329
        %v408 = vunpack.c.h.b16 %v329
        %v409 = vunpack.c.l.b16 %v330
        %v410 = vunpack.c.h.b16 %v330
        %v411 = vunpack.c.l.b16 %v331
        %v412 = vunpack.c.h.b16 %v331
        %v413 = vunpack.c.l.b16 %v332
        %v414 = vunpack.c.h.b16 %v332
        %v415 = vunpack.c.l.b16 %v333
        %v416 = vunpack.c.h.b16 %v333
        %v417 = vunpack.c.l.b16 %v334
        %v418 = vunpack.c.h.b16 %v334
        %v419 = vunpack.c.l.b16 %v335
        %v420 = vunpack.c.h.b16 %v335
        %v421 = vunpack.c.l.b16 %v336
        %v422 = vunpack.c.h.b16 %v336
        %v423 = vunpack.c.l.b16 %v337
        %v424 = vunpack.c.h.b16 %v337
        %v425 = vunpack.c.l.b16 %v338
        %v426 = vunpack.c.h.b16 %v338
        %v427 = vunpack.c.l.b16 %v339
        %v428 = vunpack.c.h.b16 %v339
        %v429 = vunpack.c.l.b16 %v340
        %v430 = vunpack.c.h.b16 %v340
        %v431 = vunpack.c.l.b16 %v341
        %v432 = vunpack.c.h.b16 %v341
        %v433 = vunpack.c.l.b16 %v342
        %v434 = vunpack.c.h.b16 %v342
        %v435 = vunpack.c.l.b16 %v343
        %v436 = vunpack.c.h.b16 %v343
        %v437 = vunpack.c.l.b16 %v344
        %v438 = vunpack.c.h.b16 %v344
        %v439 = vunpack.c.l.b16 %v345
        %v440 = vunpack.c.h.b16 %v345
        %v441 = vunpack.c.l.b16 %v346
        %v442 = vunpack.c.h.b16 %v346
        %v443 = vunpack.c.l.b16 %v347
        %v444 = vunpack.c.h.b16 %v347
        %v445 = vunpack.c.l.b16 %v348
        %v446 = vunpack.c.h.b16 %v348
        %v447 = vunpack.c.l.b16 %v349
        %v448 = vunpack.c.h.b16 %v349
        %v449 = vunpack.c.l.b16 %v350
        %v450 = vunpack.c.h.b16 %v350
        %v451 = vunpack.c.l.b16 %v351
        %v452 = vunpack.c.h.b16 %v351
        %v453 = vunpack.c.l.b16 %v352
        %v454 = vunpack.c.h.b16 %v352
        %v455 = vunpack.c.l.b16 %v353
        %v456 = vunpack.c.h.b16 %v353
        %v457 = vunpack.c.l.b16 %v354
        %v458 = vunpack.c.h.b16 %v354
        %v459 = vunpack.c.l.b16 %v355
        %v460 = vunpack.c.h.b16 %v355
        %v461 = vunpack.c.l.b16 %v356
        %v462 = vunpack.c.h.b16 %v356
        %v463 = vpack.c.b16 %v401, %v399
        %v464 = vpack.c.b16 %v402, %v400
        %v465 = vpack.c.b16 %v405, %v403
        %v466 = vpack.c.b16 %v406, %v404
        %v467 = vpack.c.b16 %v409, %v407
        %v468 = vpack.c.b16 %v410, %v408
        %v469 = vpack.c.b16 %v413, %v411
        %v470 = vpack.c.b16 %v414, %v412
        %v471 = vpack.c.b16 %v417, %v415
        %v472 = vpack.c.b16 %v418, %v416
        %v473 = vpack.c.b16 %v421, %v419
        %v474 = vpack.c.b16 %v422, %v420
        %v475 = vpack.c.b16 %v425, %v423
        %v476 = vpack.c.b16 %v426, %v424
        %v477 = vpack.c.b16 %v429, %v427
        %v478 = vpack.c.b16 %v430, %v428
        %v479 = vpack.c.b16 %v433, %v431
        %v480 = vpack.c.b16 %v434, %v432
        %v481 = vpack.c.b16 %v437, %v435
        %v482 = vpack.c.b16 %v438, %v436
        %v483 = vpack.c.b16 %v441, %v439
        %v484 = vpack.c.b16 %v442, %v440
        %v485 = vpack.c.b16 %v445, %v443
        %v486 = vpack.c.b16 %v446, %v444
        %v487 = vpack.c.b16 %v449, %v447
        %v488 = vpack.c.b16 %v450, %v448
        %v489 = vpack.c.b16 %v453, %v451
        %v490 = vpack.c.b16 %v454, %v452
        %v491 = vpack.c.b16 %v457, %v455
        %v492 = vpack.c.b16 %v458, %v456
        %v493 = vpack.c.b16 %v461, %v459
        %v494 = vpack.c.b16 %v462, %v460
        %527 = vmatpush.bf16.msra.mxu0 %v477
        %528 = vmatpush.bf16.msra.mxu0 %v475
        %529 = vmatpush.bf16.msra.mxu0 %v473
        %530 = vmatpush.bf16.msra.mxu0 %v471
        %531 = vmatpush.bf16.msra.mxu0 %v469
        %532 = vmatpush.bf16.msra.mxu0 %v467
        %533 = vmatpush.bf16.msra.mxu0 %v465
        %534 = vmatpush.bf16.msra.mxu0 %v463
        %535 = vmatmul.bf16.gmra.mxu0 %v363
        %v536 = vpop.f32.mrf.mxu0
        %v537 = vadd.f32 0.0, %v536
        %v538 = vpop.f32.mrf.mxu0
        %v539 = vadd.f32 0.0, %v538
        %540 = vdwg.mxu0
        %541 = vmatpush.bf16.msra.mxu0 %v493
        %542 = vmatpush.bf16.msra.mxu0 %v491
        %543 = vmatpush.bf16.msra.mxu0 %v489
        %544 = vmatpush.bf16.msra.mxu0 %v487
        %545 = vmatpush.bf16.msra.mxu0 %v485
        %546 = vmatpush.bf16.msra.mxu0 %v483
        %547 = vmatpush.bf16.msra.mxu0 %v481
        %548 = vmatpush.bf16.msra.mxu0 %v479
        %549 = vmatmul.bf16.gmra.mxu0 %v364
        %v550 = vpop.f32.mrf.mxu0
        %v551 = vadd.f32 %v537, %v550
        %v552 = vpop.f32.mrf.mxu0
        %v553 = vadd.f32 %v539, %v552
        %554 = vdwg.mxu0
        %555 = vmatpush.bf16.msra.mxu0 %v478
        %556 = vmatpush.bf16.msra.mxu0 %v476
        %557 = vmatpush.bf16.msra.mxu0 %v474
        %558 = vmatpush.bf16.msra.mxu0 %v472
        %559 = vmatpush.bf16.msra.mxu0 %v470
        %560 = vmatpush.bf16.msra.mxu0 %v468
        %561 = vmatpush.bf16.msra.mxu0 %v466
        %562 = vmatpush.bf16.msra.mxu0 %v464
        %563 = vmatmul.bf16.gmra.mxu0 %v363
        %v564 = vpop.f32.mrf.mxu0
        %v565 = vadd.f32 0.0, %v564
        %v566 = vpop.f32.mrf.mxu0
        %v567 = vadd.f32 0.0, %v566
        %568 = vdwg.mxu0
        %569 = vmatpush.bf16.msra.mxu0 %v494
        %570 = vmatpush.bf16.msra.mxu0 %v492
        %571 = vmatpush.bf16.msra.mxu0 %v490
        %572 = vmatpush.bf16.msra.mxu0 %v488
        %573 = vmatpush.bf16.msra.mxu0 %v486
        %574 = vmatpush.bf16.msra.mxu0 %v484
        %575 = vmatpush.bf16.msra.mxu0 %v482
        %576 = vmatpush.bf16.msra.mxu0 %v480
        %577 = vmatmul.bf16.gmra.mxu0 %v364
        %v578 = vpop.f32.mrf.mxu0
        %v579 = vadd.f32 %v565, %v578
        %v580 = vpop.f32.mrf.mxu0
        %v581 = vadd.f32 %v567, %v580
        %582 = vdwg.mxu0
        %v583 = vadd.f32 %v321, %v551
        %v584 = vadd.f32 %v322, %v579
        %v585 = vadd.f32 %v323, %v553
        %v586 = vadd.f32 %v324, %v581
        %587 = vst [vmem:[#allocation2] sm:$0xff] %v583
        %588 = vst [vmem:[#allocation2 + $0x8] sm:$0xff] %v584
        %589 = vst [vmem:[#allocation2 + $0x10] sm:$0xff] %v585
        %590 = vst [vmem:[#allocation2 + $0x18] sm:$0xff] %v586
        %p591 = scmp.eq.s32.totalorder %s21, 2
        // Predicated region
        $region75: #{baseline_vit_forward.17} parent=65 // pred_check
          %p592 = pneg %p591
        $region76: #{baseline_vit_forward.17} parent=65 // pred_check_branch
          %594 = sbr.rel (%p592) target = $region78
        $region77: #{baseline_vit_forward.17} parent=65 // pred_region
          %v595 = vld [vmem:[#allocation2] sm:$0xff]
          %v596 = vld [vmem:[#allocation2 + $0x8] sm:$0xff]
          %v597 = vld [vmem:[#allocation2 + $0x10] sm:$0xff]
          %v598 = vld [vmem:[#allocation2 + $0x18] sm:$0xff]
          %v599 = vld [vmem:[%s297] sm:$0x3]
          %v601 = vperm.slane %v599, 0
          %v602 = vperm.slane %v599, 1
          %v605 = vadd.f32 %v595, %v601
          %v606 = vadd.f32 %v596, %v602
          %v607 = vadd.f32 %v597, %v601
          %v608 = vadd.f32 %v598, %v602
          %609 = vst [vmem:[%s308] sm:$0xff] %v605
          %610 = vst [vmem:[%s308 + $0x8] sm:$0xff] %v606
          %611 = vst [vmem:[%s308 + $0x10] sm:$0xff] %v607
          %612 = vst [vmem:[%s308 + $0x18] sm:$0xff] %v608
        $region78: #{baseline_vit_forward.17} parent=65 // pred_fallthru
          _
        %s613 = smul.u32 2, %s19
        %s614 = smul.u32 2, %s20
        %p615 = scmp.lt.s32.totalorder %s613, 1
        %s616 = scalar_select %p615, %s613, 1
        %p617 = scmp.lt.s32.totalorder %s614, 1
        %s618 = scalar_select %p617, %s614, 1
        %s619 = smul.addr %s616, 2
        %s620 = sadd.s32 %s618, %s619
        %s621 = smul.addr %s620, 8
        %s622 = scalar_lea.vmem %s3, %s621
        // Predicated region
        $region79: #{baseline_vit_forward.17} parent=65 // pred_check
          %p623 = pneg %p135
        $region80: #{baseline_vit_forward.17} parent=65 // pred_check_branch
          %625 = sbr.rel (%p623) target = $region82
        $region81: #{baseline_vit_forward.17} parent=65 // pred_region
          %s626 = smul.u32 2, %s19
          %s627 = smul.u32 2, %s20
        $region82: #{baseline_vit_forward.17} parent=65 // pred_fallthru
          _
        // Predicated region
        $region83: #{baseline_vit_forward.17} parent=65 // pred_check
          %p628 = pneg %p135
        $region84: #{baseline_vit_forward.17} parent=65 // pred_check_branch
          %630 = sbr.rel (%p628) target = $region86
        $region85: #{baseline_vit_forward.17} parent=65 // pred_region
          %s631 = smul.u32 2, %s19
          %s632 = smul.u32 2, %s20
          %p633 = scmp.lt.s32.totalorder %s631, 1
          %s634 = scalar_select %p633, %s631, 1
          %p635 = scmp.lt.s32.totalorder %s632, 1
          %s636 = scalar_select %p635, %s632, 1
          %s637 = smul.addr %s634, 2
          %s638 = sadd.s32 %s636, %s637
          %s639 = smul.addr %s638, 8
          %s640 = scalar_lea.vmem %s3, %s639
        $region86: #{baseline_vit_forward.17} parent=65 // pred_fallthru
          _
      $region66: #{baseline_vit_forward.17} parent=5 // pred_fallthru
        _
      %p641 = scmp.le.s32.totalorder 2, %s9
      // Predicated region
      $region87: #{baseline_vit_forward.17} parent=5 // pred_check
        %p642 = pneg %p641
      $region88: #{baseline_vit_forward.17} parent=5 // pred_check_branch
        %644 = sbr.rel (%p642) target = $region90
      $region89: #{baseline_vit_forward.17} parent=5 // pred_region
        %s645 = ssub.s32 %s9, 2
      $region90: #{baseline_vit_forward.17} parent=5 // pred_fallthru
        _
    $region6: #{baseline_vit_forward.17} parent=1 // loop_footer
      %s13 = sadd.s32 1, %s9
    $region7: #{baseline_vit_forward.17} parent=1 // loop_footer_branch
      %8 = sbr.rel target = $region3
    $region8: #{baseline_vit_forward.17} parent=1 // loop_exit
      _

// kernel: baseline_vit_forward.18
$region0: #{baseline_vit_forward.18}
  #allocation0 [shape = 'u32[]', space=smem, size = 0x4, offset = 0x4, fixed_abs, tag = 'smem constant byte address 0x4 - core index']
  #allocation1 [shape = 'u32[72,128]{1,0:T(1,128)}', space=vmem, size = 0x9000, scoped, tag = 'internal scratch']
  #allocation2 [shape = 'f32[32,256]{1,0:T(8,128)}', space=vmem, size = 0x8000, scoped, tag = 'scratch operand']
  %s0 = inlined_call_operand.vmem [shape: f32[32,256], index: 0, kind: input, shape index: {}]
  %s1 = inlined_call_operand.vmem [shape: bf16[256,768], index: 1, kind: input, shape index: {}]
  %s2 = inlined_call_operand.vmem [shape: f32[1,256], index: 2, kind: input, shape index: {}]
  %s3 = inlined_call_operand.vmem [shape: f32[1,256], index: 3, kind: input, shape index: {}]
  %s4 = inlined_call_operand.vmem [shape: f32[1,768], index: 4, kind: input, shape index: {}]
  %s5 = inlined_call_operand.vmem [shape: bf16[32,768], index: 5, kind: output, shape index: {}]
  %s6 = sld [smem:[#allocation0]]
  $region133: #{baseline_vit_forward.18} parent=0
    _
  %s8 = ssub.s32 1, %s6
  %s9 = scalar_select 0, %s8, %s6
  $region1: #{baseline_vit_forward.18} parent=0
    #allocation3 [shape = 'u8[262144]{0}', space=vmem, size = 0x40000, scoped, tag = 'input window, operand 1']
    #allocation4 [shape = 'u8[32768]{0}', space=vmem, size = 0x8000, scoped, tag = 'output window, operand 0']
    loop: start=0, step=1, limit=5
    $region2: #{baseline_vit_forward.18} parent=1 // loop_pre_header
      _
    $region3: #{baseline_vit_forward.18} parent=1 // loop_header
      %s11 = sphi 0, %s15
      %p12 = scmp.ge.s32.totalorder %s11, 5
      %s18 = sphi 0, %s37
      %s19 = sphi 0, %s33
      %s20 = sphi 0, %s29
      %s21 = sphi 0, %s18
      %s22 = sphi 0, %s19
      %s23 = sphi 0, %s20
      %s24 = sphi 0, %s21
      %s25 = sphi 0, %s22
      %s26 = sphi 0, %s23
      %s42 = sphi 0, %s44
      %s45 = sphi 0, %s42
      %s46 = sphi 0, %s45
      %s62 = sphi 0, %s46
      %s70 = sphi 0, %s72
      %s73 = sphi 0, %s70
      %s74 = sphi 0, %s73
      %s90 = sphi 0, %s74
      %s96 = sphi 0, %s98
      %s99 = sphi 0, %s96
      %s100 = sphi 0, %s99
      %s116 = sphi 0, %s100
      %s122 = sphi 0, %s124
      %s125 = sphi 0, %s122
      %s126 = sphi 0, %s125
      %s142 = sphi 0, %s126
      %s148 = sphi 0, %s150
      %s151 = sphi 0, %s148
      %s152 = sphi 0, %s151
      %s168 = sphi 0, %s152
      %s176 = sphi 0, %s178
      %s179 = sphi 0, %s176
      %s180 = sphi 0, %s179
      %s196 = sphi 0, %s180
    $region4: #{baseline_vit_forward.18} parent=1 // loop_header_branch
      %14 = sbr.rel (%p12) target = $region8
    $region5: #{baseline_vit_forward.18} parent=1 // loop_body
      %s16 = ssub.s32 %s11, 1
      %s17 = ssub.s32 %s11, 2
      %s27 = sadd.s32 1, %s20
      %p28 = scmp.ge.s32.totalorder %s27, 1
      %s29 = scalar_select %p28, 0, %s27
      %s30 = sadd.s32 1, %s19
      %s31 = scalar_select %p28, %s30, %s19
      %p32 = scmp.ge.s32.totalorder %s31, 3
      %s33 = scalar_select %p32, 0, %s31
      %s34 = sadd.s32 1, %s18
      %s35 = scalar_select %p32, %s34, %s18
      %p36 = scmp.ge.s32.totalorder %s35, 1
      %s37 = scalar_select %p36, 0, %s35
      %s38 = ssub.s32 %s18, %s37
      %s39 = ssub.s32 %s20, %s29
      %s40 = sor.u32 %s38, %s39
      %p41 = scmp.eq.s32.totalorder %s40, 0
      %s43 = sadd.s32 %s42, 1
      %s44 = scalar_select %p41, %s42, %s43
      %p47 = pneg %p41
      %p48 = scmp.eq.s32.totalorder %s11, 2
      %p49 = por %p47, %p48
      %p50 = scmp.ne.s32.totalorder %s42, %s45
      %p51 = scmp.eq.s32.totalorder %s11, 0
      %p52 = por %p50, %p51
      %p53 = scmp.ne.s32.totalorder %s42, %s45
      %p54 = scmp.eq.s32.totalorder %s16, 2
      %p55 = por %p53, %p54
      %p56 = scmp.ne.s32.totalorder %s45, %s46
      %p57 = scmp.eq.s32.totalorder %s16, 0
      %p58 = por %p56, %p57
      %p59 = scmp.ne.s32.totalorder %s45, %s46
      %p60 = scmp.eq.s32.totalorder %s17, 2
      %p61 = por %p59, %p60
      %p63 = scmp.ne.s32.totalorder %s46, %s62
      %p64 = scmp.eq.s32.totalorder %s17, 0
      %p65 = por %p63, %p64
      %s66 = ssub.s32 %s20, %s29
      %s67 = ssub.s32 %s19, %s33
      %s68 = sor.u32 %s66, %s67
      %p69 = scmp.eq.s32.totalorder %s68, 0
      %s71 = sadd.s32 %s70, 1
      %s72 = scalar_select %p69, %s70, %s71
      %p75 = pneg %p69
      %p76 = scmp.eq.s32.totalorder %s11, 2
      %p77 = por %p75, %p76
      %p78 = scmp.ne.s32.totalorder %s70, %s73
      %p79 = scmp.eq.s32.totalorder %s11, 0
      %p80 = por %p78, %p79
      %p81 = scmp.ne.s32.totalorder %s70, %s73
      %p82 = scmp.eq.s32.totalorder %s16, 2
      %p83 = por %p81, %p82
      %p84 = scmp.ne.s32.totalorder %s73, %s74
      %p85 = scmp.eq.s32.totalorder %s16, 0
      %p86 = por %p84, %p85
      %p87 = scmp.ne.s32.totalorder %s73, %s74
      %p88 = scmp.eq.s32.totalorder %s17, 2
      %p89 = por %p87, %p88
      %p91 = scmp.ne.s32.totalorder %s74, %s90
      %p92 = scmp.eq.s32.totalorder %s17, 0
      %p93 = por %p91, %p92
      %s94 = ssub.s32 %s20, %s29
      %p95 = scmp.eq.s32.totalorder %s94, 0
      %s97 = sadd.s32 %s96, 1
      %s98 = scalar_select %p95, %s96, %s97
      %p101 = pneg %p95
      %p102 = scmp.eq.s32.totalorder %s11, 2
      %p103 = por %p101, %p102
      %p104 = scmp.ne.s32.totalorder %s96, %s99
      %p105 = scmp.eq.s32.totalorder %s11, 0
      %p106 = por %p104, %p105
      %p107 = scmp.ne.s32.totalorder %s96, %s99
      %p108 = scmp.eq.s32.totalorder %s16, 2
      %p109 = por %p107, %p108
      %p110 = scmp.ne.s32.totalorder %s99, %s100
      %p111 = scmp.eq.s32.totalorder %s16, 0
      %p112 = por %p110, %p111
      %p113 = scmp.ne.s32.totalorder %s99, %s100
      %p114 = scmp.eq.s32.totalorder %s17, 2
      %p115 = por %p113, %p114
      %p117 = scmp.ne.s32.totalorder %s100, %s116
      %p118 = scmp.eq.s32.totalorder %s17, 0
      %p119 = por %p117, %p118
      %s120 = ssub.s32 %s20, %s29
      %p121 = scmp.eq.s32.totalorder %s120, 0
      %s123 = sadd.s32 %s122, 1
      %s124 = scalar_select %p121, %s122, %s123
      %p127 = pneg %p121
      %p128 = scmp.eq.s32.totalorder %s11, 2
      %p129 = por %p127, %p128
      %p130 = scmp.ne.s32.totalorder %s122, %s125
      %p131 = scmp.eq.s32.totalorder %s11, 0
      %p132 = por %p130, %p131
      %p133 = scmp.ne.s32.totalorder %s122, %s125
      %p134 = scmp.eq.s32.totalorder %s16, 2
      %p135 = por %p133, %p134
      %p136 = scmp.ne.s32.totalorder %s125, %s126
      %p137 = scmp.eq.s32.totalorder %s16, 0
      %p138 = por %p136, %p137
      %p139 = scmp.ne.s32.totalorder %s125, %s126
      %p140 = scmp.eq.s32.totalorder %s17, 2
      %p141 = por %p139, %p140
      %p143 = scmp.ne.s32.totalorder %s126, %s142
      %p144 = scmp.eq.s32.totalorder %s17, 0
      %p145 = por %p143, %p144
      %s146 = ssub.s32 %s19, %s33
      %p147 = scmp.eq.s32.totalorder %s146, 0
      %s149 = sadd.s32 %s148, 1
      %s150 = scalar_select %p147, %s148, %s149
      %p153 = pneg %p147
      %p154 = scmp.eq.s32.totalorder %s11, 2
      %p155 = por %p153, %p154
      %p156 = scmp.ne.s32.totalorder %s148, %s151
      %p157 = scmp.eq.s32.totalorder %s11, 0
      %p158 = por %p156, %p157
      %p159 = scmp.ne.s32.totalorder %s148, %s151
      %p160 = scmp.eq.s32.totalorder %s16, 2
      %p161 = por %p159, %p160
      %p162 = scmp.ne.s32.totalorder %s151, %s152
      %p163 = scmp.eq.s32.totalorder %s16, 0
      %p164 = por %p162, %p163
      %p165 = scmp.ne.s32.totalorder %s151, %s152
      %p166 = scmp.eq.s32.totalorder %s17, 2
      %p167 = por %p165, %p166
      %p169 = scmp.ne.s32.totalorder %s152, %s168
      %p170 = scmp.eq.s32.totalorder %s17, 0
      %p171 = por %p169, %p170
      %s172 = ssub.s32 %s18, %s37
      %s173 = ssub.s32 %s19, %s33
      %s174 = sor.u32 %s172, %s173
      %p175 = scmp.eq.s32.totalorder %s174, 0
      %s177 = sadd.s32 %s176, 1
      %s178 = scalar_select %p175, %s176, %s177
      %p181 = pneg %p175
      %p182 = scmp.eq.s32.totalorder %s11, 2
      %p183 = por %p181, %p182
      %p184 = scmp.ne.s32.totalorder %s176, %s179
      %p185 = scmp.eq.s32.totalorder %s11, 0
      %p186 = por %p184, %p185
      %p187 = scmp.ne.s32.totalorder %s176, %s179
      %p188 = scmp.eq.s32.totalorder %s16, 2
      %p189 = por %p187, %p188
      %p190 = scmp.ne.s32.totalorder %s179, %s180
      %p191 = scmp.eq.s32.totalorder %s16, 0
      %p192 = por %p190, %p191
      %p193 = scmp.ne.s32.totalorder %s179, %s180
      %p194 = scmp.eq.s32.totalorder %s17, 2
      %p195 = por %p193, %p194
      %p197 = scmp.ne.s32.totalorder %s180, %s196
      %p198 = scmp.eq.s32.totalorder %s17, 0
      %p199 = por %p197, %p198
      %p200 = scmp.le.s32.totalorder 1, %s11
      %p201 = scmp.lt.s32.totalorder %s11, 4
      %p202 = pnand %p200, %p201
      %p203 = pneg %p202
      // Predicated region
      $region9: #{baseline_vit_forward.18} parent=5 // pred_check
        _
      $region10: #{baseline_vit_forward.18} parent=5 // pred_check_branch
        %205 = sbr.rel (%p202) target = $region12
      $region11: #{baseline_vit_forward.18} parent=5 // pred_region
        %s206 = ssub.s32 %s11, 1
        // Predicated region
        $region13: #{baseline_vit_forward.18} parent=11 // pred_check
          %p207 = pneg %p58
        $region14: #{baseline_vit_forward.18} parent=11 // pred_check_branch
          %209 = sbr.rel (%p207) target = $region16
        $region15: #{baseline_vit_forward.18} parent=11 // pred_region
          %s210 = smul.u32 4, %s21
          %s211 = smul.u32 2, %s23
          %p212 = scmp.lt.s32.totalorder %s210, 3
          %s213 = scalar_select %p212, %s210, 3
          %p214 = scmp.lt.s32.totalorder %s211, 1
          %s215 = scalar_select %p214, %s211, 1
          %s216 = smul.addr %s213, 2
          %s217 = sadd.s32 %s215, %s216
          %s218 = smul.addr %s217, 8
          %s219 = scalar_lea.vmem %s0, %s218
          %s220 = smul.u32 4, %s21
          %s221 = smul.u32 2, %s23
        $region16: #{baseline_vit_forward.18} parent=11 // pred_fallthru
          _
        // Predicated region
        $region17: #{baseline_vit_forward.18} parent=11 // pred_check
          %p222 = pneg %p112
        $region18: #{baseline_vit_forward.18} parent=11 // pred_check_branch
          %224 = sbr.rel (%p222) target = $region20
        $region19: #{baseline_vit_forward.18} parent=11 // pred_region
          %s225 = smul.u32 2, %s23
          %p226 = scmp.lt.s32.totalorder %s225, 1
          %s227 = scalar_select %p226, %s225, 1
          %s228 = scalar_lea.vmem %s2, %s227
          %s229 = smul.u32 2, %s23
        $region20: #{baseline_vit_forward.18} parent=11 // pred_fallthru
          _
        // Predicated region
        $region21: #{baseline_vit_forward.18} parent=11 // pred_check
          %p230 = pneg %p138
        $region22: #{baseline_vit_forward.18} parent=11 // pred_check_branch
          %232 = sbr.rel (%p230) target = $region24
        $region23: #{baseline_vit_forward.18} parent=11 // pred_region
          %s233 = smul.u32 2, %s23
          %p234 = scmp.lt.s32.totalorder %s233, 1
          %s235 = scalar_select %p234, %s233, 1
          %s236 = scalar_lea.vmem %s3, %s235
          %s237 = smul.u32 2, %s23
        $region24: #{baseline_vit_forward.18} parent=11 // pred_fallthru
          _
      $region12: #{baseline_vit_forward.18} parent=5 // pred_fallthru
        _
      %p238 = scmp.lt.s32.totalorder %s11, 3
      // Predicated region
      $region25: #{baseline_vit_forward.18} parent=5 // pred_check
        %p239 = pneg %p238
      $region26: #{baseline_vit_forward.18} parent=5 // pred_check_branch
        %241 = sbr.rel (%p239) target = $region28
      $region27: #{baseline_vit_forward.18} parent=5 // pred_region
        // Predicated region
        $region29: #{baseline_vit_forward.18} parent=27 // pred_check
          %p242 = pneg %p80
        $region30: #{baseline_vit_forward.18} parent=27 // pred_check_branch
          %244 = sbr.rel (%p242) target = $region32
        $region31: #{baseline_vit_forward.18} parent=27 // pred_region
          %s245 = sand.u32 %s70, 1
          %s246 = sand.u32 %s70, 1
          %s247 = smul.addr %s246, 256
          %s248 = scalar_lea.vmem [#allocation3], %s247
          %s249 = smul.u32 32, %s20
          %s250 = smul.u32 2, %s19
          %s251 = smul.addr %s249, 6
          %s252 = sadd.s32 %s250, %s251
          %s253 = smul.addr %s252, 4
          %s254 = scalar_lea.vmem %s1, %s253
          // Predicated region
          $region33: #{baseline_vit_forward.18} parent=31 // pred_check
            _
          $region34: #{baseline_vit_forward.18} parent=31 // pred_check_branch
            %256 = sbr.rel (0) target = $region36
          $region35: #{baseline_vit_forward.18} parent=31 // pred_region
            // Predicated region
            $region37: #{baseline_vit_forward.18} parent=35 // pred_check
              _
            $region38: #{baseline_vit_forward.18} parent=35 // pred_check_branch
              %258 = sbr.rel (0) target = $region40
            $region39: #{baseline_vit_forward.18} parent=35 // pred_region
              // Predicated region
              $region52: #{baseline_vit_forward.18} parent=39 // pred_check
                _
              $region53: #{baseline_vit_forward.18} parent=39 // pred_check_branch
                %336 = sbr.rel (0) target = $region55
              $region54: #{baseline_vit_forward.18} parent=39 // pred_region
                loop: start=0, step=1, limit=1
                $region56: #{baseline_vit_forward.18} parent=54 // loop_pre_header
                  _
                $region57: #{baseline_vit_forward.18} parent=54 // loop_header
                  %s338 = sphi 0, %s342
                  %p339 = scmp.ge.s32.totalorder %s338, 1
                  %s343 = sphi %s254, %s254
                  %s344 = sphi %s248, %s248
                $region58: #{baseline_vit_forward.18} parent=54 // loop_header_branch
                  %341 = sbr.rel (%p339) target = $region62
                $region59: #{baseline_vit_forward.18} parent=54 // loop_body
                  %v345 = vld [vmem:[%s343] sm:$0xff]
                  %346 = vst [vmem:[%s344] sm:$0xff] %v345
                  %v347 = vld [vmem:[%s343 + $0x18] sm:$0xff]
                  %348 = vst [vmem:[%s344 + $0x8] sm:$0xff] %v347
                  %v349 = vld [vmem:[%s343 + $0x30] sm:$0xff]
                  %350 = vst [vmem:[%s344 + $0x10] sm:$0xff] %v349
                  %v351 = vld [vmem:[%s343 + $0x48] sm:$0xff]
                  %352 = vst [vmem:[%s344 + $0x18] sm:$0xff] %v351
                  %v353 = vld [vmem:[%s343 + $0x60] sm:$0xff]
                  %354 = vst [vmem:[%s344 + $0x20] sm:$0xff] %v353
                  %v355 = vld [vmem:[%s343 + $0x78] sm:$0xff]
                  %356 = vst [vmem:[%s344 + $0x28] sm:$0xff] %v355
                  %v357 = vld [vmem:[%s343 + $0x90] sm:$0xff]
                  %358 = vst [vmem:[%s344 + $0x30] sm:$0xff] %v357
                  %v359 = vld [vmem:[%s343 + $0xa8] sm:$0xff]
                  %360 = vst [vmem:[%s344 + $0x38] sm:$0xff] %v359
                  %v361 = vld [vmem:[%s343 + $0xc0] sm:$0xff]
                  %362 = vst [vmem:[%s344 + $0x40] sm:$0xff] %v361
                  %v363 = vld [vmem:[%s343 + $0xd8] sm:$0xff]
                  %364 = vst [vmem:[%s344 + $0x48] sm:$0xff] %v363
                  %v365 = vld [vmem:[%s343 + $0xf0] sm:$0xff]
                  %366 = vst [vmem:[%s344 + $0x50] sm:$0xff] %v365
                  %v367 = vld [vmem:[%s343 + $0x108] sm:$0xff]
                  %368 = vst [vmem:[%s344 + $0x58] sm:$0xff] %v367
                  %v369 = vld [vmem:[%s343 + $0x120] sm:$0xff]
                  %370 = vst [vmem:[%s344 + $0x60] sm:$0xff] %v369
                  %v371 = vld [vmem:[%s343 + $0x138] sm:$0xff]
                  %372 = vst [vmem:[%s344 + $0x68] sm:$0xff] %v371
                  %v373 = vld [vmem:[%s343 + $0x150] sm:$0xff]
                  %374 = vst [vmem:[%s344 + $0x70] sm:$0xff] %v373
                  %v375 = vld [vmem:[%s343 + $0x168] sm:$0xff]
                  %376 = vst [vmem:[%s344 + $0x78] sm:$0xff] %v375
                  %v377 = vld [vmem:[%s343 + $0x180] sm:$0xff]
                  %378 = vst [vmem:[%s344 + $0x80] sm:$0xff] %v377
                  %v379 = vld [vmem:[%s343 + $0x198] sm:$0xff]
                  %380 = vst [vmem:[%s344 + $0x88] sm:$0xff] %v379
                  %v381 = vld [vmem:[%s343 + $0x1b0] sm:$0xff]
                  %382 = vst [vmem:[%s344 + $0x90] sm:$0xff] %v381
                  %v383 = vld [vmem:[%s343 + $0x1c8] sm:$0xff]
                  %384 = vst [vmem:[%s344 + $0x98] sm:$0xff] %v383
                  %v385 = vld [vmem:[%s343 + $0x1e0] sm:$0xff]
                  %386 = vst [vmem:[%s344 + $0xa0] sm:$0xff] %v385
                  %v387 = vld [vmem:[%s343 + $0x1f8] sm:$0xff]
                  %388 = vst [vmem:[%s344 + $0xa8] sm:$0xff] %v387
                  %v389 = vld [vmem:[%s343 + $0x210] sm:$0xff]
                  %390 = vst [vmem:[%s344 + $0xb0] sm:$0xff] %v389
                  %v391 = vld [vmem:[%s343 + $0x228] sm:$0xff]
                  %392 = vst [vmem:[%s344 + $0xb8] sm:$0xff] %v391
                  %v393 = vld [vmem:[%s343 + $0x240] sm:$0xff]
                  %394 = vst [vmem:[%s344 + $0xc0] sm:$0xff] %v393
                  %v395 = vld [vmem:[%s343 + $0x258] sm:$0xff]
                  %396 = vst [vmem:[%s344 + $0xc8] sm:$0xff] %v395
                  %v397 = vld [vmem:[%s343 + $0x270] sm:$0xff]
                  %398 = vst [vmem:[%s344 + $0xd0] sm:$0xff] %v397
                  %v399 = vld [vmem:[%s343 + $0x288] sm:$0xff]
                  %400 = vst [vmem:[%s344 + $0xd8] sm:$0xff] %v399
                  %v401 = vld [vmem:[%s343 + $0x2a0] sm:$0xff]
                  %402 = vst [vmem:[%s344 + $0xe0] sm:$0xff] %v401
                  %v403 = vld [vmem:[%s343 + $0x2b8] sm:$0xff]
                  %404 = vst [vmem:[%s344 + $0xe8] sm:$0xff] %v403
                  %v405 = vld [vmem:[%s343 + $0x2d0] sm:$0xff]
                  %406 = vst [vmem:[%s344 + $0xf0] sm:$0xff] %v405
                  %v407 = vld [vmem:[%s343 + $0x2e8] sm:$0xff]
                  %408 = vst [vmem:[%s344 + $0xf8] sm:$0xff] %v407
                $region60: #{baseline_vit_forward.18} parent=54 // loop_footer
                  %s342 = sadd.s32 1, %s338
                $region61: #{baseline_vit_forward.18} parent=54 // loop_footer_branch
                  %337 = sbr.rel target = $region57
                $region62: #{baseline_vit_forward.18} parent=54 // loop_exit
                  _
              $region55: #{baseline_vit_forward.18} parent=39 // pred_fallthru
                _
              // Predicated region
              $region63: #{baseline_vit_forward.18} parent=39 // pred_check
                _
              $region64: #{baseline_vit_forward.18} parent=39 // pred_check_branch
                %410 = sbr.rel target = $region66
              $region65: #{baseline_vit_forward.18} parent=39 // pred_region
                _
              $region66: #{baseline_vit_forward.18} parent=39 // pred_fallthru
                _
            $region40: #{baseline_vit_forward.18} parent=35 // pred_fallthru
              _
            // Predicated region
            $region41: #{baseline_vit_forward.18} parent=35 // pred_check
              _
            $region42: #{baseline_vit_forward.18} parent=35 // pred_check_branch
              %260 = sbr.rel target = $region44
            $region43: #{baseline_vit_forward.18} parent=35 // pred_region
              %s262 = ssub.s32 256, 1
              loop: start=0, step=1, limit=1
              $region45: #{baseline_vit_forward.18} parent=43 // loop_pre_header
                _
              $region46: #{baseline_vit_forward.18} parent=43 // loop_header
                %s264 = sphi 0, %s268
                %p265 = scmp.ge.s32.totalorder %s264, 1
                %s269 = sphi %s254, %s254
                %s270 = sphi %s248, %s248
              $region47: #{baseline_vit_forward.18} parent=43 // loop_header_branch
                %267 = sbr.rel (%p265) target = $region51
              $region48: #{baseline_vit_forward.18} parent=43 // loop_body
                %v271 = vld [vmem:[%s269] sm:%s262]
                %272 = vst [vmem:[%s270] sm:%s262] %v271
                %v273 = vld [vmem:[%s269 + $0x18] sm:%s262]
                %274 = vst [vmem:[%s270 + $0x8] sm:%s262] %v273
                %v275 = vld [vmem:[%s269 + $0x30] sm:%s262]
                %276 = vst [vmem:[%s270 + $0x10] sm:%s262] %v275
                %v277 = vld [vmem:[%s269 + $0x48] sm:%s262]
                %278 = vst [vmem:[%s270 + $0x18] sm:%s262] %v277
                %v279 = vld [vmem:[%s269 + $0x60] sm:%s262]
                %280 = vst [vmem:[%s270 + $0x20] sm:%s262] %v279
                %v281 = vld [vmem:[%s269 + $0x78] sm:%s262]
                %282 = vst [vmem:[%s270 + $0x28] sm:%s262] %v281
                %v283 = vld [vmem:[%s269 + $0x90] sm:%s262]
                %284 = vst [vmem:[%s270 + $0x30] sm:%s262] %v283
                %v285 = vld [vmem:[%s269 + $0xa8] sm:%s262]
                %286 = vst [vmem:[%s270 + $0x38] sm:%s262] %v285
                %v287 = vld [vmem:[%s269 + $0xc0] sm:%s262]
                %288 = vst [vmem:[%s270 + $0x40] sm:%s262] %v287
                %v289 = vld [vmem:[%s269 + $0xd8] sm:%s262]
                %290 = vst [vmem:[%s270 + $0x48] sm:%s262] %v289
                %v291 = vld [vmem:[%s269 + $0xf0] sm:%s262]
                %292 = vst [vmem:[%s270 + $0x50] sm:%s262] %v291
                %v293 = vld [vmem:[%s269 + $0x108] sm:%s262]
                %294 = vst [vmem:[%s270 + $0x58] sm:%s262] %v293
                %v295 = vld [vmem:[%s269 + $0x120] sm:%s262]
                %296 = vst [vmem:[%s270 + $0x60] sm:%s262] %v295
                %v297 = vld [vmem:[%s269 + $0x138] sm:%s262]
                %298 = vst [vmem:[%s270 + $0x68] sm:%s262] %v297
                %v299 = vld [vmem:[%s269 + $0x150] sm:%s262]
                %300 = vst [vmem:[%s270 + $0x70] sm:%s262] %v299
                %v301 = vld [vmem:[%s269 + $0x168] sm:%s262]
                %302 = vst [vmem:[%s270 + $0x78] sm:%s262] %v301
                %v303 = vld [vmem:[%s269 + $0x180] sm:%s262]
                %304 = vst [vmem:[%s270 + $0x80] sm:%s262] %v303
                %v305 = vld [vmem:[%s269 + $0x198] sm:%s262]
                %306 = vst [vmem:[%s270 + $0x88] sm:%s262] %v305
                %v307 = vld [vmem:[%s269 + $0x1b0] sm:%s262]
                %308 = vst [vmem:[%s270 + $0x90] sm:%s262] %v307
                %v309 = vld [vmem:[%s269 + $0x1c8] sm:%s262]
                %310 = vst [vmem:[%s270 + $0x98] sm:%s262] %v309
                %v311 = vld [vmem:[%s269 + $0x1e0] sm:%s262]
                %312 = vst [vmem:[%s270 + $0xa0] sm:%s262] %v311
                %v313 = vld [vmem:[%s269 + $0x1f8] sm:%s262]
                %314 = vst [vmem:[%s270 + $0xa8] sm:%s262] %v313
                %v315 = vld [vmem:[%s269 + $0x210] sm:%s262]
                %316 = vst [vmem:[%s270 + $0xb0] sm:%s262] %v315
                %v317 = vld [vmem:[%s269 + $0x228] sm:%s262]
                %318 = vst [vmem:[%s270 + $0xb8] sm:%s262] %v317
                %v319 = vld [vmem:[%s269 + $0x240] sm:%s262]
                %320 = vst [vmem:[%s270 + $0xc0] sm:%s262] %v319
                %v321 = vld [vmem:[%s269 + $0x258] sm:%s262]
                %322 = vst [vmem:[%s270 + $0xc8] sm:%s262] %v321
                %v323 = vld [vmem:[%s269 + $0x270] sm:%s262]
                %324 = vst [vmem:[%s270 + $0xd0] sm:%s262] %v323
                %v325 = vld [vmem:[%s269 + $0x288] sm:%s262]
                %326 = vst [vmem:[%s270 + $0xd8] sm:%s262] %v325
                %v327 = vld [vmem:[%s269 + $0x2a0] sm:%s262]
                %328 = vst [vmem:[%s270 + $0xe0] sm:%s262] %v327
                %v329 = vld [vmem:[%s269 + $0x2b8] sm:%s262]
                %330 = vst [vmem:[%s270 + $0xe8] sm:%s262] %v329
                %v331 = vld [vmem:[%s269 + $0x2d0] sm:%s262]
                %332 = vst [vmem:[%s270 + $0xf0] sm:%s262] %v331
                %v333 = vld [vmem:[%s269 + $0x2e8] sm:%s262]
                %334 = vst [vmem:[%s270 + $0xf8] sm:%s262] %v333
              $region49: #{baseline_vit_forward.18} parent=43 // loop_footer
                %s268 = sadd.s32 1, %s264
              $region50: #{baseline_vit_forward.18} parent=43 // loop_footer_branch
                %263 = sbr.rel target = $region46
              $region51: #{baseline_vit_forward.18} parent=43 // loop_exit
                _
            $region44: #{baseline_vit_forward.18} parent=35 // pred_fallthru
              _
          $region36: #{baseline_vit_forward.18} parent=31 // pred_fallthru
            _
          %411 = vnop
        $region32: #{baseline_vit_forward.18} parent=27 // pred_fallthru
          _
        // Predicated region
        $region67: #{baseline_vit_forward.18} parent=27 // pred_check
          %p412 = pneg %p158
        $region68: #{baseline_vit_forward.18} parent=27 // pred_check_branch
          %414 = sbr.rel (%p412) target = $region70
        $region69: #{baseline_vit_forward.18} parent=27 // pred_region
          %s415 = smul.u32 2, %s19
          %p416 = scmp.lt.s32.totalorder %s415, 5
          %s417 = scalar_select %p416, %s415, 5
          %s418 = scalar_lea.vmem %s4, %s417
          %s419 = smul.u32 2, %s19
        $region70: #{baseline_vit_forward.18} parent=27 // pred_fallthru
          _
      $region28: #{baseline_vit_forward.18} parent=5 // pred_fallthru
        _
      %p420 = scmp.le.s32.totalorder 1, %s11
      %p421 = scmp.lt.s32.totalorder %s11, 4
      %p422 = pnand %p420, %p421
      %p423 = pneg %p422
      // Predicated region
      $region71: #{baseline_vit_forward.18} parent=5 // pred_check
        _
      $region72: #{baseline_vit_forward.18} parent=5 // pred_check_branch
        %425 = sbr.rel (%p422) target = $region74
      $region73: #{baseline_vit_forward.18} parent=5 // pred_region
        %s426 = ssub.s32 %s11, 1
        %s427 = sand.u32 %s73, 1
        %s428 = sand.u32 %s73, 1
        %s429 = smul.addr %s428, 256
        %s430 = scalar_lea.vmem [#allocation3], %s429
        // Predicated region
        $region75: #{baseline_vit_forward.18} parent=73 // pred_check
          %p431 = pneg %p86
        $region76: #{baseline_vit_forward.18} parent=73 // pred_check_branch
          %433 = sbr.rel (%p431) target = $region78
        $region77: #{baseline_vit_forward.18} parent=73 // pred_region
          _
        $region78: #{baseline_vit_forward.18} parent=73 // pred_fallthru
          _
        %s434 = smul.u32 4, %s21
        %s435 = smul.u32 2, %s23
        %p436 = scmp.lt.s32.totalorder %s434, 3
        %s437 = scalar_select %p436, %s434, 3
        %p438 = scmp.lt.s32.totalorder %s435, 1
        %s439 = scalar_select %p438, %s435, 1
        %s440 = smul.addr %s437, 2
        %s441 = sadd.s32 %s439, %s440
        %s442 = smul.addr %s441, 8
        %s443 = scalar_lea.vmem %s0, %s442
        %p444 = pneg %p58
        %p445 = pneg %p55
        %s446 = sand.u32 %s73, 1
        %s447 = sand.u32 %s73, 1
        %s448 = smul.addr %s447, 256
        %s449 = scalar_lea.vmem [#allocation3], %s448
        %p450 = pneg %p86
        %p451 = pneg %p83
        %s452 = smul.u32 2, %s23
        %p453 = scmp.lt.s32.totalorder %s452, 1
        %s454 = scalar_select %p453, %s452, 1
        %s455 = scalar_lea.vmem %s2, %s454
        %p456 = pneg %p112
        %p457 = pneg %p109
        %s458 = smul.u32 2, %s23
        %p459 = scmp.lt.s32.totalorder %s458, 1
        %s460 = scalar_select %p459, %s458, 1
        %s461 = scalar_lea.vmem %s3, %s460
        %p462 = pneg %p138
        %p463 = pneg %p135
        %s464 = smul.u32 2, %s22
        %p465 = scmp.lt.s32.totalorder %s464, 5
        %s466 = scalar_select %p465, %s464, 5
        %s467 = scalar_lea.vmem %s4, %s466
        %p468 = pneg %p164
        %p469 = pneg %p161
        %p470 = pneg %p192
        %p471 = pneg %p189
        %s472 = sand.u32 %s179, 1
        %s473 = sand.u32 %s179, 1
        %s474 = smul.addr %s473, 32
        %s475 = scalar_lea.vmem [#allocation4], %s474
        %s476 = smul.u32 4, %s21
        %s477 = smul.u32 2, %s23
        %p478 = scmp.lt.s32.totalorder %s476, 3
        %s479 = scalar_select %p478, %s476, 3
        %p480 = scmp.lt.s32.totalorder %s477, 1
        %s481 = scalar_select %p480, %s477, 1
        %s482 = smul.addr %s479, 2
        %s483 = sadd.s32 %s481, %s482
        %s484 = smul.addr %s483, 8
        %s485 = scalar_lea.vmem %s0, %s484
        %s486 = smul.u32 4, %s21
        %s487 = smul.u32 2, %s23
        %s488 = smul.u32 32, %s23
        %s489 = smul.u32 2, %s22
        %s490 = smul.u32 2, %s23
        %p491 = scmp.lt.s32.totalorder %s490, 1
        %s492 = scalar_select %p491, %s490, 1
        %s493 = scalar_lea.vmem %s2, %s492
        %s494 = smul.u32 2, %s23
        %s495 = smul.u32 2, %s23
        %p496 = scmp.lt.s32.totalorder %s495, 1
        %s497 = scalar_select %p496, %s495, 1
        %s498 = scalar_lea.vmem %s3, %s497
        %s499 = smul.u32 2, %s23
        %s500 = smul.u32 2, %s22
        %p501 = scmp.lt.s32.totalorder %s500, 5
        %s502 = scalar_select %p501, %s500, 5
        %s503 = scalar_lea.vmem %s4, %s502
        %s504 = smul.u32 2, %s22
        %s505 = smul.u32 4, %s21
        %s506 = smul.u32 2, %s22
        %v507 = vld [vmem:[%s485] sm:$0xff]
        %v508 = vld [vmem:[%s485 + $0x8] sm:$0xff]
        %v509 = vld [vmem:[%s485 + $0x10] sm:$0xff]
        %v510 = vld [vmem:[%s485 + $0x18] sm:$0xff]
        %v511 = vld [vmem:[%s485 + $0x20] sm:$0xff]
        %v512 = vld [vmem:[%s485 + $0x28] sm:$0xff]
        %v513 = vld [vmem:[%s485 + $0x30] sm:$0xff]
        %v514 = vld [vmem:[%s485 + $0x38] sm:$0xff]
        %v515 = vadd.f32 %v507, %v508
        %516 = vadd.xlane.f32.xlu0 %v515
        %v517 = vpop.xlane.xlu0 %516
        %v518 = vadd.f32 %v509, %v510
        %519 = vadd.xlane.f32.xlu0 %v518
        %v520 = vpop.xlane.xlu0 %519
        %v521 = vadd.f32 %v511, %v512
        %522 = vadd.xlane.f32.xlu0 %v521
        %v523 = vpop.xlane.xlu0 %522
        %v524 = vadd.f32 %v513, %v514
        %525 = vadd.xlane.f32.xlu0 %v524
        %v526 = vpop.xlane.xlu0 %525
        %v527 = vrcp.pop 256.0
        %v528 = vmul.f32 256.0, %v527
        %v529 = vsub.f32 1.0, %v528
        %v530 = vmul.f32 %v527, %v529
        %v531 = vadd.f32 %v527, %v530
        %vm532 = vweird.f32 %v527
        %v533 = vsel %vm532, %v527, %v531
        %v534 = vmul.f32 %v517, %v533
        %v535 = vmul.f32 %v520, %v533
        %v536 = vmul.f32 %v523, %v533
        %v537 = vmul.f32 %v526, %v533
        %v538 = vsub.f32 %v507, %v534
        %v539 = vsub.f32 %v508, %v534
        %v540 = vsub.f32 %v509, %v535
        %v541 = vsub.f32 %v510, %v535
        %v542 = vsub.f32 %v511, %v536
        %v543 = vsub.f32 %v512, %v536
        %v544 = vsub.f32 %v513, %v537
        %v545 = vsub.f32 %v514, %v537
        %v546 = vmul.f32 %v538, %v538
        %v547 = vmul.f32 %v539, %v539
        %v548 = vmul.f32 %v540, %v540
        %v549 = vmul.f32 %v541, %v541
        %v550 = vmul.f32 %v542, %v542
        %v551 = vmul.f32 %v543, %v543
        %v552 = vmul.f32 %v544, %v544
        %v553 = vmul.f32 %v545, %v545
        %v554 = vadd.f32 %v546, %v547
        %555 = vadd.xlane.f32.xlu0 %v554
        %v556 = vpop.xlane.xlu0 %555
        %v557 = vadd.f32 %v548, %v549
        %558 = vadd.xlane.f32.xlu0 %v557
        %v559 = vpop.xlane.xlu0 %558
        %v560 = vadd.f32 %v550, %v551
        %561 = vadd.xlane.f32.xlu0 %v560
        %v562 = vpop.xlane.xlu0 %561
        %v563 = vadd.f32 %v552, %v553
        %564 = vadd.xlane.f32.xlu0 %v563
        %v565 = vpop.xlane.xlu0 %564
        %v566 = vmul.f32 %v556, %v533
        %v567 = vmul.f32 %v559, %v533
        %v568 = vmul.f32 %v562, %v533
        %v569 = vmul.f32 %v565, %v533
        %v570 = vadd.f32 %v566, 1e-06
        %v571 = vadd.f32 %v567, 1e-06
        %v572 = vadd.f32 %v568, 1e-06
        %v573 = vadd.f32 %v569, 1e-06
        %v574 = vrsqrt.pop %v570
        %v575 = vmul.f32 %v574, %v570
        %v576 = vmul.f32 %v575, %v574
        %v577 = vmul.f32 0.5, %v576
        %v578 = vsub.f32 1.5, %v577
        %v579 = vmul.f32 %v574, %v578
        %vm580 = vweird.f32 %v570
        %vm581 = vweird.f32 %v574
        %vm582 = vmor %vm580, %vm581
        %v583 = vsel %vm582, %v574, %v579
        %v584 = vrsqrt.pop %v571
        %v585 = vmul.f32 %v584, %v571
        %v586 = vmul.f32 %v585, %v584
        %v587 = vmul.f32 0.5, %v586
        %v588 = vsub.f32 1.5, %v587
        %v589 = vmul.f32 %v584, %v588
        %vm590 = vweird.f32 %v571
        %vm591 = vweird.f32 %v584
        %vm592 = vmor %vm590, %vm591
        %v593 = vsel %vm592, %v584, %v589
        %v594 = vrsqrt.pop %v572
        %v595 = vmul.f32 %v594, %v572
        %v596 = vmul.f32 %v595, %v594
        %v597 = vmul.f32 0.5, %v596
        %v598 = vsub.f32 1.5, %v597
        %v599 = vmul.f32 %v594, %v598
        %vm600 = vweird.f32 %v572
        %vm601 = vweird.f32 %v594
        %vm602 = vmor %vm600, %vm601
        %v603 = vsel %vm602, %v594, %v599
        %v604 = vrsqrt.pop %v573
        %v605 = vmul.f32 %v604, %v573
        %v606 = vmul.f32 %v605, %v604
        %v607 = vmul.f32 0.5, %v606
        %v608 = vsub.f32 1.5, %v607
        %v609 = vmul.f32 %v604, %v608
        %vm610 = vweird.f32 %v573
        %vm611 = vweird.f32 %v604
        %vm612 = vmor %vm610, %vm611
        %v613 = vsel %vm612, %v604, %v609
        %v614 = vmul.f32 %v538, %v583
        %v615 = vmul.f32 %v539, %v583
        %v616 = vmul.f32 %v540, %v593
        %v617 = vmul.f32 %v541, %v593
        %v618 = vmul.f32 %v542, %v603
        %v619 = vmul.f32 %v543, %v603
        %v620 = vmul.f32 %v544, %v613
        %v621 = vmul.f32 %v545, %v613
        %v622 = vld [vmem:[%s493] sm:$0x3]
        %v624 = vperm.slane %v622, 0
        %v625 = vperm.slane %v622, 1
        %v628 = vmul.f32 %v614, %v624
        %v629 = vmul.f32 %v615, %v625
        %v630 = vmul.f32 %v616, %v624
        %v631 = vmul.f32 %v617, %v625
        %v632 = vmul.f32 %v618, %v624
        %v633 = vmul.f32 %v619, %v625
        %v634 = vmul.f32 %v620, %v624
        %v635 = vmul.f32 %v621, %v625
        %v636 = vld [vmem:[%s498] sm:$0x3]
        %v638 = vperm.slane %v636, 0
        %v639 = vperm.slane %v636, 1
        %v642 = vadd.f32 %v628, %v638
        %v643 = vadd.f32 %v629, %v639
        %v644 = vadd.f32 %v630, %v638
        %v645 = vadd.f32 %v631, %v639
        %v646 = vadd.f32 %v632, %v638
        %v647 = vadd.f32 %v633, %v639
        %v648 = vadd.f32 %v634, %v638
        %v649 = vadd.f32 %v635, %v639
        %v650 = vpack.c.bf16 %v644, %v642
        %v651 = vpack.c.bf16 %v645, %v643
        %v652 = vpack.c.bf16 %v648, %v646
        %v653 = vpack.c.bf16 %v649, %v647
        %p654 = scmp.eq.s32.totalorder %s23, 0
        // Predicated region
        $region79: #{baseline_vit_forward.18} parent=73 // pred_check
          %p655 = pneg %p654
        $region80: #{baseline_vit_forward.18} parent=73 // pred_check_branch
          %657 = sbr.rel (%p655) target = $region82
        $region81: #{baseline_vit_forward.18} parent=73 // pred_region
          %658 = vst [vmem:[#allocation2] sm:$0xff] 0.0
          %659 = vst [vmem:[#allocation2 + $0x8] sm:$0xff] 0.0
          %660 = vst [vmem:[#allocation2 + $0x10] sm:$0xff] 0.0
          %661 = vst [vmem:[#allocation2 + $0x18] sm:$0xff] 0.0
          %662 = vst [vmem:[#allocation2 + $0x20] sm:$0xff] 0.0
          %663 = vst [vmem:[#allocation2 + $0x28] sm:$0xff] 0.0
          %664 = vst [vmem:[#allocation2 + $0x30] sm:$0xff] 0.0
          %665 = vst [vmem:[#allocation2 + $0x38] sm:$0xff] 0.0
        $region82: #{baseline_vit_forward.18} parent=73 // pred_fallthru
          _
        %v666 = vld [vmem:[#allocation2] sm:$0xff]
        %v667 = vld [vmem:[#allocation2 + $0x8] sm:$0xff]
        %v668 = vld [vmem:[#allocation2 + $0x10] sm:$0xff]
        %v669 = vld [vmem:[#allocation2 + $0x18] sm:$0xff]
        %v670 = vld [vmem:[#allocation2 + $0x20] sm:$0xff]
        %v671 = vld [vmem:[#allocation2 + $0x28] sm:$0xff]
        %v672 = vld [vmem:[#allocation2 + $0x30] sm:$0xff]
        %v673 = vld [vmem:[#allocation2 + $0x38] sm:$0xff]
        %v674 = vld [vmem:[%s430] sm:$0xff]
        %v675 = vld [vmem:[%s430 + $0x8] sm:$0xff]
        %v676 = vld [vmem:[%s430 + $0x10] sm:$0xff]
        %v677 = vld [vmem:[%s430 + $0x18] sm:$0xff]
        %v678 = vld [vmem:[%s430 + $0x20] sm:$0xff]
        %v679 = vld [vmem:[%s430 + $0x28] sm:$0xff]
        %v680 = vld [vmem:[%s430 + $0x30] sm:$0xff]
        %v681 = vld [vmem:[%s430 + $0x38] sm:$0xff]
        %v682 = vld [vmem:[%s430 + $0x40] sm:$0xff]
        %v683 = vld [vmem:[%s430 + $0x48] sm:$0xff]
        %v684 = vld [vmem:[%s430 + $0x50] sm:$0xff]
        %v685 = vld [vmem:[%s430 + $0x58] sm:$0xff]
        %v686 = vld [vmem:[%s430 + $0x60] sm:$0xff]
        %v687 = vld [vmem:[%s430 + $0x68] sm:$0xff]
        %v688 = vld [vmem:[%s430 + $0x70] sm:$0xff]
        %v689 = vld [vmem:[%s430 + $0x78] sm:$0xff]
        %v690 = vld [vmem:[%s430 + $0x80] sm:$0xff]
        %v691 = vld [vmem:[%s430 + $0x88] sm:$0xff]
        %v692 = vld [vmem:[%s430 + $0x90] sm:$0xff]
        %v693 = vld [vmem:[%s430 + $0x98] sm:$0xff]
        %v694 = vld [vmem:[%s430 + $0xa0] sm:$0xff]
        %v695 = vld [vmem:[%s430 + $0xa8] sm:$0xff]
        %v696 = vld [vmem:[%s430 + $0xb0] sm:$0xff]
        %v697 = vld [vmem:[%s430 + $0xb8] sm:$0xff]
        %v698 = vld [vmem:[%s430 + $0xc0] sm:$0xff]
        %v699 = vld [vmem:[%s430 + $0xc8] sm:$0xff]
        %v700 = vld [vmem:[%s430 + $0xd0] sm:$0xff]
        %v701 = vld [vmem:[%s430 + $0xd8] sm:$0xff]
        %v702 = vld [vmem:[%s430 + $0xe0] sm:$0xff]
        %v703 = vld [vmem:[%s430 + $0xe8] sm:$0xff]
        %v704 = vld [vmem:[%s430 + $0xf0] sm:$0xff]
        %v705 = vld [vmem:[%s430 + $0xf8] sm:$0xff]
        %v738 = vunpack.c.l.b16 %v674
        %v739 = vunpack.c.h.b16 %v674
        %v740 = vunpack.c.l.b16 %v675
        %v741 = vunpack.c.h.b16 %v675
        %v742 = vunpack.c.l.b16 %v676
        %v743 = vunpack.c.h.b16 %v676
        %v744 = vunpack.c.l.b16 %v677
        %v745 = vunpack.c.h.b16 %v677
        %v746 = vunpack.c.l.b16 %v678
        %v747 = vunpack.c.h.b16 %v678
        %v748 = vunpack.c.l.b16 %v679
        %v749 = vunpack.c.h.b16 %v679
        %v750 = vunpack.c.l.b16 %v680
        %v751 = vunpack.c.h.b16 %v680
        %v752 = vunpack.c.l.b16 %v681
        %v753 = vunpack.c.h.b16 %v681
        %v754 = vunpack.c.l.b16 %v682
        %v755 = vunpack.c.h.b16 %v682
        %v756 = vunpack.c.l.b16 %v683
        %v757 = vunpack.c.h.b16 %v683
        %v758 = vunpack.c.l.b16 %v684
        %v759 = vunpack.c.h.b16 %v684
        %v760 = vunpack.c.l.b16 %v685
        %v761 = vunpack.c.h.b16 %v685
        %v762 = vunpack.c.l.b16 %v686
        %v763 = vunpack.c.h.b16 %v686
        %v764 = vunpack.c.l.b16 %v687
        %v765 = vunpack.c.h.b16 %v687
        %v766 = vunpack.c.l.b16 %v688
        %v767 = vunpack.c.h.b16 %v688
        %v768 = vunpack.c.l.b16 %v689
        %v769 = vunpack.c.h.b16 %v689
        %v770 = vunpack.c.l.b16 %v690
        %v771 = vunpack.c.h.b16 %v690
        %v772 = vunpack.c.l.b16 %v691
        %v773 = vunpack.c.h.b16 %v691
        %v774 = vunpack.c.l.b16 %v692
        %v775 = vunpack.c.h.b16 %v692
        %v776 = vunpack.c.l.b16 %v693
        %v777 = vunpack.c.h.b16 %v693
        %v778 = vunpack.c.l.b16 %v694
        %v779 = vunpack.c.h.b16 %v694
        %v780 = vunpack.c.l.b16 %v695
        %v781 = vunpack.c.h.b16 %v695
        %v782 = vunpack.c.l.b16 %v696
        %v783 = vunpack.c.h.b16 %v696
        %v784 = vunpack.c.l.b16 %v697
        %v785 = vunpack.c.h.b16 %v697
        %v786 = vunpack.c.l.b16 %v698
        %v787 = vunpack.c.h.b16 %v698
        %v788 = vunpack.c.l.b16 %v699
        %v789 = vunpack.c.h.b16 %v699
        %v790 = vunpack.c.l.b16 %v700
        %v791 = vunpack.c.h.b16 %v700
        %v792 = vunpack.c.l.b16 %v701
        %v793 = vunpack.c.h.b16 %v701
        %v794 = vunpack.c.l.b16 %v702
        %v795 = vunpack.c.h.b16 %v702
        %v796 = vunpack.c.l.b16 %v703
        %v797 = vunpack.c.h.b16 %v703
        %v798 = vunpack.c.l.b16 %v704
        %v799 = vunpack.c.h.b16 %v704
        %v800 = vunpack.c.l.b16 %v705
        %v801 = vunpack.c.h.b16 %v705
        %v802 = vpack.c.b16 %v740, %v738
        %v803 = vpack.c.b16 %v741, %v739
        %v804 = vpack.c.b16 %v744, %v742
        %v805 = vpack.c.b16 %v745, %v743
        %v806 = vpack.c.b16 %v748, %v746
        %v807 = vpack.c.b16 %v749, %v747
        %v808 = vpack.c.b16 %v752, %v750
        %v809 = vpack.c.b16 %v753, %v751
        %v810 = vpack.c.b16 %v756, %v754
        %v811 = vpack.c.b16 %v757, %v755
        %v812 = vpack.c.b16 %v760, %v758
        %v813 = vpack.c.b16 %v761, %v759
        %v814 = vpack.c.b16 %v764, %v762
        %v815 = vpack.c.b16 %v765, %v763
        %v816 = vpack.c.b16 %v768, %v766
        %v817 = vpack.c.b16 %v769, %v767
        %v818 = vpack.c.b16 %v772, %v770
        %v819 = vpack.c.b16 %v773, %v771
        %v820 = vpack.c.b16 %v776, %v774
        %v821 = vpack.c.b16 %v777, %v775
        %v822 = vpack.c.b16 %v780, %v778
        %v823 = vpack.c.b16 %v781, %v779
        %v824 = vpack.c.b16 %v784, %v782
        %v825 = vpack.c.b16 %v785, %v783
        %v826 = vpack.c.b16 %v788, %v786
        %v827 = vpack.c.b16 %v789, %v787
        %v828 = vpack.c.b16 %v792, %v790
        %v829 = vpack.c.b16 %v793, %v791
        %v830 = vpack.c.b16 %v796, %v794
        %v831 = vpack.c.b16 %v797, %v795
        %v832 = vpack.c.b16 %v800, %v798
        %v833 = vpack.c.b16 %v801, %v799
        %866 = vmatpush.bf16.msra.mxu0 %v816
        %867 = vmatpush.bf16.msra.mxu0 %v814
        %868 = vmatpush.bf16.msra.mxu0 %v812
        %869 = vmatpush.bf16.msra.mxu0 %v810
        %870 = vmatpush.bf16.msra.mxu0 %v808
        %871 = vmatpush.bf16.msra.mxu0 %v806
        %872 = vmatpush.bf16.msra.mxu0 %v804
        %873 = vmatpush.bf16.msra.mxu0 %v802
        %874 = vmatmul.bf16.gmra.mxu0 %v650
        %v875 = vpop.f32.mrf.mxu0
        %v876 = vadd.f32 0.0, %v875
        %v877 = vpop.f32.mrf.mxu0
        %v878 = vadd.f32 0.0, %v877
        %879 = vmatmul.bf16.gmra.mxu0 %v652
        %v880 = vpop.f32.mrf.mxu0
        %v881 = vadd.f32 0.0, %v880
        %v882 = vpop.f32.mrf.mxu0
        %v883 = vadd.f32 0.0, %v882
        %884 = vdwg.mxu0
        %885 = vmatpush.bf16.msra.mxu0 %v832
        %886 = vmatpush.bf16.msra.mxu0 %v830
        %887 = vmatpush.bf16.msra.mxu0 %v828
        %888 = vmatpush.bf16.msra.mxu0 %v826
        %889 = vmatpush.bf16.msra.mxu0 %v824
        %890 = vmatpush.bf16.msra.mxu0 %v822
        %891 = vmatpush.bf16.msra.mxu0 %v820
        %892 = vmatpush.bf16.msra.mxu0 %v818
        %893 = vmatmul.bf16.gmra.mxu0 %v651
        %v894 = vpop.f32.mrf.mxu0
        %v895 = vadd.f32 %v876, %v894
        %v896 = vpop.f32.mrf.mxu0
        %v897 = vadd.f32 %v878, %v896
        %898 = vmatmul.bf16.gmra.mxu0 %v653
        %v899 = vpop.f32.mrf.mxu0
        %v900 = vadd.f32 %v881, %v899
        %v901 = vpop.f32.mrf.mxu0
        %v902 = vadd.f32 %v883, %v901
        %903 = vdwg.mxu0
        %904 = vmatpush.bf16.msra.mxu0 %v817
        %905 = vmatpush.bf16.msra.mxu0 %v815
        %906 = vmatpush.bf16.msra.mxu0 %v813
        %907 = vmatpush.bf16.msra.mxu0 %v811
        %908 = vmatpush.bf16.msra.mxu0 %v809
        %909 = vmatpush.bf16.msra.mxu0 %v807
        %910 = vmatpush.bf16.msra.mxu0 %v805
        %911 = vmatpush.bf16.msra.mxu0 %v803
        %912 = vmatmul.bf16.gmra.mxu0 %v650
        %v913 = vpop.f32.mrf.mxu0
        %v914 = vadd.f32 0.0, %v913
        %v915 = vpop.f32.mrf.mxu0
        %v916 = vadd.f32 0.0, %v915
        %917 = vmatmul.bf16.gmra.mxu0 %v652
        %v918 = vpop.f32.mrf.mxu0
        %v919 = vadd.f32 0.0, %v918
        %v920 = vpop.f32.mrf.mxu0
        %v921 = vadd.f32 0.0, %v920
        %922 = vdwg.mxu0
        %923 = vmatpush.bf16.msra.mxu0 %v833
        %924 = vmatpush.bf16.msra.mxu0 %v831
        %925 = vmatpush.bf16.msra.mxu0 %v829
        %926 = vmatpush.bf16.msra.mxu0 %v827
        %927 = vmatpush.bf16.msra.mxu0 %v825
        %928 = vmatpush.bf16.msra.mxu0 %v823
        %929 = vmatpush.bf16.msra.mxu0 %v821
        %930 = vmatpush.bf16.msra.mxu0 %v819
        %931 = vmatmul.bf16.gmra.mxu0 %v651
        %v932 = vpop.f32.mrf.mxu0
        %v933 = vadd.f32 %v914, %v932
        %v934 = vpop.f32.mrf.mxu0
        %v935 = vadd.f32 %v916, %v934
        %936 = vmatmul.bf16.gmra.mxu0 %v653
        %v937 = vpop.f32.mrf.mxu0
        %v938 = vadd.f32 %v919, %v937
        %v939 = vpop.f32.mrf.mxu0
        %v940 = vadd.f32 %v921, %v939
        %941 = vdwg.mxu0
        %v942 = vadd.f32 %v666, %v895
        %v943 = vadd.f32 %v667, %v933
        %v944 = vadd.f32 %v668, %v897
        %v945 = vadd.f32 %v669, %v935
        %v946 = vadd.f32 %v670, %v900
        %v947 = vadd.f32 %v671, %v938
        %v948 = vadd.f32 %v672, %v902
        %v949 = vadd.f32 %v673, %v940
        %950 = vst [vmem:[#allocation2] sm:$0xff] %v942
        %951 = vst [vmem:[#allocation2 + $0x8] sm:$0xff] %v943
        %952 = vst [vmem:[#allocation2 + $0x10] sm:$0xff] %v944
        %953 = vst [vmem:[#allocation2 + $0x18] sm:$0xff] %v945
        %954 = vst [vmem:[#allocation2 + $0x20] sm:$0xff] %v946
        %955 = vst [vmem:[#allocation2 + $0x28] sm:$0xff] %v947
        %956 = vst [vmem:[#allocation2 + $0x30] sm:$0xff] %v948
        %957 = vst [vmem:[#allocation2 + $0x38] sm:$0xff] %v949
        // Predicated region
        $region83: #{baseline_vit_forward.18} parent=73 // pred_check
          %p958 = pneg %p654
        $region84: #{baseline_vit_forward.18} parent=73 // pred_check_branch
          %960 = sbr.rel (%p958) target = $region86
        $region85: #{baseline_vit_forward.18} parent=73 // pred_region
          %v961 = vld [vmem:[#allocation2] sm:$0xff]
          %v962 = vld [vmem:[#allocation2 + $0x8] sm:$0xff]
          %v963 = vld [vmem:[#allocation2 + $0x10] sm:$0xff]
          %v964 = vld [vmem:[#allocation2 + $0x18] sm:$0xff]
          %v965 = vld [vmem:[#allocation2 + $0x20] sm:$0xff]
          %v966 = vld [vmem:[#allocation2 + $0x28] sm:$0xff]
          %v967 = vld [vmem:[#allocation2 + $0x30] sm:$0xff]
          %v968 = vld [vmem:[#allocation2 + $0x38] sm:$0xff]
          %v969 = vld [vmem:[%s503] sm:$0x3]
          %v971 = vperm.slane %v969, 0
          %v972 = vperm.slane %v969, 1
          %v975 = vadd.f32 %v961, %v971
          %v976 = vadd.f32 %v962, %v972
          %v977 = vadd.f32 %v963, %v971
          %v978 = vadd.f32 %v964, %v972
          %v979 = vadd.f32 %v965, %v971
          %v980 = vadd.f32 %v966, %v972
          %v981 = vadd.f32 %v967, %v971
          %v982 = vadd.f32 %v968, %v972
          %v983 = vpack.c.bf16 %v976, %v975
          %v984 = vpack.c.bf16 %v978, %v977
          %v985 = vpack.c.bf16 %v980, %v979
          %v986 = vpack.c.bf16 %v982, %v981
          %987 = vst [vmem:[%s475] sm:$0xff] %v983
          %988 = vst [vmem:[%s475 + $0x8] sm:$0xff] %v984
          %989 = vst [vmem:[%s475 + $0x10] sm:$0xff] %v985
          %990 = vst [vmem:[%s475 + $0x18] sm:$0xff] %v986
        $region86: #{baseline_vit_forward.18} parent=73 // pred_fallthru
          _
        %s991 = sand.u32 %s179, 1
        %s992 = sand.u32 %s179, 1
        %s993 = smul.addr %s992, 32
        %s994 = scalar_lea.vmem [#allocation4], %s993
        // Predicated region
        $region87: #{baseline_vit_forward.18} parent=73 // pred_check
          %p995 = pneg %p189
        $region88: #{baseline_vit_forward.18} parent=73 // pred_check_branch
          %997 = sbr.rel (%p995) target = $region90
        $region89: #{baseline_vit_forward.18} parent=73 // pred_region
          %s998 = smul.u32 4, %s21
          %s999 = smul.u32 2, %s22
          %s1000 = smul.addr %s998, 6
          %s1001 = sadd.s32 %s999, %s1000
          %s1002 = smul.addr %s1001, 4
          %s1003 = scalar_lea.vmem %s5, %s1002
          // Predicated region
          $region91: #{baseline_vit_forward.18} parent=89 // pred_check
            _
          $region92: #{baseline_vit_forward.18} parent=89 // pred_check_branch
            %1005 = sbr.rel (0) target = $region94
          $region93: #{baseline_vit_forward.18} parent=89 // pred_region
            // Predicated region
            $region95: #{baseline_vit_forward.18} parent=93 // pred_check
              _
            $region96: #{baseline_vit_forward.18} parent=93 // pred_check_branch
              %1007 = sbr.rel (0) target = $region98
            $region97: #{baseline_vit_forward.18} parent=93 // pred_region
              // Predicated region
              $region110: #{baseline_vit_forward.18} parent=97 // pred_check
                _
              $region111: #{baseline_vit_forward.18} parent=97 // pred_check_branch
                %1029 = sbr.rel (0) target = $region113
              $region112: #{baseline_vit_forward.18} parent=97 // pred_region
                loop: start=0, step=1, limit=1
                $region114: #{baseline_vit_forward.18} parent=112 // loop_pre_header
                  _
                $region115: #{baseline_vit_forward.18} parent=112 // loop_header
                  %s1031 = sphi 0, %s1035
                  %p1032 = scmp.ge.s32.totalorder %s1031, 1
                  %s1036 = sphi %s994, %s994
                  %s1037 = sphi %s1003, %s1003
                $region116: #{baseline_vit_forward.18} parent=112 // loop_header_branch
                  %1034 = sbr.rel (%p1032) target = $region120
                $region117: #{baseline_vit_forward.18} parent=112 // loop_body
                  %v1038 = vld [vmem:[%s1036] sm:$0xff]
                  %1039 = vst [vmem:[%s1037] sm:$0xff] %v1038
                  %v1040 = vld [vmem:[%s1036 + $0x8] sm:$0xff]
                  %1041 = vst [vmem:[%s1037 + $0x18] sm:$0xff] %v1040
                  %v1042 = vld [vmem:[%s1036 + $0x10] sm:$0xff]
                  %1043 = vst [vmem:[%s1037 + $0x30] sm:$0xff] %v1042
                  %v1044 = vld [vmem:[%s1036 + $0x18] sm:$0xff]
                  %1045 = vst [vmem:[%s1037 + $0x48] sm:$0xff] %v1044
                $region118: #{baseline_vit_forward.18} parent=112 // loop_footer
                  %s1035 = sadd.s32 1, %s1031
                $region119: #{baseline_vit_forward.18} parent=112 // loop_footer_branch
                  %1030 = sbr.rel target = $region115
                $region120: #{baseline_vit_forward.18} parent=112 // loop_exit
                  _
              $region113: #{baseline_vit_forward.18} parent=97 // pred_fallthru
                _
              // Predicated region
              $region121: #{baseline_vit_forward.18} parent=97 // pred_check
                _
              $region122: #{baseline_vit_forward.18} parent=97 // pred_check_branch
                %1047 = sbr.rel target = $region124
              $region123: #{baseline_vit_forward.18} parent=97 // pred_region
                _
              $region124: #{baseline_vit_forward.18} parent=97 // pred_fallthru
                _
            $region98: #{baseline_vit_forward.18} parent=93 // pred_fallthru
              _
            // Predicated region
            $region99: #{baseline_vit_forward.18} parent=93 // pred_check
              _
            $region100: #{baseline_vit_forward.18} parent=93 // pred_check_branch
              %1009 = sbr.rel target = $region102
            $region101: #{baseline_vit_forward.18} parent=93 // pred_region
              %s1011 = ssub.s32 256, 1
              loop: start=0, step=1, limit=1
              $region103: #{baseline_vit_forward.18} parent=101 // loop_pre_header
                _
              $region104: #{baseline_vit_forward.18} parent=101 // loop_header
                %s1013 = sphi 0, %s1017
                %p1014 = scmp.ge.s32.totalorder %s1013, 1
                %s1018 = sphi %s994, %s994
                %s1019 = sphi %s1003, %s1003
              $region105: #{baseline_vit_forward.18} parent=101 // loop_header_branch
                %1016 = sbr.rel (%p1014) target = $region109
              $region106: #{baseline_vit_forward.18} parent=101 // loop_body
                %v1020 = vld [vmem:[%s1018] sm:%s1011]
                %1021 = vst [vmem:[%s1019] sm:%s1011] %v1020
                %v1022 = vld [vmem:[%s1018 + $0x8] sm:%s1011]
                %1023 = vst [vmem:[%s1019 + $0x18] sm:%s1011] %v1022
                %v1024 = vld [vmem:[%s1018 + $0x10] sm:%s1011]
                %1025 = vst [vmem:[%s1019 + $0x30] sm:%s1011] %v1024
                %v1026 = vld [vmem:[%s1018 + $0x18] sm:%s1011]
                %1027 = vst [vmem:[%s1019 + $0x48] sm:%s1011] %v1026
              $region107: #{baseline_vit_forward.18} parent=101 // loop_footer
                %s1017 = sadd.s32 1, %s1013
              $region108: #{baseline_vit_forward.18} parent=101 // loop_footer_branch
                %1012 = sbr.rel target = $region104
              $region109: #{baseline_vit_forward.18} parent=101 // loop_exit
                _
            $region102: #{baseline_vit_forward.18} parent=93 // pred_fallthru
              _
          $region94: #{baseline_vit_forward.18} parent=89 // pred_fallthru
            _
          %1048 = vnop
        $region90: #{baseline_vit_forward.18} parent=73 // pred_fallthru
          _
      $region74: #{baseline_vit_forward.18} parent=5 // pred_fallthru
        _
      %p1049 = scmp.le.s32.totalorder 2, %s11
      // Predicated region
      $region125: #{baseline_vit_forward.18} parent=5 // pred_check
        %p1050 = pneg %p1049
      $region126: #{baseline_vit_forward.18} parent=5 // pred_check_branch
        %1052 = sbr.rel (%p1050) target = $region128
      $region127: #{baseline_vit_forward.18} parent=5 // pred_region
        %s1053 = ssub.s32 %s11, 2
        // Predicated region
        $region129: #{baseline_vit_forward.18} parent=127 // pred_check
          %p1054 = pneg %p195
        $region130: #{baseline_vit_forward.18} parent=127 // pred_check_branch
          %1056 = sbr.rel (%p1054) target = $region132
        $region131: #{baseline_vit_forward.18} parent=127 // pred_region
          %s1057 = sand.u32 %s180, 1
          %s1058 = sand.u32 %s180, 1
          %s1059 = smul.addr %s1058, 32
          %s1060 = scalar_lea.vmem [#allocation4], %s1059
        $region132: #{baseline_vit_forward.18} parent=127 // pred_fallthru
          _
      $region128: #{baseline_vit_forward.18} parent=5 // pred_fallthru
        _
    $region6: #{baseline_vit_forward.18} parent=1 // loop_footer
      %s15 = sadd.s32 1, %s11
    $region7: #{baseline_vit_forward.18} parent=1 // loop_footer_branch
      %10 = sbr.rel target = $region3
    $region8: #{baseline_vit_forward.18} parent=1 // loop_exit
      _

// kernel: baseline_vit_forward.19
$region0: #{baseline_vit_forward.19}
  #allocation0 [shape = 'u32[]', space=smem, size = 0x4, offset = 0x4, fixed_abs, tag = 'smem constant byte address 0x4 - core index']
  #allocation1 [shape = 'u32[72,128]{1,0:T(1,128)}', space=vmem, size = 0x9000, scoped, tag = 'internal scratch']
  %s0 = inlined_call_operand.vmem [shape: bf16[2,4,16,64], index: 0, kind: input, shape index: {}]
  %s1 = inlined_call_operand.vmem [shape: bf16[2,4,16,64], index: 1, kind: input, shape index: {}]
  %s2 = inlined_call_operand.vmem [shape: bf16[2,4,16,64], index: 2, kind: input, shape index: {}]
  %s3 = inlined_call_operand.vmem [shape: bf16[2,4,16,64], index: 3, kind: output, shape index: {}]
  %s4 = sld [smem:[#allocation0]]
  $region45: #{baseline_vit_forward.19} parent=0
    _
  %s6 = ssub.s32 1, %s4
  %s7 = scalar_select 0, %s6, %s4
  loop: start=0, step=1, limit=10
  $region2: #{baseline_vit_forward.19} parent=0 // loop_pre_header
    _
  $region3: #{baseline_vit_forward.19} parent=0 // loop_header
    %s9 = sphi 0, %s13
    %p10 = scmp.ge.s32.totalorder %s9, 10
    %s16 = sphi 0, %s28
    %s17 = sphi 0, %s24
    %s18 = sphi 0, %s16
    %s19 = sphi 0, %s17
    %s20 = sphi 0, %s18
    %s21 = sphi 0, %s19
    %s33 = sphi 0, %s35
    %s36 = sphi 0, %s33
    %s37 = sphi 0, %s36
    %s53 = sphi 0, %s37
    %s61 = sphi 0, %s63
    %s64 = sphi 0, %s61
    %s65 = sphi 0, %s64
    %s81 = sphi 0, %s65
    %s89 = sphi 0, %s91
    %s92 = sphi 0, %s89
    %s93 = sphi 0, %s92
    %s109 = sphi 0, %s93
    %s117 = sphi 0, %s119
    %s120 = sphi 0, %s117
    %s121 = sphi 0, %s120
    %s137 = sphi 0, %s121
  $region4: #{baseline_vit_forward.19} parent=0 // loop_header_branch
    %12 = sbr.rel (%p10) target = $region8
  $region5: #{baseline_vit_forward.19} parent=0 // loop_body
    %s14 = ssub.s32 %s9, 1
    %s15 = ssub.s32 %s9, 2
    %s22 = sadd.s32 1, %s17
    %p23 = scmp.ge.s32.totalorder %s22, 4
    %s24 = scalar_select %p23, 0, %s22
    %s25 = sadd.s32 1, %s16
    %s26 = scalar_select %p23, %s25, %s16
    %p27 = scmp.ge.s32.totalorder %s26, 2
    %s28 = scalar_select %p27, 0, %s26
    %s29 = ssub.s32 %s16, %s28
    %s30 = ssub.s32 %s17, %s24
    %s31 = sor.u32 %s29, %s30
    %p32 = scmp.eq.s32.totalorder %s31, 0
    %s34 = sadd.s32 %s33, 1
    %s35 = scalar_select %p32, %s33, %s34
    %p38 = pneg %p32
    %p39 = scmp.eq.s32.totalorder %s9, 7
    %p40 = por %p38, %p39
    %p41 = scmp.ne.s32.totalorder %s33, %s36
    %p42 = scmp.eq.s32.totalorder %s9, 0
    %p43 = por %p41, %p42
    %p44 = scmp.ne.s32.totalorder %s33, %s36
    %p45 = scmp.eq.s32.totalorder %s14, 7
    %p46 = por %p44, %p45
    %p47 = scmp.ne.s32.totalorder %s36, %s37
    %p48 = scmp.eq.s32.totalorder %s14, 0
    %p49 = por %p47, %p48
    %p50 = scmp.ne.s32.totalorder %s36, %s37
    %p51 = scmp.eq.s32.totalorder %s15, 7
    %p52 = por %p50, %p51
    %p54 = scmp.ne.s32.totalorder %s37, %s53
    %p55 = scmp.eq.s32.totalorder %s15, 0
    %p56 = por %p54, %p55
    %s57 = ssub.s32 %s16, %s28
    %s58 = ssub.s32 %s17, %s24
    %s59 = sor.u32 %s57, %s58
    %p60 = scmp.eq.s32.totalorder %s59, 0
    %s62 = sadd.s32 %s61, 1
    %s63 = scalar_select %p60, %s61, %s62
    %p66 = pneg %p60
    %p67 = scmp.eq.s32.totalorder %s9, 7
    %p68 = por %p66, %p67
    %p69 = scmp.ne.s32.totalorder %s61, %s64
    %p70 = scmp.eq.s32.totalorder %s9, 0
    %p71 = por %p69, %p70
    %p72 = scmp.ne.s32.totalorder %s61, %s64
    %p73 = scmp.eq.s32.totalorder %s14, 7
    %p74 = por %p72, %p73
    %p75 = scmp.ne.s32.totalorder %s64, %s65
    %p76 = scmp.eq.s32.totalorder %s14, 0
    %p77 = por %p75, %p76
    %p78 = scmp.ne.s32.totalorder %s64, %s65
    %p79 = scmp.eq.s32.totalorder %s15, 7
    %p80 = por %p78, %p79
    %p82 = scmp.ne.s32.totalorder %s65, %s81
    %p83 = scmp.eq.s32.totalorder %s15, 0
    %p84 = por %p82, %p83
    %s85 = ssub.s32 %s16, %s28
    %s86 = ssub.s32 %s17, %s24
    %s87 = sor.u32 %s85, %s86
    %p88 = scmp.eq.s32.totalorder %s87, 0
    %s90 = sadd.s32 %s89, 1
    %s91 = scalar_select %p88, %s89, %s90
    %p94 = pneg %p88
    %p95 = scmp.eq.s32.totalorder %s9, 7
    %p96 = por %p94, %p95
    %p97 = scmp.ne.s32.totalorder %s89, %s92
    %p98 = scmp.eq.s32.totalorder %s9, 0
    %p99 = por %p97, %p98
    %p100 = scmp.ne.s32.totalorder %s89, %s92
    %p101 = scmp.eq.s32.totalorder %s14, 7
    %p102 = por %p100, %p101
    %p103 = scmp.ne.s32.totalorder %s92, %s93
    %p104 = scmp.eq.s32.totalorder %s14, 0
    %p105 = por %p103, %p104
    %p106 = scmp.ne.s32.totalorder %s92, %s93
    %p107 = scmp.eq.s32.totalorder %s15, 7
    %p108 = por %p106, %p107
    %p110 = scmp.ne.s32.totalorder %s93, %s109
    %p111 = scmp.eq.s32.totalorder %s15, 0
    %p112 = por %p110, %p111
    %s113 = ssub.s32 %s16, %s28
    %s114 = ssub.s32 %s17, %s24
    %s115 = sor.u32 %s113, %s114
    %p116 = scmp.eq.s32.totalorder %s115, 0
    %s118 = sadd.s32 %s117, 1
    %s119 = scalar_select %p116, %s117, %s118
    %p122 = pneg %p116
    %p123 = scmp.eq.s32.totalorder %s9, 7
    %p124 = por %p122, %p123
    %p125 = scmp.ne.s32.totalorder %s117, %s120
    %p126 = scmp.eq.s32.totalorder %s9, 0
    %p127 = por %p125, %p126
    %p128 = scmp.ne.s32.totalorder %s117, %s120
    %p129 = scmp.eq.s32.totalorder %s14, 7
    %p130 = por %p128, %p129
    %p131 = scmp.ne.s32.totalorder %s120, %s121
    %p132 = scmp.eq.s32.totalorder %s14, 0
    %p133 = por %p131, %p132
    %p134 = scmp.ne.s32.totalorder %s120, %s121
    %p135 = scmp.eq.s32.totalorder %s15, 7
    %p136 = por %p134, %p135
    %p138 = scmp.ne.s32.totalorder %s121, %s137
    %p139 = scmp.eq.s32.totalorder %s15, 0
    %p140 = por %p138, %p139
    %p141 = scmp.le.s32.totalorder 1, %s9
    %p142 = scmp.lt.s32.totalorder %s9, 9
    %p143 = pnand %p141, %p142
    %p144 = pneg %p143
    // Predicated region
    $region9: #{baseline_vit_forward.19} parent=5 // pred_check
      _
    $region10: #{baseline_vit_forward.19} parent=5 // pred_check_branch
      %146 = sbr.rel (%p143) target = $region12
    $region11: #{baseline_vit_forward.19} parent=5 // pred_region
      %s147 = ssub.s32 %s9, 1
    $region12: #{baseline_vit_forward.19} parent=5 // pred_fallthru
      _
    %p148 = scmp.lt.s32.totalorder %s9, 8
    // Predicated region
    $region13: #{baseline_vit_forward.19} parent=5 // pred_check
      %p149 = pneg %p148
    $region14: #{baseline_vit_forward.19} parent=5 // pred_check_branch
      %151 = sbr.rel (%p149) target = $region16
    $region15: #{baseline_vit_forward.19} parent=5 // pred_region
      // Predicated region
      $region17: #{baseline_vit_forward.19} parent=15 // pred_check
        %p152 = pneg %p43
      $region18: #{baseline_vit_forward.19} parent=15 // pred_check_branch
        %154 = sbr.rel (%p152) target = $region20
      $region19: #{baseline_vit_forward.19} parent=15 // pred_region
        %p155 = scmp.lt.s32.totalorder %s16, 1
        %s156 = scalar_select %p155, %s16, 1
        %p157 = scmp.lt.s32.totalorder %s17, 3
        %s158 = scalar_select %p157, %s17, 3
        %s159 = smul.addr %s158, 2
        %s160 = smul.addr %s156, 8
        %s161 = sadd.s32 %s159, %s160
        %s162 = smul.addr %s161, 4
        %s163 = scalar_lea.vmem %s0, %s162
      $region20: #{baseline_vit_forward.19} parent=15 // pred_fallthru
        _
      // Predicated region
      $region21: #{baseline_vit_forward.19} parent=15 // pred_check
        %p164 = pneg %p71
      $region22: #{baseline_vit_forward.19} parent=15 // pred_check_branch
        %166 = sbr.rel (%p164) target = $region24
      $region23: #{baseline_vit_forward.19} parent=15 // pred_region
        %p167 = scmp.lt.s32.totalorder %s16, 1
        %s168 = scalar_select %p167, %s16, 1
        %p169 = scmp.lt.s32.totalorder %s17, 3
        %s170 = scalar_select %p169, %s17, 3
        %s171 = smul.addr %s170, 2
        %s172 = smul.addr %s168, 8
        %s173 = sadd.s32 %s171, %s172
        %s174 = smul.addr %s173, 4
        %s175 = scalar_lea.vmem %s1, %s174
      $region24: #{baseline_vit_forward.19} parent=15 // pred_fallthru
        _
      // Predicated region
      $region25: #{baseline_vit_forward.19} parent=15 // pred_check
        %p176 = pneg %p99
      $region26: #{baseline_vit_forward.19} parent=15 // pred_check_branch
        %178 = sbr.rel (%p176) target = $region28
      $region27: #{baseline_vit_forward.19} parent=15 // pred_region
        %p179 = scmp.lt.s32.totalorder %s16, 1
        %s180 = scalar_select %p179, %s16, 1
        %p181 = scmp.lt.s32.totalorder %s17, 3
        %s182 = scalar_select %p181, %s17, 3
        %s183 = smul.addr %s182, 2
        %s184 = smul.addr %s180, 8
        %s185 = sadd.s32 %s183, %s184
        %s186 = smul.addr %s185, 4
        %s187 = scalar_lea.vmem %s2, %s186
      $region28: #{baseline_vit_forward.19} parent=15 // pred_fallthru
        _
    $region16: #{baseline_vit_forward.19} parent=5 // pred_fallthru
      _
    %p188 = scmp.le.s32.totalorder 1, %s9
    %p189 = scmp.lt.s32.totalorder %s9, 9
    %p190 = pnand %p188, %p189
    %p191 = pneg %p190
    // Predicated region
    $region29: #{baseline_vit_forward.19} parent=5 // pred_check
      _
    $region30: #{baseline_vit_forward.19} parent=5 // pred_check_branch
      %193 = sbr.rel (%p190) target = $region32
    $region31: #{baseline_vit_forward.19} parent=5 // pred_region
      %s194 = ssub.s32 %s9, 1
      %p195 = scmp.lt.s32.totalorder %s18, 1
      %s196 = scalar_select %p195, %s18, 1
      %p197 = scmp.lt.s32.totalorder %s19, 3
      %s198 = scalar_select %p197, %s19, 3
      %s199 = smul.addr %s198, 2
      %s200 = smul.addr %s196, 8
      %s201 = sadd.s32 %s199, %s200
      %s202 = smul.addr %s201, 4
      %s203 = scalar_lea.vmem %s0, %s202
      %p204 = pneg %p49
      %p205 = pneg %p46
      %p206 = scmp.lt.s32.totalorder %s18, 1
      %s207 = scalar_select %p206, %s18, 1
      %p208 = scmp.lt.s32.totalorder %s19, 3
      %s209 = scalar_select %p208, %s19, 3
      %s210 = smul.addr %s209, 2
      %s211 = smul.addr %s207, 8
      %s212 = sadd.s32 %s210, %s211
      %s213 = smul.addr %s212, 4
      %s214 = scalar_lea.vmem %s1, %s213
      %p215 = pneg %p77
      %p216 = pneg %p74
      %p217 = scmp.lt.s32.totalorder %s18, 1
      %s218 = scalar_select %p217, %s18, 1
      %p219 = scmp.lt.s32.totalorder %s19, 3
      %s220 = scalar_select %p219, %s19, 3
      %s221 = smul.addr %s220, 2
      %s222 = smul.addr %s218, 8
      %s223 = sadd.s32 %s221, %s222
      %s224 = smul.addr %s223, 4
      %s225 = scalar_lea.vmem %s2, %s224
      %p226 = pneg %p105
      %p227 = pneg %p102
      %p228 = pneg %p133
      %p229 = pneg %p130
      %p230 = scmp.lt.s32.totalorder %s18, 1
      %s231 = scalar_select %p230, %s18, 1
      %p232 = scmp.lt.s32.totalorder %s19, 3
      %s233 = scalar_select %p232, %s19, 3
      %s234 = smul.addr %s233, 2
      %s235 = smul.addr %s231, 8
      %s236 = sadd.s32 %s234, %s235
      %s237 = smul.addr %s236, 4
      %s238 = scalar_lea.vmem %s3, %s237
      %p239 = scmp.lt.s32.totalorder %s18, 1
      %s240 = scalar_select %p239, %s18, 1
      %p241 = scmp.lt.s32.totalorder %s19, 3
      %s242 = scalar_select %p241, %s19, 3
      %s243 = smul.addr %s242, 2
      %s244 = smul.addr %s240, 8
      %s245 = sadd.s32 %s243, %s244
      %s246 = smul.addr %s245, 4
      %s247 = scalar_lea.vmem %s0, %s246
      %p248 = scmp.lt.s32.totalorder %s18, 1
      %s249 = scalar_select %p248, %s18, 1
      %p250 = scmp.lt.s32.totalorder %s19, 3
      %s251 = scalar_select %p250, %s19, 3
      %s252 = smul.addr %s251, 2
      %s253 = smul.addr %s249, 8
      %s254 = sadd.s32 %s252, %s253
      %s255 = smul.addr %s254, 4
      %s256 = scalar_lea.vmem %s1, %s255
      %p257 = scmp.lt.s32.totalorder %s18, 1
      %s258 = scalar_select %p257, %s18, 1
      %p259 = scmp.lt.s32.totalorder %s19, 3
      %s260 = scalar_select %p259, %s19, 3
      %s261 = smul.addr %s260, 2
      %s262 = smul.addr %s258, 8
      %s263 = sadd.s32 %s261, %s262
      %s264 = smul.addr %s263, 4
      %s265 = scalar_lea.vmem %s2, %s264
      %p266 = scmp.lt.s32.totalorder %s18, 1
      %s267 = scalar_select %p266, %s18, 1
      %p268 = scmp.lt.s32.totalorder %s19, 3
      %s269 = scalar_select %p268, %s19, 3
      %s270 = smul.addr %s269, 2
      %s271 = smul.addr %s267, 8
      %s272 = sadd.s32 %s270, %s271
      %s273 = smul.addr %s272, 4
      %s274 = scalar_lea.vmem %s3, %s273
      %v276 = vld [vmem:[%s247] sm:$0xf]
      %v277 = vld [vmem:[%s247 + $0x4] sm:$0xf]
      %v278 = vld [vmem:[%s256] sm:$0xf]
      %v279 = vld [vmem:[%s256 + $0x4] sm:$0xf]
      %v280 = vld [vmem:[%s265] sm:$0xf]
      %v281 = vld [vmem:[%s265 + $0x4] sm:$0xf]
      %v284 = vunpack.c.l.b16 %v276
      %v285 = vunpack.c.l.b16 %v277
      %v286 = vpack.c.b16 %v285, %v284
      %v289 = vunpack.c.l.b16 %v278
      %v290 = vunpack.c.l.b16 %v279
      %v291 = vpack.c.b16 %v290, %v289
      %vm292 = vcmask 523264
      %v294 = vsel %vm292, %v286, 0
      %v297 = vsel %vm292, %v291, 0
      %299 = vmatpush.bf16.xpose.msra.mxu0 0
      %300 = vmatpush.bf16.xpose.msra.mxu0 0
      %301 = vmatpush.bf16.xpose.msra.mxu0 0
      %302 = vmatpush.bf16.xpose.msra.mxu0 0
      %303 = vmatpush.bf16.xpose.msra.mxu0 0
      %304 = vmatpush.bf16.xpose.msra.mxu0 0
      %305 = vmatpush.bf16.xpose.msra.mxu0 0
      %306 = vmatpush.bf16.xpose.msra.mxu0 %v297
      %307 = vmatmul.bf16.gmra.mxu0 %v294
      %v308 = vpop.f32.mrf.mxu0
      %v309 = vadd.f32 0.0, %v308
      %v310 = vpop.f32.mrf.mxu0
      %v311 = vadd.f32 0.0, %v310
      %312 = vdwg.mxu0
      %v313 = vmul.f32 %v309, 0.125
      %v314 = vmul.f32 %v311, 0.125
      %v315 = vlaneseq
      %v316 = vand.u32 %v315, 127
      %vm317 = vcmp.lt.s32.totalorder %v316, 9
      %v318 = vsel %vm317, %v313, -1e+30
      %v319 = vsel %vm317, %v314, -1e+30
      %vm320 = vcmask 130048
      %v321 = vsel %vm320, %v318, -inf
      %322 = vmax.xlane.f32.xlu0 %v321
      %v323 = vpop.xlane.xlu0 %322
      %v324 = vsel %vm320, %v319, -inf
      %325 = vmax.xlane.f32.xlu0 %v324
      %v326 = vpop.xlane.xlu0 %325
      %v327 = vsub.f32 %v318, %v323
      %v328 = vsub.f32 %v319, %v326
      %v329 = vmul.f32 %v327, 1.442695
      %v330 = vpow.pop %v329
      %v331 = vmul.f32 %v328, 1.442695
      %v332 = vpow.pop %v331
      %v333 = vsel %vm320, %v330, 0.0
      %334 = vadd.xlane.f32.xlu0 %v333
      %v335 = vpop.xlane.xlu0 %334
      %v336 = vsel %vm320, %v332, 0.0
      %337 = vadd.xlane.f32.xlu0 %v336
      %v338 = vpop.xlane.xlu0 %337
      %v339 = vrcp.pop %v335
      %v340 = vrcp.pop %v338
      %v341 = vmul.f32 %v330, %v339
      %v342 = vmul.f32 %v332, %v340
      %v343 = vpack.c.bf16 %v342, %v341
      %v346 = vunpack.c.l.b16 %v280
      %v347 = vunpack.c.l.b16 %v281
      %v348 = vpack.c.b16 %v347, %v346
      %v351 = vsel %vm320, %v343, 0
      %353 = vmatpush.bf16.msra.mxu0 0
      %354 = vmatpush.bf16.msra.mxu0 0
      %355 = vmatpush.bf16.msra.mxu0 0
      %356 = vmatpush.bf16.msra.mxu0 0
      %357 = vmatpush.bf16.msra.mxu0 0
      %358 = vmatpush.bf16.msra.mxu0 0
      %359 = vmatpush.bf16.msra.mxu0 0
      %360 = vmatpush.bf16.msra.mxu0 %v348
      %361 = vmatmul.bf16.gmra.mxu0 %v351
      %v362 = vpop.f32.mrf.mxu0
      %v363 = vadd.f32 0.0, %v362
      %v364 = vpop.f32.mrf.mxu0
      %v365 = vadd.f32 0.0, %v364
      %366 = vdwg.mxu0
      %v367 = vpack.c.bf16 %v363, %v363
      %v368 = vpack.c.bf16 %v365, %v365
      %vm369 = vcmask 519168
      %370 = vst.msk [vmem:[%s274] sm:$0xf] %vm369, %v367
      %371 = vst.msk [vmem:[%s274 + $0x4] sm:$0xf] %vm369, %v368
      %p372 = scmp.lt.s32.totalorder %s18, 1
      %s373 = scalar_select %p372, %s18, 1
      %p374 = scmp.lt.s32.totalorder %s19, 3
      %s375 = scalar_select %p374, %s19, 3
      %s376 = smul.addr %s375, 2
      %s377 = smul.addr %s373, 8
      %s378 = sadd.s32 %s376, %s377
      %s379 = smul.addr %s378, 4
      %s380 = scalar_lea.vmem %s3, %s379
      // Predicated region
      $region33: #{baseline_vit_forward.19} parent=31 // pred_check
        %p381 = pneg %p130
      $region34: #{baseline_vit_forward.19} parent=31 // pred_check_branch
        %383 = sbr.rel (%p381) target = $region36
      $region35: #{baseline_vit_forward.19} parent=31 // pred_region
        _
      $region36: #{baseline_vit_forward.19} parent=31 // pred_fallthru
        _
    $region32: #{baseline_vit_forward.19} parent=5 // pred_fallthru
      _
    %p384 = scmp.le.s32.totalorder 2, %s9
    // Predicated region
    $region37: #{baseline_vit_forward.19} parent=5 // pred_check
      %p385 = pneg %p384
    $region38: #{baseline_vit_forward.19} parent=5 // pred_check_branch
      %387 = sbr.rel (%p385) target = $region40
    $region39: #{baseline_vit_forward.19} parent=5 // pred_region
      %s388 = ssub.s32 %s9, 2
      // Predicated region
      $region41: #{baseline_vit_forward.19} parent=39 // pred_check
        %p389 = pneg %p136
      $region42: #{baseline_vit_forward.19} parent=39 // pred_check_branch
        %391 = sbr.rel (%p389) target = $region44
      $region43: #{baseline_vit_forward.19} parent=39 // pred_region
        %p392 = scmp.lt.s32.totalorder %s20, 1
        %s393 = scalar_select %p392, %s20, 1
        %p394 = scmp.lt.s32.totalorder %s21, 3
        %s395 = scalar_select %p394, %s21, 3
        %s396 = smul.addr %s395, 2
        %s397 = smul.addr %s393, 8
        %s398 = sadd.s32 %s396, %s397
        %s399 = smul.addr %s398, 4
        %s400 = scalar_lea.vmem %s3, %s399
      $region44: #{baseline_vit_forward.19} parent=39 // pred_fallthru
        _
    $region40: #{baseline_vit_forward.19} parent=5 // pred_fallthru
      _
  $region6: #{baseline_vit_forward.19} parent=0 // loop_footer
    %s13 = sadd.s32 1, %s9
  $region7: #{baseline_vit_forward.19} parent=0 // loop_footer_branch
    %8 = sbr.rel target = $region3
  $region8: #{baseline_vit_forward.19} parent=0 // loop_exit
    _

// kernel: baseline_vit_forward.20
$region0: #{baseline_vit_forward.20}
  #allocation0 [shape = 'u32[]', space=smem, size = 0x4, offset = 0x4, fixed_abs, tag = 'smem constant byte address 0x4 - core index']
  #allocation1 [shape = 'u32[72,128]{1,0:T(1,128)}', space=vmem, size = 0x9000, scoped, tag = 'internal scratch']
  #allocation2 [shape = 'f32[32,256]{1,0:T(8,128)}', space=vmem, size = 0x8000, scoped, tag = 'scratch operand']
  %s0 = inlined_call_operand.vmem [shape: bf16[32,256], index: 0, kind: input, shape index: {}]
  %s1 = inlined_call_operand.vmem [shape: bf16[256,256], index: 1, kind: input, shape index: {}]
  %s2 = inlined_call_operand.vmem [shape: f32[1,256], index: 2, kind: input, shape index: {}]
  %s3 = inlined_call_operand.vmem [shape: f32[32,256], index: 3, kind: input, shape index: {}]
  %s4 = inlined_call_operand.vmem [shape: f32[32,256], index: 4, kind: output, shape index: {}]
  %s5 = sld [smem:[#allocation0]]
  $region34: #{baseline_vit_forward.20} parent=0
    _
  %s7 = ssub.s32 1, %s5
  %s8 = scalar_select 0, %s7, %s5
  // Predicated region
  $region2: #{baseline_vit_forward.20} parent=0 // pred_check
    _
  $region3: #{baseline_vit_forward.20} parent=0 // pred_check_branch
    %10 = sbr.rel (0) target = $region5
  $region4: #{baseline_vit_forward.20} parent=0 // pred_region
    _
  $region5: #{baseline_vit_forward.20} parent=0 // pred_fallthru
    _
  // Predicated region
  $region6: #{baseline_vit_forward.20} parent=0 // pred_check
    _
  $region7: #{baseline_vit_forward.20} parent=0 // pred_check_branch
    %12 = sbr.rel (0) target = $region9
  $region8: #{baseline_vit_forward.20} parent=0 // pred_region
    _
  $region9: #{baseline_vit_forward.20} parent=0 // pred_fallthru
    _
  // Predicated region
  $region10: #{baseline_vit_forward.20} parent=0 // pred_check
    _
  $region11: #{baseline_vit_forward.20} parent=0 // pred_check_branch
    %14 = sbr.rel (0) target = $region13
  $region12: #{baseline_vit_forward.20} parent=0 // pred_region
    _
  $region13: #{baseline_vit_forward.20} parent=0 // pred_fallthru
    _
  // Predicated region
  $region14: #{baseline_vit_forward.20} parent=0 // pred_check
    _
  $region15: #{baseline_vit_forward.20} parent=0 // pred_check_branch
    %16 = sbr.rel (0) target = $region17
  $region16: #{baseline_vit_forward.20} parent=0 // pred_region
    _
  $region17: #{baseline_vit_forward.20} parent=0 // pred_fallthru
    _
  %v17 = vld [vmem:[%s0] sm:$0xff]
  %v18 = vld [vmem:[%s0 + $0x8] sm:$0xff]
  %v19 = vld [vmem:[%s0 + $0x10] sm:$0xff]
  %v20 = vld [vmem:[%s0 + $0x18] sm:$0xff]
  %p21 = scmp.eq.s32.totalorder 0, 0
  // Predicated region
  $region18: #{baseline_vit_forward.20} parent=0 // pred_check
    %p22 = pneg %p21
  $region19: #{baseline_vit_forward.20} parent=0 // pred_check_branch
    %24 = sbr.rel (%p22) target = $region21
  $region20: #{baseline_vit_forward.20} parent=0 // pred_region
    %25 = vst [vmem:[#allocation2] sm:$0xff] 0.0
    %26 = vst [vmem:[#allocation2 + $0x8] sm:$0xff] 0.0
    %27 = vst [vmem:[#allocation2 + $0x10] sm:$0xff] 0.0
    %28 = vst [vmem:[#allocation2 + $0x18] sm:$0xff] 0.0
    %29 = vst [vmem:[#allocation2 + $0x20] sm:$0xff] 0.0
    %30 = vst [vmem:[#allocation2 + $0x28] sm:$0xff] 0.0
    %31 = vst [vmem:[#allocation2 + $0x30] sm:$0xff] 0.0
    %32 = vst [vmem:[#allocation2 + $0x38] sm:$0xff] 0.0
  $region21: #{baseline_vit_forward.20} parent=0 // pred_fallthru
    _
  %v33 = vld [vmem:[#allocation2] sm:$0xff]
  %v34 = vld [vmem:[#allocation2 + $0x8] sm:$0xff]
  %v35 = vld [vmem:[#allocation2 + $0x10] sm:$0xff]
  %v36 = vld [vmem:[#allocation2 + $0x18] sm:$0xff]
  %v37 = vld [vmem:[#allocation2 + $0x20] sm:$0xff]
  %v38 = vld [vmem:[#allocation2 + $0x28] sm:$0xff]
  %v39 = vld [vmem:[#allocation2 + $0x30] sm:$0xff]
  %v40 = vld [vmem:[#allocation2 + $0x38] sm:$0xff]
  %v41 = vld [vmem:[%s1] sm:$0xff]
  %v42 = vld [vmem:[%s1 + $0x8] sm:$0xff]
  %v43 = vld [vmem:[%s1 + $0x10] sm:$0xff]
  %v44 = vld [vmem:[%s1 + $0x18] sm:$0xff]
  %v45 = vld [vmem:[%s1 + $0x20] sm:$0xff]
  %v46 = vld [vmem:[%s1 + $0x28] sm:$0xff]
  %v47 = vld [vmem:[%s1 + $0x30] sm:$0xff]
  %v48 = vld [vmem:[%s1 + $0x38] sm:$0xff]
  %v49 = vld [vmem:[%s1 + $0x40] sm:$0xff]
  %v50 = vld [vmem:[%s1 + $0x48] sm:$0xff]
  %v51 = vld [vmem:[%s1 + $0x50] sm:$0xff]
  %v52 = vld [vmem:[%s1 + $0x58] sm:$0xff]
  %v53 = vld [vmem:[%s1 + $0x60] sm:$0xff]
  %v54 = vld [vmem:[%s1 + $0x68] sm:$0xff]
  %v55 = vld [vmem:[%s1 + $0x70] sm:$0xff]
  %v56 = vld [vmem:[%s1 + $0x78] sm:$0xff]
  %v57 = vld [vmem:[%s1 + $0x80] sm:$0xff]
  %v58 = vld [vmem:[%s1 + $0x88] sm:$0xff]
  %v59 = vld [vmem:[%s1 + $0x90] sm:$0xff]
  %v60 = vld [vmem:[%s1 + $0x98] sm:$0xff]
  %v61 = vld [vmem:[%s1 + $0xa0] sm:$0xff]
  %v62 = vld [vmem:[%s1 + $0xa8] sm:$0xff]
  %v63 = vld [vmem:[%s1 + $0xb0] sm:$0xff]
  %v64 = vld [vmem:[%s1 + $0xb8] sm:$0xff]
  %v65 = vld [vmem:[%s1 + $0xc0] sm:$0xff]
  %v66 = vld [vmem:[%s1 + $0xc8] sm:$0xff]
  %v67 = vld [vmem:[%s1 + $0xd0] sm:$0xff]
  %v68 = vld [vmem:[%s1 + $0xd8] sm:$0xff]
  %v69 = vld [vmem:[%s1 + $0xe0] sm:$0xff]
  %v70 = vld [vmem:[%s1 + $0xe8] sm:$0xff]
  %v71 = vld [vmem:[%s1 + $0xf0] sm:$0xff]
  %v72 = vld [vmem:[%s1 + $0xf8] sm:$0xff]
  %v77 = vunpack.c.l.b16 %v17
  %v78 = vunpack.c.h.b16 %v17
  %v79 = vunpack.c.l.b16 %v18
  %v80 = vunpack.c.h.b16 %v18
  %v81 = vunpack.c.l.b16 %v19
  %v82 = vunpack.c.h.b16 %v19
  %v83 = vunpack.c.l.b16 %v20
  %v84 = vunpack.c.h.b16 %v20
  %v85 = vpack.c.b16 %v79, %v77
  %v86 = vpack.c.b16 %v80, %v78
  %v87 = vpack.c.b16 %v83, %v81
  %v88 = vpack.c.b16 %v84, %v82
  %v125 = vunpack.c.l.b16 %v41
  %v126 = vunpack.c.h.b16 %v41
  %v127 = vunpack.c.l.b16 %v42
  %v128 = vunpack.c.h.b16 %v42
  %v129 = vunpack.c.l.b16 %v43
  %v130 = vunpack.c.h.b16 %v43
  %v131 = vunpack.c.l.b16 %v44
  %v132 = vunpack.c.h.b16 %v44
  %v133 = vunpack.c.l.b16 %v45
  %v134 = vunpack.c.h.b16 %v45
  %v135 = vunpack.c.l.b16 %v46
  %v136 = vunpack.c.h.b16 %v46
  %v137 = vunpack.c.l.b16 %v47
  %v138 = vunpack.c.h.b16 %v47
  %v139 = vunpack.c.l.b16 %v48
  %v140 = vunpack.c.h.b16 %v48
  %v141 = vunpack.c.l.b16 %v49
  %v142 = vunpack.c.h.b16 %v49
  %v143 = vunpack.c.l.b16 %v50
  %v144 = vunpack.c.h.b16 %v50
  %v145 = vunpack.c.l.b16 %v51
  %v146 = vunpack.c.h.b16 %v51
  %v147 = vunpack.c.l.b16 %v52
  %v148 = vunpack.c.h.b16 %v52
  %v149 = vunpack.c.l.b16 %v53
  %v150 = vunpack.c.h.b16 %v53
  %v151 = vunpack.c.l.b16 %v54
  %v152 = vunpack.c.h.b16 %v54
  %v153 = vunpack.c.l.b16 %v55
  %v154 = vunpack.c.h.b16 %v55
  %v155 = vunpack.c.l.b16 %v56
  %v156 = vunpack.c.h.b16 %v56
  %v157 = vunpack.c.l.b16 %v57
  %v158 = vunpack.c.h.b16 %v57
  %v159 = vunpack.c.l.b16 %v58
  %v160 = vunpack.c.h.b16 %v58
  %v161 = vunpack.c.l.b16 %v59
  %v162 = vunpack.c.h.b16 %v59
  %v163 = vunpack.c.l.b16 %v60
  %v164 = vunpack.c.h.b16 %v60
  %v165 = vunpack.c.l.b16 %v61
  %v166 = vunpack.c.h.b16 %v61
  %v167 = vunpack.c.l.b16 %v62
  %v168 = vunpack.c.h.b16 %v62
  %v169 = vunpack.c.l.b16 %v63
  %v170 = vunpack.c.h.b16 %v63
  %v171 = vunpack.c.l.b16 %v64
  %v172 = vunpack.c.h.b16 %v64
  %v173 = vunpack.c.l.b16 %v65
  %v174 = vunpack.c.h.b16 %v65
  %v175 = vunpack.c.l.b16 %v66
  %v176 = vunpack.c.h.b16 %v66
  %v177 = vunpack.c.l.b16 %v67
  %v178 = vunpack.c.h.b16 %v67
  %v179 = vunpack.c.l.b16 %v68
  %v180 = vunpack.c.h.b16 %v68
  %v181 = vunpack.c.l.b16 %v69
  %v182 = vunpack.c.h.b16 %v69
  %v183 = vunpack.c.l.b16 %v70
  %v184 = vunpack.c.h.b16 %v70
  %v185 = vunpack.c.l.b16 %v71
  %v186 = vunpack.c.h.b16 %v71
  %v187 = vunpack.c.l.b16 %v72
  %v188 = vunpack.c.h.b16 %v72
  %v189 = vpack.c.b16 %v127, %v125
  %v190 = vpack.c.b16 %v128, %v126
  %v191 = vpack.c.b16 %v131, %v129
  %v192 = vpack.c.b16 %v132, %v130
  %v193 = vpack.c.b16 %v135, %v133
  %v194 = vpack.c.b16 %v136, %v134
  %v195 = vpack.c.b16 %v139, %v137
  %v196 = vpack.c.b16 %v140, %v138
  %v197 = vpack.c.b16 %v143, %v141
  %v198 = vpack.c.b16 %v144, %v142
  %v199 = vpack.c.b16 %v147, %v145
  %v200 = vpack.c.b16 %v148, %v146
  %v201 = vpack.c.b16 %v151, %v149
  %v202 = vpack.c.b16 %v152, %v150
  %v203 = vpack.c.b16 %v155, %v153
  %v204 = vpack.c.b16 %v156, %v154
  %v205 = vpack.c.b16 %v159, %v157
  %v206 = vpack.c.b16 %v160, %v158
  %v207 = vpack.c.b16 %v163, %v161
  %v208 = vpack.c.b16 %v164, %v162
  %v209 = vpack.c.b16 %v167, %v165
  %v210 = vpack.c.b16 %v168, %v166
  %v211 = vpack.c.b16 %v171, %v169
  %v212 = vpack.c.b16 %v172, %v170
  %v213 = vpack.c.b16 %v175, %v173
  %v214 = vpack.c.b16 %v176, %v174
  %v215 = vpack.c.b16 %v179, %v177
  %v216 = vpack.c.b16 %v180, %v178
  %v217 = vpack.c.b16 %v183, %v181
  %v218 = vpack.c.b16 %v184, %v182
  %v219 = vpack.c.b16 %v187, %v185
  %v220 = vpack.c.b16 %v188, %v186
  %253 = vmatpush.bf16.msra.mxu0 %v203
  %254 = vmatpush.bf16.msra.mxu0 %v201
  %255 = vmatpush.bf16.msra.mxu0 %v199
  %256 = vmatpush.bf16.msra.mxu0 %v197
  %257 = vmatpush.bf16.msra.mxu0 %v195
  %258 = vmatpush.bf16.msra.mxu0 %v193
  %259 = vmatpush.bf16.msra.mxu0 %v191
  %260 = vmatpush.bf16.msra.mxu0 %v189
  %261 = vmatmul.bf16.gmra.mxu0 %v85
  %v262 = vpop.f32.mrf.mxu0
  %v263 = vadd.f32 0.0, %v262
  %v264 = vpop.f32.mrf.mxu0
  %v265 = vadd.f32 0.0, %v264
  %266 = vmatmul.bf16.gmra.mxu0 %v87
  %v267 = vpop.f32.mrf.mxu0
  %v268 = vadd.f32 0.0, %v267
  %v269 = vpop.f32.mrf.mxu0
  %v270 = vadd.f32 0.0, %v269
  %271 = vdwg.mxu0
  %272 = vmatpush.bf16.msra.mxu0 %v219
  %273 = vmatpush.bf16.msra.mxu0 %v217
  %274 = vmatpush.bf16.msra.mxu0 %v215
  %275 = vmatpush.bf16.msra.mxu0 %v213
  %276 = vmatpush.bf16.msra.mxu0 %v211
  %277 = vmatpush.bf16.msra.mxu0 %v209
  %278 = vmatpush.bf16.msra.mxu0 %v207
  %279 = vmatpush.bf16.msra.mxu0 %v205
  %280 = vmatmul.bf16.gmra.mxu0 %v86
  %v281 = vpop.f32.mrf.mxu0
  %v282 = vadd.f32 %v263, %v281
  %v283 = vpop.f32.mrf.mxu0
  %v284 = vadd.f32 %v265, %v283
  %285 = vmatmul.bf16.gmra.mxu0 %v88
  %v286 = vpop.f32.mrf.mxu0
  %v287 = vadd.f32 %v268, %v286
  %v288 = vpop.f32.mrf.mxu0
  %v289 = vadd.f32 %v270, %v288
  %290 = vdwg.mxu0
  %291 = vmatpush.bf16.msra.mxu0 %v204
  %292 = vmatpush.bf16.msra.mxu0 %v202
  %293 = vmatpush.bf16.msra.mxu0 %v200
  %294 = vmatpush.bf16.msra.mxu0 %v198
  %295 = vmatpush.bf16.msra.mxu0 %v196
  %296 = vmatpush.bf16.msra.mxu0 %v194
  %297 = vmatpush.bf16.msra.mxu0 %v192
  %298 = vmatpush.bf16.msra.mxu0 %v190
  %299 = vmatmul.bf16.gmra.mxu0 %v85
  %v300 = vpop.f32.mrf.mxu0
  %v301 = vadd.f32 0.0, %v300
  %v302 = vpop.f32.mrf.mxu0
  %v303 = vadd.f32 0.0, %v302
  %304 = vmatmul.bf16.gmra.mxu0 %v87
  %v305 = vpop.f32.mrf.mxu0
  %v306 = vadd.f32 0.0, %v305
  %v307 = vpop.f32.mrf.mxu0
  %v308 = vadd.f32 0.0, %v307
  %309 = vdwg.mxu0
  %310 = vmatpush.bf16.msra.mxu0 %v220
  %311 = vmatpush.bf16.msra.mxu0 %v218
  %312 = vmatpush.bf16.msra.mxu0 %v216
  %313 = vmatpush.bf16.msra.mxu0 %v214
  %314 = vmatpush.bf16.msra.mxu0 %v212
  %315 = vmatpush.bf16.msra.mxu0 %v210
  %316 = vmatpush.bf16.msra.mxu0 %v208
  %317 = vmatpush.bf16.msra.mxu0 %v206
  %318 = vmatmul.bf16.gmra.mxu0 %v86
  %v319 = vpop.f32.mrf.mxu0
  %v320 = vadd.f32 %v301, %v319
  %v321 = vpop.f32.mrf.mxu0
  %v322 = vadd.f32 %v303, %v321
  %323 = vmatmul.bf16.gmra.mxu0 %v88
  %v324 = vpop.f32.mrf.mxu0
  %v325 = vadd.f32 %v306, %v324
  %v326 = vpop.f32.mrf.mxu0
  %v327 = vadd.f32 %v308, %v326
  %328 = vdwg.mxu0
  %v329 = vadd.f32 %v33, %v282
  %v330 = vadd.f32 %v34, %v320
  %v331 = vadd.f32 %v35, %v284
  %v332 = vadd.f32 %v36, %v322
  %v333 = vadd.f32 %v37, %v287
  %v334 = vadd.f32 %v38, %v325
  %v335 = vadd.f32 %v39, %v289
  %v336 = vadd.f32 %v40, %v327
  %337 = vst [vmem:[#allocation2] sm:$0xff] %v329
  %338 = vst [vmem:[#allocation2 + $0x8] sm:$0xff] %v330
  %339 = vst [vmem:[#allocation2 + $0x10] sm:$0xff] %v331
  %340 = vst [vmem:[#allocation2 + $0x18] sm:$0xff] %v332
  %341 = vst [vmem:[#allocation2 + $0x20] sm:$0xff] %v333
  %342 = vst [vmem:[#allocation2 + $0x28] sm:$0xff] %v334
  %343 = vst [vmem:[#allocation2 + $0x30] sm:$0xff] %v335
  %344 = vst [vmem:[#allocation2 + $0x38] sm:$0xff] %v336
  // Predicated region
  $region22: #{baseline_vit_forward.20} parent=0 // pred_check
    %p345 = pneg %p21
  $region23: #{baseline_vit_forward.20} parent=0 // pred_check_branch
    %347 = sbr.rel (%p345) target = $region25
  $region24: #{baseline_vit_forward.20} parent=0 // pred_region
    %v348 = vld [vmem:[#allocation2] sm:$0xff]
    %v349 = vld [vmem:[#allocation2 + $0x8] sm:$0xff]
    %v350 = vld [vmem:[#allocation2 + $0x10] sm:$0xff]
    %v351 = vld [vmem:[#allocation2 + $0x18] sm:$0xff]
    %v352 = vld [vmem:[#allocation2 + $0x20] sm:$0xff]
    %v353 = vld [vmem:[#allocation2 + $0x28] sm:$0xff]
    %v354 = vld [vmem:[#allocation2 + $0x30] sm:$0xff]
    %v355 = vld [vmem:[#allocation2 + $0x38] sm:$0xff]
    %v356 = vld [vmem:[%s2] sm:$0x3]
    %v358 = vperm.slane %v356, 0
    %v359 = vperm.slane %v356, 1
    %v362 = vadd.f32 %v348, %v358
    %v363 = vadd.f32 %v349, %v359
    %v364 = vadd.f32 %v350, %v358
    %v365 = vadd.f32 %v351, %v359
    %v366 = vadd.f32 %v352, %v358
    %v367 = vadd.f32 %v353, %v359
    %v368 = vadd.f32 %v354, %v358
    %v369 = vadd.f32 %v355, %v359
    %v370 = vld [vmem:[%s3] sm:$0xff]
    %v371 = vld [vmem:[%s3 + $0x8] sm:$0xff]
    %v372 = vld [vmem:[%s3 + $0x10] sm:$0xff]
    %v373 = vld [vmem:[%s3 + $0x18] sm:$0xff]
    %v374 = vld [vmem:[%s3 + $0x20] sm:$0xff]
    %v375 = vld [vmem:[%s3 + $0x28] sm:$0xff]
    %v376 = vld [vmem:[%s3 + $0x30] sm:$0xff]
    %v377 = vld [vmem:[%s3 + $0x38] sm:$0xff]
    %v378 = vadd.f32 %v362, %v370
    %v379 = vadd.f32 %v363, %v371
    %v380 = vadd.f32 %v364, %v372
    %v381 = vadd.f32 %v365, %v373
    %v382 = vadd.f32 %v366, %v374
    %v383 = vadd.f32 %v367, %v375
    %v384 = vadd.f32 %v368, %v376
    %v385 = vadd.f32 %v369, %v377
    %386 = vst [vmem:[%s4] sm:$0xff] %v378
    %387 = vst [vmem:[%s4 + $0x8] sm:$0xff] %v379
    %388 = vst [vmem:[%s4 + $0x10] sm:$0xff] %v380
    %389 = vst [vmem:[%s4 + $0x18] sm:$0xff] %v381
    %390 = vst [vmem:[%s4 + $0x20] sm:$0xff] %v382
    %391 = vst [vmem:[%s4 + $0x28] sm:$0xff] %v383
    %392 = vst [vmem:[%s4 + $0x30] sm:$0xff] %v384
    %393 = vst [vmem:[%s4 + $0x38] sm:$0xff] %v385
  $region25: #{baseline_vit_forward.20} parent=0 // pred_fallthru
    _
  // Predicated region
  $region26: #{baseline_vit_forward.20} parent=0 // pred_check
    _
  $region27: #{baseline_vit_forward.20} parent=0 // pred_check_branch
    %395 = sbr.rel (0) target = $region29
  $region28: #{baseline_vit_forward.20} parent=0 // pred_region
    _
  $region29: #{baseline_vit_forward.20} parent=0 // pred_fallthru
    _
  // Predicated region
  $region30: #{baseline_vit_forward.20} parent=0 // pred_check
    _
  $region31: #{baseline_vit_forward.20} parent=0 // pred_check_branch
    %397 = sbr.rel (0) target = $region33
  $region32: #{baseline_vit_forward.20} parent=0 // pred_region
    _
  $region33: #{baseline_vit_forward.20} parent=0 // pred_fallthru
    _

// kernel: baseline_vit_forward.21
$region0: #{baseline_vit_forward.21}
  #allocation0 [shape = 'u32[]', space=smem, size = 0x4, offset = 0x4, fixed_abs, tag = 'smem constant byte address 0x4 - core index']
  #allocation1 [shape = 'u32[72,128]{1,0:T(1,128)}', space=vmem, size = 0x9000, scoped, tag = 'internal scratch']
  #allocation2 [shape = 'f32[32,512]{1,0:T(8,128)}', space=vmem, size = 0x10000, scoped, tag = 'scratch operand']
  %s0 = inlined_call_operand.vmem [shape: f32[32,256], index: 0, kind: input, shape index: {}]
  %s1 = inlined_call_operand.vmem [shape: bf16[256,1024], index: 1, kind: input, shape index: {}]
  %s2 = inlined_call_operand.vmem [shape: f32[1,256], index: 2, kind: input, shape index: {}]
  %s3 = inlined_call_operand.vmem [shape: f32[1,256], index: 3, kind: input, shape index: {}]
  %s4 = inlined_call_operand.vmem [shape: f32[1,1024], index: 4, kind: input, shape index: {}]
  %s5 = inlined_call_operand.vmem [shape: bf16[32,1024], index: 5, kind: output, shape index: {}]
  %s6 = sld [smem:[#allocation0]]
  $region103: #{baseline_vit_forward.21} parent=0
    _
  %s8 = ssub.s32 1, %s6
  %s9 = scalar_select 0, %s8, %s6
  $region1: #{baseline_vit_forward.21} parent=0
    #allocation3 [shape = 'u8[524288]{0}', space=vmem, size = 0x80000, scoped, tag = 'input window, operand 1']
    #allocation4 [shape = 'u8[65536]{0}', space=vmem, size = 0x10000, scoped, tag = 'output window, operand 0']
    loop: start=0, step=1, limit=4
    $region2: #{baseline_vit_forward.21} parent=1 // loop_pre_header
      _
    $region3: #{baseline_vit_forward.21} parent=1 // loop_header
      %s11 = sphi 0, %s15
      %p12 = scmp.ge.s32.totalorder %s11, 4
      %s18 = sphi 0, %s37
      %s19 = sphi 0, %s33
      %s20 = sphi 0, %s29
      %s21 = sphi 0, %s18
      %s22 = sphi 0, %s19
      %s23 = sphi 0, %s20
      %s24 = sphi 0, %s21
      %s25 = sphi 0, %s22
      %s26 = sphi 0, %s23
      %s42 = sphi 0, %s44
      %s45 = sphi 0, %s42
      %s46 = sphi 0, %s45
      %s62 = sphi 0, %s46
      %s70 = sphi 0, %s72
      %s73 = sphi 0, %s70
      %s74 = sphi 0, %s73
      %s90 = sphi 0, %s74
      %s96 = sphi 0, %s98
      %s99 = sphi 0, %s96
      %s100 = sphi 0, %s99
      %s116 = sphi 0, %s100
      %s122 = sphi 0, %s124
      %s125 = sphi 0, %s122
      %s126 = sphi 0, %s125
      %s142 = sphi 0, %s126
      %s148 = sphi 0, %s150
      %s151 = sphi 0, %s148
      %s152 = sphi 0, %s151
      %s168 = sphi 0, %s152
      %s176 = sphi 0, %s178
      %s179 = sphi 0, %s176
      %s180 = sphi 0, %s179
      %s196 = sphi 0, %s180
    $region4: #{baseline_vit_forward.21} parent=1 // loop_header_branch
      %14 = sbr.rel (%p12) target = $region8
    $region5: #{baseline_vit_forward.21} parent=1 // loop_body
      %s16 = ssub.s32 %s11, 1
      %s17 = ssub.s32 %s11, 2
      %s27 = sadd.s32 1, %s20
      %p28 = scmp.ge.s32.totalorder %s27, 1
      %s29 = scalar_select %p28, 0, %s27
      %s30 = sadd.s32 1, %s19
      %s31 = scalar_select %p28, %s30, %s19
      %p32 = scmp.ge.s32.totalorder %s31, 2
      %s33 = scalar_select %p32, 0, %s31
      %s34 = sadd.s32 1, %s18
      %s35 = scalar_select %p32, %s34, %s18
      %p36 = scmp.ge.s32.totalorder %s35, 1
      %s37 = scalar_select %p36, 0, %s35
      %s38 = ssub.s32 %s18, %s37
      %s39 = ssub.s32 %s20, %s29
      %s40 = sor.u32 %s38, %s39
      %p41 = scmp.eq.s32.totalorder %s40, 0
      %s43 = sadd.s32 %s42, 1
      %s44 = scalar_select %p41, %s42, %s43
      %p47 = pneg %p41
      %p48 = scmp.eq.s32.totalorder %s11, 1
      %p49 = por %p47, %p48
      %p50 = scmp.ne.s32.totalorder %s42, %s45
      %p51 = scmp.eq.s32.totalorder %s11, 0
      %p52 = por %p50, %p51
      %p53 = scmp.ne.s32.totalorder %s42, %s45
      %p54 = scmp.eq.s32.totalorder %s16, 1
      %p55 = por %p53, %p54
      %p56 = scmp.ne.s32.totalorder %s45, %s46
      %p57 = scmp.eq.s32.totalorder %s16, 0
      %p58 = por %p56, %p57
      %p59 = scmp.ne.s32.totalorder %s45, %s46
      %p60 = scmp.eq.s32.totalorder %s17, 1
      %p61 = por %p59, %p60
      %p63 = scmp.ne.s32.totalorder %s46, %s62
      %p64 = scmp.eq.s32.totalorder %s17, 0
      %p65 = por %p63, %p64
      %s66 = ssub.s32 %s20, %s29
      %s67 = ssub.s32 %s19, %s33
      %s68 = sor.u32 %s66, %s67
      %p69 = scmp.eq.s32.totalorder %s68, 0
      %s71 = sadd.s32 %s70, 1
      %s72 = scalar_select %p69, %s70, %s71
      %p75 = pneg %p69
      %p76 = scmp.eq.s32.totalorder %s11, 1
      %p77 = por %p75, %p76
      %p78 = scmp.ne.s32.totalorder %s70, %s73
      %p79 = scmp.eq.s32.totalorder %s11, 0
      %p80 = por %p78, %p79
      %p81 = scmp.ne.s32.totalorder %s70, %s73
      %p82 = scmp.eq.s32.totalorder %s16, 1
      %p83 = por %p81, %p82
      %p84 = scmp.ne.s32.totalorder %s73, %s74
      %p85 = scmp.eq.s32.totalorder %s16, 0
      %p86 = por %p84, %p85
      %p87 = scmp.ne.s32.totalorder %s73, %s74
      %p88 = scmp.eq.s32.totalorder %s17, 1
      %p89 = por %p87, %p88
      %p91 = scmp.ne.s32.totalorder %s74, %s90
      %p92 = scmp.eq.s32.totalorder %s17, 0
      %p93 = por %p91, %p92
      %s94 = ssub.s32 %s20, %s29
      %p95 = scmp.eq.s32.totalorder %s94, 0
      %s97 = sadd.s32 %s96, 1
      %s98 = scalar_select %p95, %s96, %s97
      %p101 = pneg %p95
      %p102 = scmp.eq.s32.totalorder %s11, 1
      %p103 = por %p101, %p102
      %p104 = scmp.ne.s32.totalorder %s96, %s99
      %p105 = scmp.eq.s32.totalorder %s11, 0
      %p106 = por %p104, %p105
      %p107 = scmp.ne.s32.totalorder %s96, %s99
      %p108 = scmp.eq.s32.totalorder %s16, 1
      %p109 = por %p107, %p108
      %p110 = scmp.ne.s32.totalorder %s99, %s100
      %p111 = scmp.eq.s32.totalorder %s16, 0
      %p112 = por %p110, %p111
      %p113 = scmp.ne.s32.totalorder %s99, %s100
      %p114 = scmp.eq.s32.totalorder %s17, 1
      %p115 = por %p113, %p114
      %p117 = scmp.ne.s32.totalorder %s100, %s116
      %p118 = scmp.eq.s32.totalorder %s17, 0
      %p119 = por %p117, %p118
      %s120 = ssub.s32 %s20, %s29
      %p121 = scmp.eq.s32.totalorder %s120, 0
      %s123 = sadd.s32 %s122, 1
      %s124 = scalar_select %p121, %s122, %s123
      %p127 = pneg %p121
      %p128 = scmp.eq.s32.totalorder %s11, 1
      %p129 = por %p127, %p128
      %p130 = scmp.ne.s32.totalorder %s122, %s125
      %p131 = scmp.eq.s32.totalorder %s11, 0
      %p132 = por %p130, %p131
      %p133 = scmp.ne.s32.totalorder %s122, %s125
      %p134 = scmp.eq.s32.totalorder %s16, 1
      %p135 = por %p133, %p134
      %p136 = scmp.ne.s32.totalorder %s125, %s126
      %p137 = scmp.eq.s32.totalorder %s16, 0
      %p138 = por %p136, %p137
      %p139 = scmp.ne.s32.totalorder %s125, %s126
      %p140 = scmp.eq.s32.totalorder %s17, 1
      %p141 = por %p139, %p140
      %p143 = scmp.ne.s32.totalorder %s126, %s142
      %p144 = scmp.eq.s32.totalorder %s17, 0
      %p145 = por %p143, %p144
      %s146 = ssub.s32 %s19, %s33
      %p147 = scmp.eq.s32.totalorder %s146, 0
      %s149 = sadd.s32 %s148, 1
      %s150 = scalar_select %p147, %s148, %s149
      %p153 = pneg %p147
      %p154 = scmp.eq.s32.totalorder %s11, 1
      %p155 = por %p153, %p154
      %p156 = scmp.ne.s32.totalorder %s148, %s151
      %p157 = scmp.eq.s32.totalorder %s11, 0
      %p158 = por %p156, %p157
      %p159 = scmp.ne.s32.totalorder %s148, %s151
      %p160 = scmp.eq.s32.totalorder %s16, 1
      %p161 = por %p159, %p160
      %p162 = scmp.ne.s32.totalorder %s151, %s152
      %p163 = scmp.eq.s32.totalorder %s16, 0
      %p164 = por %p162, %p163
      %p165 = scmp.ne.s32.totalorder %s151, %s152
      %p166 = scmp.eq.s32.totalorder %s17, 1
      %p167 = por %p165, %p166
      %p169 = scmp.ne.s32.totalorder %s152, %s168
      %p170 = scmp.eq.s32.totalorder %s17, 0
      %p171 = por %p169, %p170
      %s172 = ssub.s32 %s18, %s37
      %s173 = ssub.s32 %s19, %s33
      %s174 = sor.u32 %s172, %s173
      %p175 = scmp.eq.s32.totalorder %s174, 0
      %s177 = sadd.s32 %s176, 1
      %s178 = scalar_select %p175, %s176, %s177
      %p181 = pneg %p175
      %p182 = scmp.eq.s32.totalorder %s11, 1
      %p183 = por %p181, %p182
      %p184 = scmp.ne.s32.totalorder %s176, %s179
      %p185 = scmp.eq.s32.totalorder %s11, 0
      %p186 = por %p184, %p185
      %p187 = scmp.ne.s32.totalorder %s176, %s179
      %p188 = scmp.eq.s32.totalorder %s16, 1
      %p189 = por %p187, %p188
      %p190 = scmp.ne.s32.totalorder %s179, %s180
      %p191 = scmp.eq.s32.totalorder %s16, 0
      %p192 = por %p190, %p191
      %p193 = scmp.ne.s32.totalorder %s179, %s180
      %p194 = scmp.eq.s32.totalorder %s17, 1
      %p195 = por %p193, %p194
      %p197 = scmp.ne.s32.totalorder %s180, %s196
      %p198 = scmp.eq.s32.totalorder %s17, 0
      %p199 = por %p197, %p198
      %p200 = scmp.le.s32.totalorder 1, %s11
      %p201 = scmp.lt.s32.totalorder %s11, 3
      %p202 = pnand %p200, %p201
      %p203 = pneg %p202
      // Predicated region
      $region9: #{baseline_vit_forward.21} parent=5 // pred_check
        _
      $region10: #{baseline_vit_forward.21} parent=5 // pred_check_branch
        %205 = sbr.rel (%p202) target = $region12
      $region11: #{baseline_vit_forward.21} parent=5 // pred_region
        %s206 = ssub.s32 %s11, 1
        // Predicated region
        $region13: #{baseline_vit_forward.21} parent=11 // pred_check
          %p207 = pneg %p58
        $region14: #{baseline_vit_forward.21} parent=11 // pred_check_branch
          %209 = sbr.rel (%p207) target = $region16
        $region15: #{baseline_vit_forward.21} parent=11 // pred_region
          %s210 = smul.u32 4, %s21
          %s211 = smul.u32 2, %s23
          %p212 = scmp.lt.s32.totalorder %s210, 3
          %s213 = scalar_select %p212, %s210, 3
          %p214 = scmp.lt.s32.totalorder %s211, 1
          %s215 = scalar_select %p214, %s211, 1
          %s216 = smul.addr %s213, 2
          %s217 = sadd.s32 %s215, %s216
          %s218 = smul.addr %s217, 8
          %s219 = scalar_lea.vmem %s0, %s218
          %s220 = smul.u32 4, %s21
          %s221 = smul.u32 2, %s23
        $region16: #{baseline_vit_forward.21} parent=11 // pred_fallthru
          _
        // Predicated region
        $region17: #{baseline_vit_forward.21} parent=11 // pred_check
          %p222 = pneg %p112
        $region18: #{baseline_vit_forward.21} parent=11 // pred_check_branch
          %224 = sbr.rel (%p222) target = $region20
        $region19: #{baseline_vit_forward.21} parent=11 // pred_region
          %s225 = smul.u32 2, %s23
          %p226 = scmp.lt.s32.totalorder %s225, 1
          %s227 = scalar_select %p226, %s225, 1
          %s228 = scalar_lea.vmem %s2, %s227
          %s229 = smul.u32 2, %s23
        $region20: #{baseline_vit_forward.21} parent=11 // pred_fallthru
          _
        // Predicated region
        $region21: #{baseline_vit_forward.21} parent=11 // pred_check
          %p230 = pneg %p138
        $region22: #{baseline_vit_forward.21} parent=11 // pred_check_branch
          %232 = sbr.rel (%p230) target = $region24
        $region23: #{baseline_vit_forward.21} parent=11 // pred_region
          %s233 = smul.u32 2, %s23
          %p234 = scmp.lt.s32.totalorder %s233, 1
          %s235 = scalar_select %p234, %s233, 1
          %s236 = scalar_lea.vmem %s3, %s235
          %s237 = smul.u32 2, %s23
        $region24: #{baseline_vit_forward.21} parent=11 // pred_fallthru
          _
      $region12: #{baseline_vit_forward.21} parent=5 // pred_fallthru
        _
      %p238 = scmp.lt.s32.totalorder %s11, 2
      // Predicated region
      $region25: #{baseline_vit_forward.21} parent=5 // pred_check
        %p239 = pneg %p238
      $region26: #{baseline_vit_forward.21} parent=5 // pred_check_branch
        %241 = sbr.rel (%p239) target = $region28
      $region27: #{baseline_vit_forward.21} parent=5 // pred_region
        // Predicated region
        $region29: #{baseline_vit_forward.21} parent=27 // pred_check
          %p242 = pneg %p80
        $region30: #{baseline_vit_forward.21} parent=27 // pred_check_branch
          %244 = sbr.rel (%p242) target = $region32
        $region31: #{baseline_vit_forward.21} parent=27 // pred_region
          %s245 = sand.u32 %s70, 1
          %s246 = sand.u32 %s70, 1
          %s247 = smul.addr %s246, 512
          %s248 = scalar_lea.vmem [#allocation3], %s247
          %s249 = smul.u32 32, %s20
          %s250 = smul.u32 4, %s19
          %s251 = smul.addr %s249, 8
          %s252 = sadd.s32 %s250, %s251
          %s253 = smul.addr %s252, 4
          %s254 = scalar_lea.vmem %s1, %s253
          // Predicated region
          $region33: #{baseline_vit_forward.21} parent=31 // pred_check
            _
          $region34: #{baseline_vit_forward.21} parent=31 // pred_check_branch
            %256 = sbr.rel (0) target = $region36
          $region35: #{baseline_vit_forward.21} parent=31 // pred_region
            // Predicated region
            $region37: #{baseline_vit_forward.21} parent=35 // pred_check
              _
            $region38: #{baseline_vit_forward.21} parent=35 // pred_check_branch
              %258 = sbr.rel (0) target = $region40
            $region39: #{baseline_vit_forward.21} parent=35 // pred_region
              loop: start=0, step=1, limit=1
              $region41: #{baseline_vit_forward.21} parent=39 // loop_pre_header
                _
              $region42: #{baseline_vit_forward.21} parent=39 // loop_header
                %s260 = sphi 0, %s264
                %p261 = scmp.ge.s32.totalorder %s260, 1
                %s265 = sphi %s254, %s254
                %s266 = sphi %s248, %s248
              $region43: #{baseline_vit_forward.21} parent=39 // loop_header_branch
                %263 = sbr.rel (%p261) target = $region47
              $region44: #{baseline_vit_forward.21} parent=39 // loop_body
                %v267 = vld [vmem:[%s265] sm:$0xff]
                %268 = vst [vmem:[%s266] sm:$0xff] %v267
                %v269 = vld [vmem:[%s265 + $0x8] sm:$0xff]
                %270 = vst [vmem:[%s266 + $0x8] sm:$0xff] %v269
                %v271 = vld [vmem:[%s265 + $0x20] sm:$0xff]
                %272 = vst [vmem:[%s266 + $0x10] sm:$0xff] %v271
                %v273 = vld [vmem:[%s265 + $0x28] sm:$0xff]
                %274 = vst [vmem:[%s266 + $0x18] sm:$0xff] %v273
                %v275 = vld [vmem:[%s265 + $0x40] sm:$0xff]
                %276 = vst [vmem:[%s266 + $0x20] sm:$0xff] %v275
                %v277 = vld [vmem:[%s265 + $0x48] sm:$0xff]
                %278 = vst [vmem:[%s266 + $0x28] sm:$0xff] %v277
                %v279 = vld [vmem:[%s265 + $0x60] sm:$0xff]
                %280 = vst [vmem:[%s266 + $0x30] sm:$0xff] %v279
                %v281 = vld [vmem:[%s265 + $0x68] sm:$0xff]
                %282 = vst [vmem:[%s266 + $0x38] sm:$0xff] %v281
                %v283 = vld [vmem:[%s265 + $0x80] sm:$0xff]
                %284 = vst [vmem:[%s266 + $0x40] sm:$0xff] %v283
                %v285 = vld [vmem:[%s265 + $0x88] sm:$0xff]
                %286 = vst [vmem:[%s266 + $0x48] sm:$0xff] %v285
                %v287 = vld [vmem:[%s265 + $0xa0] sm:$0xff]
                %288 = vst [vmem:[%s266 + $0x50] sm:$0xff] %v287
                %v289 = vld [vmem:[%s265 + $0xa8] sm:$0xff]
                %290 = vst [vmem:[%s266 + $0x58] sm:$0xff] %v289
                %v291 = vld [vmem:[%s265 + $0xc0] sm:$0xff]
                %292 = vst [vmem:[%s266 + $0x60] sm:$0xff] %v291
                %v293 = vld [vmem:[%s265 + $0xc8] sm:$0xff]
                %294 = vst [vmem:[%s266 + $0x68] sm:$0xff] %v293
                %v295 = vld [vmem:[%s265 + $0xe0] sm:$0xff]
                %296 = vst [vmem:[%s266 + $0x70] sm:$0xff] %v295
                %v297 = vld [vmem:[%s265 + $0xe8] sm:$0xff]
                %298 = vst [vmem:[%s266 + $0x78] sm:$0xff] %v297
                %v299 = vld [vmem:[%s265 + $0x100] sm:$0xff]
                %300 = vst [vmem:[%s266 + $0x80] sm:$0xff] %v299
                %v301 = vld [vmem:[%s265 + $0x108] sm:$0xff]
                %302 = vst [vmem:[%s266 + $0x88] sm:$0xff] %v301
                %v303 = vld [vmem:[%s265 + $0x120] sm:$0xff]
                %304 = vst [vmem:[%s266 + $0x90] sm:$0xff] %v303
                %v305 = vld [vmem:[%s265 + $0x128] sm:$0xff]
                %306 = vst [vmem:[%s266 + $0x98] sm:$0xff] %v305
                %v307 = vld [vmem:[%s265 + $0x140] sm:$0xff]
                %308 = vst [vmem:[%s266 + $0xa0] sm:$0xff] %v307
                %v309 = vld [vmem:[%s265 + $0x148] sm:$0xff]
                %310 = vst [vmem:[%s266 + $0xa8] sm:$0xff] %v309
                %v311 = vld [vmem:[%s265 + $0x160] sm:$0xff]
                %312 = vst [vmem:[%s266 + $0xb0] sm:$0xff] %v311
                %v313 = vld [vmem:[%s265 + $0x168] sm:$0xff]
                %314 = vst [vmem:[%s266 + $0xb8] sm:$0xff] %v313
                %v315 = vld [vmem:[%s265 + $0x180] sm:$0xff]
                %316 = vst [vmem:[%s266 + $0xc0] sm:$0xff] %v315
                %v317 = vld [vmem:[%s265 + $0x188] sm:$0xff]
                %318 = vst [vmem:[%s266 + $0xc8] sm:$0xff] %v317
                %v319 = vld [vmem:[%s265 + $0x1a0] sm:$0xff]
                %320 = vst [vmem:[%s266 + $0xd0] sm:$0xff] %v319
                %v321 = vld [vmem:[%s265 + $0x1a8] sm:$0xff]
                %322 = vst [vmem:[%s266 + $0xd8] sm:$0xff] %v321
                %v323 = vld [vmem:[%s265 + $0x1c0] sm:$0xff]
                %324 = vst [vmem:[%s266 + $0xe0] sm:$0xff] %v323
                %v325 = vld [vmem:[%s265 + $0x1c8] sm:$0xff]
                %326 = vst [vmem:[%s266 + $0xe8] sm:$0xff] %v325
                %v327 = vld [vmem:[%s265 + $0x1e0] sm:$0xff]
                %328 = vst [vmem:[%s266 + $0xf0] sm:$0xff] %v327
                %v329 = vld [vmem:[%s265 + $0x1e8] sm:$0xff]
                %330 = vst [vmem:[%s266 + $0xf8] sm:$0xff] %v329
                %v331 = vld [vmem:[%s265 + $0x200] sm:$0xff]
                %332 = vst [vmem:[%s266 + $0x100] sm:$0xff] %v331
                %v333 = vld [vmem:[%s265 + $0x208] sm:$0xff]
                %334 = vst [vmem:[%s266 + $0x108] sm:$0xff] %v333
                %v335 = vld [vmem:[%s265 + $0x220] sm:$0xff]
                %336 = vst [vmem:[%s266 + $0x110] sm:$0xff] %v335
                %v337 = vld [vmem:[%s265 + $0x228] sm:$0xff]
                %338 = vst [vmem:[%s266 + $0x118] sm:$0xff] %v337
                %v339 = vld [vmem:[%s265 + $0x240] sm:$0xff]
                %340 = vst [vmem:[%s266 + $0x120] sm:$0xff] %v339
                %v341 = vld [vmem:[%s265 + $0x248] sm:$0xff]
                %342 = vst [vmem:[%s266 + $0x128] sm:$0xff] %v341
                %v343 = vld [vmem:[%s265 + $0x260] sm:$0xff]
                %344 = vst [vmem:[%s266 + $0x130] sm:$0xff] %v343
                %v345 = vld [vmem:[%s265 + $0x268] sm:$0xff]
                %346 = vst [vmem:[%s266 + $0x138] sm:$0xff] %v345
                %v347 = vld [vmem:[%s265 + $0x280] sm:$0xff]
                %348 = vst [vmem:[%s266 + $0x140] sm:$0xff] %v347
                %v349 = vld [vmem:[%s265 + $0x288] sm:$0xff]
                %350 = vst [vmem:[%s266 + $0x148] sm:$0xff] %v349
                %v351 = vld [vmem:[%s265 + $0x2a0] sm:$0xff]
                %352 = vst [vmem:[%s266 + $0x150] sm:$0xff] %v351
                %v353 = vld [vmem:[%s265 + $0x2a8] sm:$0xff]
                %354 = vst [vmem:[%s266 + $0x158] sm:$0xff] %v353
                %v355 = vld [vmem:[%s265 + $0x2c0] sm:$0xff]
                %356 = vst [vmem:[%s266 + $0x160] sm:$0xff] %v355
                %v357 = vld [vmem:[%s265 + $0x2c8] sm:$0xff]
                %358 = vst [vmem:[%s266 + $0x168] sm:$0xff] %v357
                %v359 = vld [vmem:[%s265 + $0x2e0] sm:$0xff]
                %360 = vst [vmem:[%s266 + $0x170] sm:$0xff] %v359
                %v361 = vld [vmem:[%s265 + $0x2e8] sm:$0xff]
                %362 = vst [vmem:[%s266 + $0x178] sm:$0xff] %v361
                %v363 = vld [vmem:[%s265 + $0x300] sm:$0xff]
                %364 = vst [vmem:[%s266 + $0x180] sm:$0xff] %v363
                %v365 = vld [vmem:[%s265 + $0x308] sm:$0xff]
                %366 = vst [vmem:[%s266 + $0x188] sm:$0xff] %v365
                %v367 = vld [vmem:[%s265 + $0x320] sm:$0xff]
                %368 = vst [vmem:[%s266 + $0x190] sm:$0xff] %v367
                %v369 = vld [vmem:[%s265 + $0x328] sm:$0xff]
                %370 = vst [vmem:[%s266 + $0x198] sm:$0xff] %v369
                %v371 = vld [vmem:[%s265 + $0x340] sm:$0xff]
                %372 = vst [vmem:[%s266 + $0x1a0] sm:$0xff] %v371
                %v373 = vld [vmem:[%s265 + $0x348] sm:$0xff]
                %374 = vst [vmem:[%s266 + $0x1a8] sm:$0xff] %v373
                %v375 = vld [vmem:[%s265 + $0x360] sm:$0xff]
                %376 = vst [vmem:[%s266 + $0x1b0] sm:$0xff] %v375
                %v377 = vld [vmem:[%s265 + $0x368] sm:$0xff]
                %378 = vst [vmem:[%s266 + $0x1b8] sm:$0xff] %v377
                %v379 = vld [vmem:[%s265 + $0x380] sm:$0xff]
                %380 = vst [vmem:[%s266 + $0x1c0] sm:$0xff] %v379
                %v381 = vld [vmem:[%s265 + $0x388] sm:$0xff]
                %382 = vst [vmem:[%s266 + $0x1c8] sm:$0xff] %v381
                %v383 = vld [vmem:[%s265 + $0x3a0] sm:$0xff]
                %384 = vst [vmem:[%s266 + $0x1d0] sm:$0xff] %v383
                %v385 = vld [vmem:[%s265 + $0x3a8] sm:$0xff]
                %386 = vst [vmem:[%s266 + $0x1d8] sm:$0xff] %v385
                %v387 = vld [vmem:[%s265 + $0x3c0] sm:$0xff]
                %388 = vst [vmem:[%s266 + $0x1e0] sm:$0xff] %v387
                %v389 = vld [vmem:[%s265 + $0x3c8] sm:$0xff]
                %390 = vst [vmem:[%s266 + $0x1e8] sm:$0xff] %v389
                %v391 = vld [vmem:[%s265 + $0x3e0] sm:$0xff]
                %392 = vst [vmem:[%s266 + $0x1f0] sm:$0xff] %v391
                %v393 = vld [vmem:[%s265 + $0x3e8] sm:$0xff]
                %394 = vst [vmem:[%s266 + $0x1f8] sm:$0xff] %v393
              $region45: #{baseline_vit_forward.21} parent=39 // loop_footer
                %s264 = sadd.s32 1, %s260
              $region46: #{baseline_vit_forward.21} parent=39 // loop_footer_branch
                %259 = sbr.rel target = $region42
              $region47: #{baseline_vit_forward.21} parent=39 // loop_exit
                _
            $region40: #{baseline_vit_forward.21} parent=35 // pred_fallthru
              _
            // Predicated region
            $region48: #{baseline_vit_forward.21} parent=35 // pred_check
              _
            $region49: #{baseline_vit_forward.21} parent=35 // pred_check_branch
              %396 = sbr.rel target = $region51
            $region50: #{baseline_vit_forward.21} parent=35 // pred_region
              _
            $region51: #{baseline_vit_forward.21} parent=35 // pred_fallthru
              _
          $region36: #{baseline_vit_forward.21} parent=31 // pred_fallthru
            _
          %397 = vnop
        $region32: #{baseline_vit_forward.21} parent=27 // pred_fallthru
          _
        // Predicated region
        $region52: #{baseline_vit_forward.21} parent=27 // pred_check
          %p398 = pneg %p158
        $region53: #{baseline_vit_forward.21} parent=27 // pred_check_branch
          %400 = sbr.rel (%p398) target = $region55
        $region54: #{baseline_vit_forward.21} parent=27 // pred_region
          %s401 = smul.u32 4, %s19
          %p402 = scmp.lt.s32.totalorder %s401, 7
          %s403 = scalar_select %p402, %s401, 7
          %s404 = scalar_lea.vmem %s4, %s403
          %s405 = smul.u32 4, %s19
        $region55: #{baseline_vit_forward.21} parent=27 // pred_fallthru
          _
      $region28: #{baseline_vit_forward.21} parent=5 // pred_fallthru
        _
      %p406 = scmp.le.s32.totalorder 1, %s11
      %p407 = scmp.lt.s32.totalorder %s11, 3
      %p408 = pnand %p406, %p407
      %p409 = pneg %p408
      // Predicated region
      $region56: #{baseline_vit_forward.21} parent=5 // pred_check
        _
      $region57: #{baseline_vit_forward.21} parent=5 // pred_check_branch
        %411 = sbr.rel (%p408) target = $region59
      $region58: #{baseline_vit_forward.21} parent=5 // pred_region
        %s412 = ssub.s32 %s11, 1
        %s413 = sand.u32 %s73, 1
        %s414 = sand.u32 %s73, 1
        %s415 = smul.addr %s414, 512
        %s416 = scalar_lea.vmem [#allocation3], %s415
        // Predicated region
        $region60: #{baseline_vit_forward.21} parent=58 // pred_check
          %p417 = pneg %p86
        $region61: #{baseline_vit_forward.21} parent=58 // pred_check_branch
          %419 = sbr.rel (%p417) target = $region63
        $region62: #{baseline_vit_forward.21} parent=58 // pred_region
          _
        $region63: #{baseline_vit_forward.21} parent=58 // pred_fallthru
          _
        %s420 = smul.u32 4, %s21
        %s421 = smul.u32 2, %s23
        %p422 = scmp.lt.s32.totalorder %s420, 3
        %s423 = scalar_select %p422, %s420, 3
        %p424 = scmp.lt.s32.totalorder %s421, 1
        %s425 = scalar_select %p424, %s421, 1
        %s426 = smul.addr %s423, 2
        %s427 = sadd.s32 %s425, %s426
        %s428 = smul.addr %s427, 8
        %s429 = scalar_lea.vmem %s0, %s428
        %p430 = pneg %p58
        %p431 = pneg %p55
        %s432 = sand.u32 %s73, 1
        %s433 = sand.u32 %s73, 1
        %s434 = smul.addr %s433, 512
        %s435 = scalar_lea.vmem [#allocation3], %s434
        %p436 = pneg %p86
        %p437 = pneg %p83
        %s438 = smul.u32 2, %s23
        %p439 = scmp.lt.s32.totalorder %s438, 1
        %s440 = scalar_select %p439, %s438, 1
        %s441 = scalar_lea.vmem %s2, %s440
        %p442 = pneg %p112
        %p443 = pneg %p109
        %s444 = smul.u32 2, %s23
        %p445 = scmp.lt.s32.totalorder %s444, 1
        %s446 = scalar_select %p445, %s444, 1
        %s447 = scalar_lea.vmem %s3, %s446
        %p448 = pneg %p138
        %p449 = pneg %p135
        %s450 = smul.u32 4, %s22
        %p451 = scmp.lt.s32.totalorder %s450, 7
        %s452 = scalar_select %p451, %s450, 7
        %s453 = scalar_lea.vmem %s4, %s452
        %p454 = pneg %p164
        %p455 = pneg %p161
        %p456 = pneg %p192
        %p457 = pneg %p189
        %s458 = sand.u32 %s179, 1
        %s459 = sand.u32 %s179, 1
        %s460 = smul.addr %s459, 64
        %s461 = scalar_lea.vmem [#allocation4], %s460
        %s462 = smul.u32 4, %s21
        %s463 = smul.u32 2, %s23
        %p464 = scmp.lt.s32.totalorder %s462, 3
        %s465 = scalar_select %p464, %s462, 3
        %p466 = scmp.lt.s32.totalorder %s463, 1
        %s467 = scalar_select %p466, %s463, 1
        %s468 = smul.addr %s465, 2
        %s469 = sadd.s32 %s467, %s468
        %s470 = smul.addr %s469, 8
        %s471 = scalar_lea.vmem %s0, %s470
        %s472 = smul.u32 4, %s21
        %s473 = smul.u32 2, %s23
        %s474 = smul.u32 32, %s23
        %s475 = smul.u32 4, %s22
        %s476 = smul.u32 2, %s23
        %p477 = scmp.lt.s32.totalorder %s476, 1
        %s478 = scalar_select %p477, %s476, 1
        %s479 = scalar_lea.vmem %s2, %s478
        %s480 = smul.u32 2, %s23
        %s481 = smul.u32 2, %s23
        %p482 = scmp.lt.s32.totalorder %s481, 1
        %s483 = scalar_select %p482, %s481, 1
        %s484 = scalar_lea.vmem %s3, %s483
        %s485 = smul.u32 2, %s23
        %s486 = smul.u32 4, %s22
        %p487 = scmp.lt.s32.totalorder %s486, 7
        %s488 = scalar_select %p487, %s486, 7
        %s489 = scalar_lea.vmem %s4, %s488
        %s490 = smul.u32 4, %s22
        %s491 = smul.u32 4, %s21
        %s492 = smul.u32 4, %s22
        %v493 = vld [vmem:[%s471] sm:$0xff]
        %v494 = vld [vmem:[%s471 + $0x8] sm:$0xff]
        %v495 = vld [vmem:[%s471 + $0x10] sm:$0xff]
        %v496 = vld [vmem:[%s471 + $0x18] sm:$0xff]
        %v497 = vld [vmem:[%s471 + $0x20] sm:$0xff]
        %v498 = vld [vmem:[%s471 + $0x28] sm:$0xff]
        %v499 = vld [vmem:[%s471 + $0x30] sm:$0xff]
        %v500 = vld [vmem:[%s471 + $0x38] sm:$0xff]
        %v501 = vadd.f32 %v493, %v494
        %502 = vadd.xlane.f32.xlu0 %v501
        %v503 = vpop.xlane.xlu0 %502
        %v504 = vadd.f32 %v495, %v496
        %505 = vadd.xlane.f32.xlu0 %v504
        %v506 = vpop.xlane.xlu0 %505
        %v507 = vadd.f32 %v497, %v498
        %508 = vadd.xlane.f32.xlu0 %v507
        %v509 = vpop.xlane.xlu0 %508
        %v510 = vadd.f32 %v499, %v500
        %511 = vadd.xlane.f32.xlu0 %v510
        %v512 = vpop.xlane.xlu0 %511
        %v513 = vrcp.pop 256.0
        %v514 = vmul.f32 256.0, %v513
        %v515 = vsub.f32 1.0, %v514
        %v516 = vmul.f32 %v513, %v515
        %v517 = vadd.f32 %v513, %v516
        %vm518 = vweird.f32 %v513
        %v519 = vsel %vm518, %v513, %v517
        %v520 = vmul.f32 %v503, %v519
        %v521 = vmul.f32 %v506, %v519
        %v522 = vmul.f32 %v509, %v519
        %v523 = vmul.f32 %v512, %v519
        %v524 = vsub.f32 %v493, %v520
        %v525 = vsub.f32 %v494, %v520
        %v526 = vsub.f32 %v495, %v521
        %v527 = vsub.f32 %v496, %v521
        %v528 = vsub.f32 %v497, %v522
        %v529 = vsub.f32 %v498, %v522
        %v530 = vsub.f32 %v499, %v523
        %v531 = vsub.f32 %v500, %v523
        %v532 = vmul.f32 %v524, %v524
        %v533 = vmul.f32 %v525, %v525
        %v534 = vmul.f32 %v526, %v526
        %v535 = vmul.f32 %v527, %v527
        %v536 = vmul.f32 %v528, %v528
        %v537 = vmul.f32 %v529, %v529
        %v538 = vmul.f32 %v530, %v530
        %v539 = vmul.f32 %v531, %v531
        %v540 = vadd.f32 %v532, %v533
        %541 = vadd.xlane.f32.xlu0 %v540
        %v542 = vpop.xlane.xlu0 %541
        %v543 = vadd.f32 %v534, %v535
        %544 = vadd.xlane.f32.xlu0 %v543
        %v545 = vpop.xlane.xlu0 %544
        %v546 = vadd.f32 %v536, %v537
        %547 = vadd.xlane.f32.xlu0 %v546
        %v548 = vpop.xlane.xlu0 %547
        %v549 = vadd.f32 %v538, %v539
        %550 = vadd.xlane.f32.xlu0 %v549
        %v551 = vpop.xlane.xlu0 %550
        %v552 = vmul.f32 %v542, %v519
        %v553 = vmul.f32 %v545, %v519
        %v554 = vmul.f32 %v548, %v519
        %v555 = vmul.f32 %v551, %v519
        %v556 = vadd.f32 %v552, 1e-06
        %v557 = vadd.f32 %v553, 1e-06
        %v558 = vadd.f32 %v554, 1e-06
        %v559 = vadd.f32 %v555, 1e-06
        %v560 = vrsqrt.pop %v556
        %v561 = vmul.f32 %v560, %v556
        %v562 = vmul.f32 %v561, %v560
        %v563 = vmul.f32 0.5, %v562
        %v564 = vsub.f32 1.5, %v563
        %v565 = vmul.f32 %v560, %v564
        %vm566 = vweird.f32 %v556
        %vm567 = vweird.f32 %v560
        %vm568 = vmor %vm566, %vm567
        %v569 = vsel %vm568, %v560, %v565
        %v570 = vrsqrt.pop %v557
        %v571 = vmul.f32 %v570, %v557
        %v572 = vmul.f32 %v571, %v570
        %v573 = vmul.f32 0.5, %v572
        %v574 = vsub.f32 1.5, %v573
        %v575 = vmul.f32 %v570, %v574
        %vm576 = vweird.f32 %v557
        %vm577 = vweird.f32 %v570
        %vm578 = vmor %vm576, %vm577
        %v579 = vsel %vm578, %v570, %v575
        %v580 = vrsqrt.pop %v558
        %v581 = vmul.f32 %v580, %v558
        %v582 = vmul.f32 %v581, %v580
        %v583 = vmul.f32 0.5, %v582
        %v584 = vsub.f32 1.5, %v583
        %v585 = vmul.f32 %v580, %v584
        %vm586 = vweird.f32 %v558
        %vm587 = vweird.f32 %v580
        %vm588 = vmor %vm586, %vm587
        %v589 = vsel %vm588, %v580, %v585
        %v590 = vrsqrt.pop %v559
        %v591 = vmul.f32 %v590, %v559
        %v592 = vmul.f32 %v591, %v590
        %v593 = vmul.f32 0.5, %v592
        %v594 = vsub.f32 1.5, %v593
        %v595 = vmul.f32 %v590, %v594
        %vm596 = vweird.f32 %v559
        %vm597 = vweird.f32 %v590
        %vm598 = vmor %vm596, %vm597
        %v599 = vsel %vm598, %v590, %v595
        %v600 = vmul.f32 %v524, %v569
        %v601 = vmul.f32 %v525, %v569
        %v602 = vmul.f32 %v526, %v579
        %v603 = vmul.f32 %v527, %v579
        %v604 = vmul.f32 %v528, %v589
        %v605 = vmul.f32 %v529, %v589
        %v606 = vmul.f32 %v530, %v599
        %v607 = vmul.f32 %v531, %v599
        %v608 = vld [vmem:[%s479] sm:$0x3]
        %v610 = vperm.slane %v608, 0
        %v611 = vperm.slane %v608, 1
        %v614 = vmul.f32 %v600, %v610
        %v615 = vmul.f32 %v601, %v611
        %v616 = vmul.f32 %v602, %v610
        %v617 = vmul.f32 %v603, %v611
        %v618 = vmul.f32 %v604, %v610
        %v619 = vmul.f32 %v605, %v611
        %v620 = vmul.f32 %v606, %v610
        %v621 = vmul.f32 %v607, %v611
        %v622 = vld [vmem:[%s484] sm:$0x3]
        %v624 = vperm.slane %v622, 0
        %v625 = vperm.slane %v622, 1
        %v628 = vadd.f32 %v614, %v624
        %v629 = vadd.f32 %v615, %v625
        %v630 = vadd.f32 %v616, %v624
        %v631 = vadd.f32 %v617, %v625
        %v632 = vadd.f32 %v618, %v624
        %v633 = vadd.f32 %v619, %v625
        %v634 = vadd.f32 %v620, %v624
        %v635 = vadd.f32 %v621, %v625
        %v636 = vpack.c.bf16 %v630, %v628
        %v637 = vpack.c.bf16 %v631, %v629
        %v638 = vpack.c.bf16 %v634, %v632
        %v639 = vpack.c.bf16 %v635, %v633
        %p640 = scmp.eq.s32.totalorder %s23, 0
        // Predicated region
        $region64: #{baseline_vit_forward.21} parent=58 // pred_check
          %p641 = pneg %p640
        $region65: #{baseline_vit_forward.21} parent=58 // pred_check_branch
          %643 = sbr.rel (%p641) target = $region67
        $region66: #{baseline_vit_forward.21} parent=58 // pred_region
          %644 = vst [vmem:[#allocation2] sm:$0xff] 0.0
          %645 = vst [vmem:[#allocation2 + $0x8] sm:$0xff] 0.0
          %646 = vst [vmem:[#allocation2 + $0x10] sm:$0xff] 0.0
          %647 = vst [vmem:[#allocation2 + $0x18] sm:$0xff] 0.0
          %648 = vst [vmem:[#allocation2 + $0x20] sm:$0xff] 0.0
          %649 = vst [vmem:[#allocation2 + $0x28] sm:$0xff] 0.0
          %650 = vst [vmem:[#allocation2 + $0x30] sm:$0xff] 0.0
          %651 = vst [vmem:[#allocation2 + $0x38] sm:$0xff] 0.0
          %652 = vst [vmem:[#allocation2 + $0x40] sm:$0xff] 0.0
          %653 = vst [vmem:[#allocation2 + $0x48] sm:$0xff] 0.0
          %654 = vst [vmem:[#allocation2 + $0x50] sm:$0xff] 0.0
          %655 = vst [vmem:[#allocation2 + $0x58] sm:$0xff] 0.0
          %656 = vst [vmem:[#allocation2 + $0x60] sm:$0xff] 0.0
          %657 = vst [vmem:[#allocation2 + $0x68] sm:$0xff] 0.0
          %658 = vst [vmem:[#allocation2 + $0x70] sm:$0xff] 0.0
          %659 = vst [vmem:[#allocation2 + $0x78] sm:$0xff] 0.0
        $region67: #{baseline_vit_forward.21} parent=58 // pred_fallthru
          _
        %v660 = vld [vmem:[#allocation2] sm:$0xff]
        %v661 = vld [vmem:[#allocation2 + $0x8] sm:$0xff]
        %v662 = vld [vmem:[#allocation2 + $0x10] sm:$0xff]
        %v663 = vld [vmem:[#allocation2 + $0x18] sm:$0xff]
        %v664 = vld [vmem:[#allocation2 + $0x20] sm:$0xff]
        %v665 = vld [vmem:[#allocation2 + $0x28] sm:$0xff]
        %v666 = vld [vmem:[#allocation2 + $0x30] sm:$0xff]
        %v667 = vld [vmem:[#allocation2 + $0x38] sm:$0xff]
        %v668 = vld [vmem:[#allocation2 + $0x40] sm:$0xff]
        %v669 = vld [vmem:[#allocation2 + $0x48] sm:$0xff]
        %v670 = vld [vmem:[#allocation2 + $0x50] sm:$0xff]
        %v671 = vld [vmem:[#allocation2 + $0x58] sm:$0xff]
        %v672 = vld [vmem:[#allocation2 + $0x60] sm:$0xff]
        %v673 = vld [vmem:[#allocation2 + $0x68] sm:$0xff]
        %v674 = vld [vmem:[#allocation2 + $0x70] sm:$0xff]
        %v675 = vld [vmem:[#allocation2 + $0x78] sm:$0xff]
        %v676 = vld [vmem:[%s416] sm:$0xff]
        %v677 = vld [vmem:[%s416 + $0x8] sm:$0xff]
        %v678 = vld [vmem:[%s416 + $0x10] sm:$0xff]
        %v679 = vld [vmem:[%s416 + $0x18] sm:$0xff]
        %v680 = vld [vmem:[%s416 + $0x20] sm:$0xff]
        %v681 = vld [vmem:[%s416 + $0x28] sm:$0xff]
        %v682 = vld [vmem:[%s416 + $0x30] sm:$0xff]
        %v683 = vld [vmem:[%s416 + $0x38] sm:$0xff]
        %v684 = vld [vmem:[%s416 + $0x40] sm:$0xff]
        %v685 = vld [vmem:[%s416 + $0x48] sm:$0xff]
        %v686 = vld [vmem:[%s416 + $0x50] sm:$0xff]
        %v687 = vld [vmem:[%s416 + $0x58] sm:$0xff]
        %v688 = vld [vmem:[%s416 + $0x60] sm:$0xff]
        %v689 = vld [vmem:[%s416 + $0x68] sm:$0xff]
        %v690 = vld [vmem:[%s416 + $0x70] sm:$0xff]
        %v691 = vld [vmem:[%s416 + $0x78] sm:$0xff]
        %v692 = vld [vmem:[%s416 + $0x80] sm:$0xff]
        %v693 = vld [vmem:[%s416 + $0x88] sm:$0xff]
        %v694 = vld [vmem:[%s416 + $0x90] sm:$0xff]
        %v695 = vld [vmem:[%s416 + $0x98] sm:$0xff]
        %v696 = vld [vmem:[%s416 + $0xa0] sm:$0xff]
        %v697 = vld [vmem:[%s416 + $0xa8] sm:$0xff]
        %v698 = vld [vmem:[%s416 + $0xb0] sm:$0xff]
        %v699 = vld [vmem:[%s416 + $0xb8] sm:$0xff]
        %v700 = vld [vmem:[%s416 + $0xc0] sm:$0xff]
        %v701 = vld [vmem:[%s416 + $0xc8] sm:$0xff]
        %v702 = vld [vmem:[%s416 + $0xd0] sm:$0xff]
        %v703 = vld [vmem:[%s416 + $0xd8] sm:$0xff]
        %v704 = vld [vmem:[%s416 + $0xe0] sm:$0xff]
        %v705 = vld [vmem:[%s416 + $0xe8] sm:$0xff]
        %v706 = vld [vmem:[%s416 + $0xf0] sm:$0xff]
        %v707 = vld [vmem:[%s416 + $0xf8] sm:$0xff]
        %v708 = vld [vmem:[%s416 + $0x100] sm:$0xff]
        %v709 = vld [vmem:[%s416 + $0x108] sm:$0xff]
        %v710 = vld [vmem:[%s416 + $0x110] sm:$0xff]
        %v711 = vld [vmem:[%s416 + $0x118] sm:$0xff]
        %v712 = vld [vmem:[%s416 + $0x120] sm:$0xff]
        %v713 = vld [vmem:[%s416 + $0x128] sm:$0xff]
        %v714 = vld [vmem:[%s416 + $0x130] sm:$0xff]
        %v715 = vld [vmem:[%s416 + $0x138] sm:$0xff]
        %v716 = vld [vmem:[%s416 + $0x140] sm:$0xff]
        %v717 = vld [vmem:[%s416 + $0x148] sm:$0xff]
        %v718 = vld [vmem:[%s416 + $0x150] sm:$0xff]
        %v719 = vld [vmem:[%s416 + $0x158] sm:$0xff]
        %v720 = vld [vmem:[%s416 + $0x160] sm:$0xff]
        %v721 = vld [vmem:[%s416 + $0x168] sm:$0xff]
        %v722 = vld [vmem:[%s416 + $0x170] sm:$0xff]
        %v723 = vld [vmem:[%s416 + $0x178] sm:$0xff]
        %v724 = vld [vmem:[%s416 + $0x180] sm:$0xff]
        %v725 = vld [vmem:[%s416 + $0x188] sm:$0xff]
        %v726 = vld [vmem:[%s416 + $0x190] sm:$0xff]
        %v727 = vld [vmem:[%s416 + $0x198] sm:$0xff]
        %v728 = vld [vmem:[%s416 + $0x1a0] sm:$0xff]
        %v729 = vld [vmem:[%s416 + $0x1a8] sm:$0xff]
        %v730 = vld [vmem:[%s416 + $0x1b0] sm:$0xff]
        %v731 = vld [vmem:[%s416 + $0x1b8] sm:$0xff]
        %v732 = vld [vmem:[%s416 + $0x1c0] sm:$0xff]
        %v733 = vld [vmem:[%s416 + $0x1c8] sm:$0xff]
        %v734 = vld [vmem:[%s416 + $0x1d0] sm:$0xff]
        %v735 = vld [vmem:[%s416 + $0x1d8] sm:$0xff]
        %v736 = vld [vmem:[%s416 + $0x1e0] sm:$0xff]
        %v737 = vld [vmem:[%s416 + $0x1e8] sm:$0xff]
        %v738 = vld [vmem:[%s416 + $0x1f0] sm:$0xff]
        %v739 = vld [vmem:[%s416 + $0x1f8] sm:$0xff]
        %v804 = vunpack.c.l.b16 %v676
        %v805 = vunpack.c.h.b16 %v676
        %v806 = vunpack.c.l.b16 %v677
        %v807 = vunpack.c.h.b16 %v677
        %v808 = vunpack.c.l.b16 %v678
        %v809 = vunpack.c.h.b16 %v678
        %v810 = vunpack.c.l.b16 %v679
        %v811 = vunpack.c.h.b16 %v679
        %v812 = vunpack.c.l.b16 %v680
        %v813 = vunpack.c.h.b16 %v680
        %v814 = vunpack.c.l.b16 %v681
        %v815 = vunpack.c.h.b16 %v681
        %v816 = vunpack.c.l.b16 %v682
        %v817 = vunpack.c.h.b16 %v682
        %v818 = vunpack.c.l.b16 %v683
        %v819 = vunpack.c.h.b16 %v683
        %v820 = vunpack.c.l.b16 %v684
        %v821 = vunpack.c.h.b16 %v684
        %v822 = vunpack.c.l.b16 %v685
        %v823 = vunpack.c.h.b16 %v685
        %v824 = vunpack.c.l.b16 %v686
        %v825 = vunpack.c.h.b16 %v686
        %v826 = vunpack.c.l.b16 %v687
        %v827 = vunpack.c.h.b16 %v687
        %v828 = vunpack.c.l.b16 %v688
        %v829 = vunpack.c.h.b16 %v688
        %v830 = vunpack.c.l.b16 %v689
        %v831 = vunpack.c.h.b16 %v689
        %v832 = vunpack.c.l.b16 %v690
        %v833 = vunpack.c.h.b16 %v690
        %v834 = vunpack.c.l.b16 %v691
        %v835 = vunpack.c.h.b16 %v691
        %v836 = vunpack.c.l.b16 %v692
        %v837 = vunpack.c.h.b16 %v692
        %v838 = vunpack.c.l.b16 %v693
        %v839 = vunpack.c.h.b16 %v693
        %v840 = vunpack.c.l.b16 %v694
        %v841 = vunpack.c.h.b16 %v694
        %v842 = vunpack.c.l.b16 %v695
        %v843 = vunpack.c.h.b16 %v695
        %v844 = vunpack.c.l.b16 %v696
        %v845 = vunpack.c.h.b16 %v696
        %v846 = vunpack.c.l.b16 %v697
        %v847 = vunpack.c.h.b16 %v697
        %v848 = vunpack.c.l.b16 %v698
        %v849 = vunpack.c.h.b16 %v698
        %v850 = vunpack.c.l.b16 %v699
        %v851 = vunpack.c.h.b16 %v699
        %v852 = vunpack.c.l.b16 %v700
        %v853 = vunpack.c.h.b16 %v700
        %v854 = vunpack.c.l.b16 %v701
        %v855 = vunpack.c.h.b16 %v701
        %v856 = vunpack.c.l.b16 %v702
        %v857 = vunpack.c.h.b16 %v702
        %v858 = vunpack.c.l.b16 %v703
        %v859 = vunpack.c.h.b16 %v703
        %v860 = vunpack.c.l.b16 %v704
        %v861 = vunpack.c.h.b16 %v704
        %v862 = vunpack.c.l.b16 %v705
        %v863 = vunpack.c.h.b16 %v705
        %v864 = vunpack.c.l.b16 %v706
        %v865 = vunpack.c.h.b16 %v706
        %v866 = vunpack.c.l.b16 %v707
        %v867 = vunpack.c.h.b16 %v707
        %v868 = vunpack.c.l.b16 %v708
        %v869 = vunpack.c.h.b16 %v708
        %v870 = vunpack.c.l.b16 %v709
        %v871 = vunpack.c.h.b16 %v709
        %v872 = vunpack.c.l.b16 %v710
        %v873 = vunpack.c.h.b16 %v710
        %v874 = vunpack.c.l.b16 %v711
        %v875 = vunpack.c.h.b16 %v711
        %v876 = vunpack.c.l.b16 %v712
        %v877 = vunpack.c.h.b16 %v712
        %v878 = vunpack.c.l.b16 %v713
        %v879 = vunpack.c.h.b16 %v713
        %v880 = vunpack.c.l.b16 %v714
        %v881 = vunpack.c.h.b16 %v714
        %v882 = vunpack.c.l.b16 %v715
        %v883 = vunpack.c.h.b16 %v715
        %v884 = vunpack.c.l.b16 %v716
        %v885 = vunpack.c.h.b16 %v716
        %v886 = vunpack.c.l.b16 %v717
        %v887 = vunpack.c.h.b16 %v717
        %v888 = vunpack.c.l.b16 %v718
        %v889 = vunpack.c.h.b16 %v718
        %v890 = vunpack.c.l.b16 %v719
        %v891 = vunpack.c.h.b16 %v719
        %v892 = vunpack.c.l.b16 %v720
        %v893 = vunpack.c.h.b16 %v720
        %v894 = vunpack.c.l.b16 %v721
        %v895 = vunpack.c.h.b16 %v721
        %v896 = vunpack.c.l.b16 %v722
        %v897 = vunpack.c.h.b16 %v722
        %v898 = vunpack.c.l.b16 %v723
        %v899 = vunpack.c.h.b16 %v723
        %v900 = vunpack.c.l.b16 %v724
        %v901 = vunpack.c.h.b16 %v724
        %v902 = vunpack.c.l.b16 %v725
        %v903 = vunpack.c.h.b16 %v725
        %v904 = vunpack.c.l.b16 %v726
        %v905 = vunpack.c.h.b16 %v726
        %v906 = vunpack.c.l.b16 %v727
        %v907 = vunpack.c.h.b16 %v727
        %v908 = vunpack.c.l.b16 %v728
        %v909 = vunpack.c.h.b16 %v728
        %v910 = vunpack.c.l.b16 %v729
        %v911 = vunpack.c.h.b16 %v729
        %v912 = vunpack.c.l.b16 %v730
        %v913 = vunpack.c.h.b16 %v730
        %v914 = vunpack.c.l.b16 %v731
        %v915 = vunpack.c.h.b16 %v731
        %v916 = vunpack.c.l.b16 %v732
        %v917 = vunpack.c.h.b16 %v732
        %v918 = vunpack.c.l.b16 %v733
        %v919 = vunpack.c.h.b16 %v733
        %v920 = vunpack.c.l.b16 %v734
        %v921 = vunpack.c.h.b16 %v734
        %v922 = vunpack.c.l.b16 %v735
        %v923 = vunpack.c.h.b16 %v735
        %v924 = vunpack.c.l.b16 %v736
        %v925 = vunpack.c.h.b16 %v736
        %v926 = vunpack.c.l.b16 %v737
        %v927 = vunpack.c.h.b16 %v737
        %v928 = vunpack.c.l.b16 %v738
        %v929 = vunpack.c.h.b16 %v738
        %v930 = vunpack.c.l.b16 %v739
        %v931 = vunpack.c.h.b16 %v739
        %v932 = vpack.c.b16 %v808, %v804
        %v933 = vpack.c.b16 %v809, %v805
        %v934 = vpack.c.b16 %v810, %v806
        %v935 = vpack.c.b16 %v811, %v807
        %v936 = vpack.c.b16 %v816, %v812
        %v937 = vpack.c.b16 %v817, %v813
        %v938 = vpack.c.b16 %v818, %v814
        %v939 = vpack.c.b16 %v819, %v815
        %v940 = vpack.c.b16 %v824, %v820
        %v941 = vpack.c.b16 %v825, %v821
        %v942 = vpack.c.b16 %v826, %v822
        %v943 = vpack.c.b16 %v827, %v823
        %v944 = vpack.c.b16 %v832, %v828
        %v945 = vpack.c.b16 %v833, %v829
        %v946 = vpack.c.b16 %v834, %v830
        %v947 = vpack.c.b16 %v835, %v831
        %v948 = vpack.c.b16 %v840, %v836
        %v949 = vpack.c.b16 %v841, %v837
        %v950 = vpack.c.b16 %v842, %v838
        %v951 = vpack.c.b16 %v843, %v839
        %v952 = vpack.c.b16 %v848, %v844
        %v953 = vpack.c.b16 %v849, %v845
        %v954 = vpack.c.b16 %v850, %v846
        %v955 = vpack.c.b16 %v851, %v847
        %v956 = vpack.c.b16 %v856, %v852
        %v957 = vpack.c.b16 %v857, %v853
        %v958 = vpack.c.b16 %v858, %v854
        %v959 = vpack.c.b16 %v859, %v855
        %v960 = vpack.c.b16 %v864, %v860
        %v961 = vpack.c.b16 %v865, %v861
        %v962 = vpack.c.b16 %v866, %v862
        %v963 = vpack.c.b16 %v867, %v863
        %v964 = vpack.c.b16 %v872, %v868
        %v965 = vpack.c.b16 %v873, %v869
        %v966 = vpack.c.b16 %v874, %v870
        %v967 = vpack.c.b16 %v875, %v871
        %v968 = vpack.c.b16 %v880, %v876
        %v969 = vpack.c.b16 %v881, %v877
        %v970 = vpack.c.b16 %v882, %v878
        %v971 = vpack.c.b16 %v883, %v879
        %v972 = vpack.c.b16 %v888, %v884
        %v973 = vpack.c.b16 %v889, %v885
        %v974 = vpack.c.b16 %v890, %v886
        %v975 = vpack.c.b16 %v891, %v887
        %v976 = vpack.c.b16 %v896, %v892
        %v977 = vpack.c.b16 %v897, %v893
        %v978 = vpack.c.b16 %v898, %v894
        %v979 = vpack.c.b16 %v899, %v895
        %v980 = vpack.c.b16 %v904, %v900
        %v981 = vpack.c.b16 %v905, %v901
        %v982 = vpack.c.b16 %v906, %v902
        %v983 = vpack.c.b16 %v907, %v903
        %v984 = vpack.c.b16 %v912, %v908
        %v985 = vpack.c.b16 %v913, %v909
        %v986 = vpack.c.b16 %v914, %v910
        %v987 = vpack.c.b16 %v915, %v911
        %v988 = vpack.c.b16 %v920, %v916
        %v989 = vpack.c.b16 %v921, %v917
        %v990 = vpack.c.b16 %v922, %v918
        %v991 = vpack.c.b16 %v923, %v919
        %v992 = vpack.c.b16 %v928, %v924
        %v993 = vpack.c.b16 %v929, %v925
        %v994 = vpack.c.b16 %v930, %v926
        %v995 = vpack.c.b16 %v931, %v927
        %1060 = vmatpush.bf16.msra.mxu0 %v960
        %1061 = vmatpush.bf16.msra.mxu0 %v956
        %1062 = vmatpush.bf16.msra.mxu0 %v952
        %1063 = vmatpush.bf16.msra.mxu0 %v948
        %1064 = vmatpush.bf16.msra.mxu0 %v944
        %1065 = vmatpush.bf16.msra.mxu0 %v940
        %1066 = vmatpush.bf16.msra.mxu0 %v936
        %1067 = vmatpush.bf16.msra.mxu0 %v932
        %1068 = vmatmul.bf16.gmra.mxu0 %v636
        %v1069 = vpop.f32.mrf.mxu0
        %v1070 = vadd.f32 0.0, %v1069
        %v1071 = vpop.f32.mrf.mxu0
        %v1072 = vadd.f32 0.0, %v1071
        %1073 = vmatmul.bf16.gmra.mxu0 %v638
        %v1074 = vpop.f32.mrf.mxu0
        %v1075 = vadd.f32 0.0, %v1074
        %v1076 = vpop.f32.mrf.mxu0
        %v1077 = vadd.f32 0.0, %v1076
        %1078 = vdwg.mxu0
        %1079 = vmatpush.bf16.msra.mxu0 %v992
        %1080 = vmatpush.bf16.msra.mxu0 %v988
        %1081 = vmatpush.bf16.msra.mxu0 %v984
        %1082 = vmatpush.bf16.msra.mxu0 %v980
        %1083 = vmatpush.bf16.msra.mxu0 %v976
        %1084 = vmatpush.bf16.msra.mxu0 %v972
        %1085 = vmatpush.bf16.msra.mxu0 %v968
        %1086 = vmatpush.bf16.msra.mxu0 %v964
        %1087 = vmatmul.bf16.gmra.mxu0 %v637
        %v1088 = vpop.f32.mrf.mxu0
        %v1089 = vadd.f32 %v1070, %v1088
        %v1090 = vpop.f32.mrf.mxu0
        %v1091 = vadd.f32 %v1072, %v1090
        %1092 = vmatmul.bf16.gmra.mxu0 %v639
        %v1093 = vpop.f32.mrf.mxu0
        %v1094 = vadd.f32 %v1075, %v1093
        %v1095 = vpop.f32.mrf.mxu0
        %v1096 = vadd.f32 %v1077, %v1095
        %1097 = vdwg.mxu0
        %1098 = vmatpush.bf16.msra.mxu0 %v961
        %1099 = vmatpush.bf16.msra.mxu0 %v957
        %1100 = vmatpush.bf16.msra.mxu0 %v953
        %1101 = vmatpush.bf16.msra.mxu0 %v949
        %1102 = vmatpush.bf16.msra.mxu0 %v945
        %1103 = vmatpush.bf16.msra.mxu0 %v941
        %1104 = vmatpush.bf16.msra.mxu0 %v937
        %1105 = vmatpush.bf16.msra.mxu0 %v933
        %1106 = vmatmul.bf16.gmra.mxu0 %v636
        %v1107 = vpop.f32.mrf.mxu0
        %v1108 = vadd.f32 0.0, %v1107
        %v1109 = vpop.f32.mrf.mxu0
        %v1110 = vadd.f32 0.0, %v1109
        %1111 = vmatmul.bf16.gmra.mxu0 %v638
        %v1112 = vpop.f32.mrf.mxu0
        %v1113 = vadd.f32 0.0, %v1112
        %v1114 = vpop.f32.mrf.mxu0
        %v1115 = vadd.f32 0.0, %v1114
        %1116 = vdwg.mxu0
        %1117 = vmatpush.bf16.msra.mxu0 %v993
        %1118 = vmatpush.bf16.msra.mxu0 %v989
        %1119 = vmatpush.bf16.msra.mxu0 %v985
        %1120 = vmatpush.bf16.msra.mxu0 %v981
        %1121 = vmatpush.bf16.msra.mxu0 %v977
        %1122 = vmatpush.bf16.msra.mxu0 %v973
        %1123 = vmatpush.bf16.msra.mxu0 %v969
        %1124 = vmatpush.bf16.msra.mxu0 %v965
        %1125 = vmatmul.bf16.gmra.mxu0 %v637
        %v1126 = vpop.f32.mrf.mxu0
        %v1127 = vadd.f32 %v1108, %v1126
        %v1128 = vpop.f32.mrf.mxu0
        %v1129 = vadd.f32 %v1110, %v1128
        %1130 = vmatmul.bf16.gmra.mxu0 %v639
        %v1131 = vpop.f32.mrf.mxu0
        %v1132 = vadd.f32 %v1113, %v1131
        %v1133 = vpop.f32.mrf.mxu0
        %v1134 = vadd.f32 %v1115, %v1133
        %1135 = vdwg.mxu0
        %1136 = vmatpush.bf16.msra.mxu0 %v962
        %1137 = vmatpush.bf16.msra.mxu0 %v958
        %1138 = vmatpush.bf16.msra.mxu0 %v954
        %1139 = vmatpush.bf16.msra.mxu0 %v950
        %1140 = vmatpush.bf16.msra.mxu0 %v946
        %1141 = vmatpush.bf16.msra.mxu0 %v942
        %1142 = vmatpush.bf16.msra.mxu0 %v938
        %1143 = vmatpush.bf16.msra.mxu0 %v934
        %1144 = vmatmul.bf16.gmra.mxu0 %v636
        %v1145 = vpop.f32.mrf.mxu0
        %v1146 = vadd.f32 0.0, %v1145
        %v1147 = vpop.f32.mrf.mxu0
        %v1148 = vadd.f32 0.0, %v1147
        %1149 = vmatmul.bf16.gmra.mxu0 %v638
        %v1150 = vpop.f32.mrf.mxu0
        %v1151 = vadd.f32 0.0, %v1150
        %v1152 = vpop.f32.mrf.mxu0
        %v1153 = vadd.f32 0.0, %v1152
        %1154 = vdwg.mxu0
        %1155 = vmatpush.bf16.msra.mxu0 %v994
        %1156 = vmatpush.bf16.msra.mxu0 %v990
        %1157 = vmatpush.bf16.msra.mxu0 %v986
        %1158 = vmatpush.bf16.msra.mxu0 %v982
        %1159 = vmatpush.bf16.msra.mxu0 %v978
        %1160 = vmatpush.bf16.msra.mxu0 %v974
        %1161 = vmatpush.bf16.msra.mxu0 %v970
        %1162 = vmatpush.bf16.msra.mxu0 %v966
        %1163 = vmatmul.bf16.gmra.mxu0 %v637
        %v1164 = vpop.f32.mrf.mxu0
        %v1165 = vadd.f32 %v1146, %v1164
        %v1166 = vpop.f32.mrf.mxu0
        %v1167 = vadd.f32 %v1148, %v1166
        %1168 = vmatmul.bf16.gmra.mxu0 %v639
        %v1169 = vpop.f32.mrf.mxu0
        %v1170 = vadd.f32 %v1151, %v1169
        %v1171 = vpop.f32.mrf.mxu0
        %v1172 = vadd.f32 %v1153, %v1171
        %1173 = vdwg.mxu0
        %1174 = vmatpush.bf16.msra.mxu0 %v963
        %1175 = vmatpush.bf16.msra.mxu0 %v959
        %1176 = vmatpush.bf16.msra.mxu0 %v955
        %1177 = vmatpush.bf16.msra.mxu0 %v951
        %1178 = vmatpush.bf16.msra.mxu0 %v947
        %1179 = vmatpush.bf16.msra.mxu0 %v943
        %1180 = vmatpush.bf16.msra.mxu0 %v939
        %1181 = vmatpush.bf16.msra.mxu0 %v935
        %1182 = vmatmul.bf16.gmra.mxu0 %v636
        %v1183 = vpop.f32.mrf.mxu0
        %v1184 = vadd.f32 0.0, %v1183
        %v1185 = vpop.f32.mrf.mxu0
        %v1186 = vadd.f32 0.0, %v1185
        %1187 = vmatmul.bf16.gmra.mxu0 %v638
        %v1188 = vpop.f32.mrf.mxu0
        %v1189 = vadd.f32 0.0, %v1188
        %v1190 = vpop.f32.mrf.mxu0
        %v1191 = vadd.f32 0.0, %v1190
        %1192 = vdwg.mxu0
        %1193 = vmatpush.bf16.msra.mxu0 %v995
        %1194 = vmatpush.bf16.msra.mxu0 %v991
        %1195 = vmatpush.bf16.msra.mxu0 %v987
        %1196 = vmatpush.bf16.msra.mxu0 %v983
        %1197 = vmatpush.bf16.msra.mxu0 %v979
        %1198 = vmatpush.bf16.msra.mxu0 %v975
        %1199 = vmatpush.bf16.msra.mxu0 %v971
        %1200 = vmatpush.bf16.msra.mxu0 %v967
        %1201 = vmatmul.bf16.gmra.mxu0 %v637
        %v1202 = vpop.f32.mrf.mxu0
        %v1203 = vadd.f32 %v1184, %v1202
        %v1204 = vpop.f32.mrf.mxu0
        %v1205 = vadd.f32 %v1186, %v1204
        %1206 = vmatmul.bf16.gmra.mxu0 %v639
        %v1207 = vpop.f32.mrf.mxu0
        %v1208 = vadd.f32 %v1189, %v1207
        %v1209 = vpop.f32.mrf.mxu0
        %v1210 = vadd.f32 %v1191, %v1209
        %1211 = vdwg.mxu0
        %v1212 = vadd.f32 %v660, %v1089
        %v1213 = vadd.f32 %v661, %v1127
        %v1214 = vadd.f32 %v662, %v1165
        %v1215 = vadd.f32 %v663, %v1203
        %v1216 = vadd.f32 %v664, %v1091
        %v1217 = vadd.f32 %v665, %v1129
        %v1218 = vadd.f32 %v666, %v1167
        %v1219 = vadd.f32 %v667, %v1205
        %v1220 = vadd.f32 %v668, %v1094
        %v1221 = vadd.f32 %v669, %v1132
        %v1222 = vadd.f32 %v670, %v1170
        %v1223 = vadd.f32 %v671, %v1208
        %v1224 = vadd.f32 %v672, %v1096
        %v1225 = vadd.f32 %v673, %v1134
        %v1226 = vadd.f32 %v674, %v1172
        %v1227 = vadd.f32 %v675, %v1210
        %1228 = vst [vmem:[#allocation2] sm:$0xff] %v1212
        %1229 = vst [vmem:[#allocation2 + $0x8] sm:$0xff] %v1213
        %1230 = vst [vmem:[#allocation2 + $0x10] sm:$0xff] %v1214
        %1231 = vst [vmem:[#allocation2 + $0x18] sm:$0xff] %v1215
        %1232 = vst [vmem:[#allocation2 + $0x20] sm:$0xff] %v1216
        %1233 = vst [vmem:[#allocation2 + $0x28] sm:$0xff] %v1217
        %1234 = vst [vmem:[#allocation2 + $0x30] sm:$0xff] %v1218
        %1235 = vst [vmem:[#allocation2 + $0x38] sm:$0xff] %v1219
        %1236 = vst [vmem:[#allocation2 + $0x40] sm:$0xff] %v1220
        %1237 = vst [vmem:[#allocation2 + $0x48] sm:$0xff] %v1221
        %1238 = vst [vmem:[#allocation2 + $0x50] sm:$0xff] %v1222
        %1239 = vst [vmem:[#allocation2 + $0x58] sm:$0xff] %v1223
        %1240 = vst [vmem:[#allocation2 + $0x60] sm:$0xff] %v1224
        %1241 = vst [vmem:[#allocation2 + $0x68] sm:$0xff] %v1225
        %1242 = vst [vmem:[#allocation2 + $0x70] sm:$0xff] %v1226
        %1243 = vst [vmem:[#allocation2 + $0x78] sm:$0xff] %v1227
        // Predicated region
        $region68: #{baseline_vit_forward.21} parent=58 // pred_check
          %p1244 = pneg %p640
        $region69: #{baseline_vit_forward.21} parent=58 // pred_check_branch
          %1246 = sbr.rel (%p1244) target = $region71
        $region70: #{baseline_vit_forward.21} parent=58 // pred_region
          %v1247 = vld [vmem:[#allocation2] sm:$0xff]
          %v1248 = vld [vmem:[#allocation2 + $0x8] sm:$0xff]
          %v1249 = vld [vmem:[#allocation2 + $0x10] sm:$0xff]
          %v1250 = vld [vmem:[#allocation2 + $0x18] sm:$0xff]
          %v1251 = vld [vmem:[#allocation2 + $0x20] sm:$0xff]
          %v1252 = vld [vmem:[#allocation2 + $0x28] sm:$0xff]
          %v1253 = vld [vmem:[#allocation2 + $0x30] sm:$0xff]
          %v1254 = vld [vmem:[#allocation2 + $0x38] sm:$0xff]
          %v1255 = vld [vmem:[#allocation2 + $0x40] sm:$0xff]
          %v1256 = vld [vmem:[#allocation2 + $0x48] sm:$0xff]
          %v1257 = vld [vmem:[#allocation2 + $0x50] sm:$0xff]
          %v1258 = vld [vmem:[#allocation2 + $0x58] sm:$0xff]
          %v1259 = vld [vmem:[#allocation2 + $0x60] sm:$0xff]
          %v1260 = vld [vmem:[#allocation2 + $0x68] sm:$0xff]
          %v1261 = vld [vmem:[#allocation2 + $0x70] sm:$0xff]
          %v1262 = vld [vmem:[#allocation2 + $0x78] sm:$0xff]
          %v1263 = vld [vmem:[%s489] sm:$0xf]
          %v1265 = vperm.slane %v1263, 0
          %v1266 = vperm.slane %v1263, 1
          %v1267 = vperm.slane %v1263, 2
          %v1268 = vperm.slane %v1263, 3
          %v1273 = vadd.f32 %v1247, %v1265
          %v1274 = vadd.f32 %v1248, %v1266
          %v1275 = vadd.f32 %v1249, %v1267
          %v1276 = vadd.f32 %v1250, %v1268
          %v1277 = vadd.f32 %v1251, %v1265
          %v1278 = vadd.f32 %v1252, %v1266
          %v1279 = vadd.f32 %v1253, %v1267
          %v1280 = vadd.f32 %v1254, %v1268
          %v1281 = vadd.f32 %v1255, %v1265
          %v1282 = vadd.f32 %v1256, %v1266
          %v1283 = vadd.f32 %v1257, %v1267
          %v1284 = vadd.f32 %v1258, %v1268
          %v1285 = vadd.f32 %v1259, %v1265
          %v1286 = vadd.f32 %v1260, %v1266
          %v1287 = vadd.f32 %v1261, %v1267
          %v1288 = vadd.f32 %v1262, %v1268
          %v1289 = vmul.f32 %v1273, %v1273
          %v1290 = vmul.f32 %v1274, %v1274
          %v1291 = vmul.f32 %v1275, %v1275
          %v1292 = vmul.f32 %v1276, %v1276
          %v1293 = vmul.f32 %v1277, %v1277
          %v1294 = vmul.f32 %v1278, %v1278
          %v1295 = vmul.f32 %v1279, %v1279
          %v1296 = vmul.f32 %v1280, %v1280
          %v1297 = vmul.f32 %v1281, %v1281
          %v1298 = vmul.f32 %v1282, %v1282
          %v1299 = vmul.f32 %v1283, %v1283
          %v1300 = vmul.f32 %v1284, %v1284
          %v1301 = vmul.f32 %v1285, %v1285
          %v1302 = vmul.f32 %v1286, %v1286
          %v1303 = vmul.f32 %v1287, %v1287
          %v1304 = vmul.f32 %v1288, %v1288
          %v1305 = vmul.f32 %v1273, %v1289
          %v1306 = vmul.f32 %v1274, %v1290
          %v1307 = vmul.f32 %v1275, %v1291
          %v1308 = vmul.f32 %v1276, %v1292
          %v1309 = vmul.f32 %v1277, %v1293
          %v1310 = vmul.f32 %v1278, %v1294
          %v1311 = vmul.f32 %v1279, %v1295
          %v1312 = vmul.f32 %v1280, %v1296
          %v1313 = vmul.f32 %v1281, %v1297
          %v1314 = vmul.f32 %v1282, %v1298
          %v1315 = vmul.f32 %v1283, %v1299
          %v1316 = vmul.f32 %v1284, %v1300
          %v1317 = vmul.f32 %v1285, %v1301
          %v1318 = vmul.f32 %v1286, %v1302
          %v1319 = vmul.f32 %v1287, %v1303
          %v1320 = vmul.f32 %v1288, %v1304
          %v1321 = vmul.f32 %v1305, 0.044715
          %v1322 = vmul.f32 %v1306, 0.044715
          %v1323 = vmul.f32 %v1307, 0.044715
          %v1324 = vmul.f32 %v1308, 0.044715
          %v1325 = vmul.f32 %v1309, 0.044715
          %v1326 = vmul.f32 %v1310, 0.044715
          %v1327 = vmul.f32 %v1311, 0.044715
          %v1328 = vmul.f32 %v1312, 0.044715
          %v1329 = vmul.f32 %v1313, 0.044715
          %v1330 = vmul.f32 %v1314, 0.044715
          %v1331 = vmul.f32 %v1315, 0.044715
          %v1332 = vmul.f32 %v1316, 0.044715
          %v1333 = vmul.f32 %v1317, 0.044715
          %v1334 = vmul.f32 %v1318, 0.044715
          %v1335 = vmul.f32 %v1319, 0.044715
          %v1336 = vmul.f32 %v1320, 0.044715
          %v1337 = vadd.f32 %v1273, %v1321
          %v1338 = vadd.f32 %v1274, %v1322
          %v1339 = vadd.f32 %v1275, %v1323
          %v1340 = vadd.f32 %v1276, %v1324
          %v1341 = vadd.f32 %v1277, %v1325
          %v1342 = vadd.f32 %v1278, %v1326
          %v1343 = vadd.f32 %v1279, %v1327
          %v1344 = vadd.f32 %v1280, %v1328
          %v1345 = vadd.f32 %v1281, %v1329
          %v1346 = vadd.f32 %v1282, %v1330
          %v1347 = vadd.f32 %v1283, %v1331
          %v1348 = vadd.f32 %v1284, %v1332
          %v1349 = vadd.f32 %v1285, %v1333
          %v1350 = vadd.f32 %v1286, %v1334
          %v1351 = vadd.f32 %v1287, %v1335
          %v1352 = vadd.f32 %v1288, %v1336
          %v1353 = vmul.f32 %v1337, 0.7978846
          %v1354 = vmul.f32 %v1338, 0.7978846
          %v1355 = vmul.f32 %v1339, 0.7978846
          %v1356 = vmul.f32 %v1340, 0.7978846
          %v1357 = vmul.f32 %v1341, 0.7978846
          %v1358 = vmul.f32 %v1342, 0.7978846
          %v1359 = vmul.f32 %v1343, 0.7978846
          %v1360 = vmul.f32 %v1344, 0.7978846
          %v1361 = vmul.f32 %v1345, 0.7978846
          %v1362 = vmul.f32 %v1346, 0.7978846
          %v1363 = vmul.f32 %v1347, 0.7978846
          %v1364 = vmul.f32 %v1348, 0.7978846
          %v1365 = vmul.f32 %v1349, 0.7978846
          %v1366 = vmul.f32 %v1350, 0.7978846
          %v1367 = vmul.f32 %v1351, 0.7978846
          %v1368 = vmul.f32 %v1352, 0.7978846
          %v1369 = vtanh.pop %v1353
          %v1370 = vtanh.pop %v1354
          %v1371 = vtanh.pop %v1355
          %v1372 = vtanh.pop %v1356
          %v1373 = vtanh.pop %v1357
          %v1374 = vtanh.pop %v1358
          %v1375 = vtanh.pop %v1359
          %v1376 = vtanh.pop %v1360
          %v1377 = vtanh.pop %v1361
          %v1378 = vtanh.pop %v1362
          %v1379 = vtanh.pop %v1363
          %v1380 = vtanh.pop %v1364
          %v1381 = vtanh.pop %v1365
          %v1382 = vtanh.pop %v1366
          %v1383 = vtanh.pop %v1367
          %v1384 = vtanh.pop %v1368
          %v1385 = vadd.f32 %v1369, 1.0
          %v1386 = vadd.f32 %v1370, 1.0
          %v1387 = vadd.f32 %v1371, 1.0
          %v1388 = vadd.f32 %v1372, 1.0
          %v1389 = vadd.f32 %v1373, 1.0
          %v1390 = vadd.f32 %v1374, 1.0
          %v1391 = vadd.f32 %v1375, 1.0
          %v1392 = vadd.f32 %v1376, 1.0
          %v1393 = vadd.f32 %v1377, 1.0
          %v1394 = vadd.f32 %v1378, 1.0
          %v1395 = vadd.f32 %v1379, 1.0
          %v1396 = vadd.f32 %v1380, 1.0
          %v1397 = vadd.f32 %v1381, 1.0
          %v1398 = vadd.f32 %v1382, 1.0
          %v1399 = vadd.f32 %v1383, 1.0
          %v1400 = vadd.f32 %v1384, 1.0
          %v1401 = vmul.f32 %v1385, 0.5
          %v1402 = vmul.f32 %v1386, 0.5
          %v1403 = vmul.f32 %v1387, 0.5
          %v1404 = vmul.f32 %v1388, 0.5
          %v1405 = vmul.f32 %v1389, 0.5
          %v1406 = vmul.f32 %v1390, 0.5
          %v1407 = vmul.f32 %v1391, 0.5
          %v1408 = vmul.f32 %v1392, 0.5
          %v1409 = vmul.f32 %v1393, 0.5
          %v1410 = vmul.f32 %v1394, 0.5
          %v1411 = vmul.f32 %v1395, 0.5
          %v1412 = vmul.f32 %v1396, 0.5
          %v1413 = vmul.f32 %v1397, 0.5
          %v1414 = vmul.f32 %v1398, 0.5
          %v1415 = vmul.f32 %v1399, 0.5
          %v1416 = vmul.f32 %v1400, 0.5
          %v1417 = vmul.f32 %v1273, %v1401
          %v1418 = vmul.f32 %v1274, %v1402
          %v1419 = vmul.f32 %v1275, %v1403
          %v1420 = vmul.f32 %v1276, %v1404
          %v1421 = vmul.f32 %v1277, %v1405
          %v1422 = vmul.f32 %v1278, %v1406
          %v1423 = vmul.f32 %v1279, %v1407
          %v1424 = vmul.f32 %v1280, %v1408
          %v1425 = vmul.f32 %v1281, %v1409
          %v1426 = vmul.f32 %v1282, %v1410
          %v1427 = vmul.f32 %v1283, %v1411
          %v1428 = vmul.f32 %v1284, %v1412
          %v1429 = vmul.f32 %v1285, %v1413
          %v1430 = vmul.f32 %v1286, %v1414
          %v1431 = vmul.f32 %v1287, %v1415
          %v1432 = vmul.f32 %v1288, %v1416
          %v1433 = vpack.c.bf16 %v1418, %v1417
          %v1434 = vpack.c.bf16 %v1420, %v1419
          %v1435 = vpack.c.bf16 %v1422, %v1421
          %v1436 = vpack.c.bf16 %v1424, %v1423
          %v1437 = vpack.c.bf16 %v1426, %v1425
          %v1438 = vpack.c.bf16 %v1428, %v1427
          %v1439 = vpack.c.bf16 %v1430, %v1429
          %v1440 = vpack.c.bf16 %v1432, %v1431
          %1441 = vst [vmem:[%s461] sm:$0xff] %v1433
          %1442 = vst [vmem:[%s461 + $0x8] sm:$0xff] %v1434
          %1443 = vst [vmem:[%s461 + $0x10] sm:$0xff] %v1435
          %1444 = vst [vmem:[%s461 + $0x18] sm:$0xff] %v1436
          %1445 = vst [vmem:[%s461 + $0x20] sm:$0xff] %v1437
          %1446 = vst [vmem:[%s461 + $0x28] sm:$0xff] %v1438
          %1447 = vst [vmem:[%s461 + $0x30] sm:$0xff] %v1439
          %1448 = vst [vmem:[%s461 + $0x38] sm:$0xff] %v1440
        $region71: #{baseline_vit_forward.21} parent=58 // pred_fallthru
          _
        %s1449 = sand.u32 %s179, 1
        %s1450 = sand.u32 %s179, 1
        %s1451 = smul.addr %s1450, 64
        %s1452 = scalar_lea.vmem [#allocation4], %s1451
        // Predicated region
        $region72: #{baseline_vit_forward.21} parent=58 // pred_check
          %p1453 = pneg %p189
        $region73: #{baseline_vit_forward.21} parent=58 // pred_check_branch
          %1455 = sbr.rel (%p1453) target = $region75
        $region74: #{baseline_vit_forward.21} parent=58 // pred_region
          %s1456 = smul.u32 4, %s21
          %s1457 = smul.u32 4, %s22
          %s1458 = smul.addr %s1456, 8
          %s1459 = sadd.s32 %s1457, %s1458
          %s1460 = smul.addr %s1459, 4
          %s1461 = scalar_lea.vmem %s5, %s1460
          // Predicated region
          $region76: #{baseline_vit_forward.21} parent=74 // pred_check
            _
          $region77: #{baseline_vit_forward.21} parent=74 // pred_check_branch
            %1463 = sbr.rel (0) target = $region79
          $region78: #{baseline_vit_forward.21} parent=74 // pred_region
            // Predicated region
            $region80: #{baseline_vit_forward.21} parent=78 // pred_check
              _
            $region81: #{baseline_vit_forward.21} parent=78 // pred_check_branch
              %1465 = sbr.rel (0) target = $region83
            $region82: #{baseline_vit_forward.21} parent=78 // pred_region
              loop: start=0, step=1, limit=1
              $region84: #{baseline_vit_forward.21} parent=82 // loop_pre_header
                _
              $region85: #{baseline_vit_forward.21} parent=82 // loop_header
                %s1467 = sphi 0, %s1471
                %p1468 = scmp.ge.s32.totalorder %s1467, 1
                %s1472 = sphi %s1452, %s1452
                %s1473 = sphi %s1461, %s1461
              $region86: #{baseline_vit_forward.21} parent=82 // loop_header_branch
                %1470 = sbr.rel (%p1468) target = $region90
              $region87: #{baseline_vit_forward.21} parent=82 // loop_body
                %v1474 = vld [vmem:[%s1472] sm:$0xff]
                %1475 = vst [vmem:[%s1473] sm:$0xff] %v1474
                %v1476 = vld [vmem:[%s1472 + $0x8] sm:$0xff]
                %1477 = vst [vmem:[%s1473 + $0x8] sm:$0xff] %v1476
                %v1478 = vld [vmem:[%s1472 + $0x10] sm:$0xff]
                %1479 = vst [vmem:[%s1473 + $0x20] sm:$0xff] %v1478
                %v1480 = vld [vmem:[%s1472 + $0x18] sm:$0xff]
                %1481 = vst [vmem:[%s1473 + $0x28] sm:$0xff] %v1480
                %v1482 = vld [vmem:[%s1472 + $0x20] sm:$0xff]
                %1483 = vst [vmem:[%s1473 + $0x40] sm:$0xff] %v1482
                %v1484 = vld [vmem:[%s1472 + $0x28] sm:$0xff]
                %1485 = vst [vmem:[%s1473 + $0x48] sm:$0xff] %v1484
                %v1486 = vld [vmem:[%s1472 + $0x30] sm:$0xff]
                %1487 = vst [vmem:[%s1473 + $0x60] sm:$0xff] %v1486
                %v1488 = vld [vmem:[%s1472 + $0x38] sm:$0xff]
                %1489 = vst [vmem:[%s1473 + $0x68] sm:$0xff] %v1488
              $region88: #{baseline_vit_forward.21} parent=82 // loop_footer
                %s1471 = sadd.s32 1, %s1467
              $region89: #{baseline_vit_forward.21} parent=82 // loop_footer_branch
                %1466 = sbr.rel target = $region85
              $region90: #{baseline_vit_forward.21} parent=82 // loop_exit
                _
            $region83: #{baseline_vit_forward.21} parent=78 // pred_fallthru
              _
            // Predicated region
            $region91: #{baseline_vit_forward.21} parent=78 // pred_check
              _
            $region92: #{baseline_vit_forward.21} parent=78 // pred_check_branch
              %1491 = sbr.rel target = $region94
            $region93: #{baseline_vit_forward.21} parent=78 // pred_region
              _
            $region94: #{baseline_vit_forward.21} parent=78 // pred_fallthru
              _
          $region79: #{baseline_vit_forward.21} parent=74 // pred_fallthru
            _
          %1492 = vnop
        $region75: #{baseline_vit_forward.21} parent=58 // pred_fallthru
          _
      $region59: #{baseline_vit_forward.21} parent=5 // pred_fallthru
        _
      %p1493 = scmp.le.s32.totalorder 2, %s11
      // Predicated region
      $region95: #{baseline_vit_forward.21} parent=5 // pred_check
        %p1494 = pneg %p1493
      $region96: #{baseline_vit_forward.21} parent=5 // pred_check_branch
        %1496 = sbr.rel (%p1494) target = $region98
      $region97: #{baseline_vit_forward.21} parent=5 // pred_region
        %s1497 = ssub.s32 %s11, 2
        // Predicated region
        $region99: #{baseline_vit_forward.21} parent=97 // pred_check
          %p1498 = pneg %p195
        $region100: #{baseline_vit_forward.21} parent=97 // pred_check_branch
          %1500 = sbr.rel (%p1498) target = $region102
        $region101: #{baseline_vit_forward.21} parent=97 // pred_region
          %s1501 = sand.u32 %s180, 1
          %s1502 = sand.u32 %s180, 1
          %s1503 = smul.addr %s1502, 64
          %s1504 = scalar_lea.vmem [#allocation4], %s1503
        $region102: #{baseline_vit_forward.21} parent=97 // pred_fallthru
          _
      $region98: #{baseline_vit_forward.21} parent=5 // pred_fallthru
        _
    $region6: #{baseline_vit_forward.21} parent=1 // loop_footer
      %s15 = sadd.s32 1, %s11
    $region7: #{baseline_vit_forward.21} parent=1 // loop_footer_branch
      %10 = sbr.rel target = $region3
    $region8: #{baseline_vit_forward.21} parent=1 // loop_exit
      _

// kernel: baseline_vit_forward.22
$region0: #{baseline_vit_forward.22}
  #allocation0 [shape = 'u32[]', space=smem, size = 0x4, offset = 0x4, fixed_abs, tag = 'smem constant byte address 0x4 - core index']
  #allocation1 [shape = 'u32[72,128]{1,0:T(1,128)}', space=vmem, size = 0x9000, scoped, tag = 'internal scratch']
  #allocation2 [shape = 'f32[32,256]{1,0:T(8,128)}', space=vmem, size = 0x8000, scoped, tag = 'scratch operand']
  %s0 = inlined_call_operand.vmem [shape: bf16[32,1024], index: 0, kind: input, shape index: {}]
  %s1 = inlined_call_operand.vmem [shape: bf16[1024,256], index: 1, kind: input, shape index: {}]
  %s2 = inlined_call_operand.vmem [shape: f32[1,256], index: 2, kind: input, shape index: {}]
  %s3 = inlined_call_operand.vmem [shape: f32[32,256], index: 3, kind: input, shape index: {}]
  %s4 = inlined_call_operand.vmem [shape: f32[32,256], index: 4, kind: output, shape index: {}]
  %s5 = sld [smem:[#allocation0]]
  $region80: #{baseline_vit_forward.22} parent=0
    _
  %s7 = ssub.s32 1, %s5
  %s8 = scalar_select 0, %s7, %s5
  $region1: #{baseline_vit_forward.22} parent=0
    #allocation3 [shape = 'u8[65536]{0}', space=vmem, size = 0x10000, scoped, tag = 'input window, operand 0']
    loop: start=0, step=1, limit=4
    $region2: #{baseline_vit_forward.22} parent=1 // loop_pre_header
      _
    $region3: #{baseline_vit_forward.22} parent=1 // loop_header
      %s10 = sphi 0, %s14
      %p11 = scmp.ge.s32.totalorder %s10, 4
      %s17 = sphi 0, %s36
      %s18 = sphi 0, %s32
      %s19 = sphi 0, %s28
      %s20 = sphi 0, %s17
      %s21 = sphi 0, %s18
      %s22 = sphi 0, %s19
      %s23 = sphi 0, %s20
      %s24 = sphi 0, %s21
      %s25 = sphi 0, %s22
      %s41 = sphi 0, %s43
      %s44 = sphi 0, %s41
      %s45 = sphi 0, %s44
      %s61 = sphi 0, %s45
      %s69 = sphi 0, %s71
      %s72 = sphi 0, %s69
      %s73 = sphi 0, %s72
      %s89 = sphi 0, %s73
      %s95 = sphi 0, %s97
      %s98 = sphi 0, %s95
      %s99 = sphi 0, %s98
      %s115 = sphi 0, %s99
      %s123 = sphi 0, %s125
      %s126 = sphi 0, %s123
      %s127 = sphi 0, %s126
      %s143 = sphi 0, %s127
      %s151 = sphi 0, %s153
      %s154 = sphi 0, %s151
      %s155 = sphi 0, %s154
      %s171 = sphi 0, %s155
    $region4: #{baseline_vit_forward.22} parent=1 // loop_header_branch
      %13 = sbr.rel (%p11) target = $region8
    $region5: #{baseline_vit_forward.22} parent=1 // loop_body
      %s15 = ssub.s32 %s10, 1
      %s16 = ssub.s32 %s10, 2
      %s26 = sadd.s32 1, %s19
      %p27 = scmp.ge.s32.totalorder %s26, 2
      %s28 = scalar_select %p27, 0, %s26
      %s29 = sadd.s32 1, %s18
      %s30 = scalar_select %p27, %s29, %s18
      %p31 = scmp.ge.s32.totalorder %s30, 1
      %s32 = scalar_select %p31, 0, %s30
      %s33 = sadd.s32 1, %s17
      %s34 = scalar_select %p31, %s33, %s17
      %p35 = scmp.ge.s32.totalorder %s34, 1
      %s36 = scalar_select %p35, 0, %s34
      %s37 = ssub.s32 %s17, %s36
      %s38 = ssub.s32 %s19, %s28
      %s39 = sor.u32 %s37, %s38
      %p40 = scmp.eq.s32.totalorder %s39, 0
      %s42 = sadd.s32 %s41, 1
      %s43 = scalar_select %p40, %s41, %s42
      %p46 = pneg %p40
      %p47 = scmp.eq.s32.totalorder %s10, 1
      %p48 = por %p46, %p47
      %p49 = scmp.ne.s32.totalorder %s41, %s44
      %p50 = scmp.eq.s32.totalorder %s10, 0
      %p51 = por %p49, %p50
      %p52 = scmp.ne.s32.totalorder %s41, %s44
      %p53 = scmp.eq.s32.totalorder %s15, 1
      %p54 = por %p52, %p53
      %p55 = scmp.ne.s32.totalorder %s44, %s45
      %p56 = scmp.eq.s32.totalorder %s15, 0
      %p57 = por %p55, %p56
      %p58 = scmp.ne.s32.totalorder %s44, %s45
      %p59 = scmp.eq.s32.totalorder %s16, 1
      %p60 = por %p58, %p59
      %p62 = scmp.ne.s32.totalorder %s45, %s61
      %p63 = scmp.eq.s32.totalorder %s16, 0
      %p64 = por %p62, %p63
      %s65 = ssub.s32 %s19, %s28
      %s66 = ssub.s32 %s18, %s32
      %s67 = sor.u32 %s65, %s66
      %p68 = scmp.eq.s32.totalorder %s67, 0
      %s70 = sadd.s32 %s69, 1
      %s71 = scalar_select %p68, %s69, %s70
      %p74 = pneg %p68
      %p75 = scmp.eq.s32.totalorder %s10, 1
      %p76 = por %p74, %p75
      %p77 = scmp.ne.s32.totalorder %s69, %s72
      %p78 = scmp.eq.s32.totalorder %s10, 0
      %p79 = por %p77, %p78
      %p80 = scmp.ne.s32.totalorder %s69, %s72
      %p81 = scmp.eq.s32.totalorder %s15, 1
      %p82 = por %p80, %p81
      %p83 = scmp.ne.s32.totalorder %s72, %s73
      %p84 = scmp.eq.s32.totalorder %s15, 0
      %p85 = por %p83, %p84
      %p86 = scmp.ne.s32.totalorder %s72, %s73
      %p87 = scmp.eq.s32.totalorder %s16, 1
      %p88 = por %p86, %p87
      %p90 = scmp.ne.s32.totalorder %s73, %s89
      %p91 = scmp.eq.s32.totalorder %s16, 0
      %p92 = por %p90, %p91
      %s93 = ssub.s32 %s18, %s32
      %p94 = scmp.eq.s32.totalorder %s93, 0
      %s96 = sadd.s32 %s95, 1
      %s97 = scalar_select %p94, %s95, %s96
      %p100 = pneg %p94
      %p101 = scmp.eq.s32.totalorder %s10, 1
      %p102 = por %p100, %p101
      %p103 = scmp.ne.s32.totalorder %s95, %s98
      %p104 = scmp.eq.s32.totalorder %s10, 0
      %p105 = por %p103, %p104
      %p106 = scmp.ne.s32.totalorder %s95, %s98
      %p107 = scmp.eq.s32.totalorder %s15, 1
      %p108 = por %p106, %p107
      %p109 = scmp.ne.s32.totalorder %s98, %s99
      %p110 = scmp.eq.s32.totalorder %s15, 0
      %p111 = por %p109, %p110
      %p112 = scmp.ne.s32.totalorder %s98, %s99
      %p113 = scmp.eq.s32.totalorder %s16, 1
      %p114 = por %p112, %p113
      %p116 = scmp.ne.s32.totalorder %s99, %s115
      %p117 = scmp.eq.s32.totalorder %s16, 0
      %p118 = por %p116, %p117
      %s119 = ssub.s32 %s17, %s36
      %s120 = ssub.s32 %s18, %s32
      %s121 = sor.u32 %s119, %s120
      %p122 = scmp.eq.s32.totalorder %s121, 0
      %s124 = sadd.s32 %s123, 1
      %s125 = scalar_select %p122, %s123, %s124
      %p128 = pneg %p122
      %p129 = scmp.eq.s32.totalorder %s10, 1
      %p130 = por %p128, %p129
      %p131 = scmp.ne.s32.totalorder %s123, %s126
      %p132 = scmp.eq.s32.totalorder %s10, 0
      %p133 = por %p131, %p132
      %p134 = scmp.ne.s32.totalorder %s123, %s126
      %p135 = scmp.eq.s32.totalorder %s15, 1
      %p136 = por %p134, %p135
      %p137 = scmp.ne.s32.totalorder %s126, %s127
      %p138 = scmp.eq.s32.totalorder %s15, 0
      %p139 = por %p137, %p138
      %p140 = scmp.ne.s32.totalorder %s126, %s127
      %p141 = scmp.eq.s32.totalorder %s16, 1
      %p142 = por %p140, %p141
      %p144 = scmp.ne.s32.totalorder %s127, %s143
      %p145 = scmp.eq.s32.totalorder %s16, 0
      %p146 = por %p144, %p145
      %s147 = ssub.s32 %s17, %s36
      %s148 = ssub.s32 %s18, %s32
      %s149 = sor.u32 %s147, %s148
      %p150 = scmp.eq.s32.totalorder %s149, 0
      %s152 = sadd.s32 %s151, 1
      %s153 = scalar_select %p150, %s151, %s152
      %p156 = pneg %p150
      %p157 = scmp.eq.s32.totalorder %s10, 1
      %p158 = por %p156, %p157
      %p159 = scmp.ne.s32.totalorder %s151, %s154
      %p160 = scmp.eq.s32.totalorder %s10, 0
      %p161 = por %p159, %p160
      %p162 = scmp.ne.s32.totalorder %s151, %s154
      %p163 = scmp.eq.s32.totalorder %s15, 1
      %p164 = por %p162, %p163
      %p165 = scmp.ne.s32.totalorder %s154, %s155
      %p166 = scmp.eq.s32.totalorder %s15, 0
      %p167 = por %p165, %p166
      %p168 = scmp.ne.s32.totalorder %s154, %s155
      %p169 = scmp.eq.s32.totalorder %s16, 1
      %p170 = por %p168, %p169
      %p172 = scmp.ne.s32.totalorder %s155, %s171
      %p173 = scmp.eq.s32.totalorder %s16, 0
      %p174 = por %p172, %p173
      %p175 = scmp.le.s32.totalorder 1, %s10
      %p176 = scmp.lt.s32.totalorder %s10, 3
      %p177 = pnand %p175, %p176
      %p178 = pneg %p177
      // Predicated region
      $region9: #{baseline_vit_forward.22} parent=5 // pred_check
        _
      $region10: #{baseline_vit_forward.22} parent=5 // pred_check_branch
        %180 = sbr.rel (%p177) target = $region12
      $region11: #{baseline_vit_forward.22} parent=5 // pred_region
        %s181 = ssub.s32 %s10, 1
        // Predicated region
        $region13: #{baseline_vit_forward.22} parent=11 // pred_check
          %p182 = pneg %p111
        $region14: #{baseline_vit_forward.22} parent=11 // pred_check_branch
          %184 = sbr.rel (%p182) target = $region16
        $region15: #{baseline_vit_forward.22} parent=11 // pred_region
          %s185 = smul.u32 2, %s21
          %p186 = scmp.lt.s32.totalorder %s185, 1
          %s187 = scalar_select %p186, %s185, 1
          %s188 = scalar_lea.vmem %s2, %s187
          %s189 = smul.u32 2, %s21
        $region16: #{baseline_vit_forward.22} parent=11 // pred_fallthru
          _
        // Predicated region
        $region17: #{baseline_vit_forward.22} parent=11 // pred_check
          %p190 = pneg %p139
        $region18: #{baseline_vit_forward.22} parent=11 // pred_check_branch
          %192 = sbr.rel (%p190) target = $region20
        $region19: #{baseline_vit_forward.22} parent=11 // pred_region
          %s193 = smul.u32 4, %s20
          %s194 = smul.u32 2, %s21
          %p195 = scmp.lt.s32.totalorder %s193, 3
          %s196 = scalar_select %p195, %s193, 3
          %p197 = scmp.lt.s32.totalorder %s194, 1
          %s198 = scalar_select %p197, %s194, 1
          %s199 = smul.addr %s196, 2
          %s200 = sadd.s32 %s198, %s199
          %s201 = smul.addr %s200, 8
          %s202 = scalar_lea.vmem %s3, %s201
          %s203 = smul.u32 4, %s20
          %s204 = smul.u32 2, %s21
        $region20: #{baseline_vit_forward.22} parent=11 // pred_fallthru
          _
      $region12: #{baseline_vit_forward.22} parent=5 // pred_fallthru
        _
      %p205 = scmp.lt.s32.totalorder %s10, 2
      // Predicated region
      $region21: #{baseline_vit_forward.22} parent=5 // pred_check
        %p206 = pneg %p205
      $region22: #{baseline_vit_forward.22} parent=5 // pred_check_branch
        %208 = sbr.rel (%p206) target = $region24
      $region23: #{baseline_vit_forward.22} parent=5 // pred_region
        // Predicated region
        $region25: #{baseline_vit_forward.22} parent=23 // pred_check
          %p209 = pneg %p51
        $region26: #{baseline_vit_forward.22} parent=23 // pred_check_branch
          %211 = sbr.rel (%p209) target = $region28
        $region27: #{baseline_vit_forward.22} parent=23 // pred_region
          %s212 = sand.u32 %s41, 1
          %s213 = sand.u32 %s41, 1
          %s214 = smul.addr %s213, 64
          %s215 = scalar_lea.vmem [#allocation3], %s214
          %s216 = smul.u32 4, %s17
          %s217 = smul.u32 4, %s19
          %s218 = smul.addr %s216, 8
          %s219 = sadd.s32 %s217, %s218
          %s220 = smul.addr %s219, 4
          %s221 = scalar_lea.vmem %s0, %s220
          // Predicated region
          $region29: #{baseline_vit_forward.22} parent=27 // pred_check
            _
          $region30: #{baseline_vit_forward.22} parent=27 // pred_check_branch
            %223 = sbr.rel (0) target = $region32
          $region31: #{baseline_vit_forward.22} parent=27 // pred_region
            // Predicated region
            $region33: #{baseline_vit_forward.22} parent=31 // pred_check
              _
            $region34: #{baseline_vit_forward.22} parent=31 // pred_check_branch
              %225 = sbr.rel (0) target = $region36
            $region35: #{baseline_vit_forward.22} parent=31 // pred_region
              loop: start=0, step=1, limit=1
              $region37: #{baseline_vit_forward.22} parent=35 // loop_pre_header
                _
              $region38: #{baseline_vit_forward.22} parent=35 // loop_header
                %s227 = sphi 0, %s231
                %p228 = scmp.ge.s32.totalorder %s227, 1
                %s232 = sphi %s221, %s221
                %s233 = sphi %s215, %s215
              $region39: #{baseline_vit_forward.22} parent=35 // loop_header_branch
                %230 = sbr.rel (%p228) target = $region43
              $region40: #{baseline_vit_forward.22} parent=35 // loop_body
                %v234 = vld [vmem:[%s232] sm:$0xff]
                %235 = vst [vmem:[%s233] sm:$0xff] %v234
                %v236 = vld [vmem:[%s232 + $0x8] sm:$0xff]
                %237 = vst [vmem:[%s233 + $0x8] sm:$0xff] %v236
                %v238 = vld [vmem:[%s232 + $0x20] sm:$0xff]
                %239 = vst [vmem:[%s233 + $0x10] sm:$0xff] %v238
                %v240 = vld [vmem:[%s232 + $0x28] sm:$0xff]
                %241 = vst [vmem:[%s233 + $0x18] sm:$0xff] %v240
                %v242 = vld [vmem:[%s232 + $0x40] sm:$0xff]
                %243 = vst [vmem:[%s233 + $0x20] sm:$0xff] %v242
                %v244 = vld [vmem:[%s232 + $0x48] sm:$0xff]
                %245 = vst [vmem:[%s233 + $0x28] sm:$0xff] %v244
                %v246 = vld [vmem:[%s232 + $0x60] sm:$0xff]
                %247 = vst [vmem:[%s233 + $0x30] sm:$0xff] %v246
                %v248 = vld [vmem:[%s232 + $0x68] sm:$0xff]
                %249 = vst [vmem:[%s233 + $0x38] sm:$0xff] %v248
              $region41: #{baseline_vit_forward.22} parent=35 // loop_footer
                %s231 = sadd.s32 1, %s227
              $region42: #{baseline_vit_forward.22} parent=35 // loop_footer_branch
                %226 = sbr.rel target = $region38
              $region43: #{baseline_vit_forward.22} parent=35 // loop_exit
                _
            $region36: #{baseline_vit_forward.22} parent=31 // pred_fallthru
              _
            // Predicated region
            $region44: #{baseline_vit_forward.22} parent=31 // pred_check
              _
            $region45: #{baseline_vit_forward.22} parent=31 // pred_check_branch
              %251 = sbr.rel target = $region47
            $region46: #{baseline_vit_forward.22} parent=31 // pred_region
              _
            $region47: #{baseline_vit_forward.22} parent=31 // pred_fallthru
              _
          $region32: #{baseline_vit_forward.22} parent=27 // pred_fallthru
            _
          %252 = vnop
        $region28: #{baseline_vit_forward.22} parent=23 // pred_fallthru
          _
        // Predicated region
        $region48: #{baseline_vit_forward.22} parent=23 // pred_check
          %p253 = pneg %p79
        $region49: #{baseline_vit_forward.22} parent=23 // pred_check_branch
          %255 = sbr.rel (%p253) target = $region51
        $region50: #{baseline_vit_forward.22} parent=23 // pred_region
          %s256 = smul.u32 64, %s19
          %s257 = smul.u32 2, %s18
          %p258 = scmp.lt.s32.totalorder %s256, 127
          %s259 = scalar_select %p258, %s256, 127
          %p260 = scmp.lt.s32.totalorder %s257, 1
          %s261 = scalar_select %p260, %s257, 1
          %s262 = smul.addr %s259, 2
          %s263 = sadd.s32 %s261, %s262
          %s264 = smul.addr %s263, 4
          %s265 = scalar_lea.vmem %s1, %s264
          %s266 = smul.u32 64, %s19
          %s267 = smul.u32 2, %s18
        $region51: #{baseline_vit_forward.22} parent=23 // pred_fallthru
          _
      $region24: #{baseline_vit_forward.22} parent=5 // pred_fallthru
        _
      %p268 = scmp.le.s32.totalorder 1, %s10
      %p269 = scmp.lt.s32.totalorder %s10, 3
      %p270 = pnand %p268, %p269
      %p271 = pneg %p270
      // Predicated region
      $region52: #{baseline_vit_forward.22} parent=5 // pred_check
        _
      $region53: #{baseline_vit_forward.22} parent=5 // pred_check_branch
        %273 = sbr.rel (%p270) target = $region55
      $region54: #{baseline_vit_forward.22} parent=5 // pred_region
        %s274 = ssub.s32 %s10, 1
        %s275 = sand.u32 %s44, 1
        %s276 = sand.u32 %s44, 1
        %s277 = smul.addr %s276, 64
        %s278 = scalar_lea.vmem [#allocation3], %s277
        // Predicated region
        $region56: #{baseline_vit_forward.22} parent=54 // pred_check
          %p279 = pneg %p57
        $region57: #{baseline_vit_forward.22} parent=54 // pred_check_branch
          %281 = sbr.rel (%p279) target = $region59
        $region58: #{baseline_vit_forward.22} parent=54 // pred_region
          _
        $region59: #{baseline_vit_forward.22} parent=54 // pred_fallthru
          _
        %s282 = sand.u32 %s44, 1
        %s283 = sand.u32 %s44, 1
        %s284 = smul.addr %s283, 64
        %s285 = scalar_lea.vmem [#allocation3], %s284
        %p286 = pneg %p57
        %p287 = pneg %p54
        %s288 = smul.u32 64, %s22
        %s289 = smul.u32 2, %s21
        %p290 = scmp.lt.s32.totalorder %s288, 127
        %s291 = scalar_select %p290, %s288, 127
        %p292 = scmp.lt.s32.totalorder %s289, 1
        %s293 = scalar_select %p292, %s289, 1
        %s294 = smul.addr %s291, 2
        %s295 = sadd.s32 %s293, %s294
        %s296 = smul.addr %s295, 4
        %s297 = scalar_lea.vmem %s1, %s296
        %p298 = pneg %p85
        %p299 = pneg %p82
        %s300 = smul.u32 2, %s21
        %p301 = scmp.lt.s32.totalorder %s300, 1
        %s302 = scalar_select %p301, %s300, 1
        %s303 = scalar_lea.vmem %s2, %s302
        %p304 = pneg %p111
        %p305 = pneg %p108
        %s306 = smul.u32 4, %s20
        %s307 = smul.u32 2, %s21
        %p308 = scmp.lt.s32.totalorder %s306, 3
        %s309 = scalar_select %p308, %s306, 3
        %p310 = scmp.lt.s32.totalorder %s307, 1
        %s311 = scalar_select %p310, %s307, 1
        %s312 = smul.addr %s309, 2
        %s313 = sadd.s32 %s311, %s312
        %s314 = smul.addr %s313, 8
        %s315 = scalar_lea.vmem %s3, %s314
        %p316 = pneg %p139
        %p317 = pneg %p136
        %p318 = pneg %p167
        %p319 = pneg %p164
        %s320 = smul.u32 4, %s20
        %s321 = smul.u32 2, %s21
        %p322 = scmp.lt.s32.totalorder %s320, 3
        %s323 = scalar_select %p322, %s320, 3
        %p324 = scmp.lt.s32.totalorder %s321, 1
        %s325 = scalar_select %p324, %s321, 1
        %s326 = smul.addr %s323, 2
        %s327 = sadd.s32 %s325, %s326
        %s328 = smul.addr %s327, 8
        %s329 = scalar_lea.vmem %s4, %s328
        %s330 = smul.u32 4, %s20
        %s331 = smul.u32 4, %s22
        %s332 = smul.u32 64, %s22
        %s333 = smul.u32 2, %s21
        %p334 = scmp.lt.s32.totalorder %s332, 127
        %s335 = scalar_select %p334, %s332, 127
        %p336 = scmp.lt.s32.totalorder %s333, 1
        %s337 = scalar_select %p336, %s333, 1
        %s338 = smul.addr %s335, 2
        %s339 = sadd.s32 %s337, %s338
        %s340 = smul.addr %s339, 4
        %s341 = scalar_lea.vmem %s1, %s340
        %s342 = smul.u32 64, %s22
        %s343 = smul.u32 2, %s21
        %s344 = smul.u32 2, %s21
        %p345 = scmp.lt.s32.totalorder %s344, 1
        %s346 = scalar_select %p345, %s344, 1
        %s347 = scalar_lea.vmem %s2, %s346
        %s348 = smul.u32 2, %s21
        %s349 = smul.u32 4, %s20
        %s350 = smul.u32 2, %s21
        %p351 = scmp.lt.s32.totalorder %s349, 3
        %s352 = scalar_select %p351, %s349, 3
        %p353 = scmp.lt.s32.totalorder %s350, 1
        %s354 = scalar_select %p353, %s350, 1
        %s355 = smul.addr %s352, 2
        %s356 = sadd.s32 %s354, %s355
        %s357 = smul.addr %s356, 8
        %s358 = scalar_lea.vmem %s3, %s357
        %s359 = smul.u32 4, %s20
        %s360 = smul.u32 2, %s21
        %s361 = smul.u32 4, %s20
        %s362 = smul.u32 2, %s21
        %p363 = scmp.lt.s32.totalorder %s361, 3
        %s364 = scalar_select %p363, %s361, 3
        %p365 = scmp.lt.s32.totalorder %s362, 1
        %s366 = scalar_select %p365, %s362, 1
        %s367 = smul.addr %s364, 2
        %s368 = sadd.s32 %s366, %s367
        %s369 = smul.addr %s368, 8
        %s370 = scalar_lea.vmem %s4, %s369
        %s371 = smul.u32 4, %s20
        %s372 = smul.u32 2, %s21
        %v373 = vld [vmem:[%s278] sm:$0xff]
        %v374 = vld [vmem:[%s278 + $0x8] sm:$0xff]
        %v375 = vld [vmem:[%s278 + $0x10] sm:$0xff]
        %v376 = vld [vmem:[%s278 + $0x18] sm:$0xff]
        %v377 = vld [vmem:[%s278 + $0x20] sm:$0xff]
        %v378 = vld [vmem:[%s278 + $0x28] sm:$0xff]
        %v379 = vld [vmem:[%s278 + $0x30] sm:$0xff]
        %v380 = vld [vmem:[%s278 + $0x38] sm:$0xff]
        %p381 = scmp.eq.s32.totalorder %s22, 0
        // Predicated region
        $region60: #{baseline_vit_forward.22} parent=54 // pred_check
          %p382 = pneg %p381
        $region61: #{baseline_vit_forward.22} parent=54 // pred_check_branch
          %384 = sbr.rel (%p382) target = $region63
        $region62: #{baseline_vit_forward.22} parent=54 // pred_region
          %385 = vst [vmem:[#allocation2] sm:$0xff] 0.0
          %386 = vst [vmem:[#allocation2 + $0x8] sm:$0xff] 0.0
          %387 = vst [vmem:[#allocation2 + $0x10] sm:$0xff] 0.0
          %388 = vst [vmem:[#allocation2 + $0x18] sm:$0xff] 0.0
          %389 = vst [vmem:[#allocation2 + $0x20] sm:$0xff] 0.0
          %390 = vst [vmem:[#allocation2 + $0x28] sm:$0xff] 0.0
          %391 = vst [vmem:[#allocation2 + $0x30] sm:$0xff] 0.0
          %392 = vst [vmem:[#allocation2 + $0x38] sm:$0xff] 0.0
        $region63: #{baseline_vit_forward.22} parent=54 // pred_fallthru
          _
        %v393 = vld [vmem:[#allocation2] sm:$0xff]
        %v394 = vld [vmem:[#allocation2 + $0x8] sm:$0xff]
        %v395 = vld [vmem:[#allocation2 + $0x10] sm:$0xff]
        %v396 = vld [vmem:[#allocation2 + $0x18] sm:$0xff]
        %v397 = vld [vmem:[#allocation2 + $0x20] sm:$0xff]
        %v398 = vld [vmem:[#allocation2 + $0x28] sm:$0xff]
        %v399 = vld [vmem:[#allocation2 + $0x30] sm:$0xff]
        %v400 = vld [vmem:[#allocation2 + $0x38] sm:$0xff]
        %v401 = vld [vmem:[%s341] sm:$0xff]
        %v402 = vld [vmem:[%s341 + $0x8] sm:$0xff]
        %v403 = vld [vmem:[%s341 + $0x10] sm:$0xff]
        %v404 = vld [vmem:[%s341 + $0x18] sm:$0xff]
        %v405 = vld [vmem:[%s341 + $0x20] sm:$0xff]
        %v406 = vld [vmem:[%s341 + $0x28] sm:$0xff]
        %v407 = vld [vmem:[%s341 + $0x30] sm:$0xff]
        %v408 = vld [vmem:[%s341 + $0x38] sm:$0xff]
        %v409 = vld [vmem:[%s341 + $0x40] sm:$0xff]
        %v410 = vld [vmem:[%s341 + $0x48] sm:$0xff]
        %v411 = vld [vmem:[%s341 + $0x50] sm:$0xff]
        %v412 = vld [vmem:[%s341 + $0x58] sm:$0xff]
        %v413 = vld [vmem:[%s341 + $0x60] sm:$0xff]
        %v414 = vld [vmem:[%s341 + $0x68] sm:$0xff]
        %v415 = vld [vmem:[%s341 + $0x70] sm:$0xff]
        %v416 = vld [vmem:[%s341 + $0x78] sm:$0xff]
        %v417 = vld [vmem:[%s341 + $0x80] sm:$0xff]
        %v418 = vld [vmem:[%s341 + $0x88] sm:$0xff]
        %v419 = vld [vmem:[%s341 + $0x90] sm:$0xff]
        %v420 = vld [vmem:[%s341 + $0x98] sm:$0xff]
        %v421 = vld [vmem:[%s341 + $0xa0] sm:$0xff]
        %v422 = vld [vmem:[%s341 + $0xa8] sm:$0xff]
        %v423 = vld [vmem:[%s341 + $0xb0] sm:$0xff]
        %v424 = vld [vmem:[%s341 + $0xb8] sm:$0xff]
        %v425 = vld [vmem:[%s341 + $0xc0] sm:$0xff]
        %v426 = vld [vmem:[%s341 + $0xc8] sm:$0xff]
        %v427 = vld [vmem:[%s341 + $0xd0] sm:$0xff]
        %v428 = vld [vmem:[%s341 + $0xd8] sm:$0xff]
        %v429 = vld [vmem:[%s341 + $0xe0] sm:$0xff]
        %v430 = vld [vmem:[%s341 + $0xe8] sm:$0xff]
        %v431 = vld [vmem:[%s341 + $0xf0] sm:$0xff]
        %v432 = vld [vmem:[%s341 + $0xf8] sm:$0xff]
        %v433 = vld [vmem:[%s341 + $0x100] sm:$0xff]
        %v434 = vld [vmem:[%s341 + $0x108] sm:$0xff]
        %v435 = vld [vmem:[%s341 + $0x110] sm:$0xff]
        %v436 = vld [vmem:[%s341 + $0x118] sm:$0xff]
        %v437 = vld [vmem:[%s341 + $0x120] sm:$0xff]
        %v438 = vld [vmem:[%s341 + $0x128] sm:$0xff]
        %v439 = vld [vmem:[%s341 + $0x130] sm:$0xff]
        %v440 = vld [vmem:[%s341 + $0x138] sm:$0xff]
        %v441 = vld [vmem:[%s341 + $0x140] sm:$0xff]
        %v442 = vld [vmem:[%s341 + $0x148] sm:$0xff]
        %v443 = vld [vmem:[%s341 + $0x150] sm:$0xff]
        %v444 = vld [vmem:[%s341 + $0x158] sm:$0xff]
        %v445 = vld [vmem:[%s341 + $0x160] sm:$0xff]
        %v446 = vld [vmem:[%s341 + $0x168] sm:$0xff]
        %v447 = vld [vmem:[%s341 + $0x170] sm:$0xff]
        %v448 = vld [vmem:[%s341 + $0x178] sm:$0xff]
        %v449 = vld [vmem:[%s341 + $0x180] sm:$0xff]
        %v450 = vld [vmem:[%s341 + $0x188] sm:$0xff]
        %v451 = vld [vmem:[%s341 + $0x190] sm:$0xff]
        %v452 = vld [vmem:[%s341 + $0x198] sm:$0xff]
        %v453 = vld [vmem:[%s341 + $0x1a0] sm:$0xff]
        %v454 = vld [vmem:[%s341 + $0x1a8] sm:$0xff]
        %v455 = vld [vmem:[%s341 + $0x1b0] sm:$0xff]
        %v456 = vld [vmem:[%s341 + $0x1b8] sm:$0xff]
        %v457 = vld [vmem:[%s341 + $0x1c0] sm:$0xff]
        %v458 = vld [vmem:[%s341 + $0x1c8] sm:$0xff]
        %v459 = vld [vmem:[%s341 + $0x1d0] sm:$0xff]
        %v460 = vld [vmem:[%s341 + $0x1d8] sm:$0xff]
        %v461 = vld [vmem:[%s341 + $0x1e0] sm:$0xff]
        %v462 = vld [vmem:[%s341 + $0x1e8] sm:$0xff]
        %v463 = vld [vmem:[%s341 + $0x1f0] sm:$0xff]
        %v464 = vld [vmem:[%s341 + $0x1f8] sm:$0xff]
        %v473 = vunpack.c.l.b16 %v373
        %v474 = vunpack.c.h.b16 %v373
        %v475 = vunpack.c.l.b16 %v374
        %v476 = vunpack.c.h.b16 %v374
        %v477 = vunpack.c.l.b16 %v375
        %v478 = vunpack.c.h.b16 %v375
        %v479 = vunpack.c.l.b16 %v376
        %v480 = vunpack.c.h.b16 %v376
        %v481 = vunpack.c.l.b16 %v377
        %v482 = vunpack.c.h.b16 %v377
        %v483 = vunpack.c.l.b16 %v378
        %v484 = vunpack.c.h.b16 %v378
        %v485 = vunpack.c.l.b16 %v379
        %v486 = vunpack.c.h.b16 %v379
        %v487 = vunpack.c.l.b16 %v380
        %v488 = vunpack.c.h.b16 %v380
        %v489 = vpack.c.b16 %v477, %v473
        %v490 = vpack.c.b16 %v478, %v474
        %v491 = vpack.c.b16 %v479, %v475
        %v492 = vpack.c.b16 %v480, %v476
        %v493 = vpack.c.b16 %v485, %v481
        %v494 = vpack.c.b16 %v486, %v482
        %v495 = vpack.c.b16 %v487, %v483
        %v496 = vpack.c.b16 %v488, %v484
        %v569 = vunpack.c.l.b16 %v401
        %v570 = vunpack.c.h.b16 %v401
        %v571 = vunpack.c.l.b16 %v402
        %v572 = vunpack.c.h.b16 %v402
        %v573 = vunpack.c.l.b16 %v403
        %v574 = vunpack.c.h.b16 %v403
        %v575 = vunpack.c.l.b16 %v404
        %v576 = vunpack.c.h.b16 %v404
        %v577 = vunpack.c.l.b16 %v405
        %v578 = vunpack.c.h.b16 %v405
        %v579 = vunpack.c.l.b16 %v406
        %v580 = vunpack.c.h.b16 %v406
        %v581 = vunpack.c.l.b16 %v407
        %v582 = vunpack.c.h.b16 %v407
        %v583 = vunpack.c.l.b16 %v408
        %v584 = vunpack.c.h.b16 %v408
        %v585 = vunpack.c.l.b16 %v409
        %v586 = vunpack.c.h.b16 %v409
        %v587 = vunpack.c.l.b16 %v410
        %v588 = vunpack.c.h.b16 %v410
        %v589 = vunpack.c.l.b16 %v411
        %v590 = vunpack.c.h.b16 %v411
        %v591 = vunpack.c.l.b16 %v412
        %v592 = vunpack.c.h.b16 %v412
        %v593 = vunpack.c.l.b16 %v413
        %v594 = vunpack.c.h.b16 %v413
        %v595 = vunpack.c.l.b16 %v414
        %v596 = vunpack.c.h.b16 %v414
        %v597 = vunpack.c.l.b16 %v415
        %v598 = vunpack.c.h.b16 %v415
        %v599 = vunpack.c.l.b16 %v416
        %v600 = vunpack.c.h.b16 %v416
        %v601 = vunpack.c.l.b16 %v417
        %v602 = vunpack.c.h.b16 %v417
        %v603 = vunpack.c.l.b16 %v418
        %v604 = vunpack.c.h.b16 %v418
        %v605 = vunpack.c.l.b16 %v419
        %v606 = vunpack.c.h.b16 %v419
        %v607 = vunpack.c.l.b16 %v420
        %v608 = vunpack.c.h.b16 %v420
        %v609 = vunpack.c.l.b16 %v421
        %v610 = vunpack.c.h.b16 %v421
        %v611 = vunpack.c.l.b16 %v422
        %v612 = vunpack.c.h.b16 %v422
        %v613 = vunpack.c.l.b16 %v423
        %v614 = vunpack.c.h.b16 %v423
        %v615 = vunpack.c.l.b16 %v424
        %v616 = vunpack.c.h.b16 %v424
        %v617 = vunpack.c.l.b16 %v425
        %v618 = vunpack.c.h.b16 %v425
        %v619 = vunpack.c.l.b16 %v426
        %v620 = vunpack.c.h.b16 %v426
        %v621 = vunpack.c.l.b16 %v427
        %v622 = vunpack.c.h.b16 %v427
        %v623 = vunpack.c.l.b16 %v428
        %v624 = vunpack.c.h.b16 %v428
        %v625 = vunpack.c.l.b16 %v429
        %v626 = vunpack.c.h.b16 %v429
        %v627 = vunpack.c.l.b16 %v430
        %v628 = vunpack.c.h.b16 %v430
        %v629 = vunpack.c.l.b16 %v431
        %v630 = vunpack.c.h.b16 %v431
        %v631 = vunpack.c.l.b16 %v432
        %v632 = vunpack.c.h.b16 %v432
        %v633 = vunpack.c.l.b16 %v433
        %v634 = vunpack.c.h.b16 %v433
        %v635 = vunpack.c.l.b16 %v434
        %v636 = vunpack.c.h.b16 %v434
        %v637 = vunpack.c.l.b16 %v435
        %v638 = vunpack.c.h.b16 %v435
        %v639 = vunpack.c.l.b16 %v436
        %v640 = vunpack.c.h.b16 %v436
        %v641 = vunpack.c.l.b16 %v437
        %v642 = vunpack.c.h.b16 %v437
        %v643 = vunpack.c.l.b16 %v438
        %v644 = vunpack.c.h.b16 %v438
        %v645 = vunpack.c.l.b16 %v439
        %v646 = vunpack.c.h.b16 %v439
        %v647 = vunpack.c.l.b16 %v440
        %v648 = vunpack.c.h.b16 %v440
        %v649 = vunpack.c.l.b16 %v441
        %v650 = vunpack.c.h.b16 %v441
        %v651 = vunpack.c.l.b16 %v442
        %v652 = vunpack.c.h.b16 %v442
        %v653 = vunpack.c.l.b16 %v443
        %v654 = vunpack.c.h.b16 %v443
        %v655 = vunpack.c.l.b16 %v444
        %v656 = vunpack.c.h.b16 %v444
        %v657 = vunpack.c.l.b16 %v445
        %v658 = vunpack.c.h.b16 %v445
        %v659 = vunpack.c.l.b16 %v446
        %v660 = vunpack.c.h.b16 %v446
        %v661 = vunpack.c.l.b16 %v447
        %v662 = vunpack.c.h.b16 %v447
        %v663 = vunpack.c.l.b16 %v448
        %v664 = vunpack.c.h.b16 %v448
        %v665 = vunpack.c.l.b16 %v449
        %v666 = vunpack.c.h.b16 %v449
        %v667 = vunpack.c.l.b16 %v450
        %v668 = vunpack.c.h.b16 %v450
        %v669 = vunpack.c.l.b16 %v451
        %v670 = vunpack.c.h.b16 %v451
        %v671 = vunpack.c.l.b16 %v452
        %v672 = vunpack.c.h.b16 %v452
        %v673 = vunpack.c.l.b16 %v453
        %v674 = vunpack.c.h.b16 %v453
        %v675 = vunpack.c.l.b16 %v454
        %v676 = vunpack.c.h.b16 %v454
        %v677 = vunpack.c.l.b16 %v455
        %v678 = vunpack.c.h.b16 %v455
        %v679 = vunpack.c.l.b16 %v456
        %v680 = vunpack.c.h.b16 %v456
        %v681 = vunpack.c.l.b16 %v457
        %v682 = vunpack.c.h.b16 %v457
        %v683 = vunpack.c.l.b16 %v458
        %v684 = vunpack.c.h.b16 %v458
        %v685 = vunpack.c.l.b16 %v459
        %v686 = vunpack.c.h.b16 %v459
        %v687 = vunpack.c.l.b16 %v460
        %v688 = vunpack.c.h.b16 %v460
        %v689 = vunpack.c.l.b16 %v461
        %v690 = vunpack.c.h.b16 %v461
        %v691 = vunpack.c.l.b16 %v462
        %v692 = vunpack.c.h.b16 %v462
        %v693 = vunpack.c.l.b16 %v463
        %v694 = vunpack.c.h.b16 %v463
        %v695 = vunpack.c.l.b16 %v464
        %v696 = vunpack.c.h.b16 %v464
        %v697 = vpack.c.b16 %v571, %v569
        %v698 = vpack.c.b16 %v572, %v570
        %v699 = vpack.c.b16 %v575, %v573
        %v700 = vpack.c.b16 %v576, %v574
        %v701 = vpack.c.b16 %v579, %v577
        %v702 = vpack.c.b16 %v580, %v578
        %v703 = vpack.c.b16 %v583, %v581
        %v704 = vpack.c.b16 %v584, %v582
        %v705 = vpack.c.b16 %v587, %v585
        %v706 = vpack.c.b16 %v588, %v586
        %v707 = vpack.c.b16 %v591, %v589
        %v708 = vpack.c.b16 %v592, %v590
        %v709 = vpack.c.b16 %v595, %v593
        %v710 = vpack.c.b16 %v596, %v594
        %v711 = vpack.c.b16 %v599, %v597
        %v712 = vpack.c.b16 %v600, %v598
        %v713 = vpack.c.b16 %v603, %v601
        %v714 = vpack.c.b16 %v604, %v602
        %v715 = vpack.c.b16 %v607, %v605
        %v716 = vpack.c.b16 %v608, %v606
        %v717 = vpack.c.b16 %v611, %v609
        %v718 = vpack.c.b16 %v612, %v610
        %v719 = vpack.c.b16 %v615, %v613
        %v720 = vpack.c.b16 %v616, %v614
        %v721 = vpack.c.b16 %v619, %v617
        %v722 = vpack.c.b16 %v620, %v618
        %v723 = vpack.c.b16 %v623, %v621
        %v724 = vpack.c.b16 %v624, %v622
        %v725 = vpack.c.b16 %v627, %v625
        %v726 = vpack.c.b16 %v628, %v626
        %v727 = vpack.c.b16 %v631, %v629
        %v728 = vpack.c.b16 %v632, %v630
        %v729 = vpack.c.b16 %v635, %v633
        %v730 = vpack.c.b16 %v636, %v634
        %v731 = vpack.c.b16 %v639, %v637
        %v732 = vpack.c.b16 %v640, %v638
        %v733 = vpack.c.b16 %v643, %v641
        %v734 = vpack.c.b16 %v644, %v642
        %v735 = vpack.c.b16 %v647, %v645
        %v736 = vpack.c.b16 %v648, %v646
        %v737 = vpack.c.b16 %v651, %v649
        %v738 = vpack.c.b16 %v652, %v650
        %v739 = vpack.c.b16 %v655, %v653
        %v740 = vpack.c.b16 %v656, %v654
        %v741 = vpack.c.b16 %v659, %v657
        %v742 = vpack.c.b16 %v660, %v658
        %v743 = vpack.c.b16 %v663, %v661
        %v744 = vpack.c.b16 %v664, %v662
        %v745 = vpack.c.b16 %v667, %v665
        %v746 = vpack.c.b16 %v668, %v666
        %v747 = vpack.c.b16 %v671, %v669
        %v748 = vpack.c.b16 %v672, %v670
        %v749 = vpack.c.b16 %v675, %v673
        %v750 = vpack.c.b16 %v676, %v674
        %v751 = vpack.c.b16 %v679, %v677
        %v752 = vpack.c.b16 %v680, %v678
        %v753 = vpack.c.b16 %v683, %v681
        %v754 = vpack.c.b16 %v684, %v682
        %v755 = vpack.c.b16 %v687, %v685
        %v756 = vpack.c.b16 %v688, %v686
        %v757 = vpack.c.b16 %v691, %v689
        %v758 = vpack.c.b16 %v692, %v690
        %v759 = vpack.c.b16 %v695, %v693
        %v760 = vpack.c.b16 %v696, %v694
        %825 = vmatpush.bf16.msra.mxu0 %v711
        %826 = vmatpush.bf16.msra.mxu0 %v709
        %827 = vmatpush.bf16.msra.mxu0 %v707
        %828 = vmatpush.bf16.msra.mxu0 %v705
        %829 = vmatpush.bf16.msra.mxu0 %v703
        %830 = vmatpush.bf16.msra.mxu0 %v701
        %831 = vmatpush.bf16.msra.mxu0 %v699
        %832 = vmatpush.bf16.msra.mxu0 %v697
        %833 = vmatmul.bf16.gmra.mxu0 %v489
        %v834 = vpop.f32.mrf.mxu0
        %v835 = vadd.f32 0.0, %v834
        %v836 = vpop.f32.mrf.mxu0
        %v837 = vadd.f32 0.0, %v836
        %838 = vmatmul.bf16.gmra.mxu0 %v493
        %v839 = vpop.f32.mrf.mxu0
        %v840 = vadd.f32 0.0, %v839
        %v841 = vpop.f32.mrf.mxu0
        %v842 = vadd.f32 0.0, %v841
        %843 = vdwg.mxu0
        %844 = vmatpush.bf16.msra.mxu0 %v727
        %845 = vmatpush.bf16.msra.mxu0 %v725
        %846 = vmatpush.bf16.msra.mxu0 %v723
        %847 = vmatpush.bf16.msra.mxu0 %v721
        %848 = vmatpush.bf16.msra.mxu0 %v719
        %849 = vmatpush.bf16.msra.mxu0 %v717
        %850 = vmatpush.bf16.msra.mxu0 %v715
        %851 = vmatpush.bf16.msra.mxu0 %v713
        %852 = vmatmul.bf16.gmra.mxu0 %v490
        %v853 = vpop.f32.mrf.mxu0
        %v854 = vadd.f32 %v835, %v853
        %v855 = vpop.f32.mrf.mxu0
        %v856 = vadd.f32 %v837, %v855
        %857 = vmatmul.bf16.gmra.mxu0 %v494
        %v858 = vpop.f32.mrf.mxu0
        %v859 = vadd.f32 %v840, %v858
        %v860 = vpop.f32.mrf.mxu0
        %v861 = vadd.f32 %v842, %v860
        %862 = vdwg.mxu0
        %863 = vmatpush.bf16.msra.mxu0 %v743
        %864 = vmatpush.bf16.msra.mxu0 %v741
        %865 = vmatpush.bf16.msra.mxu0 %v739
        %866 = vmatpush.bf16.msra.mxu0 %v737
        %867 = vmatpush.bf16.msra.mxu0 %v735
        %868 = vmatpush.bf16.msra.mxu0 %v733
        %869 = vmatpush.bf16.msra.mxu0 %v731
        %870 = vmatpush.bf16.msra.mxu0 %v729
        %871 = vmatmul.bf16.gmra.mxu0 %v491
        %v872 = vpop.f32.mrf.mxu0
        %v873 = vadd.f32 %v854, %v872
        %v874 = vpop.f32.mrf.mxu0
        %v875 = vadd.f32 %v856, %v874
        %876 = vmatmul.bf16.gmra.mxu0 %v495
        %v877 = vpop.f32.mrf.mxu0
        %v878 = vadd.f32 %v859, %v877
        %v879 = vpop.f32.mrf.mxu0
        %v880 = vadd.f32 %v861, %v879
        %881 = vdwg.mxu0
        %882 = vmatpush.bf16.msra.mxu0 %v759
        %883 = vmatpush.bf16.msra.mxu0 %v757
        %884 = vmatpush.bf16.msra.mxu0 %v755
        %885 = vmatpush.bf16.msra.mxu0 %v753
        %886 = vmatpush.bf16.msra.mxu0 %v751
        %887 = vmatpush.bf16.msra.mxu0 %v749
        %888 = vmatpush.bf16.msra.mxu0 %v747
        %889 = vmatpush.bf16.msra.mxu0 %v745
        %890 = vmatmul.bf16.gmra.mxu0 %v492
        %v891 = vpop.f32.mrf.mxu0
        %v892 = vadd.f32 %v873, %v891
        %v893 = vpop.f32.mrf.mxu0
        %v894 = vadd.f32 %v875, %v893
        %895 = vmatmul.bf16.gmra.mxu0 %v496
        %v896 = vpop.f32.mrf.mxu0
        %v897 = vadd.f32 %v878, %v896
        %v898 = vpop.f32.mrf.mxu0
        %v899 = vadd.f32 %v880, %v898
        %900 = vdwg.mxu0
        %901 = vmatpush.bf16.msra.mxu0 %v712
        %902 = vmatpush.bf16.msra.mxu0 %v710
        %903 = vmatpush.bf16.msra.mxu0 %v708
        %904 = vmatpush.bf16.msra.mxu0 %v706
        %905 = vmatpush.bf16.msra.mxu0 %v704
        %906 = vmatpush.bf16.msra.mxu0 %v702
        %907 = vmatpush.bf16.msra.mxu0 %v700
        %908 = vmatpush.bf16.msra.mxu0 %v698
        %909 = vmatmul.bf16.gmra.mxu0 %v489
        %v910 = vpop.f32.mrf.mxu0
        %v911 = vadd.f32 0.0, %v910
        %v912 = vpop.f32.mrf.mxu0
        %v913 = vadd.f32 0.0, %v912
        %914 = vmatmul.bf16.gmra.mxu0 %v493
        %v915 = vpop.f32.mrf.mxu0
        %v916 = vadd.f32 0.0, %v915
        %v917 = vpop.f32.mrf.mxu0
        %v918 = vadd.f32 0.0, %v917
        %919 = vdwg.mxu0
        %920 = vmatpush.bf16.msra.mxu0 %v728
        %921 = vmatpush.bf16.msra.mxu0 %v726
        %922 = vmatpush.bf16.msra.mxu0 %v724
        %923 = vmatpush.bf16.msra.mxu0 %v722
        %924 = vmatpush.bf16.msra.mxu0 %v720
        %925 = vmatpush.bf16.msra.mxu0 %v718
        %926 = vmatpush.bf16.msra.mxu0 %v716
        %927 = vmatpush.bf16.msra.mxu0 %v714
        %928 = vmatmul.bf16.gmra.mxu0 %v490
        %v929 = vpop.f32.mrf.mxu0
        %v930 = vadd.f32 %v911, %v929
        %v931 = vpop.f32.mrf.mxu0
        %v932 = vadd.f32 %v913, %v931
        %933 = vmatmul.bf16.gmra.mxu0 %v494
        %v934 = vpop.f32.mrf.mxu0
        %v935 = vadd.f32 %v916, %v934
        %v936 = vpop.f32.mrf.mxu0
        %v937 = vadd.f32 %v918, %v936
        %938 = vdwg.mxu0
        %939 = vmatpush.bf16.msra.mxu0 %v744
        %940 = vmatpush.bf16.msra.mxu0 %v742
        %941 = vmatpush.bf16.msra.mxu0 %v740
        %942 = vmatpush.bf16.msra.mxu0 %v738
        %943 = vmatpush.bf16.msra.mxu0 %v736
        %944 = vmatpush.bf16.msra.mxu0 %v734
        %945 = vmatpush.bf16.msra.mxu0 %v732
        %946 = vmatpush.bf16.msra.mxu0 %v730
        %947 = vmatmul.bf16.gmra.mxu0 %v491
        %v948 = vpop.f32.mrf.mxu0
        %v949 = vadd.f32 %v930, %v948
        %v950 = vpop.f32.mrf.mxu0
        %v951 = vadd.f32 %v932, %v950
        %952 = vmatmul.bf16.gmra.mxu0 %v495
        %v953 = vpop.f32.mrf.mxu0
        %v954 = vadd.f32 %v935, %v953
        %v955 = vpop.f32.mrf.mxu0
        %v956 = vadd.f32 %v937, %v955
        %957 = vdwg.mxu0
        %958 = vmatpush.bf16.msra.mxu0 %v760
        %959 = vmatpush.bf16.msra.mxu0 %v758
        %960 = vmatpush.bf16.msra.mxu0 %v756
        %961 = vmatpush.bf16.msra.mxu0 %v754
        %962 = vmatpush.bf16.msra.mxu0 %v752
        %963 = vmatpush.bf16.msra.mxu0 %v750
        %964 = vmatpush.bf16.msra.mxu0 %v748
        %965 = vmatpush.bf16.msra.mxu0 %v746
        %966 = vmatmul.bf16.gmra.mxu0 %v492
        %v967 = vpop.f32.mrf.mxu0
        %v968 = vadd.f32 %v949, %v967
        %v969 = vpop.f32.mrf.mxu0
        %v970 = vadd.f32 %v951, %v969
        %971 = vmatmul.bf16.gmra.mxu0 %v496
        %v972 = vpop.f32.mrf.mxu0
        %v973 = vadd.f32 %v954, %v972
        %v974 = vpop.f32.mrf.mxu0
        %v975 = vadd.f32 %v956, %v974
        %976 = vdwg.mxu0
        %v977 = vadd.f32 %v393, %v892
        %v978 = vadd.f32 %v394, %v968
        %v979 = vadd.f32 %v395, %v894
        %v980 = vadd.f32 %v396, %v970
        %v981 = vadd.f32 %v397, %v897
        %v982 = vadd.f32 %v398, %v973
        %v983 = vadd.f32 %v399, %v899
        %v984 = vadd.f32 %v400, %v975
        %985 = vst [vmem:[#allocation2] sm:$0xff] %v977
        %986 = vst [vmem:[#allocation2 + $0x8] sm:$0xff] %v978
        %987 = vst [vmem:[#allocation2 + $0x10] sm:$0xff] %v979
        %988 = vst [vmem:[#allocation2 + $0x18] sm:$0xff] %v980
        %989 = vst [vmem:[#allocation2 + $0x20] sm:$0xff] %v981
        %990 = vst [vmem:[#allocation2 + $0x28] sm:$0xff] %v982
        %991 = vst [vmem:[#allocation2 + $0x30] sm:$0xff] %v983
        %992 = vst [vmem:[#allocation2 + $0x38] sm:$0xff] %v984
        %p993 = scmp.eq.s32.totalorder %s22, 1
        // Predicated region
        $region64: #{baseline_vit_forward.22} parent=54 // pred_check
          %p994 = pneg %p993
        $region65: #{baseline_vit_forward.22} parent=54 // pred_check_branch
          %996 = sbr.rel (%p994) target = $region67
        $region66: #{baseline_vit_forward.22} parent=54 // pred_region
          %v997 = vld [vmem:[#allocation2] sm:$0xff]
          %v998 = vld [vmem:[#allocation2 + $0x8] sm:$0xff]
          %v999 = vld [vmem:[#allocation2 + $0x10] sm:$0xff]
          %v1000 = vld [vmem:[#allocation2 + $0x18] sm:$0xff]
          %v1001 = vld [vmem:[#allocation2 + $0x20] sm:$0xff]
          %v1002 = vld [vmem:[#allocation2 + $0x28] sm:$0xff]
          %v1003 = vld [vmem:[#allocation2 + $0x30] sm:$0xff]
          %v1004 = vld [vmem:[#allocation2 + $0x38] sm:$0xff]
          %v1005 = vld [vmem:[%s347] sm:$0x3]
          %v1007 = vperm.slane %v1005, 0
          %v1008 = vperm.slane %v1005, 1
          %v1011 = vadd.f32 %v997, %v1007
          %v1012 = vadd.f32 %v998, %v1008
          %v1013 = vadd.f32 %v999, %v1007
          %v1014 = vadd.f32 %v1000, %v1008
          %v1015 = vadd.f32 %v1001, %v1007
          %v1016 = vadd.f32 %v1002, %v1008
          %v1017 = vadd.f32 %v1003, %v1007
          %v1018 = vadd.f32 %v1004, %v1008
          %v1019 = vld [vmem:[%s358] sm:$0xff]
          %v1020 = vld [vmem:[%s358 + $0x8] sm:$0xff]
          %v1021 = vld [vmem:[%s358 + $0x10] sm:$0xff]
          %v1022 = vld [vmem:[%s358 + $0x18] sm:$0xff]
          %v1023 = vld [vmem:[%s358 + $0x20] sm:$0xff]
          %v1024 = vld [vmem:[%s358 + $0x28] sm:$0xff]
          %v1025 = vld [vmem:[%s358 + $0x30] sm:$0xff]
          %v1026 = vld [vmem:[%s358 + $0x38] sm:$0xff]
          %v1027 = vadd.f32 %v1011, %v1019
          %v1028 = vadd.f32 %v1012, %v1020
          %v1029 = vadd.f32 %v1013, %v1021
          %v1030 = vadd.f32 %v1014, %v1022
          %v1031 = vadd.f32 %v1015, %v1023
          %v1032 = vadd.f32 %v1016, %v1024
          %v1033 = vadd.f32 %v1017, %v1025
          %v1034 = vadd.f32 %v1018, %v1026
          %1035 = vst [vmem:[%s370] sm:$0xff] %v1027
          %1036 = vst [vmem:[%s370 + $0x8] sm:$0xff] %v1028
          %1037 = vst [vmem:[%s370 + $0x10] sm:$0xff] %v1029
          %1038 = vst [vmem:[%s370 + $0x18] sm:$0xff] %v1030
          %1039 = vst [vmem:[%s370 + $0x20] sm:$0xff] %v1031
          %1040 = vst [vmem:[%s370 + $0x28] sm:$0xff] %v1032
          %1041 = vst [vmem:[%s370 + $0x30] sm:$0xff] %v1033
          %1042 = vst [vmem:[%s370 + $0x38] sm:$0xff] %v1034
        $region67: #{baseline_vit_forward.22} parent=54 // pred_fallthru
          _
        %s1043 = smul.u32 4, %s20
        %s1044 = smul.u32 2, %s21
        %p1045 = scmp.lt.s32.totalorder %s1043, 3
        %s1046 = scalar_select %p1045, %s1043, 3
        %p1047 = scmp.lt.s32.totalorder %s1044, 1
        %s1048 = scalar_select %p1047, %s1044, 1
        %s1049 = smul.addr %s1046, 2
        %s1050 = sadd.s32 %s1048, %s1049
        %s1051 = smul.addr %s1050, 8
        %s1052 = scalar_lea.vmem %s4, %s1051
        // Predicated region
        $region68: #{baseline_vit_forward.22} parent=54 // pred_check
          %p1053 = pneg %p164
        $region69: #{baseline_vit_forward.22} parent=54 // pred_check_branch
          %1055 = sbr.rel (%p1053) target = $region71
        $region70: #{baseline_vit_forward.22} parent=54 // pred_region
          %s1056 = smul.u32 4, %s20
          %s1057 = smul.u32 2, %s21
        $region71: #{baseline_vit_forward.22} parent=54 // pred_fallthru
          _
        // Predicated region
        $region72: #{baseline_vit_forward.22} parent=54 // pred_check
          %p1058 = pneg %p164
        $region73: #{baseline_vit_forward.22} parent=54 // pred_check_branch
          %1060 = sbr.rel (%p1058) target = $region75
        $region74: #{baseline_vit_forward.22} parent=54 // pred_region
          %s1061 = smul.u32 4, %s20
          %s1062 = smul.u32 2, %s21
          %p1063 = scmp.lt.s32.totalorder %s1061, 3
          %s1064 = scalar_select %p1063, %s1061, 3
          %p1065 = scmp.lt.s32.totalorder %s1062, 1
          %s1066 = scalar_select %p1065, %s1062, 1
          %s1067 = smul.addr %s1064, 2
          %s1068 = sadd.s32 %s1066, %s1067
          %s1069 = smul.addr %s1068, 8
          %s1070 = scalar_lea.vmem %s4, %s1069
        $region75: #{baseline_vit_forward.22} parent=54 // pred_fallthru
          _
      $region55: #{baseline_vit_forward.22} parent=5 // pred_fallthru
        _
      %p1071 = scmp.le.s32.totalorder 2, %s10
      // Predicated region
      $region76: #{baseline_vit_forward.22} parent=5 // pred_check
        %p1072 = pneg %p1071
      $region77: #{baseline_vit_forward.22} parent=5 // pred_check_branch
        %1074 = sbr.rel (%p1072) target = $region79
      $region78: #{baseline_vit_forward.22} parent=5 // pred_region
        %s1075 = ssub.s32 %s10, 2
      $region79: #{baseline_vit_forward.22} parent=5 // pred_fallthru
        _
    $region6: #{baseline_vit_forward.22} parent=1 // loop_footer
      %s14 = sadd.s32 1, %s10
    $region7: #{baseline_vit_forward.22} parent=1 // loop_footer_branch
      %9 = sbr.rel target = $region3
    $region8: #{baseline_vit_forward.22} parent=1 // loop_exit
      _

// kernel: baseline_vit_forward.33
$region0: #{baseline_vit_forward.33}
  #allocation0 [shape = 'u32[]', space=smem, size = 0x4, offset = 0x4, fixed_abs, tag = 'smem constant byte address 0x4 - core index']
  #allocation1 [shape = 'u32[72,128]{1,0:T(1,128)}', space=vmem, size = 0x9000, scoped, tag = 'internal scratch']
  %s0 = inlined_call_operand.vmem [shape: f32[2,256], index: 0, kind: input, shape index: {}]
  %s1 = inlined_call_operand.vmem [shape: f32[1,256], index: 1, kind: input, shape index: {}]
  %s2 = inlined_call_operand.vmem [shape: f32[1,256], index: 2, kind: input, shape index: {}]
  %s3 = inlined_call_operand.vmem [shape: f32[1,256], index: 3, kind: input, shape index: {}]
  %s4 = inlined_call_operand.vmem [shape: f32[1,256], index: 4, kind: input, shape index: {}]
  %s5 = inlined_call_operand.vmem [shape: bf16[256,128], index: 5, kind: input, shape index: {}]
  %s6 = inlined_call_operand.hbm [shape: f32[2,256], index: 6, kind: output, shape index: {0}]
  %s7 = inlined_call_operand.hbm [shape: f32[2,256], index: 7, kind: output, shape index: {1}]
  %s8 = inlined_call_operand.hbm [shape: f32[2,128], index: 8, kind: output, shape index: {2}]
  %9 = xla_tuple %s6, %s7, %s8
  %s10 = sld [smem:[#allocation0]]
  $region50: #{baseline_vit_forward.33} parent=0
    _
  %s12 = ssub.s32 1, %s10
  %s13 = scalar_select 0, %s12, %s10
  $region1: #{baseline_vit_forward.33} parent=0
    #allocation2 [shape = 'u8[2048]{0}', space=vmem, size = 0x800, scoped, tag = 'output window, operand 0, single buffered']
    #allocation3 [shape = 's32[1]{0}', space=sflag, size = 0x4, scoped, tag = 'scoped memory for baseline_vit_forward.33']
    #allocation4 [shape = 'u8[2048]{0}', space=vmem, size = 0x800, scoped, tag = 'output window, operand 1, single buffered']
    #allocation5 [shape = 's32[1]{0}', space=sflag, size = 0x4, scoped, tag = 'scoped memory for baseline_vit_forward.33']
    #allocation6 [shape = 'u8[1024]{0}', space=vmem, size = 0x400, scoped, tag = 'output window, operand 2, single buffered']
    %14 = vsyncpa [#allocation3], 0
    %15 = vsyncpa [#allocation5], 0
    // Predicated region
    $region2: #{baseline_vit_forward.33} parent=1 // pred_check
      _
    $region3: #{baseline_vit_forward.33} parent=1 // pred_check_branch
      %17 = sbr.rel (0) target = $region5
    $region4: #{baseline_vit_forward.33} parent=1 // pred_region
      _
    $region5: #{baseline_vit_forward.33} parent=1 // pred_fallthru
      _
    // Predicated region
    $region6: #{baseline_vit_forward.33} parent=1 // pred_check
      _
    $region7: #{baseline_vit_forward.33} parent=1 // pred_check_branch
      %19 = sbr.rel (0) target = $region9
    $region8: #{baseline_vit_forward.33} parent=1 // pred_region
      _
    $region9: #{baseline_vit_forward.33} parent=1 // pred_fallthru
      _
    // Predicated region
    $region10: #{baseline_vit_forward.33} parent=1 // pred_check
      _
    $region11: #{baseline_vit_forward.33} parent=1 // pred_check_branch
      %21 = sbr.rel (0) target = $region13
    $region12: #{baseline_vit_forward.33} parent=1 // pred_region
      _
    $region13: #{baseline_vit_forward.33} parent=1 // pred_fallthru
      _
    // Predicated region
    $region14: #{baseline_vit_forward.33} parent=1 // pred_check
      _
    $region15: #{baseline_vit_forward.33} parent=1 // pred_check_branch
      %23 = sbr.rel (0) target = $region17
    $region16: #{baseline_vit_forward.33} parent=1 // pred_region
      _
    $region17: #{baseline_vit_forward.33} parent=1 // pred_fallthru
      _
    // Predicated region
    $region18: #{baseline_vit_forward.33} parent=1 // pred_check
      _
    $region19: #{baseline_vit_forward.33} parent=1 // pred_check_branch
      %25 = sbr.rel (0) target = $region21
    $region20: #{baseline_vit_forward.33} parent=1 // pred_region
      _
    $region21: #{baseline_vit_forward.33} parent=1 // pred_fallthru
      _
    // Predicated region
    $region22: #{baseline_vit_forward.33} parent=1 // pred_check
      _
    $region23: #{baseline_vit_forward.33} parent=1 // pred_check_branch
      %27 = sbr.rel (0) target = $region25
    $region24: #{baseline_vit_forward.33} parent=1 // pred_region
      _
    $region25: #{baseline_vit_forward.33} parent=1 // pred_fallthru
      _
    %v28 = vld [vmem:[%s0] sm:$0xf]
    %30 = vst [vmem:[#allocation1] ss:$4 sm:$0xff] %v28
    %v31 = vld.sshfl [vmem:[#allocation1] sm:$0xff pattern:$0x73625140]
    %v32 = vld.sshfl [vmem:[#allocation1 + $0x8] sm:$0xff pattern:$0x73625140]
    %vm35 = vcmask 1041408
    %v36 = vsel %vm35, %v31, 0.0
    %v37 = vsel %vm35, %v32, 0.0
    %v38 = vadd.f32 %v36, %v37
    %39 = vadd.xlane.f32.xlu0 %v38
    %v40 = vpop.xlane.xlu0 %39
    %v41 = vrcp.pop 256.0
    %v42 = vmul.f32 256.0, %v41
    %v43 = vsub.f32 1.0, %v42
    %v44 = vmul.f32 %v41, %v43
    %v45 = vadd.f32 %v41, %v44
    %vm46 = vweird.f32 %v41
    %v47 = vsel %vm46, %v41, %v45
    %v48 = vmul.f32 %v40, %v47
    %v51 = vunpack.c.l.s4 269488144
    %v52 = vunpack.c.0.s8 %v51
    %v53 = vperm.slane %v48, %v52
    %v55 = vsub.f32 %v28, %v53
    %v56 = vmul.f32 %v55, %v55
    %58 = vst [vmem:[#allocation1] ss:$4 sm:$0xff] %v56
    %v59 = vld.sshfl [vmem:[#allocation1] sm:$0xff pattern:$0x73625140]
    %v60 = vld.sshfl [vmem:[#allocation1 + $0x8] sm:$0xff pattern:$0x73625140]
    %v63 = vsel %vm35, %v59, 0.0
    %v64 = vsel %vm35, %v60, 0.0
    %v65 = vadd.f32 %v63, %v64
    %66 = vadd.xlane.f32.xlu0 %v65
    %v67 = vpop.xlane.xlu0 %66
    %v68 = vmul.f32 %v67, %v47
    %v69 = vadd.f32 %v68, 1e-06
    %v70 = vrsqrt.pop %v69
    %v71 = vmul.f32 %v70, %v69
    %v72 = vmul.f32 %v71, %v70
    %v73 = vmul.f32 0.5, %v72
    %v74 = vsub.f32 1.5, %v73
    %v75 = vmul.f32 %v70, %v74
    %vm76 = vweird.f32 %v69
    %vm77 = vweird.f32 %v70
    %vm78 = vmor %vm76, %vm77
    %v79 = vsel %vm78, %v70, %v75
    %v82 = vunpack.c.l.s4 269488144
    %v83 = vunpack.c.0.s8 %v82
    %v84 = vperm.slane %v79, %v83
    %v86 = vmul.f32 %v55, %v84
    %v87 = vld [vmem:[%s1] sm:$0x3]
    %v89 = vperm.slane %v87, 0
    %v90 = vperm.slane %v87, 1
    %v91 = vrot.slane %v90, 6
    %v92 = vsel %vm35, %v89, %v91
    %v94 = vmul.f32 %v86, %v92
    %v95 = vld [vmem:[%s2] sm:$0x3]
    %v97 = vperm.slane %v95, 0
    %v98 = vperm.slane %v95, 1
    %v99 = vrot.slane %v98, 6
    %v100 = vsel %vm35, %v97, %v99
    %v102 = vadd.f32 %v94, %v100
    %104 = vst [vmem:[#allocation1] ss:$4 sm:$0xff] %v102
    %v105 = vld.sshfl [vmem:[#allocation1] sm:$0xff pattern:$0x73625140]
    %v106 = vld.sshfl [vmem:[#allocation1 + $0x8] sm:$0xff pattern:$0x73625140]
    %v109 = vsel %vm35, %v105, 0.0
    %v110 = vrot.slane %v109, 4
    %v111 = vadd.f32 %v109, %v110
    %v112 = vrot.slane %v111, 2
    %v113 = vadd.f32 %v111, %v112
    %v114 = vrot.slane %v113, 1
    %v115 = vadd.f32 %v113, %v114
    %v116 = vsel %vm35, %v106, 0.0
    %v117 = vrot.slane %v116, 4
    %v118 = vadd.f32 %v116, %v117
    %v119 = vrot.slane %v118, 2
    %v120 = vadd.f32 %v118, %v119
    %v121 = vrot.slane %v120, 1
    %v122 = vadd.f32 %v120, %v121
    %v123 = vrcp.pop 2.0
    %v124 = vmul.f32 2.0, %v123
    %v125 = vsub.f32 1.0, %v124
    %v126 = vmul.f32 %v123, %v125
    %v127 = vadd.f32 %v123, %v126
    %vm128 = vweird.f32 %v123
    %v129 = vsel %vm128, %v123, %v127
    %v130 = vmul.f32 %v115, %v129
    %v131 = vmul.f32 %v122, %v129
    %v134 = vrot.slane %v131, 6
    %v135 = vsel %vm35, %v130, %v134
    %v137 = vsub.f32 %v102, %v135
    %v138 = vmul.f32 %v137, %v137
    %140 = vst [vmem:[#allocation1] ss:$4 sm:$0xff] %v138
    %v141 = vld.sshfl [vmem:[#allocation1] sm:$0xff pattern:$0x73625140]
    %v142 = vld.sshfl [vmem:[#allocation1 + $0x8] sm:$0xff pattern:$0x73625140]
    %v145 = vsel %vm35, %v141, 0.0
    %v146 = vrot.slane %v145, 4
    %v147 = vadd.f32 %v145, %v146
    %v148 = vrot.slane %v147, 2
    %v149 = vadd.f32 %v147, %v148
    %v150 = vrot.slane %v149, 1
    %v151 = vadd.f32 %v149, %v150
    %v152 = vsel %vm35, %v142, 0.0
    %v153 = vrot.slane %v152, 4
    %v154 = vadd.f32 %v152, %v153
    %v155 = vrot.slane %v154, 2
    %v156 = vadd.f32 %v154, %v155
    %v157 = vrot.slane %v156, 1
    %v158 = vadd.f32 %v156, %v157
    %v159 = vmul.f32 %v151, %v129
    %v160 = vmul.f32 %v158, %v129
    %v161 = vadd.f32 %v159, 1e-05
    %v162 = vadd.f32 %v160, 1e-05
    %v163 = vrsqrt.pop %v161
    %v164 = vmul.f32 %v163, %v161
    %v165 = vmul.f32 %v164, %v163
    %v166 = vmul.f32 0.5, %v165
    %v167 = vsub.f32 1.5, %v166
    %v168 = vmul.f32 %v163, %v167
    %vm169 = vweird.f32 %v161
    %vm170 = vweird.f32 %v163
    %vm171 = vmor %vm169, %vm170
    %v172 = vsel %vm171, %v163, %v168
    %v173 = vrsqrt.pop %v162
    %v174 = vmul.f32 %v173, %v162
    %v175 = vmul.f32 %v174, %v173
    %v176 = vmul.f32 0.5, %v175
    %v177 = vsub.f32 1.5, %v176
    %v178 = vmul.f32 %v173, %v177
    %vm179 = vweird.f32 %v162
    %vm180 = vweird.f32 %v173
    %vm181 = vmor %vm179, %vm180
    %v182 = vsel %vm181, %v173, %v178
    %v185 = vrot.slane %v182, 6
    %v186 = vsel %vm35, %v172, %v185
    %v188 = vmul.f32 %v137, %v186
    %v189 = vld [vmem:[%s3] sm:$0x3]
    %v191 = vperm.slane %v189, 0
    %v192 = vperm.slane %v189, 1
    %v193 = vrot.slane %v192, 6
    %v194 = vsel %vm35, %v191, %v193
    %v196 = vmul.f32 %v188, %v194
    %v197 = vld [vmem:[%s4] sm:$0x3]
    %v199 = vperm.slane %v197, 0
    %v200 = vperm.slane %v197, 1
    %v201 = vrot.slane %v200, 6
    %v202 = vsel %vm35, %v199, %v201
    %v204 = vadd.f32 %v196, %v202
    %205 = vst [vmem:[#allocation2] sm:$0xf] %v102
    %206 = vst [vmem:[#allocation4] sm:$0xf] %v204
    %208 = vst [vmem:[#allocation1] ss:$4 sm:$0xff] %v204
    %v209 = vld.sshfl [vmem:[#allocation1] sm:$0xff pattern:$0x73625140]
    %v210 = vld.sshfl [vmem:[#allocation1 + $0x8] sm:$0xff pattern:$0x73625140]
    %v213 = vpack.c.bf16 %v209, %v209
    %v214 = vpack.c.bf16 %v210, %v210
    %v215 = vld [vmem:[%s5] sm:$0xf]
    %v216 = vld [vmem:[%s5 + $0x4] sm:$0xf]
    %v217 = vld [vmem:[%s5 + $0x8] sm:$0xf]
    %v218 = vld [vmem:[%s5 + $0xc] sm:$0xf]
    %v219 = vld [vmem:[%s5 + $0x10] sm:$0xf]
    %v220 = vld [vmem:[%s5 + $0x14] sm:$0xf]
    %v221 = vld [vmem:[%s5 + $0x18] sm:$0xf]
    %v222 = vld [vmem:[%s5 + $0x1c] sm:$0xf]
    %v223 = vld [vmem:[%s5 + $0x20] sm:$0xf]
    %v224 = vld [vmem:[%s5 + $0x24] sm:$0xf]
    %v225 = vld [vmem:[%s5 + $0x28] sm:$0xf]
    %v226 = vld [vmem:[%s5 + $0x2c] sm:$0xf]
    %v227 = vld [vmem:[%s5 + $0x30] sm:$0xf]
    %v228 = vld [vmem:[%s5 + $0x34] sm:$0xf]
    %v229 = vld [vmem:[%s5 + $0x38] sm:$0xf]
    %v230 = vld [vmem:[%s5 + $0x3c] sm:$0xf]
    %v231 = vld [vmem:[%s5 + $0x40] sm:$0xf]
    %v232 = vld [vmem:[%s5 + $0x44] sm:$0xf]
    %v233 = vld [vmem:[%s5 + $0x48] sm:$0xf]
    %v234 = vld [vmem:[%s5 + $0x4c] sm:$0xf]
    %v235 = vld [vmem:[%s5 + $0x50] sm:$0xf]
    %v236 = vld [vmem:[%s5 + $0x54] sm:$0xf]
    %v237 = vld [vmem:[%s5 + $0x58] sm:$0xf]
    %v238 = vld [vmem:[%s5 + $0x5c] sm:$0xf]
    %v239 = vld [vmem:[%s5 + $0x60] sm:$0xf]
    %v240 = vld [vmem:[%s5 + $0x64] sm:$0xf]
    %v241 = vld [vmem:[%s5 + $0x68] sm:$0xf]
    %v242 = vld [vmem:[%s5 + $0x6c] sm:$0xf]
    %v243 = vld [vmem:[%s5 + $0x70] sm:$0xf]
    %v244 = vld [vmem:[%s5 + $0x74] sm:$0xf]
    %v245 = vld [vmem:[%s5 + $0x78] sm:$0xf]
    %v246 = vld [vmem:[%s5 + $0x7c] sm:$0xf]
    %v279 = vunpack.c.l.b16 %v215
    %v280 = vunpack.c.l.b16 %v216
    %v281 = vunpack.c.l.b16 %v217
    %v282 = vunpack.c.l.b16 %v218
    %v283 = vunpack.c.l.b16 %v219
    %v284 = vunpack.c.l.b16 %v220
    %v285 = vunpack.c.l.b16 %v221
    %v286 = vunpack.c.l.b16 %v222
    %v287 = vunpack.c.l.b16 %v223
    %v288 = vunpack.c.l.b16 %v224
    %v289 = vunpack.c.l.b16 %v225
    %v290 = vunpack.c.l.b16 %v226
    %v291 = vunpack.c.l.b16 %v227
    %v292 = vunpack.c.l.b16 %v228
    %v293 = vunpack.c.l.b16 %v229
    %v294 = vunpack.c.l.b16 %v230
    %v295 = vunpack.c.l.b16 %v231
    %v296 = vunpack.c.l.b16 %v232
    %v297 = vunpack.c.l.b16 %v233
    %v298 = vunpack.c.l.b16 %v234
    %v299 = vunpack.c.l.b16 %v235
    %v300 = vunpack.c.l.b16 %v236
    %v301 = vunpack.c.l.b16 %v237
    %v302 = vunpack.c.l.b16 %v238
    %v303 = vunpack.c.l.b16 %v239
    %v304 = vunpack.c.l.b16 %v240
    %v305 = vunpack.c.l.b16 %v241
    %v306 = vunpack.c.l.b16 %v242
    %v307 = vunpack.c.l.b16 %v243
    %v308 = vunpack.c.l.b16 %v244
    %v309 = vunpack.c.l.b16 %v245
    %v310 = vunpack.c.l.b16 %v246
    %v311 = vpack.c.b16 %v280, %v279
    %v312 = vpack.c.b16 %v282, %v281
    %v313 = vpack.c.b16 %v284, %v283
    %v314 = vpack.c.b16 %v286, %v285
    %v315 = vpack.c.b16 %v288, %v287
    %v316 = vpack.c.b16 %v290, %v289
    %v317 = vpack.c.b16 %v292, %v291
    %v318 = vpack.c.b16 %v294, %v293
    %v319 = vpack.c.b16 %v296, %v295
    %v320 = vpack.c.b16 %v298, %v297
    %v321 = vpack.c.b16 %v300, %v299
    %v322 = vpack.c.b16 %v302, %v301
    %v323 = vpack.c.b16 %v304, %v303
    %v324 = vpack.c.b16 %v306, %v305
    %v325 = vpack.c.b16 %v308, %v307
    %v326 = vpack.c.b16 %v310, %v309
    %343 = vmatpush.bf16.msra.mxu0 %v318
    %344 = vmatpush.bf16.msra.mxu0 %v317
    %345 = vmatpush.bf16.msra.mxu0 %v316
    %346 = vmatpush.bf16.msra.mxu0 %v315
    %347 = vmatpush.bf16.msra.mxu0 %v314
    %348 = vmatpush.bf16.msra.mxu0 %v313
    %349 = vmatpush.bf16.msra.mxu0 %v312
    %350 = vmatpush.bf16.msra.mxu0 %v311
    %351 = vmatmul.bf16.gmra.mxu0 %v213
    %v352 = vpop.f32.mrf.mxu0
    %v353 = vadd.f32 0.0, %v352
    %v354 = vpop.f32.mrf.mxu0
    %355 = vdwg.mxu0
    %356 = vmatpush.bf16.msra.mxu0 %v326
    %357 = vmatpush.bf16.msra.mxu0 %v325
    %358 = vmatpush.bf16.msra.mxu0 %v324
    %359 = vmatpush.bf16.msra.mxu0 %v323
    %360 = vmatpush.bf16.msra.mxu0 %v322
    %361 = vmatpush.bf16.msra.mxu0 %v321
    %362 = vmatpush.bf16.msra.mxu0 %v320
    %363 = vmatpush.bf16.msra.mxu0 %v319
    %364 = vmatmul.bf16.gmra.mxu0 %v214
    %v365 = vpop.f32.mrf.mxu0
    %v366 = vadd.f32 %v353, %v365
    %v367 = vpop.f32.mrf.mxu0
    %368 = vdwg.mxu0
    %369 = vst [vmem:[#allocation6] sm:$0x3] %v366
    // Predicated region
    $region26: #{baseline_vit_forward.33} parent=1 // pred_check
      _
    $region27: #{baseline_vit_forward.33} parent=1 // pred_check_branch
      %371 = sbr.rel (0) target = $region29
    $region28: #{baseline_vit_forward.33} parent=1 // pred_region
      %373 = vsyncadd [#allocation3], 0
      %s375 = sshll.u32 [#allocation2], 4
      %s376 = int_to_ptr.vmem [resolvable:$true] %s375
      %s377 = sshll.u32 %s6, 4
      %s378 = int_to_ptr.hbm [resolvable:$true] %s377
      %380 = dma.vmem_to_hbm [thread:$0]  %s376, 64, %s378, [#allocation3]
    $region29: #{baseline_vit_forward.33} parent=1 // pred_fallthru
      _
    // Predicated region
    $region30: #{baseline_vit_forward.33} parent=1 // pred_check
      _
    $region31: #{baseline_vit_forward.33} parent=1 // pred_check_branch
      %382 = sbr.rel (0) target = $region33
    $region32: #{baseline_vit_forward.33} parent=1 // pred_region
      %384 = vsyncadd [#allocation5], 0
      %s386 = sshll.u32 [#allocation4], 4
      %s387 = int_to_ptr.vmem [resolvable:$true] %s386
      %s388 = sshll.u32 %s7, 4
      %s389 = int_to_ptr.hbm [resolvable:$true] %s388
      %391 = dma.vmem_to_hbm [thread:$0]  %s387, 64, %s389, [#allocation5]
    $region33: #{baseline_vit_forward.33} parent=1 // pred_fallthru
      _
    // Predicated region
    $region34: #{baseline_vit_forward.33} parent=1 // pred_check
      _
    $region35: #{baseline_vit_forward.33} parent=1 // pred_check_branch
      %393 = sbr.rel (0) target = $region37
    $region36: #{baseline_vit_forward.33} parent=1 // pred_region
      %395 = vsyncadd [#allocation5], 0
      %s397 = sshll.u32 [#allocation6], 4
      %s398 = int_to_ptr.vmem [resolvable:$true] %s397
      %s399 = sshll.u32 %s8, 4
      %s400 = int_to_ptr.hbm [resolvable:$true] %s399
      %402 = dma.vmem_to_hbm [thread:$0]  %s398, 32, %s400, [#allocation5]
    $region37: #{baseline_vit_forward.33} parent=1 // pred_fallthru
      _
    // Predicated region
    $region38: #{baseline_vit_forward.33} parent=1 // pred_check
      _
    $region39: #{baseline_vit_forward.33} parent=1 // pred_check_branch
      %404 = sbr.rel (0) target = $region41
    $region40: #{baseline_vit_forward.33} parent=1 // pred_region
      %406 = dma.done [#allocation3], 64
    $region41: #{baseline_vit_forward.33} parent=1 // pred_fallthru
      _
    // Predicated region
    $region42: #{baseline_vit_forward.33} parent=1 // pred_check
      _
    $region43: #{baseline_vit_forward.33} parent=1 // pred_check_branch
      %408 = sbr.rel (0) target = $region45
    $region44: #{baseline_vit_forward.33} parent=1 // pred_region
      %410 = dma.done [#allocation5], 64
    $region45: #{baseline_vit_forward.33} parent=1 // pred_fallthru
      _
    // Predicated region
    $region46: #{baseline_vit_forward.33} parent=1 // pred_check
      _
    $region47: #{baseline_vit_forward.33} parent=1 // pred_check_branch
      %412 = sbr.rel (0) target = $region49
    $region48: #{baseline_vit_forward.33} parent=1 // pred_region
      %414 = dma.done [#allocation5], 32
    $region49: #{baseline_vit_forward.33} parent=1 // pred_fallthru
      _
    %415 = vsyncpa [#allocation3], 1
    %416 = vsyncpa [#allocation5], 1

</llo_original>
